<compile_context>
chip_gen: v6e
topology: v6e:2x2x1
jax: 0.10.0
libtpu: 0.0.40
codegen_flags: <defaults>
</compile_context>

<pallas_src>
import math

import jax
import jax.numpy as jnp
import numpy as np
from jax import lax
from jax.experimental import pallas as pl
from jax.experimental.pallas import tpu as pltpu


def _round_up(x, m):
    return ((x + m - 1) // m) * m


def make_bilstm_tag_kernel(S, Bp, Hp):
    """Build the kernel closed over static sizes (S timesteps, padded batch Bp, padded hidden Hp)."""
    G4 = 4 * Hp   # gate width per direction (i|f|g|o blocks, each Hp lanes)

    def kernel(x_ref,          # (S*Bp, E)   time-major, batch-padded embeddings
               wih_cat_ref,    # (E, 8*Hp)   [W_ih_f | W_ih_b], gate-block padded
               b_cat_ref,      # (1, 8*Hp)   [b_f | b_b], gate-block padded
               whh_f_ref,      # (Hp, 4*Hp)
               whh_b_ref,      # (Hp, 4*Hp)
               wtag_f_ref,     # (Hp, Tp)    hidden2tag (forward-hidden rows)
               wtag_b_ref,     # (Hp, Tp)    hidden2tag (backward-hidden rows)
               btag_ref,       # (1, Tp)
               out_ref,        # (S*Bp, Tp)  lane-dense tag scores
               xproj,          # (S*Bp, 8*Hp) scratch: hoisted input projection
               hf, cf, hb, cb,           # (Bp, Hp) recurrent state scratch
               hf_seq, hb_seq):          # (S*Bp, Hp) per-step hidden scratch
        # --- Preamble: one big MXU matmul for both directions, biases folded in. ---
        xproj[...] = (jnp.dot(x_ref[...], wih_cat_ref[...],
                              preferred_element_type=jnp.float32)
                      + b_cat_ref[...])

        hf[...] = jnp.zeros_like(hf)
        cf[...] = jnp.zeros_like(cf)
        hb[...] = jnp.zeros_like(hb)
        cb[...] = jnp.zeros_like(cb)

        def cell(xp, h, c, whh_ref):
            # PyTorch LSTM gate order: i, f, g, o — each gate is a whole Hp(=128)-lane block.
            gates = xp + jnp.dot(h, whh_ref[...], preferred_element_type=jnp.float32)
            i = jax.nn.sigmoid(gates[:, 0:Hp])
            f = jax.nn.sigmoid(gates[:, Hp:2 * Hp])
            g = jnp.tanh(gates[:, 2 * Hp:3 * Hp])
            o = jax.nn.sigmoid(gates[:, 3 * Hp:4 * Hp])
            c_new = f * c + i * g
            h_new = o * jnp.tanh(c_new)
            return h_new, c_new

        # --- Fused forward/backward recurrence (two independent chains per iteration). ---
        def body(i, carry):
            rf = pl.multiple_of(i * Bp, Bp)              # forward step t = i
            rb = pl.multiple_of((S - 1 - i) * Bp, Bp)    # backward step t = S-1-i
            xp_f = xproj[pl.ds(rf, Bp), 0:G4]
            xp_b = xproj[pl.ds(rb, Bp), G4:2 * G4]

            hf_new, cf_new = cell(xp_f, hf[...], cf[...], whh_f_ref)
            hb_new, cb_new = cell(xp_b, hb[...], cb[...], whh_b_ref)

            hf[...] = hf_new
            cf[...] = cf_new
            hb[...] = hb_new
            cb[...] = cb_new
            hf_seq[pl.ds(rf, Bp), :] = hf_new
            hb_seq[pl.ds(rb, Bp), :] = hb_new
            return carry

        unroll = True if S <= 16 else 8
        lax.fori_loop(0, S, body, 0, unroll=unroll)

        # --- hidden2tag as one big lane-dense matmul pair (concat avoided). ---
        out_ref[...] = (jnp.dot(hf_seq[...], wtag_f_ref[...],
                                preferred_element_type=jnp.float32)
                        + jnp.dot(hb_seq[...], wtag_b_ref[...],
                                  preferred_element_type=jnp.float32)
                        + btag_ref[...])

    return kernel


def bilstm_crf_forward(sentences, params):
    """sentences: (B, S) int32 token ids  ->  (B, S, tagset_size) float32 tag scores."""
    emb = params['embeddings']
    B, S = sentences.shape
    E = emb.shape[1]
    H = params['whh_f'].shape[0]
    T = params['wtag'].shape[1]

    Bp = _round_up(B, 8)      # sublane multiple
    Hp = _round_up(H, 128)    # lane multiple -> whole-vreg gate slices
    Tp = _round_up(T, 128)    # lane-dense output

    # Embedding gather (glue), time-major, batch-padded, flattened to 2-D lane-dense layout.
    x = jnp.take(emb, sentences, axis=0).astype(jnp.float32)   # (B, S, E)
    x = jnp.transpose(x, (1, 0, 2))                            # (S, B, E)
    x = jnp.pad(x, ((0, 0), (0, Bp - B), (0, 0)))              # (S, Bp, E)
    x_flat = x.reshape(S * Bp, E)

    def pad_gate_cols(w, rows_out):
        # (rows_in, 4H) -> (rows_out, 4Hp): each gate block scattered to its own Hp-lane block,
        # padding is zero so padded hidden lanes stay exactly 0 through the recurrence.
        rows_in = w.shape[0]
        out = jnp.zeros((rows_out, 4 * Hp), jnp.float32)
        for g in range(4):
            out = out.at[:rows_in, g * Hp:g * Hp + H].set(w[:, g * H:(g + 1) * H])
        return out

    wih_f = pad_gate_cols(params['wih_f'], E)
    wih_b = pad_gate_cols(params['wih_b'], E)
    whh_f = pad_gate_cols(params['whh_f'], Hp)
    whh_b = pad_gate_cols(params['whh_b'], Hp)
    b_f = pad_gate_cols(params['b_f'], 1)
    b_b = pad_gate_cols(params['b_b'], 1)

    wih_cat = jnp.concatenate([wih_f, wih_b], axis=1)          # (E, 8Hp)
    b_cat = jnp.concatenate([b_f, b_b], axis=1)                # (1, 8Hp)

    wtag = params['wtag']                                      # (2H, T)
    wtag_f = jnp.zeros((Hp, Tp), jnp.float32).at[:H, :T].set(wtag[0:H])
    wtag_b = jnp.zeros((Hp, Tp), jnp.float32).at[:H, :T].set(wtag[H:2 * H])
    btag = jnp.zeros((1, Tp), jnp.float32).at[:, :T].set(params['btag'])

    # VMEM budget: everything is resident (no grid, no double-buffering).
    resident_elems = (S * Bp * E + E * 8 * Hp + 8 * Hp + 2 * Hp * 4 * Hp
                      + 2 * Hp * Tp + Tp + S * Bp * Tp
                      + S * Bp * 8 * Hp + 4 * Bp * Hp + 2 * S * Bp * Hp)
    vmem_budget = int(min(max(2 * 4 * resident_elems, 8 << 20), 64 << 20))

    kernel = make_bilstm_tag_kernel(S, Bp, Hp)
    out_flat = pl.pallas_call(
        kernel,
        out_shape=jax.ShapeDtypeStruct((S * Bp, Tp), jnp.float32),
        in_specs=[pl.BlockSpec(memory_space=pltpu.MemorySpace.VMEM)] * 8,
        out_specs=pl.BlockSpec(memory_space=pltpu.MemorySpace.VMEM),
        scratch_shapes=[
            pltpu.VMEM((S * Bp, 8 * Hp), jnp.float32),   # xproj
            pltpu.VMEM((Bp, Hp), jnp.float32),           # hf
            pltpu.VMEM((Bp, Hp), jnp.float32),           # cf
            pltpu.VMEM((Bp, Hp), jnp.float32),           # hb
            pltpu.VMEM((Bp, Hp), jnp.float32),           # cb
            pltpu.VMEM((S * Bp, Hp), jnp.float32),       # hf_seq
            pltpu.VMEM((S * Bp, Hp), jnp.float32),       # hb_seq
        ],
        compiler_params=pltpu.CompilerParams(vmem_limit_bytes=vmem_budget),
    )(x_flat, wih_cat, b_cat, whh_f, whh_b, wtag_f, wtag_b, btag)

    out = out_flat.reshape(S, Bp, Tp)[:, :B, :T]               # strip padding
    return jnp.transpose(out, (1, 0, 2))                       # (B, S, T) batch_first


def init_params(key, vocab_size, tagset_size, embedding_dim=100, hidden_dim=128):
    H = hidden_dim // 2
    ks = jax.random.split(key, 11)
    k_lstm = 1.0 / math.sqrt(H)
    k_lin = 1.0 / math.sqrt(hidden_dim)
    u = lambda k, shape, bound: jax.random.uniform(k, shape, jnp.float32, -bound, bound)
    return dict(
        embeddings=jax.random.normal(ks[0], (vocab_size, embedding_dim), jnp.float32),
        wih_f=u(ks[1], (embedding_dim, 4 * H), k_lstm),
        whh_f=u(ks[2], (H, 4 * H), k_lstm),
        b_f=u(ks[3], (1, 4 * H), k_lstm) + u(ks[4], (1, 4 * H), k_lstm),
        wih_b=u(ks[5], (embedding_dim, 4 * H), k_lstm),
        whh_b=u(ks[6], (H, 4 * H), k_lstm),
        b_b=u(ks[7], (1, 4 * H), k_lstm) + u(ks[8], (1, 4 * H), k_lstm),
        wtag=u(ks[9], (hidden_dim, tagset_size), k_lin),
        btag=u(ks[10], (1, tagset_size), k_lin),
    )


def reference_forward(sentences, params):
    """Pure-JAX reference mirroring nn.Embedding -> nn.LSTM(bidirectional) -> nn.Linear."""
    H = params['whh_f'].shape[0]
    x = jnp.take(params['embeddings'], sentences, axis=0)      # (B, S, E)
    x = jnp.transpose(x, (1, 0, 2))                            # (S, B, E)
    B = x.shape[1]

    def make_step(wih, whh, b):
        def step(carry, x_t):
            h, c = carry
            gates = x_t @ wih + h @ whh + b
            i = jax.nn.sigmoid(gates[:, 0:H])
            f = jax.nn.sigmoid(gates[:, H:2 * H])
            g = jnp.tanh(gates[:, 2 * H:3 * H])
            o = jax.nn.sigmoid(gates[:, 3 * H:4 * H])
            c = f * c + i * g
            h = o * jnp.tanh(c)
            return (h, c), h
        return step

    init = (jnp.zeros((B, H), jnp.float32), jnp.zeros((B, H), jnp.float32))
    _, hs_f = lax.scan(make_step(params['wih_f'], params['whh_f'], params['b_f']), init, x)
    _, hs_b_rev = lax.scan(make_step(params['wih_b'], params['whh_b'], params['b_b']),
                           init, x[::-1])
    hs_b = hs_b_rev[::-1]
    feats = jnp.concatenate([hs_f, hs_b], axis=-1)             # (S, B, 2H)
    out = feats @ params['wtag'] + params['btag']              # (S, B, T)
    return jnp.transpose(out, (1, 0, 2))                       # (B, S, T)


if __name__ == "__main__":
    vocab_size, tagset_size = 50, 5
    B, S = 2, 8

    key = jax.random.PRNGKey(0)
    pkey, skey = jax.random.split(key)
    params = init_params(pkey, vocab_size, tagset_size)
    sentences = jax.random.randint(skey, (B, S), 0, vocab_size, dtype=jnp.int32)

    out = jax.block_until_ready(bilstm_crf_forward(sentences, params))
    ref = jax.block_until_ready(reference_forward(sentences, params))
    np.testing.assert_allclose(np.asarray(out), np.asarray(ref), rtol=1e-4, atol=1e-4)
    assert out.shape == (B, S, tagset_size) and out.dtype == jnp.float32
    print("KERNEL_OK")
</pallas_src>

<mosaic_0001>
module attributes {stable_mosaic.version = 11 : i64} {
  func.func @kernel(%arg0: memref<64x100xf32, #tpu.memory_space<vmem>>, %arg1: memref<100x1024xf32, #tpu.memory_space<vmem>>, %arg2: memref<1x1024xf32, #tpu.memory_space<vmem>>, %arg3: memref<128x512xf32, #tpu.memory_space<vmem>>, %arg4: memref<128x512xf32, #tpu.memory_space<vmem>>, %arg5: memref<128x128xf32, #tpu.memory_space<vmem>>, %arg6: memref<128x128xf32, #tpu.memory_space<vmem>>, %arg7: memref<1x128xf32, #tpu.memory_space<vmem>>, %arg8: memref<64x128xf32, #tpu.memory_space<vmem>>, %arg9: memref<64x1024xf32, #tpu.memory_space<vmem>>, %arg10: memref<8x128xf32, #tpu.memory_space<vmem>>, %arg11: memref<8x128xf32, #tpu.memory_space<vmem>>, %arg12: memref<8x128xf32, #tpu.memory_space<vmem>>, %arg13: memref<8x128xf32, #tpu.memory_space<vmem>>, %arg14: memref<64x128xf32, #tpu.memory_space<vmem>>, %arg15: memref<64x128xf32, #tpu.memory_space<vmem>>) attributes {dimension_semantics = [], scalar_prefetch = 0 : i64, scratch_operands = 7 : i64, tpu.core_type = #tpu.core_type<tc>} {
    %c0 = arith.constant 0 : index
    %c0_0 = arith.constant 0 : index
    %0 = vector.load %arg0[%c0, %c0_0] : memref<64x100xf32, #tpu.memory_space<vmem>>, vector<64x100xf32>
    %c0_1 = arith.constant 0 : index
    %c0_2 = arith.constant 0 : index
    %1 = vector.load %arg1[%c0_1, %c0_2] : memref<100x1024xf32, #tpu.memory_space<vmem>>, vector<100x1024xf32>
    %cst = arith.constant dense<0.000000e+00> : vector<64x1024xf32>
    %2 = tpu.matmul %0, %1, %cst {dimension_numbers = #tpu.dot_dimension_numbers<[1], [0], [0], [1], [0, 0, 1, 1], [], []>} : vector<64x100xf32>, vector<100x1024xf32>, vector<64x1024xf32> -> vector<64x1024xf32>
    %c0_3 = arith.constant 0 : index
    %c0_4 = arith.constant 0 : index
    %3 = vector.load %arg2[%c0_3, %c0_4] : memref<1x1024xf32, #tpu.memory_space<vmem>>, vector<1x1024xf32>
    %4 = vector.broadcast %3 : vector<1x1024xf32> to vector<64x1024xf32>
    %5 = arith.addf %2, %4 : vector<64x1024xf32>
    %c0_5 = arith.constant 0 : index
    %c0_6 = arith.constant 0 : index
    %6 = vector.load %arg9[%c0_5, %c0_6] : memref<64x1024xf32, #tpu.memory_space<vmem>>, vector<64x1024xf32>
    tpu.vector_store %arg9[%c0_5, %c0_6], %5 {strides = array<i32>} : memref<64x1024xf32, #tpu.memory_space<vmem>>, vector<64x1024xf32>,
    %cst_7 = arith.constant 0.000000e+00 : f32
    %7 = vector.broadcast %cst_7 : f32 to vector<8x128xf32>
    %c0_8 = arith.constant 0 : index
    %c0_9 = arith.constant 0 : index
    %8 = vector.load %arg10[%c0_8, %c0_9] : memref<8x128xf32, #tpu.memory_space<vmem>>, vector<8x128xf32>
    tpu.vector_store %arg10[%c0_8, %c0_9], %7 {strides = array<i32>} : memref<8x128xf32, #tpu.memory_space<vmem>>, vector<8x128xf32>,
    %cst_10 = arith.constant 0.000000e+00 : f32
    %9 = vector.broadcast %cst_10 : f32 to vector<8x128xf32>
    %c0_11 = arith.constant 0 : index
    %c0_12 = arith.constant 0 : index
    %10 = vector.load %arg11[%c0_11, %c0_12] : memref<8x128xf32, #tpu.memory_space<vmem>>, vector<8x128xf32>
    tpu.vector_store %arg11[%c0_11, %c0_12], %9 {strides = array<i32>} : memref<8x128xf32, #tpu.memory_space<vmem>>, vector<8x128xf32>,
    %cst_13 = arith.constant 0.000000e+00 : f32
    %11 = vector.broadcast %cst_13 : f32 to vector<8x128xf32>
    %c0_14 = arith.constant 0 : index
    %c0_15 = arith.constant 0 : index
    %12 = vector.load %arg12[%c0_14, %c0_15] : memref<8x128xf32, #tpu.memory_space<vmem>>, vector<8x128xf32>
    tpu.vector_store %arg12[%c0_14, %c0_15], %11 {strides = array<i32>} : memref<8x128xf32, #tpu.memory_space<vmem>>, vector<8x128xf32>,
    %cst_16 = arith.constant 0.000000e+00 : f32
    %13 = vector.broadcast %cst_16 : f32 to vector<8x128xf32>
    %c0_17 = arith.constant 0 : index
    %c0_18 = arith.constant 0 : index
    %14 = vector.load %arg13[%c0_17, %c0_18] : memref<8x128xf32, #tpu.memory_space<vmem>>, vector<8x128xf32>
    tpu.vector_store %arg13[%c0_17, %c0_18], %13 {strides = array<i32>} : memref<8x128xf32, #tpu.memory_space<vmem>>, vector<8x128xf32>,
    %c0_i32 = arith.constant 0 : i32
    %c8_i32 = arith.constant 8 : i32
    %15 = arith.muli %c0_i32, %c8_i32 : i32
    %16 = tpu.assume_multiple %15, 8 : i32
    %c7_i32 = arith.constant 7 : i32
    %17 = arith.subi %c7_i32, %c0_i32 : i32
    %c8_i32_19 = arith.constant 8 : i32
    %18 = arith.muli %17, %c8_i32_19 : i32
    %19 = tpu.assume_multiple %18, 8 : i32
    %20 = arith.index_cast %16 : i32 to index
    %c0_20 = arith.constant 0 : index
    %21 = vector.load %arg9[%20, %c0_20] : memref<64x1024xf32, #tpu.memory_space<vmem>>, vector<8x512xf32>
    %22 = arith.index_cast %19 : i32 to index
    %c512 = arith.constant 512 : index
    %23 = vector.load %arg9[%22, %c512] : memref<64x1024xf32, #tpu.memory_space<vmem>>, vector<8x512xf32>
    %c0_21 = arith.constant 0 : index
    %c0_22 = arith.constant 0 : index
    %24 = vector.load %arg10[%c0_21, %c0_22] : memref<8x128xf32, #tpu.memory_space<vmem>>, vector<8x128xf32>
    %c0_23 = arith.constant 0 : index
    %c0_24 = arith.constant 0 : index
    %25 = vector.load %arg11[%c0_23, %c0_24] : memref<8x128xf32, #tpu.memory_space<vmem>>, vector<8x128xf32>
    %c0_25 = arith.constant 0 : index
    %c0_26 = arith.constant 0 : index
    %26 = vector.load %arg3[%c0_25, %c0_26] : memref<128x512xf32, #tpu.memory_space<vmem>>, vector<128x512xf32>
    %cst_27 = arith.constant dense<0.000000e+00> : vector<8x512xf32>
    %27 = tpu.matmul %24, %26, %cst_27 {dimension_numbers = #tpu.dot_dimension_numbers<[1], [0], [0], [1], [0, 0, 1, 1], [], []>} : vector<8x128xf32>, vector<128x512xf32>, vector<8x512xf32> -> vector<8x512xf32>
    %28 = arith.addf %21, %27 : vector<8x512xf32>
    %29 = vector.extract_strided_slice %28 {offsets = [0, 0], sizes = [8, 128], strides = [1, 1]} : vector<8x512xf32> to vector<8x128xf32>
    %30 = arith.negf %29 : vector<8x128xf32>
    %31 = math.exp %30 : vector<8x128xf32>
    %cst_28 = arith.constant 1.000000e+00 : f32
    %32 = vector.broadcast %cst_28 : f32 to vector<8x128xf32>
    %33 = arith.addf %32, %31 : vector<8x128xf32>
    %34 = arith.divf %32, %33 : vector<8x128xf32>
    %35 = vector.extract_strided_slice %28 {offsets = [0, 128], sizes = [8, 128], strides = [1, 1]} : vector<8x512xf32> to vector<8x128xf32>
    %36 = arith.negf %35 : vector<8x128xf32>
    %37 = math.exp %36 : vector<8x128xf32>
    %cst_29 = arith.constant 1.000000e+00 : f32
    %38 = vector.broadcast %cst_29 : f32 to vector<8x128xf32>
    %39 = arith.addf %38, %37 : vector<8x128xf32>
    %40 = arith.divf %38, %39 : vector<8x128xf32>
    %41 = vector.extract_strided_slice %28 {offsets = [0, 256], sizes = [8, 128], strides = [1, 1]} : vector<8x512xf32> to vector<8x128xf32>
    %42 = math.tanh %41 : vector<8x128xf32>
    %43 = vector.extract_strided_slice %28 {offsets = [0, 384], sizes = [8, 128], strides = [1, 1]} : vector<8x512xf32> to vector<8x128xf32>
    %44 = arith.negf %43 : vector<8x128xf32>
    %45 = math.exp %44 : vector<8x128xf32>
    %cst_30 = arith.constant 1.000000e+00 : f32
    %46 = vector.broadcast %cst_30 : f32 to vector<8x128xf32>
    %47 = arith.addf %46, %45 : vector<8x128xf32>
    %48 = arith.divf %46, %47 : vector<8x128xf32>
    %49 = arith.mulf %40, %25 : vector<8x128xf32>
    %50 = arith.mulf %34, %42 : vector<8x128xf32>
    %51 = arith.addf %49, %50 : vector<8x128xf32>
    %52 = math.tanh %51 : vector<8x128xf32>
    %53 = arith.mulf %48, %52 : vector<8x128xf32>
    %c0_31 = arith.constant 0 : index
    %c0_32 = arith.constant 0 : index
    %54 = vector.load %arg12[%c0_31, %c0_32] : memref<8x128xf32, #tpu.memory_space<vmem>>, vector<8x128xf32>
    %c0_33 = arith.constant 0 : index
    %c0_34 = arith.constant 0 : index
    %55 = vector.load %arg13[%c0_33, %c0_34] : memref<8x128xf32, #tpu.memory_space<vmem>>, vector<8x128xf32>
    %c0_35 = arith.constant 0 : index
    %c0_36 = arith.constant 0 : index
    %56 = vector.load %arg4[%c0_35, %c0_36] : memref<128x512xf32, #tpu.memory_space<vmem>>, vector<128x512xf32>
    %cst_37 = arith.constant dense<0.000000e+00> : vector<8x512xf32>
    %57 = tpu.matmul %54, %56, %cst_37 {dimension_numbers = #tpu.dot_dimension_numbers<[1], [0], [0], [1], [0, 0, 1, 1], [], []>} : vector<8x128xf32>, vector<128x512xf32>, vector<8x512xf32> -> vector<8x512xf32>
    %58 = arith.addf %23, %57 : vector<8x512xf32>
    %59 = vector.extract_strided_slice %58 {offsets = [0, 0], sizes = [8, 128], strides = [1, 1]} : vector<8x512xf32> to vector<8x128xf32>
    %60 = arith.negf %59 : vector<8x128xf32>
    %61 = math.exp %60 : vector<8x128xf32>
    %cst_38 = arith.constant 1.000000e+00 : f32
    %62 = vector.broadcast %cst_38 : f32 to vector<8x128xf32>
    %63 = arith.addf %62, %61 : vector<8x128xf32>
    %64 = arith.divf %62, %63 : vector<8x128xf32>
    %65 = vector.extract_strided_slice %58 {offsets = [0, 128], sizes = [8, 128], strides = [1, 1]} : vector<8x512xf32> to vector<8x128xf32>
    %66 = arith.negf %65 : vector<8x128xf32>
    %67 = math.exp %66 : vector<8x128xf32>
    %cst_39 = arith.constant 1.000000e+00 : f32
    %68 = vector.broadcast %cst_39 : f32 to vector<8x128xf32>
    %69 = arith.addf %68, %67 : vector<8x128xf32>
    %70 = arith.divf %68, %69 : vector<8x128xf32>
    %71 = vector.extract_strided_slice %58 {offsets = [0, 256], sizes = [8, 128], strides = [1, 1]} : vector<8x512xf32> to vector<8x128xf32>
    %72 = math.tanh %71 : vector<8x128xf32>
    %73 = vector.extract_strided_slice %58 {offsets = [0, 384], sizes = [8, 128], strides = [1, 1]} : vector<8x512xf32> to vector<8x128xf32>
    %74 = arith.negf %73 : vector<8x128xf32>
    %75 = math.exp %74 : vector<8x128xf32>
    %cst_40 = arith.constant 1.000000e+00 : f32
    %76 = vector.broadcast %cst_40 : f32 to vector<8x128xf32>
    %77 = arith.addf %76, %75 : vector<8x128xf32>
    %78 = arith.divf %76, %77 : vector<8x128xf32>
    %79 = arith.mulf %70, %55 : vector<8x128xf32>
    %80 = arith.mulf %64, %72 : vector<8x128xf32>
    %81 = arith.addf %79, %80 : vector<8x128xf32>
    %82 = math.tanh %81 : vector<8x128xf32>
    %83 = arith.mulf %78, %82 : vector<8x128xf32>
    %c0_41 = arith.constant 0 : index
    %c0_42 = arith.constant 0 : index
    %84 = vector.load %arg10[%c0_41, %c0_42] : memref<8x128xf32, #tpu.memory_space<vmem>>, vector<8x128xf32>
    tpu.vector_store %arg10[%c0_41, %c0_42], %53 {strides = array<i32>} : memref<8x128xf32, #tpu.memory_space<vmem>>, vector<8x128xf32>,
    %c0_43 = arith.constant 0 : index
    %c0_44 = arith.constant 0 : index
    %85 = vector.load %arg11[%c0_43, %c0_44] : memref<8x128xf32, #tpu.memory_space<vmem>>, vector<8x128xf32>
    tpu.vector_store %arg11[%c0_43, %c0_44], %51 {strides = array<i32>} : memref<8x128xf32, #tpu.memory_space<vmem>>, vector<8x128xf32>,
    %c0_45 = arith.constant 0 : index
    %c0_46 = arith.constant 0 : index
    %86 = vector.load %arg12[%c0_45, %c0_46] : memref<8x128xf32, #tpu.memory_space<vmem>>, vector<8x128xf32>
    tpu.vector_store %arg12[%c0_45, %c0_46], %83 {strides = array<i32>} : memref<8x128xf32, #tpu.memory_space<vmem>>, vector<8x128xf32>,
    %c0_47 = arith.constant 0 : index
    %c0_48 = arith.constant 0 : index
    %87 = vector.load %arg13[%c0_47, %c0_48] : memref<8x128xf32, #tpu.memory_space<vmem>>, vector<8x128xf32>
    tpu.vector_store %arg13[%c0_47, %c0_48], %81 {strides = array<i32>} : memref<8x128xf32, #tpu.memory_space<vmem>>, vector<8x128xf32>,
    %88 = arith.index_cast %16 : i32 to index
    %c0_49 = arith.constant 0 : index
    %89 = vector.load %arg14[%88, %c0_49] : memref<64x128xf32, #tpu.memory_space<vmem>>, vector<8x128xf32>
    tpu.vector_store %arg14[%88, %c0_49], %53 {strides = array<i32>} : memref<64x128xf32, #tpu.memory_space<vmem>>, vector<8x128xf32>,
    %90 = arith.index_cast %19 : i32 to index
    %c0_50 = arith.constant 0 : index
    %91 = vector.load %arg15[%90, %c0_50] : memref<64x128xf32, #tpu.memory_space<vmem>>, vector<8x128xf32>
    tpu.vector_store %arg15[%90, %c0_50], %83 {strides = array<i32>} : memref<64x128xf32, #tpu.memory_space<vmem>>, vector<8x128xf32>,
    %c1_i32 = arith.constant 1 : i32
    %c8_i32_51 = arith.constant 8 : i32
    %92 = arith.muli %c1_i32, %c8_i32_51 : i32
    %93 = tpu.assume_multiple %92, 8 : i32
    %c7_i32_52 = arith.constant 7 : i32
    %94 = arith.subi %c7_i32_52, %c1_i32 : i32
    %c8_i32_53 = arith.constant 8 : i32
    %95 = arith.muli %94, %c8_i32_53 : i32
    %96 = tpu.assume_multiple %95, 8 : i32
    %97 = arith.index_cast %93 : i32 to index
    %c0_54 = arith.constant 0 : index
    %98 = vector.load %arg9[%97, %c0_54] : memref<64x1024xf32, #tpu.memory_space<vmem>>, vector<8x512xf32>
    %99 = arith.index_cast %96 : i32 to index
    %c512_55 = arith.constant 512 : index
    %100 = vector.load %arg9[%99, %c512_55] : memref<64x1024xf32, #tpu.memory_space<vmem>>, vector<8x512xf32>
    %c0_56 = arith.constant 0 : index
    %c0_57 = arith.constant 0 : index
    %101 = vector.load %arg10[%c0_56, %c0_57] : memref<8x128xf32, #tpu.memory_space<vmem>>, vector<8x128xf32>
    %c0_58 = arith.constant 0 : index
    %c0_59 = arith.constant 0 : index
    %102 = vector.load %arg11[%c0_58, %c0_59] : memref<8x128xf32, #tpu.memory_space<vmem>>, vector<8x128xf32>
    %c0_60 = arith.constant 0 : index
    %c0_61 = arith.constant 0 : index
    %103 = vector.load %arg3[%c0_60, %c0_61] : memref<128x512xf32, #tpu.memory_space<vmem>>, vector<128x512xf32>
    %cst_62 = arith.constant dense<0.000000e+00> : vector<8x512xf32>
    %104 = tpu.matmul %101, %103, %cst_62 {dimension_numbers = #tpu.dot_dimension_numbers<[1], [0], [0], [1], [0, 0, 1, 1], [], []>} : vector<8x128xf32>, vector<128x512xf32>, vector<8x512xf32> -> vector<8x512xf32>
    %105 = arith.addf %98, %104 : vector<8x512xf32>
    %106 = vector.extract_strided_slice %105 {offsets = [0, 0], sizes = [8, 128], strides = [1, 1]} : vector<8x512xf32> to vector<8x128xf32>
    %107 = arith.negf %106 : vector<8x128xf32>
    %108 = math.exp %107 : vector<8x128xf32>
    %cst_63 = arith.constant 1.000000e+00 : f32
    %109 = vector.broadcast %cst_63 : f32 to vector<8x128xf32>
    %110 = arith.addf %109, %108 : vector<8x128xf32>
    %111 = arith.divf %109, %110 : vector<8x128xf32>
    %112 = vector.extract_strided_slice %105 {offsets = [0, 128], sizes = [8, 128], strides = [1, 1]} : vector<8x512xf32> to vector<8x128xf32>
    %113 = arith.negf %112 : vector<8x128xf32>
    %114 = math.exp %113 : vector<8x128xf32>
    %cst_64 = arith.constant 1.000000e+00 : f32
    %115 = vector.broadcast %cst_64 : f32 to vector<8x128xf32>
    %116 = arith.addf %115, %114 : vector<8x128xf32>
    %117 = arith.divf %115, %116 : vector<8x128xf32>
    %118 = vector.extract_strided_slice %105 {offsets = [0, 256], sizes = [8, 128], strides = [1, 1]} : vector<8x512xf32> to vector<8x128xf32>
    %119 = math.tanh %118 : vector<8x128xf32>
    %120 = vector.extract_strided_slice %105 {offsets = [0, 384], sizes = [8, 128], strides = [1, 1]} : vector<8x512xf32> to vector<8x128xf32>
    %121 = arith.negf %120 : vector<8x128xf32>
    %122 = math.exp %121 : vector<8x128xf32>
    %cst_65 = arith.constant 1.000000e+00 : f32
    %123 = vector.broadcast %cst_65 : f32 to vector<8x128xf32>
    %124 = arith.addf %123, %122 : vector<8x128xf32>
    %125 = arith.divf %123, %124 : vector<8x128xf32>
    %126 = arith.mulf %117, %102 : vector<8x128xf32>
    %127 = arith.mulf %111, %119 : vector<8x128xf32>
    %128 = arith.addf %126, %127 : vector<8x128xf32>
    %129 = math.tanh %128 : vector<8x128xf32>
    %130 = arith.mulf %125, %129 : vector<8x128xf32>
    %c0_66 = arith.constant 0 : index
    %c0_67 = arith.constant 0 : index
    %131 = vector.load %arg12[%c0_66, %c0_67] : memref<8x128xf32, #tpu.memory_space<vmem>>, vector<8x128xf32>
    %c0_68 = arith.constant 0 : index
    %c0_69 = arith.constant 0 : index
    %132 = vector.load %arg13[%c0_68, %c0_69] : memref<8x128xf32, #tpu.memory_space<vmem>>, vector<8x128xf32>
    %c0_70 = arith.constant 0 : index
    %c0_71 = arith.constant 0 : index
    %133 = vector.load %arg4[%c0_70, %c0_71] : memref<128x512xf32, #tpu.memory_space<vmem>>, vector<128x512xf32>
    %cst_72 = arith.constant dense<0.000000e+00> : vector<8x512xf32>
    %134 = tpu.matmul %131, %133, %cst_72 {dimension_numbers = #tpu.dot_dimension_numbers<[1], [0], [0], [1], [0, 0, 1, 1], [], []>} : vector<8x128xf32>, vector<128x512xf32>, vector<8x512xf32> -> vector<8x512xf32>
    %135 = arith.addf %100, %134 : vector<8x512xf32>
    %136 = vector.extract_strided_slice %135 {offsets = [0, 0], sizes = [8, 128], strides = [1, 1]} : vector<8x512xf32> to vector<8x128xf32>
    %137 = arith.negf %136 : vector<8x128xf32>
    %138 = math.exp %137 : vector<8x128xf32>
    %cst_73 = arith.constant 1.000000e+00 : f32
    %139 = vector.broadcast %cst_73 : f32 to vector<8x128xf32>
    %140 = arith.addf %139, %138 : vector<8x128xf32>
    %141 = arith.divf %139, %140 : vector<8x128xf32>
    %142 = vector.extract_strided_slice %135 {offsets = [0, 128], sizes = [8, 128], strides = [1, 1]} : vector<8x512xf32> to vector<8x128xf32>
    %143 = arith.negf %142 : vector<8x128xf32>
    %144 = math.exp %143 : vector<8x128xf32>
    %cst_74 = arith.constant 1.000000e+00 : f32
    %145 = vector.broadcast %cst_74 : f32 to vector<8x128xf32>
    %146 = arith.addf %145, %144 : vector<8x128xf32>
    %147 = arith.divf %145, %146 : vector<8x128xf32>
    %148 = vector.extract_strided_slice %135 {offsets = [0, 256], sizes = [8, 128], strides = [1, 1]} : vector<8x512xf32> to vector<8x128xf32>
    %149 = math.tanh %148 : vector<8x128xf32>
    %150 = vector.extract_strided_slice %135 {offsets = [0, 384], sizes = [8, 128], strides = [1, 1]} : vector<8x512xf32> to vector<8x128xf32>
    %151 = arith.negf %150 : vector<8x128xf32>
    %152 = math.exp %151 : vector<8x128xf32>
    %cst_75 = arith.constant 1.000000e+00 : f32
    %153 = vector.broadcast %cst_75 : f32 to vector<8x128xf32>
    %154 = arith.addf %153, %152 : vector<8x128xf32>
    %155 = arith.divf %153, %154 : vector<8x128xf32>
    %156 = arith.mulf %147, %132 : vector<8x128xf32>
    %157 = arith.mulf %141, %149 : vector<8x128xf32>
    %158 = arith.addf %156, %157 : vector<8x128xf32>
    %159 = math.tanh %158 : vector<8x128xf32>
    %160 = arith.mulf %155, %159 : vector<8x128xf32>
    %c0_76 = arith.constant 0 : index
    %c0_77 = arith.constant 0 : index
    %161 = vector.load %arg10[%c0_76, %c0_77] : memref<8x128xf32, #tpu.memory_space<vmem>>, vector<8x128xf32>
    tpu.vector_store %arg10[%c0_76, %c0_77], %130 {strides = array<i32>} : memref<8x128xf32, #tpu.memory_space<vmem>>, vector<8x128xf32>,
    %c0_78 = arith.constant 0 : index
    %c0_79 = arith.constant 0 : index
    %162 = vector.load %arg11[%c0_78, %c0_79] : memref<8x128xf32, #tpu.memory_space<vmem>>, vector<8x128xf32>
    tpu.vector_store %arg11[%c0_78, %c0_79], %128 {strides = array<i32>} : memref<8x128xf32, #tpu.memory_space<vmem>>, vector<8x128xf32>,
    %c0_80 = arith.constant 0 : index
    %c0_81 = arith.constant 0 : index
    %163 = vector.load %arg12[%c0_80, %c0_81] : memref<8x128xf32, #tpu.memory_space<vmem>>, vector<8x128xf32>
    tpu.vector_store %arg12[%c0_80, %c0_81], %160 {strides = array<i32>} : memref<8x128xf32, #tpu.memory_space<vmem>>, vector<8x128xf32>,
    %c0_82 = arith.constant 0 : index
    %c0_83 = arith.constant 0 : index
    %164 = vector.load %arg13[%c0_82, %c0_83] : memref<8x128xf32, #tpu.memory_space<vmem>>, vector<8x128xf32>
    tpu.vector_store %arg13[%c0_82, %c0_83], %158 {strides = array<i32>} : memref<8x128xf32, #tpu.memory_space<vmem>>, vector<8x128xf32>,
    %165 = arith.index_cast %93 : i32 to index
    %c0_84 = arith.constant 0 : index
    %166 = vector.load %arg14[%165, %c0_84] : memref<64x128xf32, #tpu.memory_space<vmem>>, vector<8x128xf32>
    tpu.vector_store %arg14[%165, %c0_84], %130 {strides = array<i32>} : memref<64x128xf32, #tpu.memory_space<vmem>>, vector<8x128xf32>,
    %167 = arith.index_cast %96 : i32 to index
    %c0_85 = arith.constant 0 : index
    %168 = vector.load %arg15[%167, %c0_85] : memref<64x128xf32, #tpu.memory_space<vmem>>, vector<8x128xf32>
    tpu.vector_store %arg15[%167, %c0_85], %160 {strides = array<i32>} : memref<64x128xf32, #tpu.memory_space<vmem>>, vector<8x128xf32>,
    %c2_i32 = arith.constant 2 : i32
    %c8_i32_86 = arith.constant 8 : i32
    %169 = arith.muli %c2_i32, %c8_i32_86 : i32
    %170 = tpu.assume_multiple %169, 8 : i32
    %c7_i32_87 = arith.constant 7 : i32
    %171 = arith.subi %c7_i32_87, %c2_i32 : i32
    %c8_i32_88 = arith.constant 8 : i32
    %172 = arith.muli %171, %c8_i32_88 : i32
    %173 = tpu.assume_multiple %172, 8 : i32
    %174 = arith.index_cast %170 : i32 to index
    %c0_89 = arith.constant 0 : index
    %175 = vector.load %arg9[%174, %c0_89] : memref<64x1024xf32, #tpu.memory_space<vmem>>, vector<8x512xf32>
    %176 = arith.index_cast %173 : i32 to index
    %c512_90 = arith.constant 512 : index
    %177 = vector.load %arg9[%176, %c512_90] : memref<64x1024xf32, #tpu.memory_space<vmem>>, vector<8x512xf32>
    %c0_91 = arith.constant 0 : index
    %c0_92 = arith.constant 0 : index
    %178 = vector.load %arg10[%c0_91, %c0_92] : memref<8x128xf32, #tpu.memory_space<vmem>>, vector<8x128xf32>
    %c0_93 = arith.constant 0 : index
    %c0_94 = arith.constant 0 : index
    %179 = vector.load %arg11[%c0_93, %c0_94] : memref<8x128xf32, #tpu.memory_space<vmem>>, vector<8x128xf32>
    %c0_95 = arith.constant 0 : index
    %c0_96 = arith.constant 0 : index
    %180 = vector.load %arg3[%c0_95, %c0_96] : memref<128x512xf32, #tpu.memory_space<vmem>>, vector<128x512xf32>
    %cst_97 = arith.constant dense<0.000000e+00> : vector<8x512xf32>
    %181 = tpu.matmul %178, %180, %cst_97 {dimension_numbers = #tpu.dot_dimension_numbers<[1], [0], [0], [1], [0, 0, 1, 1], [], []>} : vector<8x128xf32>, vector<128x512xf32>, vector<8x512xf32> -> vector<8x512xf32>
    %182 = arith.addf %175, %181 : vector<8x512xf32>
    %183 = vector.extract_strided_slice %182 {offsets = [0, 0], sizes = [8, 128], strides = [1, 1]} : vector<8x512xf32> to vector<8x128xf32>
    %184 = arith.negf %183 : vector<8x128xf32>
    %185 = math.exp %184 : vector<8x128xf32>
    %cst_98 = arith.constant 1.000000e+00 : f32
    %186 = vector.broadcast %cst_98 : f32 to vector<8x128xf32>
    %187 = arith.addf %186, %185 : vector<8x128xf32>
    %188 = arith.divf %186, %187 : vector<8x128xf32>
    %189 = vector.extract_strided_slice %182 {offsets = [0, 128], sizes = [8, 128], strides = [1, 1]} : vector<8x512xf32> to vector<8x128xf32>
    %190 = arith.negf %189 : vector<8x128xf32>
    %191 = math.exp %190 : vector<8x128xf32>
    %cst_99 = arith.constant 1.000000e+00 : f32
    %192 = vector.broadcast %cst_99 : f32 to vector<8x128xf32>
    %193 = arith.addf %192, %191 : vector<8x128xf32>
    %194 = arith.divf %192, %193 : vector<8x128xf32>
    %195 = vector.extract_strided_slice %182 {offsets = [0, 256], sizes = [8, 128], strides = [1, 1]} : vector<8x512xf32> to vector<8x128xf32>
    %196 = math.tanh %195 : vector<8x128xf32>
    %197 = vector.extract_strided_slice %182 {offsets = [0, 384], sizes = [8, 128], strides = [1, 1]} : vector<8x512xf32> to vector<8x128xf32>
    %198 = arith.negf %197 : vector<8x128xf32>
    %199 = math.exp %198 : vector<8x128xf32>
    %cst_100 = arith.constant 1.000000e+00 : f32
    %200 = vector.broadcast %cst_100 : f32 to vector<8x128xf32>
    %201 = arith.addf %200, %199 : vector<8x128xf32>
    %202 = arith.divf %200, %201 : vector<8x128xf32>
    %203 = arith.mulf %194, %179 : vector<8x128xf32>
    %204 = arith.mulf %188, %196 : vector<8x128xf32>
    %205 = arith.addf %203, %204 : vector<8x128xf32>
    %206 = math.tanh %205 : vector<8x128xf32>
    %207 = arith.mulf %202, %206 : vector<8x128xf32>
    %c0_101 = arith.constant 0 : index
    %c0_102 = arith.constant 0 : index
    %208 = vector.load %arg12[%c0_101, %c0_102] : memref<8x128xf32, #tpu.memory_space<vmem>>, vector<8x128xf32>
    %c0_103 = arith.constant 0 : index
    %c0_104 = arith.constant 0 : index
    %209 = vector.load %arg13[%c0_103, %c0_104] : memref<8x128xf32, #tpu.memory_space<vmem>>, vector<8x128xf32>
    %c0_105 = arith.constant 0 : index
    %c0_106 = arith.constant 0 : index
    %210 = vector.load %arg4[%c0_105, %c0_106] : memref<128x512xf32, #tpu.memory_space<vmem>>, vector<128x512xf32>
    %cst_107 = arith.constant dense<0.000000e+00> : vector<8x512xf32>
    %211 = tpu.matmul %208, %210, %cst_107 {dimension_numbers = #tpu.dot_dimension_numbers<[1], [0], [0], [1], [0, 0, 1, 1], [], []>} : vector<8x128xf32>, vector<128x512xf32>, vector<8x512xf32> -> vector<8x512xf32>
    %212 = arith.addf %177, %211 : vector<8x512xf32>
    %213 = vector.extract_strided_slice %212 {offsets = [0, 0], sizes = [8, 128], strides = [1, 1]} : vector<8x512xf32> to vector<8x128xf32>
    %214 = arith.negf %213 : vector<8x128xf32>
    %215 = math.exp %214 : vector<8x128xf32>
    %cst_108 = arith.constant 1.000000e+00 : f32
    %216 = vector.broadcast %cst_108 : f32 to vector<8x128xf32>
    %217 = arith.addf %216, %215 : vector<8x128xf32>
    %218 = arith.divf %216, %217 : vector<8x128xf32>
    %219 = vector.extract_strided_slice %212 {offsets = [0, 128], sizes = [8, 128], strides = [1, 1]} : vector<8x512xf32> to vector<8x128xf32>
    %220 = arith.negf %219 : vector<8x128xf32>
    %221 = math.exp %220 : vector<8x128xf32>
    %cst_109 = arith.constant 1.000000e+00 : f32
    %222 = vector.broadcast %cst_109 : f32 to vector<8x128xf32>
    %223 = arith.addf %222, %221 : vector<8x128xf32>
    %224 = arith.divf %222, %223 : vector<8x128xf32>
    %225 = vector.extract_strided_slice %212 {offsets = [0, 256], sizes = [8, 128], strides = [1, 1]} : vector<8x512xf32> to vector<8x128xf32>
    %226 = math.tanh %225 : vector<8x128xf32>
    %227 = vector.extract_strided_slice %212 {offsets = [0, 384], sizes = [8, 128], strides = [1, 1]} : vector<8x512xf32> to vector<8x128xf32>
    %228 = arith.negf %227 : vector<8x128xf32>
    %229 = math.exp %228 : vector<8x128xf32>
    %cst_110 = arith.constant 1.000000e+00 : f32
    %230 = vector.broadcast %cst_110 : f32 to vector<8x128xf32>
    %231 = arith.addf %230, %229 : vector<8x128xf32>
    %232 = arith.divf %230, %231 : vector<8x128xf32>
    %233 = arith.mulf %224, %209 : vector<8x128xf32>
    %234 = arith.mulf %218, %226 : vector<8x128xf32>
    %235 = arith.addf %233, %234 : vector<8x128xf32>
    %236 = math.tanh %235 : vector<8x128xf32>
    %237 = arith.mulf %232, %236 : vector<8x128xf32>
    %c0_111 = arith.constant 0 : index
    %c0_112 = arith.constant 0 : index
    %238 = vector.load %arg10[%c0_111, %c0_112] : memref<8x128xf32, #tpu.memory_space<vmem>>, vector<8x128xf32>
    tpu.vector_store %arg10[%c0_111, %c0_112], %207 {strides = array<i32>} : memref<8x128xf32, #tpu.memory_space<vmem>>, vector<8x128xf32>,
    %c0_113 = arith.constant 0 : index
    %c0_114 = arith.constant 0 : index
    %239 = vector.load %arg11[%c0_113, %c0_114] : memref<8x128xf32, #tpu.memory_space<vmem>>, vector<8x128xf32>
    tpu.vector_store %arg11[%c0_113, %c0_114], %205 {strides = array<i32>} : memref<8x128xf32, #tpu.memory_space<vmem>>, vector<8x128xf32>,
    %c0_115 = arith.constant 0 : index
    %c0_116 = arith.constant 0 : index
    %240 = vector.load %arg12[%c0_115, %c0_116] : memref<8x128xf32, #tpu.memory_space<vmem>>, vector<8x128xf32>
    tpu.vector_store %arg12[%c0_115, %c0_116], %237 {strides = array<i32>} : memref<8x128xf32, #tpu.memory_space<vmem>>, vector<8x128xf32>,
    %c0_117 = arith.constant 0 : index
    %c0_118 = arith.constant 0 : index
    %241 = vector.load %arg13[%c0_117, %c0_118] : memref<8x128xf32, #tpu.memory_space<vmem>>, vector<8x128xf32>
    tpu.vector_store %arg13[%c0_117, %c0_118], %235 {strides = array<i32>} : memref<8x128xf32, #tpu.memory_space<vmem>>, vector<8x128xf32>,
    %242 = arith.index_cast %170 : i32 to index
    %c0_119 = arith.constant 0 : index
    %243 = vector.load %arg14[%242, %c0_119] : memref<64x128xf32, #tpu.memory_space<vmem>>, vector<8x128xf32>
    tpu.vector_store %arg14[%242, %c0_119], %207 {strides = array<i32>} : memref<64x128xf32, #tpu.memory_space<vmem>>, vector<8x128xf32>,
    %244 = arith.index_cast %173 : i32 to index
    %c0_120 = arith.constant 0 : index
    %245 = vector.load %arg15[%244, %c0_120] : memref<64x128xf32, #tpu.memory_space<vmem>>, vector<8x128xf32>
    tpu.vector_store %arg15[%244, %c0_120], %237 {strides = array<i32>} : memref<64x128xf32, #tpu.memory_space<vmem>>, vector<8x128xf32>,
    %c3_i32 = arith.constant 3 : i32
    %c8_i32_121 = arith.constant 8 : i32
    %246 = arith.muli %c3_i32, %c8_i32_121 : i32
    %247 = tpu.assume_multiple %246, 8 : i32
    %c7_i32_122 = arith.constant 7 : i32
    %248 = arith.subi %c7_i32_122, %c3_i32 : i32
    %c8_i32_123 = arith.constant 8 : i32
    %249 = arith.muli %248, %c8_i32_123 : i32
    %250 = tpu.assume_multiple %249, 8 : i32
    %251 = arith.index_cast %247 : i32 to index
    %c0_124 = arith.constant 0 : index
    %252 = vector.load %arg9[%251, %c0_124] : memref<64x1024xf32, #tpu.memory_space<vmem>>, vector<8x512xf32>
    %253 = arith.index_cast %250 : i32 to index
    %c512_125 = arith.constant 512 : index
    %254 = vector.load %arg9[%253, %c512_125] : memref<64x1024xf32, #tpu.memory_space<vmem>>, vector<8x512xf32>
    %c0_126 = arith.constant 0 : index
    %c0_127 = arith.constant 0 : index
    %255 = vector.load %arg10[%c0_126, %c0_127] : memref<8x128xf32, #tpu.memory_space<vmem>>, vector<8x128xf32>
    %c0_128 = arith.constant 0 : index
    %c0_129 = arith.constant 0 : index
    %256 = vector.load %arg11[%c0_128, %c0_129] : memref<8x128xf32, #tpu.memory_space<vmem>>, vector<8x128xf32>
    %c0_130 = arith.constant 0 : index
    %c0_131 = arith.constant 0 : index
    %257 = vector.load %arg3[%c0_130, %c0_131] : memref<128x512xf32, #tpu.memory_space<vmem>>, vector<128x512xf32>
    %cst_132 = arith.constant dense<0.000000e+00> : vector<8x512xf32>
    %258 = tpu.matmul %255, %257, %cst_132 {dimension_numbers = #tpu.dot_dimension_numbers<[1], [0], [0], [1], [0, 0, 1, 1], [], []>} : vector<8x128xf32>, vector<128x512xf32>, vector<8x512xf32> -> vector<8x512xf32>
    %259 = arith.addf %252, %258 : vector<8x512xf32>
    %260 = vector.extract_strided_slice %259 {offsets = [0, 0], sizes = [8, 128], strides = [1, 1]} : vector<8x512xf32> to vector<8x128xf32>
    %261 = arith.negf %260 : vector<8x128xf32>
    %262 = math.exp %261 : vector<8x128xf32>
    %cst_133 = arith.constant 1.000000e+00 : f32
    %263 = vector.broadcast %cst_133 : f32 to vector<8x128xf32>
    %264 = arith.addf %263, %262 : vector<8x128xf32>
    %265 = arith.divf %263, %264 : vector<8x128xf32>
    %266 = vector.extract_strided_slice %259 {offsets = [0, 128], sizes = [8, 128], strides = [1, 1]} : vector<8x512xf32> to vector<8x128xf32>
    %267 = arith.negf %266 : vector<8x128xf32>
    %268 = math.exp %267 : vector<8x128xf32>
    %cst_134 = arith.constant 1.000000e+00 : f32
    %269 = vector.broadcast %cst_134 : f32 to vector<8x128xf32>
    %270 = arith.addf %269, %268 : vector<8x128xf32>
    %271 = arith.divf %269, %270 : vector<8x128xf32>
    %272 = vector.extract_strided_slice %259 {offsets = [0, 256], sizes = [8, 128], strides = [1, 1]} : vector<8x512xf32> to vector<8x128xf32>
    %273 = math.tanh %272 : vector<8x128xf32>
    %274 = vector.extract_strided_slice %259 {offsets = [0, 384], sizes = [8, 128], strides = [1, 1]} : vector<8x512xf32> to vector<8x128xf32>
    %275 = arith.negf %274 : vector<8x128xf32>
    %276 = math.exp %275 : vector<8x128xf32>
    %cst_135 = arith.constant 1.000000e+00 : f32
    %277 = vector.broadcast %cst_135 : f32 to vector<8x128xf32>
    %278 = arith.addf %277, %276 : vector<8x128xf32>
    %279 = arith.divf %277, %278 : vector<8x128xf32>
    %280 = arith.mulf %271, %256 : vector<8x128xf32>
    %281 = arith.mulf %265, %273 : vector<8x128xf32>
    %282 = arith.addf %280, %281 : vector<8x128xf32>
    %283 = math.tanh %282 : vector<8x128xf32>
    %284 = arith.mulf %279, %283 : vector<8x128xf32>
    %c0_136 = arith.constant 0 : index
    %c0_137 = arith.constant 0 : index
    %285 = vector.load %arg12[%c0_136, %c0_137] : memref<8x128xf32, #tpu.memory_space<vmem>>, vector<8x128xf32>
    %c0_138 = arith.constant 0 : index
    %c0_139 = arith.constant 0 : index
    %286 = vector.load %arg13[%c0_138, %c0_139] : memref<8x128xf32, #tpu.memory_space<vmem>>, vector<8x128xf32>
    %c0_140 = arith.constant 0 : index
    %c0_141 = arith.constant 0 : index
    %287 = vector.load %arg4[%c0_140, %c0_141] : memref<128x512xf32, #tpu.memory_space<vmem>>, vector<128x512xf32>
    %cst_142 = arith.constant dense<0.000000e+00> : vector<8x512xf32>
    %288 = tpu.matmul %285, %287, %cst_142 {dimension_numbers = #tpu.dot_dimension_numbers<[1], [0], [0], [1], [0, 0, 1, 1], [], []>} : vector<8x128xf32>, vector<128x512xf32>, vector<8x512xf32> -> vector<8x512xf32>
    %289 = arith.addf %254, %288 : vector<8x512xf32>
    %290 = vector.extract_strided_slice %289 {offsets = [0, 0], sizes = [8, 128], strides = [1, 1]} : vector<8x512xf32> to vector<8x128xf32>
    %291 = arith.negf %290 : vector<8x128xf32>
    %292 = math.exp %291 : vector<8x128xf32>
    %cst_143 = arith.constant 1.000000e+00 : f32
    %293 = vector.broadcast %cst_143 : f32 to vector<8x128xf32>
    %294 = arith.addf %293, %292 : vector<8x128xf32>
    %295 = arith.divf %293, %294 : vector<8x128xf32>
    %296 = vector.extract_strided_slice %289 {offsets = [0, 128], sizes = [8, 128], strides = [1, 1]} : vector<8x512xf32> to vector<8x128xf32>
    %297 = arith.negf %296 : vector<8x128xf32>
    %298 = math.exp %297 : vector<8x128xf32>
    %cst_144 = arith.constant 1.000000e+00 : f32
    %299 = vector.broadcast %cst_144 : f32 to vector<8x128xf32>
    %300 = arith.addf %299, %298 : vector<8x128xf32>
    %301 = arith.divf %299, %300 : vector<8x128xf32>
    %302 = vector.extract_strided_slice %289 {offsets = [0, 256], sizes = [8, 128], strides = [1, 1]} : vector<8x512xf32> to vector<8x128xf32>
    %303 = math.tanh %302 : vector<8x128xf32>
    %304 = vector.extract_strided_slice %289 {offsets = [0, 384], sizes = [8, 128], strides = [1, 1]} : vector<8x512xf32> to vector<8x128xf32>
    %305 = arith.negf %304 : vector<8x128xf32>
    %306 = math.exp %305 : vector<8x128xf32>
    %cst_145 = arith.constant 1.000000e+00 : f32
    %307 = vector.broadcast %cst_145 : f32 to vector<8x128xf32>
    %308 = arith.addf %307, %306 : vector<8x128xf32>
    %309 = arith.divf %307, %308 : vector<8x128xf32>
    %310 = arith.mulf %301, %286 : vector<8x128xf32>
    %311 = arith.mulf %295, %303 : vector<8x128xf32>
    %312 = arith.addf %310, %311 : vector<8x128xf32>
    %313 = math.tanh %312 : vector<8x128xf32>
    %314 = arith.mulf %309, %313 : vector<8x128xf32>
    %c0_146 = arith.constant 0 : index
    %c0_147 = arith.constant 0 : index
    %315 = vector.load %arg10[%c0_146, %c0_147] : memref<8x128xf32, #tpu.memory_space<vmem>>, vector<8x128xf32>
    tpu.vector_store %arg10[%c0_146, %c0_147], %284 {strides = array<i32>} : memref<8x128xf32, #tpu.memory_space<vmem>>, vector<8x128xf32>,
    %c0_148 = arith.constant 0 : index
    %c0_149 = arith.constant 0 : index
    %316 = vector.load %arg11[%c0_148, %c0_149] : memref<8x128xf32, #tpu.memory_space<vmem>>, vector<8x128xf32>
    tpu.vector_store %arg11[%c0_148, %c0_149], %282 {strides = array<i32>} : memref<8x128xf32, #tpu.memory_space<vmem>>, vector<8x128xf32>,
    %c0_150 = arith.constant 0 : index
    %c0_151 = arith.constant 0 : index
    %317 = vector.load %arg12[%c0_150, %c0_151] : memref<8x128xf32, #tpu.memory_space<vmem>>, vector<8x128xf32>
    tpu.vector_store %arg12[%c0_150, %c0_151], %314 {strides = array<i32>} : memref<8x128xf32, #tpu.memory_space<vmem>>, vector<8x128xf32>,
    %c0_152 = arith.constant 0 : index
    %c0_153 = arith.constant 0 : index
    %318 = vector.load %arg13[%c0_152, %c0_153] : memref<8x128xf32, #tpu.memory_space<vmem>>, vector<8x128xf32>
    tpu.vector_store %arg13[%c0_152, %c0_153], %312 {strides = array<i32>} : memref<8x128xf32, #tpu.memory_space<vmem>>, vector<8x128xf32>,
    %319 = arith.index_cast %247 : i32 to index
    %c0_154 = arith.constant 0 : index
    %320 = vector.load %arg14[%319, %c0_154] : memref<64x128xf32, #tpu.memory_space<vmem>>, vector<8x128xf32>
    tpu.vector_store %arg14[%319, %c0_154], %284 {strides = array<i32>} : memref<64x128xf32, #tpu.memory_space<vmem>>, vector<8x128xf32>,
    %321 = arith.index_cast %250 : i32 to index
    %c0_155 = arith.constant 0 : index
    %322 = vector.load %arg15[%321, %c0_155] : memref<64x128xf32, #tpu.memory_space<vmem>>, vector<8x128xf32>
    tpu.vector_store %arg15[%321, %c0_155], %314 {strides = array<i32>} : memref<64x128xf32, #tpu.memory_space<vmem>>, vector<8x128xf32>,
    %c4_i32 = arith.constant 4 : i32
    %c8_i32_156 = arith.constant 8 : i32
    %323 = arith.muli %c4_i32, %c8_i32_156 : i32
    %324 = tpu.assume_multiple %323, 8 : i32
    %c7_i32_157 = arith.constant 7 : i32
    %325 = arith.subi %c7_i32_157, %c4_i32 : i32
    %c8_i32_158 = arith.constant 8 : i32
    %326 = arith.muli %325, %c8_i32_158 : i32
    %327 = tpu.assume_multiple %326, 8 : i32
    %328 = arith.index_cast %324 : i32 to index
    %c0_159 = arith.constant 0 : index
    %329 = vector.load %arg9[%328, %c0_159] : memref<64x1024xf32, #tpu.memory_space<vmem>>, vector<8x512xf32>
    %330 = arith.index_cast %327 : i32 to index
    %c512_160 = arith.constant 512 : index
    %331 = vector.load %arg9[%330, %c512_160] : memref<64x1024xf32, #tpu.memory_space<vmem>>, vector<8x512xf32>
    %c0_161 = arith.constant 0 : index
    %c0_162 = arith.constant 0 : index
    %332 = vector.load %arg10[%c0_161, %c0_162] : memref<8x128xf32, #tpu.memory_space<vmem>>, vector<8x128xf32>
    %c0_163 = arith.constant 0 : index
    %c0_164 = arith.constant 0 : index
    %333 = vector.load %arg11[%c0_163, %c0_164] : memref<8x128xf32, #tpu.memory_space<vmem>>, vector<8x128xf32>
    %c0_165 = arith.constant 0 : index
    %c0_166 = arith.constant 0 : index
    %334 = vector.load %arg3[%c0_165, %c0_166] : memref<128x512xf32, #tpu.memory_space<vmem>>, vector<128x512xf32>
    %cst_167 = arith.constant dense<0.000000e+00> : vector<8x512xf32>
    %335 = tpu.matmul %332, %334, %cst_167 {dimension_numbers = #tpu.dot_dimension_numbers<[1], [0], [0], [1], [0, 0, 1, 1], [], []>} : vector<8x128xf32>, vector<128x512xf32>, vector<8x512xf32> -> vector<8x512xf32>
    %336 = arith.addf %329, %335 : vector<8x512xf32>
    %337 = vector.extract_strided_slice %336 {offsets = [0, 0], sizes = [8, 128], strides = [1, 1]} : vector<8x512xf32> to vector<8x128xf32>
    %338 = arith.negf %337 : vector<8x128xf32>
    %339 = math.exp %338 : vector<8x128xf32>
    %cst_168 = arith.constant 1.000000e+00 : f32
    %340 = vector.broadcast %cst_168 : f32 to vector<8x128xf32>
    %341 = arith.addf %340, %339 : vector<8x128xf32>
    %342 = arith.divf %340, %341 : vector<8x128xf32>
    %343 = vector.extract_strided_slice %336 {offsets = [0, 128], sizes = [8, 128], strides = [1, 1]} : vector<8x512xf32> to vector<8x128xf32>
    %344 = arith.negf %343 : vector<8x128xf32>
    %345 = math.exp %344 : vector<8x128xf32>
    %cst_169 = arith.constant 1.000000e+00 : f32
    %346 = vector.broadcast %cst_169 : f32 to vector<8x128xf32>
    %347 = arith.addf %346, %345 : vector<8x128xf32>
    %348 = arith.divf %346, %347 : vector<8x128xf32>
    %349 = vector.extract_strided_slice %336 {offsets = [0, 256], sizes = [8, 128], strides = [1, 1]} : vector<8x512xf32> to vector<8x128xf32>
    %350 = math.tanh %349 : vector<8x128xf32>
    %351 = vector.extract_strided_slice %336 {offsets = [0, 384], sizes = [8, 128], strides = [1, 1]} : vector<8x512xf32> to vector<8x128xf32>
    %352 = arith.negf %351 : vector<8x128xf32>
    %353 = math.exp %352 : vector<8x128xf32>
    %cst_170 = arith.constant 1.000000e+00 : f32
    %354 = vector.broadcast %cst_170 : f32 to vector<8x128xf32>
    %355 = arith.addf %354, %353 : vector<8x128xf32>
    %356 = arith.divf %354, %355 : vector<8x128xf32>
    %357 = arith.mulf %348, %333 : vector<8x128xf32>
    %358 = arith.mulf %342, %350 : vector<8x128xf32>
    %359 = arith.addf %357, %358 : vector<8x128xf32>
    %360 = math.tanh %359 : vector<8x128xf32>
    %361 = arith.mulf %356, %360 : vector<8x128xf32>
    %c0_171 = arith.constant 0 : index
    %c0_172 = arith.constant 0 : index
    %362 = vector.load %arg12[%c0_171, %c0_172] : memref<8x128xf32, #tpu.memory_space<vmem>>, vector<8x128xf32>
    %c0_173 = arith.constant 0 : index
    %c0_174 = arith.constant 0 : index
    %363 = vector.load %arg13[%c0_173, %c0_174] : memref<8x128xf32, #tpu.memory_space<vmem>>, vector<8x128xf32>
    %c0_175 = arith.constant 0 : index
    %c0_176 = arith.constant 0 : index
    %364 = vector.load %arg4[%c0_175, %c0_176] : memref<128x512xf32, #tpu.memory_space<vmem>>, vector<128x512xf32>
    %cst_177 = arith.constant dense<0.000000e+00> : vector<8x512xf32>
    %365 = tpu.matmul %362, %364, %cst_177 {dimension_numbers = #tpu.dot_dimension_numbers<[1], [0], [0], [1], [0, 0, 1, 1], [], []>} : vector<8x128xf32>, vector<128x512xf32>, vector<8x512xf32> -> vector<8x512xf32>
    %366 = arith.addf %331, %365 : vector<8x512xf32>
    %367 = vector.extract_strided_slice %366 {offsets = [0, 0], sizes = [8, 128], strides = [1, 1]} : vector<8x512xf32> to vector<8x128xf32>
    %368 = arith.negf %367 : vector<8x128xf32>
    %369 = math.exp %368 : vector<8x128xf32>
    %cst_178 = arith.constant 1.000000e+00 : f32
    %370 = vector.broadcast %cst_178 : f32 to vector<8x128xf32>
    %371 = arith.addf %370, %369 : vector<8x128xf32>
    %372 = arith.divf %370, %371 : vector<8x128xf32>
    %373 = vector.extract_strided_slice %366 {offsets = [0, 128], sizes = [8, 128], strides = [1, 1]} : vector<8x512xf32> to vector<8x128xf32>
    %374 = arith.negf %373 : vector<8x128xf32>
    %375 = math.exp %374 : vector<8x128xf32>
    %cst_179 = arith.constant 1.000000e+00 : f32
    %376 = vector.broadcast %cst_179 : f32 to vector<8x128xf32>
    %377 = arith.addf %376, %375 : vector<8x128xf32>
    %378 = arith.divf %376, %377 : vector<8x128xf32>
    %379 = vector.extract_strided_slice %366 {offsets = [0, 256], sizes = [8, 128], strides = [1, 1]} : vector<8x512xf32> to vector<8x128xf32>
    %380 = math.tanh %379 : vector<8x128xf32>
    %381 = vector.extract_strided_slice %366 {offsets = [0, 384], sizes = [8, 128], strides = [1, 1]} : vector<8x512xf32> to vector<8x128xf32>
    %382 = arith.negf %381 : vector<8x128xf32>
    %383 = math.exp %382 : vector<8x128xf32>
    %cst_180 = arith.constant 1.000000e+00 : f32
    %384 = vector.broadcast %cst_180 : f32 to vector<8x128xf32>
    %385 = arith.addf %384, %383 : vector<8x128xf32>
    %386 = arith.divf %384, %385 : vector<8x128xf32>
    %387 = arith.mulf %378, %363 : vector<8x128xf32>
    %388 = arith.mulf %372, %380 : vector<8x128xf32>
    %389 = arith.addf %387, %388 : vector<8x128xf32>
    %390 = math.tanh %389 : vector<8x128xf32>
    %391 = arith.mulf %386, %390 : vector<8x128xf32>
    %c0_181 = arith.constant 0 : index
    %c0_182 = arith.constant 0 : index
    %392 = vector.load %arg10[%c0_181, %c0_182] : memref<8x128xf32, #tpu.memory_space<vmem>>, vector<8x128xf32>
    tpu.vector_store %arg10[%c0_181, %c0_182], %361 {strides = array<i32>} : memref<8x128xf32, #tpu.memory_space<vmem>>, vector<8x128xf32>,
    %c0_183 = arith.constant 0 : index
    %c0_184 = arith.constant 0 : index
    %393 = vector.load %arg11[%c0_183, %c0_184] : memref<8x128xf32, #tpu.memory_space<vmem>>, vector<8x128xf32>
    tpu.vector_store %arg11[%c0_183, %c0_184], %359 {strides = array<i32>} : memref<8x128xf32, #tpu.memory_space<vmem>>, vector<8x128xf32>,
    %c0_185 = arith.constant 0 : index
    %c0_186 = arith.constant 0 : index
    %394 = vector.load %arg12[%c0_185, %c0_186] : memref<8x128xf32, #tpu.memory_space<vmem>>, vector<8x128xf32>
    tpu.vector_store %arg12[%c0_185, %c0_186], %391 {strides = array<i32>} : memref<8x128xf32, #tpu.memory_space<vmem>>, vector<8x128xf32>,
    %c0_187 = arith.constant 0 : index
    %c0_188 = arith.constant 0 : index
    %395 = vector.load %arg13[%c0_187, %c0_188] : memref<8x128xf32, #tpu.memory_space<vmem>>, vector<8x128xf32>
    tpu.vector_store %arg13[%c0_187, %c0_188], %389 {strides = array<i32>} : memref<8x128xf32, #tpu.memory_space<vmem>>, vector<8x128xf32>,
    %396 = arith.index_cast %324 : i32 to index
    %c0_189 = arith.constant 0 : index
    %397 = vector.load %arg14[%396, %c0_189] : memref<64x128xf32, #tpu.memory_space<vmem>>, vector<8x128xf32>
    tpu.vector_store %arg14[%396, %c0_189], %361 {strides = array<i32>} : memref<64x128xf32, #tpu.memory_space<vmem>>, vector<8x128xf32>,
    %398 = arith.index_cast %327 : i32 to index
    %c0_190 = arith.constant 0 : index
    %399 = vector.load %arg15[%398, %c0_190] : memref<64x128xf32, #tpu.memory_space<vmem>>, vector<8x128xf32>
    tpu.vector_store %arg15[%398, %c0_190], %391 {strides = array<i32>} : memref<64x128xf32, #tpu.memory_space<vmem>>, vector<8x128xf32>,
    %c5_i32 = arith.constant 5 : i32
    %c8_i32_191 = arith.constant 8 : i32
    %400 = arith.muli %c5_i32, %c8_i32_191 : i32
    %401 = tpu.assume_multiple %400, 8 : i32
    %c7_i32_192 = arith.constant 7 : i32
    %402 = arith.subi %c7_i32_192, %c5_i32 : i32
    %c8_i32_193 = arith.constant 8 : i32
    %403 = arith.muli %402, %c8_i32_193 : i32
    %404 = tpu.assume_multiple %403, 8 : i32
    %405 = arith.index_cast %401 : i32 to index
    %c0_194 = arith.constant 0 : index
    %406 = vector.load %arg9[%405, %c0_194] : memref<64x1024xf32, #tpu.memory_space<vmem>>, vector<8x512xf32>
    %407 = arith.index_cast %404 : i32 to index
    %c512_195 = arith.constant 512 : index
    %408 = vector.load %arg9[%407, %c512_195] : memref<64x1024xf32, #tpu.memory_space<vmem>>, vector<8x512xf32>
    %c0_196 = arith.constant 0 : index
    %c0_197 = arith.constant 0 : index
    %409 = vector.load %arg10[%c0_196, %c0_197] : memref<8x128xf32, #tpu.memory_space<vmem>>, vector<8x128xf32>
    %c0_198 = arith.constant 0 : index
    %c0_199 = arith.constant 0 : index
    %410 = vector.load %arg11[%c0_198, %c0_199] : memref<8x128xf32, #tpu.memory_space<vmem>>, vector<8x128xf32>
    %c0_200 = arith.constant 0 : index
    %c0_201 = arith.constant 0 : index
    %411 = vector.load %arg3[%c0_200, %c0_201] : memref<128x512xf32, #tpu.memory_space<vmem>>, vector<128x512xf32>
    %cst_202 = arith.constant dense<0.000000e+00> : vector<8x512xf32>
    %412 = tpu.matmul %409, %411, %cst_202 {dimension_numbers = #tpu.dot_dimension_numbers<[1], [0], [0], [1], [0, 0, 1, 1], [], []>} : vector<8x128xf32>, vector<128x512xf32>, vector<8x512xf32> -> vector<8x512xf32>
    %413 = arith.addf %406, %412 : vector<8x512xf32>
    %414 = vector.extract_strided_slice %413 {offsets = [0, 0], sizes = [8, 128], strides = [1, 1]} : vector<8x512xf32> to vector<8x128xf32>
    %415 = arith.negf %414 : vector<8x128xf32>
    %416 = math.exp %415 : vector<8x128xf32>
    %cst_203 = arith.constant 1.000000e+00 : f32
    %417 = vector.broadcast %cst_203 : f32 to vector<8x128xf32>
    %418 = arith.addf %417, %416 : vector<8x128xf32>
    %419 = arith.divf %417, %418 : vector<8x128xf32>
    %420 = vector.extract_strided_slice %413 {offsets = [0, 128], sizes = [8, 128], strides = [1, 1]} : vector<8x512xf32> to vector<8x128xf32>
    %421 = arith.negf %420 : vector<8x128xf32>
    %422 = math.exp %421 : vector<8x128xf32>
    %cst_204 = arith.constant 1.000000e+00 : f32
    %423 = vector.broadcast %cst_204 : f32 to vector<8x128xf32>
    %424 = arith.addf %423, %422 : vector<8x128xf32>
    %425 = arith.divf %423, %424 : vector<8x128xf32>
    %426 = vector.extract_strided_slice %413 {offsets = [0, 256], sizes = [8, 128], strides = [1, 1]} : vector<8x512xf32> to vector<8x128xf32>
    %427 = math.tanh %426 : vector<8x128xf32>
    %428 = vector.extract_strided_slice %413 {offsets = [0, 384], sizes = [8, 128], strides = [1, 1]} : vector<8x512xf32> to vector<8x128xf32>
    %429 = arith.negf %428 : vector<8x128xf32>
    %430 = math.exp %429 : vector<8x128xf32>
    %cst_205 = arith.constant 1.000000e+00 : f32
    %431 = vector.broadcast %cst_205 : f32 to vector<8x128xf32>
    %432 = arith.addf %431, %430 : vector<8x128xf32>
    %433 = arith.divf %431, %432 : vector<8x128xf32>
    %434 = arith.mulf %425, %410 : vector<8x128xf32>
    %435 = arith.mulf %419, %427 : vector<8x128xf32>
    %436 = arith.addf %434, %435 : vector<8x128xf32>
    %437 = math.tanh %436 : vector<8x128xf32>
    %438 = arith.mulf %433, %437 : vector<8x128xf32>
    %c0_206 = arith.constant 0 : index
    %c0_207 = arith.constant 0 : index
    %439 = vector.load %arg12[%c0_206, %c0_207] : memref<8x128xf32, #tpu.memory_space<vmem>>, vector<8x128xf32>
    %c0_208 = arith.constant 0 : index
    %c0_209 = arith.constant 0 : index
    %440 = vector.load %arg13[%c0_208, %c0_209] : memref<8x128xf32, #tpu.memory_space<vmem>>, vector<8x128xf32>
    %c0_210 = arith.constant 0 : index
    %c0_211 = arith.constant 0 : index
    %441 = vector.load %arg4[%c0_210, %c0_211] : memref<128x512xf32, #tpu.memory_space<vmem>>, vector<128x512xf32>
    %cst_212 = arith.constant dense<0.000000e+00> : vector<8x512xf32>
    %442 = tpu.matmul %439, %441, %cst_212 {dimension_numbers = #tpu.dot_dimension_numbers<[1], [0], [0], [1], [0, 0, 1, 1], [], []>} : vector<8x128xf32>, vector<128x512xf32>, vector<8x512xf32> -> vector<8x512xf32>
    %443 = arith.addf %408, %442 : vector<8x512xf32>
    %444 = vector.extract_strided_slice %443 {offsets = [0, 0], sizes = [8, 128], strides = [1, 1]} : vector<8x512xf32> to vector<8x128xf32>
    %445 = arith.negf %444 : vector<8x128xf32>
    %446 = math.exp %445 : vector<8x128xf32>
    %cst_213 = arith.constant 1.000000e+00 : f32
    %447 = vector.broadcast %cst_213 : f32 to vector<8x128xf32>
    %448 = arith.addf %447, %446 : vector<8x128xf32>
    %449 = arith.divf %447, %448 : vector<8x128xf32>
    %450 = vector.extract_strided_slice %443 {offsets = [0, 128], sizes = [8, 128], strides = [1, 1]} : vector<8x512xf32> to vector<8x128xf32>
    %451 = arith.negf %450 : vector<8x128xf32>
    %452 = math.exp %451 : vector<8x128xf32>
    %cst_214 = arith.constant 1.000000e+00 : f32
    %453 = vector.broadcast %cst_214 : f32 to vector<8x128xf32>
    %454 = arith.addf %453, %452 : vector<8x128xf32>
    %455 = arith.divf %453, %454 : vector<8x128xf32>
    %456 = vector.extract_strided_slice %443 {offsets = [0, 256], sizes = [8, 128], strides = [1, 1]} : vector<8x512xf32> to vector<8x128xf32>
    %457 = math.tanh %456 : vector<8x128xf32>
    %458 = vector.extract_strided_slice %443 {offsets = [0, 384], sizes = [8, 128], strides = [1, 1]} : vector<8x512xf32> to vector<8x128xf32>
    %459 = arith.negf %458 : vector<8x128xf32>
    %460 = math.exp %459 : vector<8x128xf32>
    %cst_215 = arith.constant 1.000000e+00 : f32
    %461 = vector.broadcast %cst_215 : f32 to vector<8x128xf32>
    %462 = arith.addf %461, %460 : vector<8x128xf32>
    %463 = arith.divf %461, %462 : vector<8x128xf32>
    %464 = arith.mulf %455, %440 : vector<8x128xf32>
    %465 = arith.mulf %449, %457 : vector<8x128xf32>
    %466 = arith.addf %464, %465 : vector<8x128xf32>
    %467 = math.tanh %466 : vector<8x128xf32>
    %468 = arith.mulf %463, %467 : vector<8x128xf32>
    %c0_216 = arith.constant 0 : index
    %c0_217 = arith.constant 0 : index
    %469 = vector.load %arg10[%c0_216, %c0_217] : memref<8x128xf32, #tpu.memory_space<vmem>>, vector<8x128xf32>
    tpu.vector_store %arg10[%c0_216, %c0_217], %438 {strides = array<i32>} : memref<8x128xf32, #tpu.memory_space<vmem>>, vector<8x128xf32>,
    %c0_218 = arith.constant 0 : index
    %c0_219 = arith.constant 0 : index
    %470 = vector.load %arg11[%c0_218, %c0_219] : memref<8x128xf32, #tpu.memory_space<vmem>>, vector<8x128xf32>
    tpu.vector_store %arg11[%c0_218, %c0_219], %436 {strides = array<i32>} : memref<8x128xf32, #tpu.memory_space<vmem>>, vector<8x128xf32>,
    %c0_220 = arith.constant 0 : index
    %c0_221 = arith.constant 0 : index
    %471 = vector.load %arg12[%c0_220, %c0_221] : memref<8x128xf32, #tpu.memory_space<vmem>>, vector<8x128xf32>
    tpu.vector_store %arg12[%c0_220, %c0_221], %468 {strides = array<i32>} : memref<8x128xf32, #tpu.memory_space<vmem>>, vector<8x128xf32>,
    %c0_222 = arith.constant 0 : index
    %c0_223 = arith.constant 0 : index
    %472 = vector.load %arg13[%c0_222, %c0_223] : memref<8x128xf32, #tpu.memory_space<vmem>>, vector<8x128xf32>
    tpu.vector_store %arg13[%c0_222, %c0_223], %466 {strides = array<i32>} : memref<8x128xf32, #tpu.memory_space<vmem>>, vector<8x128xf32>,
    %473 = arith.index_cast %401 : i32 to index
    %c0_224 = arith.constant 0 : index
    %474 = vector.load %arg14[%473, %c0_224] : memref<64x128xf32, #tpu.memory_space<vmem>>, vector<8x128xf32>
    tpu.vector_store %arg14[%473, %c0_224], %438 {strides = array<i32>} : memref<64x128xf32, #tpu.memory_space<vmem>>, vector<8x128xf32>,
    %475 = arith.index_cast %404 : i32 to index
    %c0_225 = arith.constant 0 : index
    %476 = vector.load %arg15[%475, %c0_225] : memref<64x128xf32, #tpu.memory_space<vmem>>, vector<8x128xf32>
    tpu.vector_store %arg15[%475, %c0_225], %468 {strides = array<i32>} : memref<64x128xf32, #tpu.memory_space<vmem>>, vector<8x128xf32>,
    %c6_i32 = arith.constant 6 : i32
    %c8_i32_226 = arith.constant 8 : i32
    %477 = arith.muli %c6_i32, %c8_i32_226 : i32
    %478 = tpu.assume_multiple %477, 8 : i32
    %c7_i32_227 = arith.constant 7 : i32
    %479 = arith.subi %c7_i32_227, %c6_i32 : i32
    %c8_i32_228 = arith.constant 8 : i32
    %480 = arith.muli %479, %c8_i32_228 : i32
    %481 = tpu.assume_multiple %480, 8 : i32
    %482 = arith.index_cast %478 : i32 to index
    %c0_229 = arith.constant 0 : index
    %483 = vector.load %arg9[%482, %c0_229] : memref<64x1024xf32, #tpu.memory_space<vmem>>, vector<8x512xf32>
    %484 = arith.index_cast %481 : i32 to index
    %c512_230 = arith.constant 512 : index
    %485 = vector.load %arg9[%484, %c512_230] : memref<64x1024xf32, #tpu.memory_space<vmem>>, vector<8x512xf32>
    %c0_231 = arith.constant 0 : index
    %c0_232 = arith.constant 0 : index
    %486 = vector.load %arg10[%c0_231, %c0_232] : memref<8x128xf32, #tpu.memory_space<vmem>>, vector<8x128xf32>
    %c0_233 = arith.constant 0 : index
    %c0_234 = arith.constant 0 : index
    %487 = vector.load %arg11[%c0_233, %c0_234] : memref<8x128xf32, #tpu.memory_space<vmem>>, vector<8x128xf32>
    %c0_235 = arith.constant 0 : index
    %c0_236 = arith.constant 0 : index
    %488 = vector.load %arg3[%c0_235, %c0_236] : memref<128x512xf32, #tpu.memory_space<vmem>>, vector<128x512xf32>
    %cst_237 = arith.constant dense<0.000000e+00> : vector<8x512xf32>
    %489 = tpu.matmul %486, %488, %cst_237 {dimension_numbers = #tpu.dot_dimension_numbers<[1], [0], [0], [1], [0, 0, 1, 1], [], []>} : vector<8x128xf32>, vector<128x512xf32>, vector<8x512xf32> -> vector<8x512xf32>
    %490 = arith.addf %483, %489 : vector<8x512xf32>
    %491 = vector.extract_strided_slice %490 {offsets = [0, 0], sizes = [8, 128], strides = [1, 1]} : vector<8x512xf32> to vector<8x128xf32>
    %492 = arith.negf %491 : vector<8x128xf32>
    %493 = math.exp %492 : vector<8x128xf32>
    %cst_238 = arith.constant 1.000000e+00 : f32
    %494 = vector.broadcast %cst_238 : f32 to vector<8x128xf32>
    %495 = arith.addf %494, %493 : vector<8x128xf32>
    %496 = arith.divf %494, %495 : vector<8x128xf32>
    %497 = vector.extract_strided_slice %490 {offsets = [0, 128], sizes = [8, 128], strides = [1, 1]} : vector<8x512xf32> to vector<8x128xf32>
    %498 = arith.negf %497 : vector<8x128xf32>
    %499 = math.exp %498 : vector<8x128xf32>
    %cst_239 = arith.constant 1.000000e+00 : f32
    %500 = vector.broadcast %cst_239 : f32 to vector<8x128xf32>
    %501 = arith.addf %500, %499 : vector<8x128xf32>
    %502 = arith.divf %500, %501 : vector<8x128xf32>
    %503 = vector.extract_strided_slice %490 {offsets = [0, 256], sizes = [8, 128], strides = [1, 1]} : vector<8x512xf32> to vector<8x128xf32>
    %504 = math.tanh %503 : vector<8x128xf32>
    %505 = vector.extract_strided_slice %490 {offsets = [0, 384], sizes = [8, 128], strides = [1, 1]} : vector<8x512xf32> to vector<8x128xf32>
    %506 = arith.negf %505 : vector<8x128xf32>
    %507 = math.exp %506 : vector<8x128xf32>
    %cst_240 = arith.constant 1.000000e+00 : f32
    %508 = vector.broadcast %cst_240 : f32 to vector<8x128xf32>
    %509 = arith.addf %508, %507 : vector<8x128xf32>
    %510 = arith.divf %508, %509 : vector<8x128xf32>
    %511 = arith.mulf %502, %487 : vector<8x128xf32>
    %512 = arith.mulf %496, %504 : vector<8x128xf32>
    %513 = arith.addf %511, %512 : vector<8x128xf32>
    %514 = math.tanh %513 : vector<8x128xf32>
    %515 = arith.mulf %510, %514 : vector<8x128xf32>
    %c0_241 = arith.constant 0 : index
    %c0_242 = arith.constant 0 : index
    %516 = vector.load %arg12[%c0_241, %c0_242] : memref<8x128xf32, #tpu.memory_space<vmem>>, vector<8x128xf32>
    %c0_243 = arith.constant 0 : index
    %c0_244 = arith.constant 0 : index
    %517 = vector.load %arg13[%c0_243, %c0_244] : memref<8x128xf32, #tpu.memory_space<vmem>>, vector<8x128xf32>
    %c0_245 = arith.constant 0 : index
    %c0_246 = arith.constant 0 : index
    %518 = vector.load %arg4[%c0_245, %c0_246] : memref<128x512xf32, #tpu.memory_space<vmem>>, vector<128x512xf32>
    %cst_247 = arith.constant dense<0.000000e+00> : vector<8x512xf32>
    %519 = tpu.matmul %516, %518, %cst_247 {dimension_numbers = #tpu.dot_dimension_numbers<[1], [0], [0], [1], [0, 0, 1, 1], [], []>} : vector<8x128xf32>, vector<128x512xf32>, vector<8x512xf32> -> vector<8x512xf32>
    %520 = arith.addf %485, %519 : vector<8x512xf32>
    %521 = vector.extract_strided_slice %520 {offsets = [0, 0], sizes = [8, 128], strides = [1, 1]} : vector<8x512xf32> to vector<8x128xf32>
    %522 = arith.negf %521 : vector<8x128xf32>
    %523 = math.exp %522 : vector<8x128xf32>
    %cst_248 = arith.constant 1.000000e+00 : f32
    %524 = vector.broadcast %cst_248 : f32 to vector<8x128xf32>
    %525 = arith.addf %524, %523 : vector<8x128xf32>
    %526 = arith.divf %524, %525 : vector<8x128xf32>
    %527 = vector.extract_strided_slice %520 {offsets = [0, 128], sizes = [8, 128], strides = [1, 1]} : vector<8x512xf32> to vector<8x128xf32>
    %528 = arith.negf %527 : vector<8x128xf32>
    %529 = math.exp %528 : vector<8x128xf32>
    %cst_249 = arith.constant 1.000000e+00 : f32
    %530 = vector.broadcast %cst_249 : f32 to vector<8x128xf32>
    %531 = arith.addf %530, %529 : vector<8x128xf32>
    %532 = arith.divf %530, %531 : vector<8x128xf32>
    %533 = vector.extract_strided_slice %520 {offsets = [0, 256], sizes = [8, 128], strides = [1, 1]} : vector<8x512xf32> to vector<8x128xf32>
    %534 = math.tanh %533 : vector<8x128xf32>
    %535 = vector.extract_strided_slice %520 {offsets = [0, 384], sizes = [8, 128], strides = [1, 1]} : vector<8x512xf32> to vector<8x128xf32>
    %536 = arith.negf %535 : vector<8x128xf32>
    %537 = math.exp %536 : vector<8x128xf32>
    %cst_250 = arith.constant 1.000000e+00 : f32
    %538 = vector.broadcast %cst_250 : f32 to vector<8x128xf32>
    %539 = arith.addf %538, %537 : vector<8x128xf32>
    %540 = arith.divf %538, %539 : vector<8x128xf32>
    %541 = arith.mulf %532, %517 : vector<8x128xf32>
    %542 = arith.mulf %526, %534 : vector<8x128xf32>
    %543 = arith.addf %541, %542 : vector<8x128xf32>
    %544 = math.tanh %543 : vector<8x128xf32>
    %545 = arith.mulf %540, %544 : vector<8x128xf32>
    %c0_251 = arith.constant 0 : index
    %c0_252 = arith.constant 0 : index
    %546 = vector.load %arg10[%c0_251, %c0_252] : memref<8x128xf32, #tpu.memory_space<vmem>>, vector<8x128xf32>
    tpu.vector_store %arg10[%c0_251, %c0_252], %515 {strides = array<i32>} : memref<8x128xf32, #tpu.memory_space<vmem>>, vector<8x128xf32>,
    %c0_253 = arith.constant 0 : index
    %c0_254 = arith.constant 0 : index
    %547 = vector.load %arg11[%c0_253, %c0_254] : memref<8x128xf32, #tpu.memory_space<vmem>>, vector<8x128xf32>
    tpu.vector_store %arg11[%c0_253, %c0_254], %513 {strides = array<i32>} : memref<8x128xf32, #tpu.memory_space<vmem>>, vector<8x128xf32>,
    %c0_255 = arith.constant 0 : index
    %c0_256 = arith.constant 0 : index
    %548 = vector.load %arg12[%c0_255, %c0_256] : memref<8x128xf32, #tpu.memory_space<vmem>>, vector<8x128xf32>
    tpu.vector_store %arg12[%c0_255, %c0_256], %545 {strides = array<i32>} : memref<8x128xf32, #tpu.memory_space<vmem>>, vector<8x128xf32>,
    %c0_257 = arith.constant 0 : index
    %c0_258 = arith.constant 0 : index
    %549 = vector.load %arg13[%c0_257, %c0_258] : memref<8x128xf32, #tpu.memory_space<vmem>>, vector<8x128xf32>
    tpu.vector_store %arg13[%c0_257, %c0_258], %543 {strides = array<i32>} : memref<8x128xf32, #tpu.memory_space<vmem>>, vector<8x128xf32>,
    %550 = arith.index_cast %478 : i32 to index
    %c0_259 = arith.constant 0 : index
    %551 = vector.load %arg14[%550, %c0_259] : memref<64x128xf32, #tpu.memory_space<vmem>>, vector<8x128xf32>
    tpu.vector_store %arg14[%550, %c0_259], %515 {strides = array<i32>} : memref<64x128xf32, #tpu.memory_space<vmem>>, vector<8x128xf32>,
    %552 = arith.index_cast %481 : i32 to index
    %c0_260 = arith.constant 0 : index
    %553 = vector.load %arg15[%552, %c0_260] : memref<64x128xf32, #tpu.memory_space<vmem>>, vector<8x128xf32>
    tpu.vector_store %arg15[%552, %c0_260], %545 {strides = array<i32>} : memref<64x128xf32, #tpu.memory_space<vmem>>, vector<8x128xf32>,
    %c7_i32_261 = arith.constant 7 : i32
    %c8_i32_262 = arith.constant 8 : i32
    %554 = arith.muli %c7_i32_261, %c8_i32_262 : i32
    %555 = tpu.assume_multiple %554, 8 : i32
    %c7_i32_263 = arith.constant 7 : i32
    %556 = arith.subi %c7_i32_263, %c7_i32_261 : i32
    %c8_i32_264 = arith.constant 8 : i32
    %557 = arith.muli %556, %c8_i32_264 : i32
    %558 = tpu.assume_multiple %557, 8 : i32
    %559 = arith.index_cast %555 : i32 to index
    %c0_265 = arith.constant 0 : index
    %560 = vector.load %arg9[%559, %c0_265] : memref<64x1024xf32, #tpu.memory_space<vmem>>, vector<8x512xf32>
    %561 = arith.index_cast %558 : i32 to index
    %c512_266 = arith.constant 512 : index
    %562 = vector.load %arg9[%561, %c512_266] : memref<64x1024xf32, #tpu.memory_space<vmem>>, vector<8x512xf32>
    %c0_267 = arith.constant 0 : index
    %c0_268 = arith.constant 0 : index
    %563 = vector.load %arg10[%c0_267, %c0_268] : memref<8x128xf32, #tpu.memory_space<vmem>>, vector<8x128xf32>
    %c0_269 = arith.constant 0 : index
    %c0_270 = arith.constant 0 : index
    %564 = vector.load %arg11[%c0_269, %c0_270] : memref<8x128xf32, #tpu.memory_space<vmem>>, vector<8x128xf32>
    %c0_271 = arith.constant 0 : index
    %c0_272 = arith.constant 0 : index
    %565 = vector.load %arg3[%c0_271, %c0_272] : memref<128x512xf32, #tpu.memory_space<vmem>>, vector<128x512xf32>
    %cst_273 = arith.constant dense<0.000000e+00> : vector<8x512xf32>
    %566 = tpu.matmul %563, %565, %cst_273 {dimension_numbers = #tpu.dot_dimension_numbers<[1], [0], [0], [1], [0, 0, 1, 1], [], []>} : vector<8x128xf32>, vector<128x512xf32>, vector<8x512xf32> -> vector<8x512xf32>
    %567 = arith.addf %560, %566 : vector<8x512xf32>
    %568 = vector.extract_strided_slice %567 {offsets = [0, 0], sizes = [8, 128], strides = [1, 1]} : vector<8x512xf32> to vector<8x128xf32>
    %569 = arith.negf %568 : vector<8x128xf32>
    %570 = math.exp %569 : vector<8x128xf32>
    %cst_274 = arith.constant 1.000000e+00 : f32
    %571 = vector.broadcast %cst_274 : f32 to vector<8x128xf32>
    %572 = arith.addf %571, %570 : vector<8x128xf32>
    %573 = arith.divf %571, %572 : vector<8x128xf32>
    %574 = vector.extract_strided_slice %567 {offsets = [0, 128], sizes = [8, 128], strides = [1, 1]} : vector<8x512xf32> to vector<8x128xf32>
    %575 = arith.negf %574 : vector<8x128xf32>
    %576 = math.exp %575 : vector<8x128xf32>
    %cst_275 = arith.constant 1.000000e+00 : f32
    %577 = vector.broadcast %cst_275 : f32 to vector<8x128xf32>
    %578 = arith.addf %577, %576 : vector<8x128xf32>
    %579 = arith.divf %577, %578 : vector<8x128xf32>
    %580 = vector.extract_strided_slice %567 {offsets = [0, 256], sizes = [8, 128], strides = [1, 1]} : vector<8x512xf32> to vector<8x128xf32>
    %581 = math.tanh %580 : vector<8x128xf32>
    %582 = vector.extract_strided_slice %567 {offsets = [0, 384], sizes = [8, 128], strides = [1, 1]} : vector<8x512xf32> to vector<8x128xf32>
    %583 = arith.negf %582 : vector<8x128xf32>
    %584 = math.exp %583 : vector<8x128xf32>
    %cst_276 = arith.constant 1.000000e+00 : f32
    %585 = vector.broadcast %cst_276 : f32 to vector<8x128xf32>
    %586 = arith.addf %585, %584 : vector<8x128xf32>
    %587 = arith.divf %585, %586 : vector<8x128xf32>
    %588 = arith.mulf %579, %564 : vector<8x128xf32>
    %589 = arith.mulf %573, %581 : vector<8x128xf32>
    %590 = arith.addf %588, %589 : vector<8x128xf32>
    %591 = math.tanh %590 : vector<8x128xf32>
    %592 = arith.mulf %587, %591 : vector<8x128xf32>
    %c0_277 = arith.constant 0 : index
    %c0_278 = arith.constant 0 : index
    %593 = vector.load %arg12[%c0_277, %c0_278] : memref<8x128xf32, #tpu.memory_space<vmem>>, vector<8x128xf32>
    %c0_279 = arith.constant 0 : index
    %c0_280 = arith.constant 0 : index
    %594 = vector.load %arg13[%c0_279, %c0_280] : memref<8x128xf32, #tpu.memory_space<vmem>>, vector<8x128xf32>
    %c0_281 = arith.constant 0 : index
    %c0_282 = arith.constant 0 : index
    %595 = vector.load %arg4[%c0_281, %c0_282] : memref<128x512xf32, #tpu.memory_space<vmem>>, vector<128x512xf32>
    %cst_283 = arith.constant dense<0.000000e+00> : vector<8x512xf32>
    %596 = tpu.matmul %593, %595, %cst_283 {dimension_numbers = #tpu.dot_dimension_numbers<[1], [0], [0], [1], [0, 0, 1, 1], [], []>} : vector<8x128xf32>, vector<128x512xf32>, vector<8x512xf32> -> vector<8x512xf32>
    %597 = arith.addf %562, %596 : vector<8x512xf32>
    %598 = vector.extract_strided_slice %597 {offsets = [0, 0], sizes = [8, 128], strides = [1, 1]} : vector<8x512xf32> to vector<8x128xf32>
    %599 = arith.negf %598 : vector<8x128xf32>
    %600 = math.exp %599 : vector<8x128xf32>
    %cst_284 = arith.constant 1.000000e+00 : f32
    %601 = vector.broadcast %cst_284 : f32 to vector<8x128xf32>
    %602 = arith.addf %601, %600 : vector<8x128xf32>
    %603 = arith.divf %601, %602 : vector<8x128xf32>
    %604 = vector.extract_strided_slice %597 {offsets = [0, 128], sizes = [8, 128], strides = [1, 1]} : vector<8x512xf32> to vector<8x128xf32>
    %605 = arith.negf %604 : vector<8x128xf32>
    %606 = math.exp %605 : vector<8x128xf32>
    %cst_285 = arith.constant 1.000000e+00 : f32
    %607 = vector.broadcast %cst_285 : f32 to vector<8x128xf32>
    %608 = arith.addf %607, %606 : vector<8x128xf32>
    %609 = arith.divf %607, %608 : vector<8x128xf32>
    %610 = vector.extract_strided_slice %597 {offsets = [0, 256], sizes = [8, 128], strides = [1, 1]} : vector<8x512xf32> to vector<8x128xf32>
    %611 = math.tanh %610 : vector<8x128xf32>
    %612 = vector.extract_strided_slice %597 {offsets = [0, 384], sizes = [8, 128], strides = [1, 1]} : vector<8x512xf32> to vector<8x128xf32>
    %613 = arith.negf %612 : vector<8x128xf32>
    %614 = math.exp %613 : vector<8x128xf32>
    %cst_286 = arith.constant 1.000000e+00 : f32
    %615 = vector.broadcast %cst_286 : f32 to vector<8x128xf32>
    %616 = arith.addf %615, %614 : vector<8x128xf32>
    %617 = arith.divf %615, %616 : vector<8x128xf32>
    %618 = arith.mulf %609, %594 : vector<8x128xf32>
    %619 = arith.mulf %603, %611 : vector<8x128xf32>
    %620 = arith.addf %618, %619 : vector<8x128xf32>
    %621 = math.tanh %620 : vector<8x128xf32>
    %622 = arith.mulf %617, %621 : vector<8x128xf32>
    %c0_287 = arith.constant 0 : index
    %c0_288 = arith.constant 0 : index
    %623 = vector.load %arg10[%c0_287, %c0_288] : memref<8x128xf32, #tpu.memory_space<vmem>>, vector<8x128xf32>
    tpu.vector_store %arg10[%c0_287, %c0_288], %592 {strides = array<i32>} : memref<8x128xf32, #tpu.memory_space<vmem>>, vector<8x128xf32>,
    %c0_289 = arith.constant 0 : index
    %c0_290 = arith.constant 0 : index
    %624 = vector.load %arg11[%c0_289, %c0_290] : memref<8x128xf32, #tpu.memory_space<vmem>>, vector<8x128xf32>
    tpu.vector_store %arg11[%c0_289, %c0_290], %590 {strides = array<i32>} : memref<8x128xf32, #tpu.memory_space<vmem>>, vector<8x128xf32>,
    %c0_291 = arith.constant 0 : index
    %c0_292 = arith.constant 0 : index
    %625 = vector.load %arg12[%c0_291, %c0_292] : memref<8x128xf32, #tpu.memory_space<vmem>>, vector<8x128xf32>
    tpu.vector_store %arg12[%c0_291, %c0_292], %622 {strides = array<i32>} : memref<8x128xf32, #tpu.memory_space<vmem>>, vector<8x128xf32>,
    %c0_293 = arith.constant 0 : index
    %c0_294 = arith.constant 0 : index
    %626 = vector.load %arg13[%c0_293, %c0_294] : memref<8x128xf32, #tpu.memory_space<vmem>>, vector<8x128xf32>
    tpu.vector_store %arg13[%c0_293, %c0_294], %620 {strides = array<i32>} : memref<8x128xf32, #tpu.memory_space<vmem>>, vector<8x128xf32>,
    %627 = arith.index_cast %555 : i32 to index
    %c0_295 = arith.constant 0 : index
    %628 = vector.load %arg14[%627, %c0_295] : memref<64x128xf32, #tpu.memory_space<vmem>>, vector<8x128xf32>
    tpu.vector_store %arg14[%627, %c0_295], %592 {strides = array<i32>} : memref<64x128xf32, #tpu.memory_space<vmem>>, vector<8x128xf32>,
    %629 = arith.index_cast %558 : i32 to index
    %c0_296 = arith.constant 0 : index
    %630 = vector.load %arg15[%629, %c0_296] : memref<64x128xf32, #tpu.memory_space<vmem>>, vector<8x128xf32>
    tpu.vector_store %arg15[%629, %c0_296], %622 {strides = array<i32>} : memref<64x128xf32, #tpu.memory_space<vmem>>, vector<8x128xf32>,
    %c8_i32_297 = arith.constant 8 : i32
    %c0_298 = arith.constant 0 : index
    %c0_299 = arith.constant 0 : index
    %631 = vector.load %arg14[%c0_298, %c0_299] : memref<64x128xf32, #tpu.memory_space<vmem>>, vector<64x128xf32>
    %c0_300 = arith.constant 0 : index
    %c0_301 = arith.constant 0 : index
    %632 = vector.load %arg5[%c0_300, %c0_301] : memref<128x128xf32, #tpu.memory_space<vmem>>, vector<128x128xf32>
    %cst_302 = arith.constant dense<0.000000e+00> : vector<64x128xf32>
    %633 = tpu.matmul %631, %632, %cst_302 {dimension_numbers = #tpu.dot_dimension_numbers<[1], [0], [0], [1], [0, 0, 1, 1], [], []>} : vector<64x128xf32>, vector<128x128xf32>, vector<64x128xf32> -> vector<64x128xf32>
    %c0_303 = arith.constant 0 : index
    %c0_304 = arith.constant 0 : index
    %634 = vector.load %arg15[%c0_303, %c0_304] : memref<64x128xf32, #tpu.memory_space<vmem>>, vector<64x128xf32>
    %c0_305 = arith.constant 0 : index
    %c0_306 = arith.constant 0 : index
    %635 = vector.load %arg6[%c0_305, %c0_306] : memref<128x128xf32, #tpu.memory_space<vmem>>, vector<128x128xf32>
    %cst_307 = arith.constant dense<0.000000e+00> : vector<64x128xf32>
    %636 = tpu.matmul %634, %635, %cst_307 {dimension_numbers = #tpu.dot_dimension_numbers<[1], [0], [0], [1], [0, 0, 1, 1], [], []>} : vector<64x128xf32>, vector<128x128xf32>, vector<64x128xf32> -> vector<64x128xf32>
    %637 = arith.addf %633, %636 : vector<64x128xf32>
    %c0_308 = arith.constant 0 : index
    %c0_309 = arith.constant 0 : index
    %638 = vector.load %arg7[%c0_308, %c0_309] : memref<1x128xf32, #tpu.memory_space<vmem>>, vector<1x128xf32>
    %639 = vector.broadcast %638 : vector<1x128xf32> to vector<64x128xf32>
    %640 = arith.addf %637, %639 : vector<64x128xf32>
    %c0_310 = arith.constant 0 : index
    %c0_311 = arith.constant 0 : index
    %641 = vector.load %arg8[%c0_310, %c0_311] : memref<64x128xf32, #tpu.memory_space<vmem>>, vector<64x128xf32>
    tpu.vector_store %arg8[%c0_310, %c0_311], %640 {strides = array<i32>} : memref<64x128xf32, #tpu.memory_space<vmem>>, vector<64x128xf32>,
    return
  }
}

</mosaic_0001>

<llo_original>
// kernel: tpu_custom_call.1
$region0: #{tpu_custom_call.1}
  #allocation0 [shape = 'u32[]', space=smem, size = 0x4, offset = 0x4, fixed_abs, tag = 'smem constant byte address 0x4 - core index']
  #allocation1 [shape = 'u32[144,128]{1,0:T(1,128)}', space=vmem, size = 0x12000, scoped, tag = 'internal scratch']
  #allocation2 [shape = 'f32[64,1024]{1,0:T(8,128)}', space=vmem, size = 0x40000, scoped, tag = 'scratch operand']
  #allocation3 [shape = 'f32[8,128]{1,0:T(8,128)}', space=vmem, size = 0x1000, scoped, tag = 'scratch operand']
  #allocation4 [shape = 'f32[8,128]{1,0:T(8,128)}', space=vmem, size = 0x1000, scoped, tag = 'scratch operand']
  #allocation5 [shape = 'f32[8,128]{1,0:T(8,128)}', space=vmem, size = 0x1000, scoped, tag = 'scratch operand']
  #allocation6 [shape = 'f32[8,128]{1,0:T(8,128)}', space=vmem, size = 0x1000, scoped, tag = 'scratch operand']
  #allocation7 [shape = 'f32[64,128]{1,0:T(8,128)}', space=vmem, size = 0x8000, scoped, tag = 'scratch operand']
  #allocation8 [shape = 'f32[64,128]{1,0:T(8,128)}', space=vmem, size = 0x8000, scoped, tag = 'scratch operand']
  %s0 = inlined_call_operand.hbm [shape: f32[64,100], index: 0, kind: input, shape index: {}]
  %s1 = inlined_call_operand.hbm [shape: f32[100,1024], index: 1, kind: input, shape index: {}]
  %s2 = inlined_call_operand.hbm [shape: f32[1,1024], index: 2, kind: input, shape index: {}]
  %s3 = inlined_call_operand.hbm [shape: f32[128,512], index: 3, kind: input, shape index: {}]
  %s4 = inlined_call_operand.hbm [shape: f32[128,512], index: 4, kind: input, shape index: {}]
  %s5 = inlined_call_operand.hbm [shape: f32[128,128], index: 5, kind: input, shape index: {}]
  %s6 = inlined_call_operand.hbm [shape: f32[128,128], index: 6, kind: input, shape index: {}]
  %s7 = inlined_call_operand.vmem [shape: f32[1,128], index: 7, kind: input, shape index: {}]
  %s8 = inlined_call_operand.hbm [shape: f32[64,128], index: 8, kind: output, shape index: {}]
  %s9 = sld [smem:[#allocation0]]
  $region70: #{tpu_custom_call.1} parent=0
    _
  %s11 = ssub.s32 1, %s9
  %s12 = scalar_select 0, %s11, %s9
  $region1: #{tpu_custom_call.1} parent=0
    #allocation9 [shape = 'u8[32768]{0}', space=vmem, size = 0x8000, scoped, tag = 'input window, operand 0, single buffered']
    #allocation10 [shape = 's32[1]{0}', space=sflag, size = 0x4, scoped, tag = 'scoped memory for tpu_custom_call.1']
    #allocation11 [shape = 's32[1]{0}', space=sflag, size = 0x4, scoped, tag = 'scoped memory for tpu_custom_call.1']
    #allocation12 [shape = 'u8[425984]{0}', space=vmem, size = 0x68000, scoped, tag = 'input window, operand 1, single buffered']
    #allocation13 [shape = 's32[1]{0}', space=sflag, size = 0x4, scoped, tag = 'scoped memory for tpu_custom_call.1']
    #allocation14 [shape = 'u8[4096]{0}', space=vmem, size = 0x1000, scoped, tag = 'input window, operand 2, single buffered']
    #allocation15 [shape = 'u8[262144]{0}', space=vmem, size = 0x40000, scoped, tag = 'input window, operand 3, single buffered']
    #allocation16 [shape = 's32[1]{0}', space=sflag, size = 0x4, scoped, tag = 'scoped memory for tpu_custom_call.1']
    #allocation17 [shape = 'u8[262144]{0}', space=vmem, size = 0x40000, scoped, tag = 'input window, operand 4, single buffered']
    #allocation18 [shape = 'u8[65536]{0}', space=vmem, size = 0x10000, scoped, tag = 'input window, operand 5, single buffered']
    #allocation19 [shape = 's32[1]{0}', space=sflag, size = 0x4, scoped, tag = 'scoped memory for tpu_custom_call.1']
    #allocation20 [shape = 'u8[65536]{0}', space=vmem, size = 0x10000, scoped, tag = 'input window, operand 6, single buffered']
    #allocation21 [shape = 'u8[32768]{0}', space=vmem, size = 0x8000, scoped, tag = 'output window, operand 0, single buffered']
    %13 = vsyncpa [#allocation10], 0
    %14 = vsyncpa [#allocation13], 0
    %15 = vsyncpa [#allocation16], 0
    %16 = vsyncpa [#allocation19], 0
    %17 = vsyncpa [#allocation11], 0
    // Predicated region
    $region2: #{tpu_custom_call.1} parent=1 // pred_check
      _
    $region3: #{tpu_custom_call.1} parent=1 // pred_check_branch
      %19 = sbr.rel (0) target = $region5
    $region4: #{tpu_custom_call.1} parent=1 // pred_region
      %s21 = ssub.s32 1024, 1024
      %22 = vsyncadd [#allocation10], %s21
      %s23 = sshll.u32 [#allocation9], 4
      %s24 = int_to_ptr.vmem [resolvable:$true] %s23
      %29 = dma.hbm_to_vmem [thread:$0]  %s0, 1024, %s24, [#allocation10], 128, 128, 8
    $region5: #{tpu_custom_call.1} parent=1 // pred_fallthru
      _
    // Predicated region
    $region6: #{tpu_custom_call.1} parent=1 // pred_check
      _
    $region7: #{tpu_custom_call.1} parent=1 // pred_check_branch
      %31 = sbr.rel (0) target = $region9
    $region8: #{tpu_custom_call.1} parent=1 // pred_region
      %s33 = ssub.s32 13312, 13312
      %34 = vsyncadd [#allocation13], %s33
      %s35 = sshll.u32 [#allocation12], 4
      %s36 = int_to_ptr.vmem [resolvable:$true] %s35
      %41 = dma.hbm_to_vmem [thread:$0]  %s1, 13312, %s36, [#allocation13], 1024, 1024, 64
    $region9: #{tpu_custom_call.1} parent=1 // pred_fallthru
      _
    // Predicated region
    $region10: #{tpu_custom_call.1} parent=1 // pred_check
      _
    $region11: #{tpu_custom_call.1} parent=1 // pred_check_branch
      %43 = sbr.rel (0) target = $region13
    $region12: #{tpu_custom_call.1} parent=1 // pred_region
      %s45 = ssub.s32 128, 128
      %46 = vsyncadd [#allocation13], %s45
      %s48 = sshll.u32 [#allocation14], 4
      %s49 = int_to_ptr.vmem [resolvable:$true] %s48
      %51 = dma.hbm_to_vmem [thread:$0]  %s2, 128, %s49, [#allocation13]
    $region13: #{tpu_custom_call.1} parent=1 // pred_fallthru
      _
    // Predicated region
    $region14: #{tpu_custom_call.1} parent=1 // pred_check
      _
    $region15: #{tpu_custom_call.1} parent=1 // pred_check_branch
      %53 = sbr.rel (0) target = $region17
    $region16: #{tpu_custom_call.1} parent=1 // pred_region
      %s55 = ssub.s32 8192, 8192
      %56 = vsyncadd [#allocation16], %s55
      %s57 = sshll.u32 [#allocation15], 4
      %s58 = int_to_ptr.vmem [resolvable:$true] %s57
      %63 = dma.hbm_to_vmem [thread:$0]  %s3, 8192, %s58, [#allocation16], 512, 512, 32
    $region17: #{tpu_custom_call.1} parent=1 // pred_fallthru
      _
    // Predicated region
    $region18: #{tpu_custom_call.1} parent=1 // pred_check
      _
    $region19: #{tpu_custom_call.1} parent=1 // pred_check_branch
      %65 = sbr.rel (0) target = $region21
    $region20: #{tpu_custom_call.1} parent=1 // pred_region
      %s67 = ssub.s32 8192, 8192
      %68 = vsyncadd [#allocation16], %s67
      %s69 = sshll.u32 [#allocation17], 4
      %s70 = int_to_ptr.vmem [resolvable:$true] %s69
      %75 = dma.hbm_to_vmem [thread:$0]  %s4, 8192, %s70, [#allocation16], 512, 512, 32
    $region21: #{tpu_custom_call.1} parent=1 // pred_fallthru
      _
    // Predicated region
    $region22: #{tpu_custom_call.1} parent=1 // pred_check
      _
    $region23: #{tpu_custom_call.1} parent=1 // pred_check_branch
      %77 = sbr.rel (0) target = $region25
    $region24: #{tpu_custom_call.1} parent=1 // pred_region
      %s79 = ssub.s32 2048, 2048
      %80 = vsyncadd [#allocation19], %s79
      %s81 = sshll.u32 [#allocation18], 4
      %s82 = int_to_ptr.vmem [resolvable:$true] %s81
      %87 = dma.hbm_to_vmem [thread:$0]  %s5, 2048, %s82, [#allocation19], 128, 128, 8
    $region25: #{tpu_custom_call.1} parent=1 // pred_fallthru
      _
    // Predicated region
    $region26: #{tpu_custom_call.1} parent=1 // pred_check
      _
    $region27: #{tpu_custom_call.1} parent=1 // pred_check_branch
      %89 = sbr.rel (0) target = $region29
    $region28: #{tpu_custom_call.1} parent=1 // pred_region
      %s91 = ssub.s32 2048, 2048
      %92 = vsyncadd [#allocation19], %s91
      %s93 = sshll.u32 [#allocation20], 4
      %s94 = int_to_ptr.vmem [resolvable:$true] %s93
      %99 = dma.hbm_to_vmem [thread:$0]  %s6, 2048, %s94, [#allocation19], 128, 128, 8
    $region29: #{tpu_custom_call.1} parent=1 // pred_fallthru
      _
    // Predicated region
    $region30: #{tpu_custom_call.1} parent=1 // pred_check
      _
    $region31: #{tpu_custom_call.1} parent=1 // pred_check_branch
      %101 = sbr.rel (0) target = $region33
    $region32: #{tpu_custom_call.1} parent=1 // pred_region
      _
    $region33: #{tpu_custom_call.1} parent=1 // pred_fallthru
      _
    // Predicated region
    $region34: #{tpu_custom_call.1} parent=1 // pred_check
      _
    $region35: #{tpu_custom_call.1} parent=1 // pred_check_branch
      %103 = sbr.rel (0) target = $region37
    $region36: #{tpu_custom_call.1} parent=1 // pred_region
      %104 = dma.done [#allocation10], 1024
    $region37: #{tpu_custom_call.1} parent=1 // pred_fallthru
      _
    // Predicated region
    $region38: #{tpu_custom_call.1} parent=1 // pred_check
      _
    $region39: #{tpu_custom_call.1} parent=1 // pred_check_branch
      %106 = sbr.rel (0) target = $region41
    $region40: #{tpu_custom_call.1} parent=1 // pred_region
      %107 = dma.done [#allocation13], 13312
    $region41: #{tpu_custom_call.1} parent=1 // pred_fallthru
      _
    // Predicated region
    $region42: #{tpu_custom_call.1} parent=1 // pred_check
      _
    $region43: #{tpu_custom_call.1} parent=1 // pred_check_branch
      %109 = sbr.rel (0) target = $region45
    $region44: #{tpu_custom_call.1} parent=1 // pred_region
      %110 = dma.done [#allocation13], 128
    $region45: #{tpu_custom_call.1} parent=1 // pred_fallthru
      _
    // Predicated region
    $region46: #{tpu_custom_call.1} parent=1 // pred_check
      _
    $region47: #{tpu_custom_call.1} parent=1 // pred_check_branch
      %112 = sbr.rel (0) target = $region49
    $region48: #{tpu_custom_call.1} parent=1 // pred_region
      %113 = dma.done [#allocation16], 8192
    $region49: #{tpu_custom_call.1} parent=1 // pred_fallthru
      _
    // Predicated region
    $region50: #{tpu_custom_call.1} parent=1 // pred_check
      _
    $region51: #{tpu_custom_call.1} parent=1 // pred_check_branch
      %115 = sbr.rel (0) target = $region53
    $region52: #{tpu_custom_call.1} parent=1 // pred_region
      %116 = dma.done [#allocation16], 8192
    $region53: #{tpu_custom_call.1} parent=1 // pred_fallthru
      _
    // Predicated region
    $region54: #{tpu_custom_call.1} parent=1 // pred_check
      _
    $region55: #{tpu_custom_call.1} parent=1 // pred_check_branch
      %118 = sbr.rel (0) target = $region57
    $region56: #{tpu_custom_call.1} parent=1 // pred_region
      %119 = dma.done [#allocation19], 2048
    $region57: #{tpu_custom_call.1} parent=1 // pred_fallthru
      _
    // Predicated region
    $region58: #{tpu_custom_call.1} parent=1 // pred_check
      _
    $region59: #{tpu_custom_call.1} parent=1 // pred_check_branch
      %121 = sbr.rel (0) target = $region61
    $region60: #{tpu_custom_call.1} parent=1 // pred_region
      %122 = dma.done [#allocation19], 2048
    $region61: #{tpu_custom_call.1} parent=1 // pred_fallthru
      _
    %v123 = vld [vmem:[#allocation9] sm:$0xff]
    %v124 = vld [vmem:[#allocation9 + $0x8] sm:$0xff]
    %v125 = vld [vmem:[#allocation9 + $0x10] sm:$0xff]
    %v126 = vld [vmem:[#allocation9 + $0x18] sm:$0xff]
    %v127 = vld [vmem:[#allocation9 + $0x20] sm:$0xff]
    %v128 = vld [vmem:[#allocation9 + $0x28] sm:$0xff]
    %v129 = vld [vmem:[#allocation9 + $0x30] sm:$0xff]
    %v130 = vld [vmem:[#allocation9 + $0x38] sm:$0xff]
    %v131 = vld [vmem:[#allocation12] sm:$0xff]
    %v132 = vld [vmem:[#allocation12 + $0x8] sm:$0xff]
    %v133 = vld [vmem:[#allocation12 + $0x10] sm:$0xff]
    %v134 = vld [vmem:[#allocation12 + $0x18] sm:$0xff]
    %v135 = vld [vmem:[#allocation12 + $0x20] sm:$0xff]
    %v136 = vld [vmem:[#allocation12 + $0x28] sm:$0xff]
    %v137 = vld [vmem:[#allocation12 + $0x30] sm:$0xff]
    %v138 = vld [vmem:[#allocation12 + $0x38] sm:$0xff]
    %v139 = vld [vmem:[#allocation12 + $0x40] sm:$0xff]
    %v140 = vld [vmem:[#allocation12 + $0x48] sm:$0xff]
    %v141 = vld [vmem:[#allocation12 + $0x50] sm:$0xff]
    %v142 = vld [vmem:[#allocation12 + $0x58] sm:$0xff]
    %v143 = vld [vmem:[#allocation12 + $0x60] sm:$0xff]
    %v144 = vld [vmem:[#allocation12 + $0x68] sm:$0xff]
    %v145 = vld [vmem:[#allocation12 + $0x70] sm:$0xff]
    %v146 = vld [vmem:[#allocation12 + $0x78] sm:$0xff]
    %v147 = vld [vmem:[#allocation12 + $0x80] sm:$0xff]
    %v148 = vld [vmem:[#allocation12 + $0x88] sm:$0xff]
    %v149 = vld [vmem:[#allocation12 + $0x90] sm:$0xff]
    %v150 = vld [vmem:[#allocation12 + $0x98] sm:$0xff]
    %v151 = vld [vmem:[#allocation12 + $0xa0] sm:$0xff]
    %v152 = vld [vmem:[#allocation12 + $0xa8] sm:$0xff]
    %v153 = vld [vmem:[#allocation12 + $0xb0] sm:$0xff]
    %v154 = vld [vmem:[#allocation12 + $0xb8] sm:$0xff]
    %v155 = vld [vmem:[#allocation12 + $0xc0] sm:$0xff]
    %v156 = vld [vmem:[#allocation12 + $0xc8] sm:$0xff]
    %v157 = vld [vmem:[#allocation12 + $0xd0] sm:$0xff]
    %v158 = vld [vmem:[#allocation12 + $0xd8] sm:$0xff]
    %v159 = vld [vmem:[#allocation12 + $0xe0] sm:$0xff]
    %v160 = vld [vmem:[#allocation12 + $0xe8] sm:$0xff]
    %v161 = vld [vmem:[#allocation12 + $0xf0] sm:$0xff]
    %v162 = vld [vmem:[#allocation12 + $0xf8] sm:$0xff]
    %v163 = vld [vmem:[#allocation12 + $0x100] sm:$0xff]
    %v164 = vld [vmem:[#allocation12 + $0x108] sm:$0xff]
    %v165 = vld [vmem:[#allocation12 + $0x110] sm:$0xff]
    %v166 = vld [vmem:[#allocation12 + $0x118] sm:$0xff]
    %v167 = vld [vmem:[#allocation12 + $0x120] sm:$0xff]
    %v168 = vld [vmem:[#allocation12 + $0x128] sm:$0xff]
    %v169 = vld [vmem:[#allocation12 + $0x130] sm:$0xff]
    %v170 = vld [vmem:[#allocation12 + $0x138] sm:$0xff]
    %v171 = vld [vmem:[#allocation12 + $0x140] sm:$0xff]
    %v172 = vld [vmem:[#allocation12 + $0x148] sm:$0xff]
    %v173 = vld [vmem:[#allocation12 + $0x150] sm:$0xff]
    %v174 = vld [vmem:[#allocation12 + $0x158] sm:$0xff]
    %v175 = vld [vmem:[#allocation12 + $0x160] sm:$0xff]
    %v176 = vld [vmem:[#allocation12 + $0x168] sm:$0xff]
    %v177 = vld [vmem:[#allocation12 + $0x170] sm:$0xff]
    %v178 = vld [vmem:[#allocation12 + $0x178] sm:$0xff]
    %v179 = vld [vmem:[#allocation12 + $0x180] sm:$0xff]
    %v180 = vld [vmem:[#allocation12 + $0x188] sm:$0xff]
    %v181 = vld [vmem:[#allocation12 + $0x190] sm:$0xff]
    %v182 = vld [vmem:[#allocation12 + $0x198] sm:$0xff]
    %v183 = vld [vmem:[#allocation12 + $0x1a0] sm:$0xff]
    %v184 = vld [vmem:[#allocation12 + $0x1a8] sm:$0xff]
    %v185 = vld [vmem:[#allocation12 + $0x1b0] sm:$0xff]
    %v186 = vld [vmem:[#allocation12 + $0x1b8] sm:$0xff]
    %v187 = vld [vmem:[#allocation12 + $0x1c0] sm:$0xff]
    %v188 = vld [vmem:[#allocation12 + $0x1c8] sm:$0xff]
    %v189 = vld [vmem:[#allocation12 + $0x1d0] sm:$0xff]
    %v190 = vld [vmem:[#allocation12 + $0x1d8] sm:$0xff]
    %v191 = vld [vmem:[#allocation12 + $0x1e0] sm:$0xff]
    %v192 = vld [vmem:[#allocation12 + $0x1e8] sm:$0xff]
    %v193 = vld [vmem:[#allocation12 + $0x1f0] sm:$0xff]
    %v194 = vld [vmem:[#allocation12 + $0x1f8] sm:$0xff]
    %v195 = vld [vmem:[#allocation12 + $0x200] sm:$0xff]
    %v196 = vld [vmem:[#allocation12 + $0x208] sm:$0xff]
    %v197 = vld [vmem:[#allocation12 + $0x210] sm:$0xff]
    %v198 = vld [vmem:[#allocation12 + $0x218] sm:$0xff]
    %v199 = vld [vmem:[#allocation12 + $0x220] sm:$0xff]
    %v200 = vld [vmem:[#allocation12 + $0x228] sm:$0xff]
    %v201 = vld [vmem:[#allocation12 + $0x230] sm:$0xff]
    %v202 = vld [vmem:[#allocation12 + $0x238] sm:$0xff]
    %v203 = vld [vmem:[#allocation12 + $0x240] sm:$0xff]
    %v204 = vld [vmem:[#allocation12 + $0x248] sm:$0xff]
    %v205 = vld [vmem:[#allocation12 + $0x250] sm:$0xff]
    %v206 = vld [vmem:[#allocation12 + $0x258] sm:$0xff]
    %v207 = vld [vmem:[#allocation12 + $0x260] sm:$0xff]
    %v208 = vld [vmem:[#allocation12 + $0x268] sm:$0xff]
    %v209 = vld [vmem:[#allocation12 + $0x270] sm:$0xff]
    %v210 = vld [vmem:[#allocation12 + $0x278] sm:$0xff]
    %v211 = vld [vmem:[#allocation12 + $0x280] sm:$0xff]
    %v212 = vld [vmem:[#allocation12 + $0x288] sm:$0xff]
    %v213 = vld [vmem:[#allocation12 + $0x290] sm:$0xff]
    %v214 = vld [vmem:[#allocation12 + $0x298] sm:$0xff]
    %v215 = vld [vmem:[#allocation12 + $0x2a0] sm:$0xff]
    %v216 = vld [vmem:[#allocation12 + $0x2a8] sm:$0xff]
    %v217 = vld [vmem:[#allocation12 + $0x2b0] sm:$0xff]
    %v218 = vld [vmem:[#allocation12 + $0x2b8] sm:$0xff]
    %v219 = vld [vmem:[#allocation12 + $0x2c0] sm:$0xff]
    %v220 = vld [vmem:[#allocation12 + $0x2c8] sm:$0xff]
    %v221 = vld [vmem:[#allocation12 + $0x2d0] sm:$0xff]
    %v222 = vld [vmem:[#allocation12 + $0x2d8] sm:$0xff]
    %v223 = vld [vmem:[#allocation12 + $0x2e0] sm:$0xff]
    %v224 = vld [vmem:[#allocation12 + $0x2e8] sm:$0xff]
    %v225 = vld [vmem:[#allocation12 + $0x2f0] sm:$0xff]
    %v226 = vld [vmem:[#allocation12 + $0x2f8] sm:$0xff]
    %v227 = vld [vmem:[#allocation12 + $0x300] sm:$0xf]
    %v228 = vld [vmem:[#allocation12 + $0x308] sm:$0xf]
    %v229 = vld [vmem:[#allocation12 + $0x310] sm:$0xf]
    %v230 = vld [vmem:[#allocation12 + $0x318] sm:$0xf]
    %v231 = vld [vmem:[#allocation12 + $0x320] sm:$0xf]
    %v232 = vld [vmem:[#allocation12 + $0x328] sm:$0xf]
    %v233 = vld [vmem:[#allocation12 + $0x330] sm:$0xf]
    %v234 = vld [vmem:[#allocation12 + $0x338] sm:$0xf]
    %v235 = vld [vmem:[#allocation14] sm:$0xff]
    %v237 = vlaneseq
    %v238 = vshrl.u32 %v237, 7
    %v239 = vsub.s32 0, %v238
    %v240 = vrot.slane %v235, %v239
    %v241 = vlaneseq
    %v242 = vshrl.u32 %v241, 7
    %v243 = vsub.s32 1, %v242
    %v244 = vrot.slane %v235, %v243
    %v245 = vlaneseq
    %v246 = vshrl.u32 %v245, 7
    %v247 = vsub.s32 2, %v246
    %v248 = vrot.slane %v235, %v247
    %v249 = vlaneseq
    %v250 = vshrl.u32 %v249, 7
    %v251 = vsub.s32 3, %v250
    %v252 = vrot.slane %v235, %v251
    %v253 = vlaneseq
    %v254 = vshrl.u32 %v253, 7
    %v255 = vsub.s32 4, %v254
    %v256 = vrot.slane %v235, %v255
    %v257 = vlaneseq
    %v258 = vshrl.u32 %v257, 7
    %v259 = vsub.s32 5, %v258
    %v260 = vrot.slane %v235, %v259
    %v261 = vlaneseq
    %v262 = vshrl.u32 %v261, 7
    %v263 = vsub.s32 6, %v262
    %v264 = vrot.slane %v235, %v263
    %v265 = vlaneseq
    %v266 = vshrl.u32 %v265, 7
    %v267 = vsub.s32 7, %v266
    %v268 = vrot.slane %v235, %v267
    %vm277 = vcmask 818176
    %v279 = vsel %vm277, %v123, 0
    %v282 = vsel %vm277, %v124, 0
    %v285 = vsel %vm277, %v125, 0
    %v288 = vsel %vm277, %v126, 0
    %v291 = vsel %vm277, %v127, 0
    %v294 = vsel %vm277, %v128, 0
    %v297 = vsel %vm277, %v129, 0
    %v300 = vsel %vm277, %v130, 0
    %vm302 = vcmask 1043456
    %v304 = vsel %vm302, %v227, 0
    %v307 = vsel %vm302, %v228, 0
    %v310 = vsel %vm302, %v229, 0
    %v313 = vsel %vm302, %v230, 0
    %v316 = vsel %vm302, %v231, 0
    %v319 = vsel %vm302, %v232, 0
    %v322 = vsel %vm302, %v233, 0
    %v325 = vsel %vm302, %v234, 0
    %327 = vmatprep.subr.mxu0 0.0
    %328 = vmatpush1.msra.mxu0 0.0
    %329 = vmatprep.subr.mxu0 0.0
    %330 = vmatpush1.msra.mxu0 0.0
    %331 = vmatprep.subr.mxu0 0.0
    %332 = vmatpush1.msra.mxu0 0.0
    %333 = vmatprep.subr.mxu0 %v307
    %334 = vmatpush1.msra.mxu0 %v304
    %335 = vmatprep.subr.mxu0 %v220
    %336 = vmatpush1.msra.mxu0 %v219
    %337 = vmatprep.subr.mxu0 %v212
    %338 = vmatpush1.msra.mxu0 %v211
    %339 = vmatprep.subr.mxu0 %v204
    %340 = vmatpush1.msra.mxu0 %v203
    %341 = vmatprep.subr.mxu0 %v196
    %342 = vmatpush1.msra.mxu0 %v195
    %343 = vmatprep.subr.mxu0 %v188
    %344 = vmatpush1.msra.mxu0 %v187
    %345 = vmatprep.subr.mxu0 %v180
    %346 = vmatpush1.msra.mxu0 %v179
    %347 = vmatprep.subr.mxu0 %v172
    %348 = vmatpush1.msra.mxu0 %v171
    %349 = vmatprep.subr.mxu0 %v164
    %350 = vmatpush1.msra.mxu0 %v163
    %351 = vmatprep.subr.mxu0 %v156
    %352 = vmatpush1.msra.mxu0 %v155
    %353 = vmatprep.subr.mxu0 %v148
    %354 = vmatpush1.msra.mxu0 %v147
    %355 = vmatprep.subr.mxu0 %v140
    %356 = vmatpush1.msra.mxu0 %v139
    %357 = vmatprep.subr.mxu0 %v132
    %358 = vmatpush1.msra.mxu0 %v131
    %359 = vmatprep.subr.mxu0 0.0
    %360 = vmatpush2.msra.mxu0 0.0
    %361 = vmatprep.subr.mxu0 0.0
    %362 = vmatpush2.msra.mxu0 0.0
    %363 = vmatprep.subr.mxu0 0.0
    %364 = vmatpush2.msra.mxu0 0.0
    %365 = vmatprep.subr.mxu0 0.0
    %366 = vmatpush2.msra.mxu0 0.0
    %367 = vmatprep.subr.mxu0 0.0
    %368 = vmatpush2.msra.mxu0 0.0
    %369 = vmatprep.subr.mxu0 0.0
    %370 = vmatpush2.msra.mxu0 0.0
    %371 = vmatprep.subr.mxu0 0.0
    %372 = vmatpush2.msra.mxu0 0.0
    %373 = vmatprep.subr.mxu0 0.0
    %374 = vmatpush2.msra.mxu0 0.0
    %375 = vmatprep.subr.mxu0 0.0
    %376 = vmatpush2.msra.mxu0 0.0
    %377 = vmatprep.subr.mxu0 0.0
    %378 = vmatpush2.msra.mxu0 0.0
    %379 = vmatprep.subr.mxu0 0.0
    %380 = vmatpush2.msra.mxu0 0.0
    %381 = vmatprep.subr.mxu0 0.0
    %382 = vmatpush2.msra.mxu0 0.0
    %383 = vmatprep.subr.mxu0 0.0
    %384 = vmatpush2.msra.mxu0 0.0
    %385 = vmatprep.subr.mxu0 0.0
    %386 = vmatpush2.msra.mxu0 0.0
    %387 = vmatprep.subr.mxu0 0.0
    %388 = vmatpush2.msra.mxu0 0.0
    %389 = vmatprep.subr.mxu0 0.0
    %390 = vmatpush2.msra.mxu0 0.0
    %391 = vmatprep.mubr.f32.mxu0 0.0
    %392 = vmatmul.mubr.f32.gmra.mxu0 %v279
    %v393 = vpop.f32.mrf.mxu0
    %v394 = vadd.f32 %v240, %v393
    %v395 = vpop.f32.mrf.mxu0
    %v396 = vadd.f32 %v244, %v395
    %397 = vmatprep.mubr.f32.mxu0 0.0
    %398 = vmatmul.mubr.f32.gmra.mxu0 %v282
    %v399 = vpop.f32.mrf.mxu0
    %v400 = vadd.f32 %v240, %v399
    %v401 = vpop.f32.mrf.mxu0
    %v402 = vadd.f32 %v244, %v401
    %403 = vmatprep.mubr.f32.mxu0 0.0
    %404 = vmatmul.mubr.f32.gmra.mxu0 %v285
    %v405 = vpop.f32.mrf.mxu0
    %v406 = vadd.f32 %v240, %v405
    %v407 = vpop.f32.mrf.mxu0
    %v408 = vadd.f32 %v244, %v407
    %409 = vmatprep.mubr.f32.mxu0 0.0
    %410 = vmatmul.mubr.f32.gmra.mxu0 %v288
    %v411 = vpop.f32.mrf.mxu0
    %v412 = vadd.f32 %v240, %v411
    %v413 = vpop.f32.mrf.mxu0
    %v414 = vadd.f32 %v244, %v413
    %415 = vmatprep.mubr.f32.mxu0 0.0
    %416 = vmatmul.mubr.f32.gmra.mxu0 %v291
    %v417 = vpop.f32.mrf.mxu0
    %v418 = vadd.f32 %v240, %v417
    %v419 = vpop.f32.mrf.mxu0
    %v420 = vadd.f32 %v244, %v419
    %421 = vmatprep.mubr.f32.mxu0 0.0
    %422 = vmatmul.mubr.f32.gmra.mxu0 %v294
    %v423 = vpop.f32.mrf.mxu0
    %v424 = vadd.f32 %v240, %v423
    %v425 = vpop.f32.mrf.mxu0
    %v426 = vadd.f32 %v244, %v425
    %427 = vmatprep.mubr.f32.mxu0 0.0
    %428 = vmatmul.mubr.f32.gmra.mxu0 %v297
    %v429 = vpop.f32.mrf.mxu0
    %v430 = vadd.f32 %v240, %v429
    %v431 = vpop.f32.mrf.mxu0
    %v432 = vadd.f32 %v244, %v431
    %433 = vmatprep.mubr.f32.mxu0 0.0
    %434 = vmatmul.mubr.f32.gmra.mxu0 %v300
    %v435 = vpop.f32.mrf.mxu0
    %v436 = vadd.f32 %v240, %v435
    %v437 = vpop.f32.mrf.mxu0
    %v438 = vadd.f32 %v244, %v437
    %439 = vdwg.mxu0
    %440 = vmatprep.subr.mxu0 0.0
    %441 = vmatpush1.msra.mxu0 0.0
    %442 = vmatprep.subr.mxu0 0.0
    %443 = vmatpush1.msra.mxu0 0.0
    %444 = vmatprep.subr.mxu0 0.0
    %445 = vmatpush1.msra.mxu0 0.0
    %446 = vmatprep.subr.mxu0 %v313
    %447 = vmatpush1.msra.mxu0 %v310
    %448 = vmatprep.subr.mxu0 %v222
    %449 = vmatpush1.msra.mxu0 %v221
    %450 = vmatprep.subr.mxu0 %v214
    %451 = vmatpush1.msra.mxu0 %v213
    %452 = vmatprep.subr.mxu0 %v206
    %453 = vmatpush1.msra.mxu0 %v205
    %454 = vmatprep.subr.mxu0 %v198
    %455 = vmatpush1.msra.mxu0 %v197
    %456 = vmatprep.subr.mxu0 %v190
    %457 = vmatpush1.msra.mxu0 %v189
    %458 = vmatprep.subr.mxu0 %v182
    %459 = vmatpush1.msra.mxu0 %v181
    %460 = vmatprep.subr.mxu0 %v174
    %461 = vmatpush1.msra.mxu0 %v173
    %462 = vmatprep.subr.mxu0 %v166
    %463 = vmatpush1.msra.mxu0 %v165
    %464 = vmatprep.subr.mxu0 %v158
    %465 = vmatpush1.msra.mxu0 %v157
    %466 = vmatprep.subr.mxu0 %v150
    %467 = vmatpush1.msra.mxu0 %v149
    %468 = vmatprep.subr.mxu0 %v142
    %469 = vmatpush1.msra.mxu0 %v141
    %470 = vmatprep.subr.mxu0 %v134
    %471 = vmatpush1.msra.mxu0 %v133
    %472 = vmatprep.subr.mxu0 0.0
    %473 = vmatpush2.msra.mxu0 0.0
    %474 = vmatprep.subr.mxu0 0.0
    %475 = vmatpush2.msra.mxu0 0.0
    %476 = vmatprep.subr.mxu0 0.0
    %477 = vmatpush2.msra.mxu0 0.0
    %478 = vmatprep.subr.mxu0 0.0
    %479 = vmatpush2.msra.mxu0 0.0
    %480 = vmatprep.subr.mxu0 0.0
    %481 = vmatpush2.msra.mxu0 0.0
    %482 = vmatprep.subr.mxu0 0.0
    %483 = vmatpush2.msra.mxu0 0.0
    %484 = vmatprep.subr.mxu0 0.0
    %485 = vmatpush2.msra.mxu0 0.0
    %486 = vmatprep.subr.mxu0 0.0
    %487 = vmatpush2.msra.mxu0 0.0
    %488 = vmatprep.subr.mxu0 0.0
    %489 = vmatpush2.msra.mxu0 0.0
    %490 = vmatprep.subr.mxu0 0.0
    %491 = vmatpush2.msra.mxu0 0.0
    %492 = vmatprep.subr.mxu0 0.0
    %493 = vmatpush2.msra.mxu0 0.0
    %494 = vmatprep.subr.mxu0 0.0
    %495 = vmatpush2.msra.mxu0 0.0
    %496 = vmatprep.subr.mxu0 0.0
    %497 = vmatpush2.msra.mxu0 0.0
    %498 = vmatprep.subr.mxu0 0.0
    %499 = vmatpush2.msra.mxu0 0.0
    %500 = vmatprep.subr.mxu0 0.0
    %501 = vmatpush2.msra.mxu0 0.0
    %502 = vmatprep.subr.mxu0 0.0
    %503 = vmatpush2.msra.mxu0 0.0
    %504 = vmatprep.mubr.f32.mxu0 0.0
    %505 = vmatmul.mubr.f32.gmra.mxu0 %v279
    %v506 = vpop.f32.mrf.mxu0
    %v507 = vadd.f32 %v248, %v506
    %v508 = vpop.f32.mrf.mxu0
    %v509 = vadd.f32 %v252, %v508
    %510 = vmatprep.mubr.f32.mxu0 0.0
    %511 = vmatmul.mubr.f32.gmra.mxu0 %v282
    %v512 = vpop.f32.mrf.mxu0
    %v513 = vadd.f32 %v248, %v512
    %v514 = vpop.f32.mrf.mxu0
    %v515 = vadd.f32 %v252, %v514
    %516 = vmatprep.mubr.f32.mxu0 0.0
    %517 = vmatmul.mubr.f32.gmra.mxu0 %v285
    %v518 = vpop.f32.mrf.mxu0
    %v519 = vadd.f32 %v248, %v518
    %v520 = vpop.f32.mrf.mxu0
    %v521 = vadd.f32 %v252, %v520
    %522 = vmatprep.mubr.f32.mxu0 0.0
    %523 = vmatmul.mubr.f32.gmra.mxu0 %v288
    %v524 = vpop.f32.mrf.mxu0
    %v525 = vadd.f32 %v248, %v524
    %v526 = vpop.f32.mrf.mxu0
    %v527 = vadd.f32 %v252, %v526
    %528 = vmatprep.mubr.f32.mxu0 0.0
    %529 = vmatmul.mubr.f32.gmra.mxu0 %v291
    %v530 = vpop.f32.mrf.mxu0
    %v531 = vadd.f32 %v248, %v530
    %v532 = vpop.f32.mrf.mxu0
    %v533 = vadd.f32 %v252, %v532
    %534 = vmatprep.mubr.f32.mxu0 0.0
    %535 = vmatmul.mubr.f32.gmra.mxu0 %v294
    %v536 = vpop.f32.mrf.mxu0
    %v537 = vadd.f32 %v248, %v536
    %v538 = vpop.f32.mrf.mxu0
    %v539 = vadd.f32 %v252, %v538
    %540 = vmatprep.mubr.f32.mxu0 0.0
    %541 = vmatmul.mubr.f32.gmra.mxu0 %v297
    %v542 = vpop.f32.mrf.mxu0
    %v543 = vadd.f32 %v248, %v542
    %v544 = vpop.f32.mrf.mxu0
    %v545 = vadd.f32 %v252, %v544
    %546 = vmatprep.mubr.f32.mxu0 0.0
    %547 = vmatmul.mubr.f32.gmra.mxu0 %v300
    %v548 = vpop.f32.mrf.mxu0
    %v549 = vadd.f32 %v248, %v548
    %v550 = vpop.f32.mrf.mxu0
    %v551 = vadd.f32 %v252, %v550
    %552 = vdwg.mxu0
    %553 = vmatprep.subr.mxu0 0.0
    %554 = vmatpush1.msra.mxu0 0.0
    %555 = vmatprep.subr.mxu0 0.0
    %556 = vmatpush1.msra.mxu0 0.0
    %557 = vmatprep.subr.mxu0 0.0
    %558 = vmatpush1.msra.mxu0 0.0
    %559 = vmatprep.subr.mxu0 %v319
    %560 = vmatpush1.msra.mxu0 %v316
    %561 = vmatprep.subr.mxu0 %v224
    %562 = vmatpush1.msra.mxu0 %v223
    %563 = vmatprep.subr.mxu0 %v216
    %564 = vmatpush1.msra.mxu0 %v215
    %565 = vmatprep.subr.mxu0 %v208
    %566 = vmatpush1.msra.mxu0 %v207
    %567 = vmatprep.subr.mxu0 %v200
    %568 = vmatpush1.msra.mxu0 %v199
    %569 = vmatprep.subr.mxu0 %v192
    %570 = vmatpush1.msra.mxu0 %v191
    %571 = vmatprep.subr.mxu0 %v184
    %572 = vmatpush1.msra.mxu0 %v183
    %573 = vmatprep.subr.mxu0 %v176
    %574 = vmatpush1.msra.mxu0 %v175
    %575 = vmatprep.subr.mxu0 %v168
    %576 = vmatpush1.msra.mxu0 %v167
    %577 = vmatprep.subr.mxu0 %v160
    %578 = vmatpush1.msra.mxu0 %v159
    %579 = vmatprep.subr.mxu0 %v152
    %580 = vmatpush1.msra.mxu0 %v151
    %581 = vmatprep.subr.mxu0 %v144
    %582 = vmatpush1.msra.mxu0 %v143
    %583 = vmatprep.subr.mxu0 %v136
    %584 = vmatpush1.msra.mxu0 %v135
    %585 = vmatprep.subr.mxu0 0.0
    %586 = vmatpush2.msra.mxu0 0.0
    %587 = vmatprep.subr.mxu0 0.0
    %588 = vmatpush2.msra.mxu0 0.0
    %589 = vmatprep.subr.mxu0 0.0
    %590 = vmatpush2.msra.mxu0 0.0
    %591 = vmatprep.subr.mxu0 0.0
    %592 = vmatpush2.msra.mxu0 0.0
    %593 = vmatprep.subr.mxu0 0.0
    %594 = vmatpush2.msra.mxu0 0.0
    %595 = vmatprep.subr.mxu0 0.0
    %596 = vmatpush2.msra.mxu0 0.0
    %597 = vmatprep.subr.mxu0 0.0
    %598 = vmatpush2.msra.mxu0 0.0
    %599 = vmatprep.subr.mxu0 0.0
    %600 = vmatpush2.msra.mxu0 0.0
    %601 = vmatprep.subr.mxu0 0.0
    %602 = vmatpush2.msra.mxu0 0.0
    %603 = vmatprep.subr.mxu0 0.0
    %604 = vmatpush2.msra.mxu0 0.0
    %605 = vmatprep.subr.mxu0 0.0
    %606 = vmatpush2.msra.mxu0 0.0
    %607 = vmatprep.subr.mxu0 0.0
    %608 = vmatpush2.msra.mxu0 0.0
    %609 = vmatprep.subr.mxu0 0.0
    %610 = vmatpush2.msra.mxu0 0.0
    %611 = vmatprep.subr.mxu0 0.0
    %612 = vmatpush2.msra.mxu0 0.0
    %613 = vmatprep.subr.mxu0 0.0
    %614 = vmatpush2.msra.mxu0 0.0
    %615 = vmatprep.subr.mxu0 0.0
    %616 = vmatpush2.msra.mxu0 0.0
    %617 = vmatprep.mubr.f32.mxu0 0.0
    %618 = vmatmul.mubr.f32.gmra.mxu0 %v279
    %v619 = vpop.f32.mrf.mxu0
    %v620 = vadd.f32 %v256, %v619
    %v621 = vpop.f32.mrf.mxu0
    %v622 = vadd.f32 %v260, %v621
    %623 = vmatprep.mubr.f32.mxu0 0.0
    %624 = vmatmul.mubr.f32.gmra.mxu0 %v282
    %v625 = vpop.f32.mrf.mxu0
    %v626 = vadd.f32 %v256, %v625
    %v627 = vpop.f32.mrf.mxu0
    %v628 = vadd.f32 %v260, %v627
    %629 = vmatprep.mubr.f32.mxu0 0.0
    %630 = vmatmul.mubr.f32.gmra.mxu0 %v285
    %v631 = vpop.f32.mrf.mxu0
    %v632 = vadd.f32 %v256, %v631
    %v633 = vpop.f32.mrf.mxu0
    %v634 = vadd.f32 %v260, %v633
    %635 = vmatprep.mubr.f32.mxu0 0.0
    %636 = vmatmul.mubr.f32.gmra.mxu0 %v288
    %v637 = vpop.f32.mrf.mxu0
    %v638 = vadd.f32 %v256, %v637
    %v639 = vpop.f32.mrf.mxu0
    %v640 = vadd.f32 %v260, %v639
    %641 = vmatprep.mubr.f32.mxu0 0.0
    %642 = vmatmul.mubr.f32.gmra.mxu0 %v291
    %v643 = vpop.f32.mrf.mxu0
    %v644 = vadd.f32 %v256, %v643
    %v645 = vpop.f32.mrf.mxu0
    %v646 = vadd.f32 %v260, %v645
    %647 = vmatprep.mubr.f32.mxu0 0.0
    %648 = vmatmul.mubr.f32.gmra.mxu0 %v294
    %v649 = vpop.f32.mrf.mxu0
    %v650 = vadd.f32 %v256, %v649
    %v651 = vpop.f32.mrf.mxu0
    %v652 = vadd.f32 %v260, %v651
    %653 = vmatprep.mubr.f32.mxu0 0.0
    %654 = vmatmul.mubr.f32.gmra.mxu0 %v297
    %v655 = vpop.f32.mrf.mxu0
    %v656 = vadd.f32 %v256, %v655
    %v657 = vpop.f32.mrf.mxu0
    %v658 = vadd.f32 %v260, %v657
    %659 = vmatprep.mubr.f32.mxu0 0.0
    %660 = vmatmul.mubr.f32.gmra.mxu0 %v300
    %v661 = vpop.f32.mrf.mxu0
    %v662 = vadd.f32 %v256, %v661
    %v663 = vpop.f32.mrf.mxu0
    %v664 = vadd.f32 %v260, %v663
    %665 = vdwg.mxu0
    %666 = vmatprep.subr.mxu0 0.0
    %667 = vmatpush1.msra.mxu0 0.0
    %668 = vmatprep.subr.mxu0 0.0
    %669 = vmatpush1.msra.mxu0 0.0
    %670 = vmatprep.subr.mxu0 0.0
    %671 = vmatpush1.msra.mxu0 0.0
    %672 = vmatprep.subr.mxu0 %v325
    %673 = vmatpush1.msra.mxu0 %v322
    %674 = vmatprep.subr.mxu0 %v226
    %675 = vmatpush1.msra.mxu0 %v225
    %676 = vmatprep.subr.mxu0 %v218
    %677 = vmatpush1.msra.mxu0 %v217
    %678 = vmatprep.subr.mxu0 %v210
    %679 = vmatpush1.msra.mxu0 %v209
    %680 = vmatprep.subr.mxu0 %v202
    %681 = vmatpush1.msra.mxu0 %v201
    %682 = vmatprep.subr.mxu0 %v194
    %683 = vmatpush1.msra.mxu0 %v193
    %684 = vmatprep.subr.mxu0 %v186
    %685 = vmatpush1.msra.mxu0 %v185
    %686 = vmatprep.subr.mxu0 %v178
    %687 = vmatpush1.msra.mxu0 %v177
    %688 = vmatprep.subr.mxu0 %v170
    %689 = vmatpush1.msra.mxu0 %v169
    %690 = vmatprep.subr.mxu0 %v162
    %691 = vmatpush1.msra.mxu0 %v161
    %692 = vmatprep.subr.mxu0 %v154
    %693 = vmatpush1.msra.mxu0 %v153
    %694 = vmatprep.subr.mxu0 %v146
    %695 = vmatpush1.msra.mxu0 %v145
    %696 = vmatprep.subr.mxu0 %v138
    %697 = vmatpush1.msra.mxu0 %v137
    %698 = vmatprep.subr.mxu0 0.0
    %699 = vmatpush2.msra.mxu0 0.0
    %700 = vmatprep.subr.mxu0 0.0
    %701 = vmatpush2.msra.mxu0 0.0
    %702 = vmatprep.subr.mxu0 0.0
    %703 = vmatpush2.msra.mxu0 0.0
    %704 = vmatprep.subr.mxu0 0.0
    %705 = vmatpush2.msra.mxu0 0.0
    %706 = vmatprep.subr.mxu0 0.0
    %707 = vmatpush2.msra.mxu0 0.0
    %708 = vmatprep.subr.mxu0 0.0
    %709 = vmatpush2.msra.mxu0 0.0
    %710 = vmatprep.subr.mxu0 0.0
    %711 = vmatpush2.msra.mxu0 0.0
    %712 = vmatprep.subr.mxu0 0.0
    %713 = vmatpush2.msra.mxu0 0.0
    %714 = vmatprep.subr.mxu0 0.0
    %715 = vmatpush2.msra.mxu0 0.0
    %716 = vmatprep.subr.mxu0 0.0
    %717 = vmatpush2.msra.mxu0 0.0
    %718 = vmatprep.subr.mxu0 0.0
    %719 = vmatpush2.msra.mxu0 0.0
    %720 = vmatprep.subr.mxu0 0.0
    %721 = vmatpush2.msra.mxu0 0.0
    %722 = vmatprep.subr.mxu0 0.0
    %723 = vmatpush2.msra.mxu0 0.0
    %724 = vmatprep.subr.mxu0 0.0
    %725 = vmatpush2.msra.mxu0 0.0
    %726 = vmatprep.subr.mxu0 0.0
    %727 = vmatpush2.msra.mxu0 0.0
    %728 = vmatprep.subr.mxu0 0.0
    %729 = vmatpush2.msra.mxu0 0.0
    %730 = vmatprep.mubr.f32.mxu0 0.0
    %731 = vmatmul.mubr.f32.gmra.mxu0 %v279
    %v732 = vpop.f32.mrf.mxu0
    %v733 = vadd.f32 %v264, %v732
    %v734 = vpop.f32.mrf.mxu0
    %v735 = vadd.f32 %v268, %v734
    %736 = vmatprep.mubr.f32.mxu0 0.0
    %737 = vmatmul.mubr.f32.gmra.mxu0 %v282
    %v738 = vpop.f32.mrf.mxu0
    %v739 = vadd.f32 %v264, %v738
    %v740 = vpop.f32.mrf.mxu0
    %v741 = vadd.f32 %v268, %v740
    %742 = vmatprep.mubr.f32.mxu0 0.0
    %743 = vmatmul.mubr.f32.gmra.mxu0 %v285
    %v744 = vpop.f32.mrf.mxu0
    %v745 = vadd.f32 %v264, %v744
    %v746 = vpop.f32.mrf.mxu0
    %v747 = vadd.f32 %v268, %v746
    %748 = vmatprep.mubr.f32.mxu0 0.0
    %749 = vmatmul.mubr.f32.gmra.mxu0 %v288
    %v750 = vpop.f32.mrf.mxu0
    %v751 = vadd.f32 %v264, %v750
    %v752 = vpop.f32.mrf.mxu0
    %v753 = vadd.f32 %v268, %v752
    %754 = vmatprep.mubr.f32.mxu0 0.0
    %755 = vmatmul.mubr.f32.gmra.mxu0 %v291
    %v756 = vpop.f32.mrf.mxu0
    %v757 = vadd.f32 %v264, %v756
    %v758 = vpop.f32.mrf.mxu0
    %v759 = vadd.f32 %v268, %v758
    %760 = vmatprep.mubr.f32.mxu0 0.0
    %761 = vmatmul.mubr.f32.gmra.mxu0 %v294
    %v762 = vpop.f32.mrf.mxu0
    %v763 = vadd.f32 %v264, %v762
    %v764 = vpop.f32.mrf.mxu0
    %v765 = vadd.f32 %v268, %v764
    %766 = vmatprep.mubr.f32.mxu0 0.0
    %767 = vmatmul.mubr.f32.gmra.mxu0 %v297
    %v768 = vpop.f32.mrf.mxu0
    %v769 = vadd.f32 %v264, %v768
    %v770 = vpop.f32.mrf.mxu0
    %v771 = vadd.f32 %v268, %v770
    %772 = vmatprep.mubr.f32.mxu0 0.0
    %773 = vmatmul.mubr.f32.gmra.mxu0 %v300
    %v774 = vpop.f32.mrf.mxu0
    %v775 = vadd.f32 %v264, %v774
    %v776 = vpop.f32.mrf.mxu0
    %v777 = vadd.f32 %v268, %v776
    %778 = vdwg.mxu0
    %779 = vst [vmem:[#allocation2] sm:$0xff] %v394
    %780 = vst [vmem:[#allocation2 + $0x8] sm:$0xff] %v396
    %781 = vst [vmem:[#allocation2 + $0x10] sm:$0xff] %v507
    %782 = vst [vmem:[#allocation2 + $0x18] sm:$0xff] %v509
    %783 = vst [vmem:[#allocation2 + $0x20] sm:$0xff] %v620
    %784 = vst [vmem:[#allocation2 + $0x28] sm:$0xff] %v622
    %785 = vst [vmem:[#allocation2 + $0x30] sm:$0xff] %v733
    %786 = vst [vmem:[#allocation2 + $0x38] sm:$0xff] %v735
    %787 = vst [vmem:[#allocation2 + $0x40] sm:$0xff] %v400
    %788 = vst [vmem:[#allocation2 + $0x48] sm:$0xff] %v402
    %789 = vst [vmem:[#allocation2 + $0x50] sm:$0xff] %v513
    %790 = vst [vmem:[#allocation2 + $0x58] sm:$0xff] %v515
    %791 = vst [vmem:[#allocation2 + $0x60] sm:$0xff] %v626
    %792 = vst [vmem:[#allocation2 + $0x68] sm:$0xff] %v628
    %793 = vst [vmem:[#allocation2 + $0x70] sm:$0xff] %v739
    %794 = vst [vmem:[#allocation2 + $0x78] sm:$0xff] %v741
    %795 = vst [vmem:[#allocation2 + $0x80] sm:$0xff] %v406
    %796 = vst [vmem:[#allocation2 + $0x88] sm:$0xff] %v408
    %797 = vst [vmem:[#allocation2 + $0x90] sm:$0xff] %v519
    %798 = vst [vmem:[#allocation2 + $0x98] sm:$0xff] %v521
    %799 = vst [vmem:[#allocation2 + $0xa0] sm:$0xff] %v632
    %800 = vst [vmem:[#allocation2 + $0xa8] sm:$0xff] %v634
    %801 = vst [vmem:[#allocation2 + $0xb0] sm:$0xff] %v745
    %802 = vst [vmem:[#allocation2 + $0xb8] sm:$0xff] %v747
    %803 = vst [vmem:[#allocation2 + $0xc0] sm:$0xff] %v412
    %804 = vst [vmem:[#allocation2 + $0xc8] sm:$0xff] %v414
    %805 = vst [vmem:[#allocation2 + $0xd0] sm:$0xff] %v525
    %806 = vst [vmem:[#allocation2 + $0xd8] sm:$0xff] %v527
    %807 = vst [vmem:[#allocation2 + $0xe0] sm:$0xff] %v638
    %808 = vst [vmem:[#allocation2 + $0xe8] sm:$0xff] %v640
    %809 = vst [vmem:[#allocation2 + $0xf0] sm:$0xff] %v751
    %810 = vst [vmem:[#allocation2 + $0xf8] sm:$0xff] %v753
    %811 = vst [vmem:[#allocation2 + $0x100] sm:$0xff] %v418
    %812 = vst [vmem:[#allocation2 + $0x108] sm:$0xff] %v420
    %813 = vst [vmem:[#allocation2 + $0x110] sm:$0xff] %v531
    %814 = vst [vmem:[#allocation2 + $0x118] sm:$0xff] %v533
    %815 = vst [vmem:[#allocation2 + $0x120] sm:$0xff] %v644
    %816 = vst [vmem:[#allocation2 + $0x128] sm:$0xff] %v646
    %817 = vst [vmem:[#allocation2 + $0x130] sm:$0xff] %v757
    %818 = vst [vmem:[#allocation2 + $0x138] sm:$0xff] %v759
    %819 = vst [vmem:[#allocation2 + $0x140] sm:$0xff] %v424
    %820 = vst [vmem:[#allocation2 + $0x148] sm:$0xff] %v426
    %821 = vst [vmem:[#allocation2 + $0x150] sm:$0xff] %v537
    %822 = vst [vmem:[#allocation2 + $0x158] sm:$0xff] %v539
    %823 = vst [vmem:[#allocation2 + $0x160] sm:$0xff] %v650
    %824 = vst [vmem:[#allocation2 + $0x168] sm:$0xff] %v652
    %825 = vst [vmem:[#allocation2 + $0x170] sm:$0xff] %v763
    %826 = vst [vmem:[#allocation2 + $0x178] sm:$0xff] %v765
    %827 = vst [vmem:[#allocation2 + $0x180] sm:$0xff] %v430
    %828 = vst [vmem:[#allocation2 + $0x188] sm:$0xff] %v432
    %829 = vst [vmem:[#allocation2 + $0x190] sm:$0xff] %v543
    %830 = vst [vmem:[#allocation2 + $0x198] sm:$0xff] %v545
    %831 = vst [vmem:[#allocation2 + $0x1a0] sm:$0xff] %v656
    %832 = vst [vmem:[#allocation2 + $0x1a8] sm:$0xff] %v658
    %833 = vst [vmem:[#allocation2 + $0x1b0] sm:$0xff] %v769
    %834 = vst [vmem:[#allocation2 + $0x1b8] sm:$0xff] %v771
    %835 = vst [vmem:[#allocation2 + $0x1c0] sm:$0xff] %v436
    %836 = vst [vmem:[#allocation2 + $0x1c8] sm:$0xff] %v438
    %837 = vst [vmem:[#allocation2 + $0x1d0] sm:$0xff] %v549
    %838 = vst [vmem:[#allocation2 + $0x1d8] sm:$0xff] %v551
    %839 = vst [vmem:[#allocation2 + $0x1e0] sm:$0xff] %v662
    %840 = vst [vmem:[#allocation2 + $0x1e8] sm:$0xff] %v664
    %841 = vst [vmem:[#allocation2 + $0x1f0] sm:$0xff] %v775
    %842 = vst [vmem:[#allocation2 + $0x1f8] sm:$0xff] %v777
    %843 = vst [vmem:[#allocation3] sm:$0xff] 0.0
    %844 = vst [vmem:[#allocation4] sm:$0xff] 0.0
    %845 = vst [vmem:[#allocation5] sm:$0xff] 0.0
    %846 = vst [vmem:[#allocation6] sm:$0xff] 0.0
    %s847 = smul.u32 0, 8
    %s848 = smul.addr %s847, 8
    %s849 = scalar_lea.vmem [#allocation2], %s848
    %v850 = vld [vmem:[%s849] sm:$0xff]
    %v851 = vld [vmem:[%s849 + $0x8] sm:$0xff]
    %v852 = vld [vmem:[%s849 + $0x10] sm:$0xff]
    %v853 = vld [vmem:[%s849 + $0x18] sm:$0xff]
    %s854 = smul.u32 7, 8
    %s855 = smul.addr %s854, 8
    %s856 = scalar_lea.vmem [#allocation2], %s855
    %v857 = vld [vmem:[%s856 + $0x20] sm:$0xff]
    %v858 = vld [vmem:[%s856 + $0x28] sm:$0xff]
    %v859 = vld [vmem:[%s856 + $0x30] sm:$0xff]
    %v860 = vld [vmem:[%s856 + $0x38] sm:$0xff]
    %v861 = vld [vmem:[#allocation3] sm:$0xff]
    %v862 = vld [vmem:[#allocation4] sm:$0xff]
    %v863 = vld [vmem:[#allocation15] sm:$0xff]
    %v864 = vld [vmem:[#allocation15 + $0x8] sm:$0xff]
    %v865 = vld [vmem:[#allocation15 + $0x10] sm:$0xff]
    %v866 = vld [vmem:[#allocation15 + $0x18] sm:$0xff]
    %v867 = vld [vmem:[#allocation15 + $0x20] sm:$0xff]
    %v868 = vld [vmem:[#allocation15 + $0x28] sm:$0xff]
    %v869 = vld [vmem:[#allocation15 + $0x30] sm:$0xff]
    %v870 = vld [vmem:[#allocation15 + $0x38] sm:$0xff]
    %v871 = vld [vmem:[#allocation15 + $0x40] sm:$0xff]
    %v872 = vld [vmem:[#allocation15 + $0x48] sm:$0xff]
    %v873 = vld [vmem:[#allocation15 + $0x50] sm:$0xff]
    %v874 = vld [vmem:[#allocation15 + $0x58] sm:$0xff]
    %v875 = vld [vmem:[#allocation15 + $0x60] sm:$0xff]
    %v876 = vld [vmem:[#allocation15 + $0x68] sm:$0xff]
    %v877 = vld [vmem:[#allocation15 + $0x70] sm:$0xff]
    %v878 = vld [vmem:[#allocation15 + $0x78] sm:$0xff]
    %v879 = vld [vmem:[#allocation15 + $0x80] sm:$0xff]
    %v880 = vld [vmem:[#allocation15 + $0x88] sm:$0xff]
    %v881 = vld [vmem:[#allocation15 + $0x90] sm:$0xff]
    %v882 = vld [vmem:[#allocation15 + $0x98] sm:$0xff]
    %v883 = vld [vmem:[#allocation15 + $0xa0] sm:$0xff]
    %v884 = vld [vmem:[#allocation15 + $0xa8] sm:$0xff]
    %v885 = vld [vmem:[#allocation15 + $0xb0] sm:$0xff]
    %v886 = vld [vmem:[#allocation15 + $0xb8] sm:$0xff]
    %v887 = vld [vmem:[#allocation15 + $0xc0] sm:$0xff]
    %v888 = vld [vmem:[#allocation15 + $0xc8] sm:$0xff]
    %v889 = vld [vmem:[#allocation15 + $0xd0] sm:$0xff]
    %v890 = vld [vmem:[#allocation15 + $0xd8] sm:$0xff]
    %v891 = vld [vmem:[#allocation15 + $0xe0] sm:$0xff]
    %v892 = vld [vmem:[#allocation15 + $0xe8] sm:$0xff]
    %v893 = vld [vmem:[#allocation15 + $0xf0] sm:$0xff]
    %v894 = vld [vmem:[#allocation15 + $0xf8] sm:$0xff]
    %v895 = vld [vmem:[#allocation15 + $0x100] sm:$0xff]
    %v896 = vld [vmem:[#allocation15 + $0x108] sm:$0xff]
    %v897 = vld [vmem:[#allocation15 + $0x110] sm:$0xff]
    %v898 = vld [vmem:[#allocation15 + $0x118] sm:$0xff]
    %v899 = vld [vmem:[#allocation15 + $0x120] sm:$0xff]
    %v900 = vld [vmem:[#allocation15 + $0x128] sm:$0xff]
    %v901 = vld [vmem:[#allocation15 + $0x130] sm:$0xff]
    %v902 = vld [vmem:[#allocation15 + $0x138] sm:$0xff]
    %v903 = vld [vmem:[#allocation15 + $0x140] sm:$0xff]
    %v904 = vld [vmem:[#allocation15 + $0x148] sm:$0xff]
    %v905 = vld [vmem:[#allocation15 + $0x150] sm:$0xff]
    %v906 = vld [vmem:[#allocation15 + $0x158] sm:$0xff]
    %v907 = vld [vmem:[#allocation15 + $0x160] sm:$0xff]
    %v908 = vld [vmem:[#allocation15 + $0x168] sm:$0xff]
    %v909 = vld [vmem:[#allocation15 + $0x170] sm:$0xff]
    %v910 = vld [vmem:[#allocation15 + $0x178] sm:$0xff]
    %v911 = vld [vmem:[#allocation15 + $0x180] sm:$0xff]
    %v912 = vld [vmem:[#allocation15 + $0x188] sm:$0xff]
    %v913 = vld [vmem:[#allocation15 + $0x190] sm:$0xff]
    %v914 = vld [vmem:[#allocation15 + $0x198] sm:$0xff]
    %v915 = vld [vmem:[#allocation15 + $0x1a0] sm:$0xff]
    %v916 = vld [vmem:[#allocation15 + $0x1a8] sm:$0xff]
    %v917 = vld [vmem:[#allocation15 + $0x1b0] sm:$0xff]
    %v918 = vld [vmem:[#allocation15 + $0x1b8] sm:$0xff]
    %v919 = vld [vmem:[#allocation15 + $0x1c0] sm:$0xff]
    %v920 = vld [vmem:[#allocation15 + $0x1c8] sm:$0xff]
    %v921 = vld [vmem:[#allocation15 + $0x1d0] sm:$0xff]
    %v922 = vld [vmem:[#allocation15 + $0x1d8] sm:$0xff]
    %v923 = vld [vmem:[#allocation15 + $0x1e0] sm:$0xff]
    %v924 = vld [vmem:[#allocation15 + $0x1e8] sm:$0xff]
    %v925 = vld [vmem:[#allocation15 + $0x1f0] sm:$0xff]
    %v926 = vld [vmem:[#allocation15 + $0x1f8] sm:$0xff]
    %927 = vmatprep.subr.mxu0 %v924
    %928 = vmatpush1.msra.mxu0 %v923
    %929 = vmatprep.subr.mxu0 %v920
    %930 = vmatpush1.msra.mxu0 %v919
    %931 = vmatprep.subr.mxu0 %v916
    %932 = vmatpush1.msra.mxu0 %v915
    %933 = vmatprep.subr.mxu0 %v912
    %934 = vmatpush1.msra.mxu0 %v911
    %935 = vmatprep.subr.mxu0 %v908
    %936 = vmatpush1.msra.mxu0 %v907
    %937 = vmatprep.subr.mxu0 %v904
    %938 = vmatpush1.msra.mxu0 %v903
    %939 = vmatprep.subr.mxu0 %v900
    %940 = vmatpush1.msra.mxu0 %v899
    %941 = vmatprep.subr.mxu0 %v896
    %942 = vmatpush1.msra.mxu0 %v895
    %943 = vmatprep.subr.mxu0 %v892
    %944 = vmatpush1.msra.mxu0 %v891
    %945 = vmatprep.subr.mxu0 %v888
    %946 = vmatpush1.msra.mxu0 %v887
    %947 = vmatprep.subr.mxu0 %v884
    %948 = vmatpush1.msra.mxu0 %v883
    %949 = vmatprep.subr.mxu0 %v880
    %950 = vmatpush1.msra.mxu0 %v879
    %951 = vmatprep.subr.mxu0 %v876
    %952 = vmatpush1.msra.mxu0 %v875
    %953 = vmatprep.subr.mxu0 %v872
    %954 = vmatpush1.msra.mxu0 %v871
    %955 = vmatprep.subr.mxu0 %v868
    %956 = vmatpush1.msra.mxu0 %v867
    %957 = vmatprep.subr.mxu0 %v864
    %958 = vmatpush1.msra.mxu0 %v863
    %959 = vmatprep.subr.mxu0 0.0
    %960 = vmatpush2.msra.mxu0 0.0
    %961 = vmatprep.subr.mxu0 0.0
    %962 = vmatpush2.msra.mxu0 0.0
    %963 = vmatprep.subr.mxu0 0.0
    %964 = vmatpush2.msra.mxu0 0.0
    %965 = vmatprep.subr.mxu0 0.0
    %966 = vmatpush2.msra.mxu0 0.0
    %967 = vmatprep.subr.mxu0 0.0
    %968 = vmatpush2.msra.mxu0 0.0
    %969 = vmatprep.subr.mxu0 0.0
    %970 = vmatpush2.msra.mxu0 0.0
    %971 = vmatprep.subr.mxu0 0.0
    %972 = vmatpush2.msra.mxu0 0.0
    %973 = vmatprep.subr.mxu0 0.0
    %974 = vmatpush2.msra.mxu0 0.0
    %975 = vmatprep.subr.mxu0 0.0
    %976 = vmatpush2.msra.mxu0 0.0
    %977 = vmatprep.subr.mxu0 0.0
    %978 = vmatpush2.msra.mxu0 0.0
    %979 = vmatprep.subr.mxu0 0.0
    %980 = vmatpush2.msra.mxu0 0.0
    %981 = vmatprep.subr.mxu0 0.0
    %982 = vmatpush2.msra.mxu0 0.0
    %983 = vmatprep.subr.mxu0 0.0
    %984 = vmatpush2.msra.mxu0 0.0
    %985 = vmatprep.subr.mxu0 0.0
    %986 = vmatpush2.msra.mxu0 0.0
    %987 = vmatprep.subr.mxu0 0.0
    %988 = vmatpush2.msra.mxu0 0.0
    %989 = vmatprep.subr.mxu0 0.0
    %990 = vmatpush2.msra.mxu0 0.0
    %991 = vmatprep.mubr.f32.mxu0 0.0
    %992 = vmatmul.mubr.f32.gmra.mxu0 %v861
    %v993 = vpop.f32.mrf.mxu0
    %v994 = vadd.f32 0.0, %v993
    %v995 = vpop.f32.mrf.mxu0
    %v996 = vadd.f32 0.0, %v995
    %997 = vdwg.mxu0
    %998 = vmatprep.subr.mxu0 %v926
    %999 = vmatpush1.msra.mxu0 %v925
    %1000 = vmatprep.subr.mxu0 %v922
    %1001 = vmatpush1.msra.mxu0 %v921
    %1002 = vmatprep.subr.mxu0 %v918
    %1003 = vmatpush1.msra.mxu0 %v917
    %1004 = vmatprep.subr.mxu0 %v914
    %1005 = vmatpush1.msra.mxu0 %v913
    %1006 = vmatprep.subr.mxu0 %v910
    %1007 = vmatpush1.msra.mxu0 %v909
    %1008 = vmatprep.subr.mxu0 %v906
    %1009 = vmatpush1.msra.mxu0 %v905
    %1010 = vmatprep.subr.mxu0 %v902
    %1011 = vmatpush1.msra.mxu0 %v901
    %1012 = vmatprep.subr.mxu0 %v898
    %1013 = vmatpush1.msra.mxu0 %v897
    %1014 = vmatprep.subr.mxu0 %v894
    %1015 = vmatpush1.msra.mxu0 %v893
    %1016 = vmatprep.subr.mxu0 %v890
    %1017 = vmatpush1.msra.mxu0 %v889
    %1018 = vmatprep.subr.mxu0 %v886
    %1019 = vmatpush1.msra.mxu0 %v885
    %1020 = vmatprep.subr.mxu0 %v882
    %1021 = vmatpush1.msra.mxu0 %v881
    %1022 = vmatprep.subr.mxu0 %v878
    %1023 = vmatpush1.msra.mxu0 %v877
    %1024 = vmatprep.subr.mxu0 %v874
    %1025 = vmatpush1.msra.mxu0 %v873
    %1026 = vmatprep.subr.mxu0 %v870
    %1027 = vmatpush1.msra.mxu0 %v869
    %1028 = vmatprep.subr.mxu0 %v866
    %1029 = vmatpush1.msra.mxu0 %v865
    %1030 = vmatprep.subr.mxu0 0.0
    %1031 = vmatpush2.msra.mxu0 0.0
    %1032 = vmatprep.subr.mxu0 0.0
    %1033 = vmatpush2.msra.mxu0 0.0
    %1034 = vmatprep.subr.mxu0 0.0
    %1035 = vmatpush2.msra.mxu0 0.0
    %1036 = vmatprep.subr.mxu0 0.0
    %1037 = vmatpush2.msra.mxu0 0.0
    %1038 = vmatprep.subr.mxu0 0.0
    %1039 = vmatpush2.msra.mxu0 0.0
    %1040 = vmatprep.subr.mxu0 0.0
    %1041 = vmatpush2.msra.mxu0 0.0
    %1042 = vmatprep.subr.mxu0 0.0
    %1043 = vmatpush2.msra.mxu0 0.0
    %1044 = vmatprep.subr.mxu0 0.0
    %1045 = vmatpush2.msra.mxu0 0.0
    %1046 = vmatprep.subr.mxu0 0.0
    %1047 = vmatpush2.msra.mxu0 0.0
    %1048 = vmatprep.subr.mxu0 0.0
    %1049 = vmatpush2.msra.mxu0 0.0
    %1050 = vmatprep.subr.mxu0 0.0
    %1051 = vmatpush2.msra.mxu0 0.0
    %1052 = vmatprep.subr.mxu0 0.0
    %1053 = vmatpush2.msra.mxu0 0.0
    %1054 = vmatprep.subr.mxu0 0.0
    %1055 = vmatpush2.msra.mxu0 0.0
    %1056 = vmatprep.subr.mxu0 0.0
    %1057 = vmatpush2.msra.mxu0 0.0
    %1058 = vmatprep.subr.mxu0 0.0
    %1059 = vmatpush2.msra.mxu0 0.0
    %1060 = vmatprep.subr.mxu0 0.0
    %1061 = vmatpush2.msra.mxu0 0.0
    %1062 = vmatprep.mubr.f32.mxu0 0.0
    %1063 = vmatmul.mubr.f32.gmra.mxu0 %v861
    %v1064 = vpop.f32.mrf.mxu0
    %v1065 = vadd.f32 0.0, %v1064
    %v1066 = vpop.f32.mrf.mxu0
    %v1067 = vadd.f32 0.0, %v1066
    %1068 = vdwg.mxu0
    %v1069 = vadd.f32 %v850, %v994
    %v1070 = vadd.f32 %v851, %v996
    %v1071 = vadd.f32 %v852, %v1065
    %v1072 = vadd.f32 %v853, %v1067
    %v1073 = vxor.u32 %v1069, 2147483648
    %v1074 = vmul.f32 %v1073, 1.442695
    %v1075 = vpow.pop %v1074
    %v1076 = vadd.f32 %v1075, 1.0
    %v1077 = vrcp.pop %v1076
    %v1078 = vmul.f32 1.0, %v1077
    %v1079 = vxor.u32 %v1070, 2147483648
    %v1080 = vmul.f32 %v1079, 1.442695
    %v1081 = vpow.pop %v1080
    %v1082 = vadd.f32 %v1081, 1.0
    %v1083 = vrcp.pop %v1082
    %v1084 = vmul.f32 1.0, %v1083
    %v1085 = vtanh.pop %v1071
    %v1086 = vxor.u32 %v1072, 2147483648
    %v1087 = vmul.f32 %v1086, 1.442695
    %v1088 = vpow.pop %v1087
    %v1089 = vadd.f32 %v1088, 1.0
    %v1090 = vrcp.pop %v1089
    %v1091 = vmul.f32 1.0, %v1090
    %v1092 = vmul.f32 %v1084, %v862
    %v1093 = vmul.f32 %v1078, %v1085
    %v1094 = vadd.f32 %v1092, %v1093
    %v1095 = vtanh.pop %v1094
    %v1096 = vmul.f32 %v1091, %v1095
    %v1097 = vld [vmem:[#allocation5] sm:$0xff]
    %v1098 = vld [vmem:[#allocation6] sm:$0xff]
    %v1099 = vld [vmem:[#allocation17] sm:$0xff]
    %v1100 = vld [vmem:[#allocation17 + $0x8] sm:$0xff]
    %v1101 = vld [vmem:[#allocation17 + $0x10] sm:$0xff]
    %v1102 = vld [vmem:[#allocation17 + $0x18] sm:$0xff]
    %v1103 = vld [vmem:[#allocation17 + $0x20] sm:$0xff]
    %v1104 = vld [vmem:[#allocation17 + $0x28] sm:$0xff]
    %v1105 = vld [vmem:[#allocation17 + $0x30] sm:$0xff]
    %v1106 = vld [vmem:[#allocation17 + $0x38] sm:$0xff]
    %v1107 = vld [vmem:[#allocation17 + $0x40] sm:$0xff]
    %v1108 = vld [vmem:[#allocation17 + $0x48] sm:$0xff]
    %v1109 = vld [vmem:[#allocation17 + $0x50] sm:$0xff]
    %v1110 = vld [vmem:[#allocation17 + $0x58] sm:$0xff]
    %v1111 = vld [vmem:[#allocation17 + $0x60] sm:$0xff]
    %v1112 = vld [vmem:[#allocation17 + $0x68] sm:$0xff]
    %v1113 = vld [vmem:[#allocation17 + $0x70] sm:$0xff]
    %v1114 = vld [vmem:[#allocation17 + $0x78] sm:$0xff]
    %v1115 = vld [vmem:[#allocation17 + $0x80] sm:$0xff]
    %v1116 = vld [vmem:[#allocation17 + $0x88] sm:$0xff]
    %v1117 = vld [vmem:[#allocation17 + $0x90] sm:$0xff]
    %v1118 = vld [vmem:[#allocation17 + $0x98] sm:$0xff]
    %v1119 = vld [vmem:[#allocation17 + $0xa0] sm:$0xff]
    %v1120 = vld [vmem:[#allocation17 + $0xa8] sm:$0xff]
    %v1121 = vld [vmem:[#allocation17 + $0xb0] sm:$0xff]
    %v1122 = vld [vmem:[#allocation17 + $0xb8] sm:$0xff]
    %v1123 = vld [vmem:[#allocation17 + $0xc0] sm:$0xff]
    %v1124 = vld [vmem:[#allocation17 + $0xc8] sm:$0xff]
    %v1125 = vld [vmem:[#allocation17 + $0xd0] sm:$0xff]
    %v1126 = vld [vmem:[#allocation17 + $0xd8] sm:$0xff]
    %v1127 = vld [vmem:[#allocation17 + $0xe0] sm:$0xff]
    %v1128 = vld [vmem:[#allocation17 + $0xe8] sm:$0xff]
    %v1129 = vld [vmem:[#allocation17 + $0xf0] sm:$0xff]
    %v1130 = vld [vmem:[#allocation17 + $0xf8] sm:$0xff]
    %v1131 = vld [vmem:[#allocation17 + $0x100] sm:$0xff]
    %v1132 = vld [vmem:[#allocation17 + $0x108] sm:$0xff]
    %v1133 = vld [vmem:[#allocation17 + $0x110] sm:$0xff]
    %v1134 = vld [vmem:[#allocation17 + $0x118] sm:$0xff]
    %v1135 = vld [vmem:[#allocation17 + $0x120] sm:$0xff]
    %v1136 = vld [vmem:[#allocation17 + $0x128] sm:$0xff]
    %v1137 = vld [vmem:[#allocation17 + $0x130] sm:$0xff]
    %v1138 = vld [vmem:[#allocation17 + $0x138] sm:$0xff]
    %v1139 = vld [vmem:[#allocation17 + $0x140] sm:$0xff]
    %v1140 = vld [vmem:[#allocation17 + $0x148] sm:$0xff]
    %v1141 = vld [vmem:[#allocation17 + $0x150] sm:$0xff]
    %v1142 = vld [vmem:[#allocation17 + $0x158] sm:$0xff]
    %v1143 = vld [vmem:[#allocation17 + $0x160] sm:$0xff]
    %v1144 = vld [vmem:[#allocation17 + $0x168] sm:$0xff]
    %v1145 = vld [vmem:[#allocation17 + $0x170] sm:$0xff]
    %v1146 = vld [vmem:[#allocation17 + $0x178] sm:$0xff]
    %v1147 = vld [vmem:[#allocation17 + $0x180] sm:$0xff]
    %v1148 = vld [vmem:[#allocation17 + $0x188] sm:$0xff]
    %v1149 = vld [vmem:[#allocation17 + $0x190] sm:$0xff]
    %v1150 = vld [vmem:[#allocation17 + $0x198] sm:$0xff]
    %v1151 = vld [vmem:[#allocation17 + $0x1a0] sm:$0xff]
    %v1152 = vld [vmem:[#allocation17 + $0x1a8] sm:$0xff]
    %v1153 = vld [vmem:[#allocation17 + $0x1b0] sm:$0xff]
    %v1154 = vld [vmem:[#allocation17 + $0x1b8] sm:$0xff]
    %v1155 = vld [vmem:[#allocation17 + $0x1c0] sm:$0xff]
    %v1156 = vld [vmem:[#allocation17 + $0x1c8] sm:$0xff]
    %v1157 = vld [vmem:[#allocation17 + $0x1d0] sm:$0xff]
    %v1158 = vld [vmem:[#allocation17 + $0x1d8] sm:$0xff]
    %v1159 = vld [vmem:[#allocation17 + $0x1e0] sm:$0xff]
    %v1160 = vld [vmem:[#allocation17 + $0x1e8] sm:$0xff]
    %v1161 = vld [vmem:[#allocation17 + $0x1f0] sm:$0xff]
    %v1162 = vld [vmem:[#allocation17 + $0x1f8] sm:$0xff]
    %1163 = vmatprep.subr.mxu0 %v1160
    %1164 = vmatpush1.msra.mxu0 %v1159
    %1165 = vmatprep.subr.mxu0 %v1156
    %1166 = vmatpush1.msra.mxu0 %v1155
    %1167 = vmatprep.subr.mxu0 %v1152
    %1168 = vmatpush1.msra.mxu0 %v1151
    %1169 = vmatprep.subr.mxu0 %v1148
    %1170 = vmatpush1.msra.mxu0 %v1147
    %1171 = vmatprep.subr.mxu0 %v1144
    %1172 = vmatpush1.msra.mxu0 %v1143
    %1173 = vmatprep.subr.mxu0 %v1140
    %1174 = vmatpush1.msra.mxu0 %v1139
    %1175 = vmatprep.subr.mxu0 %v1136
    %1176 = vmatpush1.msra.mxu0 %v1135
    %1177 = vmatprep.subr.mxu0 %v1132
    %1178 = vmatpush1.msra.mxu0 %v1131
    %1179 = vmatprep.subr.mxu0 %v1128
    %1180 = vmatpush1.msra.mxu0 %v1127
    %1181 = vmatprep.subr.mxu0 %v1124
    %1182 = vmatpush1.msra.mxu0 %v1123
    %1183 = vmatprep.subr.mxu0 %v1120
    %1184 = vmatpush1.msra.mxu0 %v1119
    %1185 = vmatprep.subr.mxu0 %v1116
    %1186 = vmatpush1.msra.mxu0 %v1115
    %1187 = vmatprep.subr.mxu0 %v1112
    %1188 = vmatpush1.msra.mxu0 %v1111
    %1189 = vmatprep.subr.mxu0 %v1108
    %1190 = vmatpush1.msra.mxu0 %v1107
    %1191 = vmatprep.subr.mxu0 %v1104
    %1192 = vmatpush1.msra.mxu0 %v1103
    %1193 = vmatprep.subr.mxu0 %v1100
    %1194 = vmatpush1.msra.mxu0 %v1099
    %1195 = vmatprep.subr.mxu0 0.0
    %1196 = vmatpush2.msra.mxu0 0.0
    %1197 = vmatprep.subr.mxu0 0.0
    %1198 = vmatpush2.msra.mxu0 0.0
    %1199 = vmatprep.subr.mxu0 0.0
    %1200 = vmatpush2.msra.mxu0 0.0
    %1201 = vmatprep.subr.mxu0 0.0
    %1202 = vmatpush2.msra.mxu0 0.0
    %1203 = vmatprep.subr.mxu0 0.0
    %1204 = vmatpush2.msra.mxu0 0.0
    %1205 = vmatprep.subr.mxu0 0.0
    %1206 = vmatpush2.msra.mxu0 0.0
    %1207 = vmatprep.subr.mxu0 0.0
    %1208 = vmatpush2.msra.mxu0 0.0
    %1209 = vmatprep.subr.mxu0 0.0
    %1210 = vmatpush2.msra.mxu0 0.0
    %1211 = vmatprep.subr.mxu0 0.0
    %1212 = vmatpush2.msra.mxu0 0.0
    %1213 = vmatprep.subr.mxu0 0.0
    %1214 = vmatpush2.msra.mxu0 0.0
    %1215 = vmatprep.subr.mxu0 0.0
    %1216 = vmatpush2.msra.mxu0 0.0
    %1217 = vmatprep.subr.mxu0 0.0
    %1218 = vmatpush2.msra.mxu0 0.0
    %1219 = vmatprep.subr.mxu0 0.0
    %1220 = vmatpush2.msra.mxu0 0.0
    %1221 = vmatprep.subr.mxu0 0.0
    %1222 = vmatpush2.msra.mxu0 0.0
    %1223 = vmatprep.subr.mxu0 0.0
    %1224 = vmatpush2.msra.mxu0 0.0
    %1225 = vmatprep.subr.mxu0 0.0
    %1226 = vmatpush2.msra.mxu0 0.0
    %1227 = vmatprep.mubr.f32.mxu0 0.0
    %1228 = vmatmul.mubr.f32.gmra.mxu0 %v1097
    %v1229 = vpop.f32.mrf.mxu0
    %v1230 = vadd.f32 0.0, %v1229
    %v1231 = vpop.f32.mrf.mxu0
    %v1232 = vadd.f32 0.0, %v1231
    %1233 = vdwg.mxu0
    %1234 = vmatprep.subr.mxu0 %v1162
    %1235 = vmatpush1.msra.mxu0 %v1161
    %1236 = vmatprep.subr.mxu0 %v1158
    %1237 = vmatpush1.msra.mxu0 %v1157
    %1238 = vmatprep.subr.mxu0 %v1154
    %1239 = vmatpush1.msra.mxu0 %v1153
    %1240 = vmatprep.subr.mxu0 %v1150
    %1241 = vmatpush1.msra.mxu0 %v1149
    %1242 = vmatprep.subr.mxu0 %v1146
    %1243 = vmatpush1.msra.mxu0 %v1145
    %1244 = vmatprep.subr.mxu0 %v1142
    %1245 = vmatpush1.msra.mxu0 %v1141
    %1246 = vmatprep.subr.mxu0 %v1138
    %1247 = vmatpush1.msra.mxu0 %v1137
    %1248 = vmatprep.subr.mxu0 %v1134
    %1249 = vmatpush1.msra.mxu0 %v1133
    %1250 = vmatprep.subr.mxu0 %v1130
    %1251 = vmatpush1.msra.mxu0 %v1129
    %1252 = vmatprep.subr.mxu0 %v1126
    %1253 = vmatpush1.msra.mxu0 %v1125
    %1254 = vmatprep.subr.mxu0 %v1122
    %1255 = vmatpush1.msra.mxu0 %v1121
    %1256 = vmatprep.subr.mxu0 %v1118
    %1257 = vmatpush1.msra.mxu0 %v1117
    %1258 = vmatprep.subr.mxu0 %v1114
    %1259 = vmatpush1.msra.mxu0 %v1113
    %1260 = vmatprep.subr.mxu0 %v1110
    %1261 = vmatpush1.msra.mxu0 %v1109
    %1262 = vmatprep.subr.mxu0 %v1106
    %1263 = vmatpush1.msra.mxu0 %v1105
    %1264 = vmatprep.subr.mxu0 %v1102
    %1265 = vmatpush1.msra.mxu0 %v1101
    %1266 = vmatprep.subr.mxu0 0.0
    %1267 = vmatpush2.msra.mxu0 0.0
    %1268 = vmatprep.subr.mxu0 0.0
    %1269 = vmatpush2.msra.mxu0 0.0
    %1270 = vmatprep.subr.mxu0 0.0
    %1271 = vmatpush2.msra.mxu0 0.0
    %1272 = vmatprep.subr.mxu0 0.0
    %1273 = vmatpush2.msra.mxu0 0.0
    %1274 = vmatprep.subr.mxu0 0.0
    %1275 = vmatpush2.msra.mxu0 0.0
    %1276 = vmatprep.subr.mxu0 0.0
    %1277 = vmatpush2.msra.mxu0 0.0
    %1278 = vmatprep.subr.mxu0 0.0
    %1279 = vmatpush2.msra.mxu0 0.0
    %1280 = vmatprep.subr.mxu0 0.0
    %1281 = vmatpush2.msra.mxu0 0.0
    %1282 = vmatprep.subr.mxu0 0.0
    %1283 = vmatpush2.msra.mxu0 0.0
    %1284 = vmatprep.subr.mxu0 0.0
    %1285 = vmatpush2.msra.mxu0 0.0
    %1286 = vmatprep.subr.mxu0 0.0
    %1287 = vmatpush2.msra.mxu0 0.0
    %1288 = vmatprep.subr.mxu0 0.0
    %1289 = vmatpush2.msra.mxu0 0.0
    %1290 = vmatprep.subr.mxu0 0.0
    %1291 = vmatpush2.msra.mxu0 0.0
    %1292 = vmatprep.subr.mxu0 0.0
    %1293 = vmatpush2.msra.mxu0 0.0
    %1294 = vmatprep.subr.mxu0 0.0
    %1295 = vmatpush2.msra.mxu0 0.0
    %1296 = vmatprep.subr.mxu0 0.0
    %1297 = vmatpush2.msra.mxu0 0.0
    %1298 = vmatprep.mubr.f32.mxu0 0.0
    %1299 = vmatmul.mubr.f32.gmra.mxu0 %v1097
    %v1300 = vpop.f32.mrf.mxu0
    %v1301 = vadd.f32 0.0, %v1300
    %v1302 = vpop.f32.mrf.mxu0
    %v1303 = vadd.f32 0.0, %v1302
    %1304 = vdwg.mxu0
    %v1305 = vadd.f32 %v857, %v1230
    %v1306 = vadd.f32 %v858, %v1232
    %v1307 = vadd.f32 %v859, %v1301
    %v1308 = vadd.f32 %v860, %v1303
    %v1309 = vxor.u32 %v1305, 2147483648
    %v1310 = vmul.f32 %v1309, 1.442695
    %v1311 = vpow.pop %v1310
    %v1312 = vadd.f32 %v1311, 1.0
    %v1313 = vrcp.pop %v1312
    %v1314 = vmul.f32 1.0, %v1313
    %v1315 = vxor.u32 %v1306, 2147483648
    %v1316 = vmul.f32 %v1315, 1.442695
    %v1317 = vpow.pop %v1316
    %v1318 = vadd.f32 %v1317, 1.0
    %v1319 = vrcp.pop %v1318
    %v1320 = vmul.f32 1.0, %v1319
    %v1321 = vtanh.pop %v1307
    %v1322 = vxor.u32 %v1308, 2147483648
    %v1323 = vmul.f32 %v1322, 1.442695
    %v1324 = vpow.pop %v1323
    %v1325 = vadd.f32 %v1324, 1.0
    %v1326 = vrcp.pop %v1325
    %v1327 = vmul.f32 1.0, %v1326
    %v1328 = vmul.f32 %v1320, %v1098
    %v1329 = vmul.f32 %v1314, %v1321
    %v1330 = vadd.f32 %v1328, %v1329
    %v1331 = vtanh.pop %v1330
    %v1332 = vmul.f32 %v1327, %v1331
    %1333 = vst [vmem:[#allocation3] sm:$0xff] %v1096
    %1334 = vst [vmem:[#allocation4] sm:$0xff] %v1094
    %1335 = vst [vmem:[#allocation5] sm:$0xff] %v1332
    %1336 = vst [vmem:[#allocation6] sm:$0xff] %v1330
    %1337 = vst [vmem:[#allocation7] sm:$0xff] %v1096
    %s1338 = scalar_lea.vmem [#allocation8], 56
    %1339 = vst [vmem:[%s1338] sm:$0xff] %v1332
    %s1340 = smul.u32 1, 8
    %s1341 = smul.addr %s1340, 8
    %s1342 = scalar_lea.vmem [#allocation2], %s1341
    %v1343 = vld [vmem:[%s1342] sm:$0xff]
    %v1344 = vld [vmem:[%s1342 + $0x8] sm:$0xff]
    %v1345 = vld [vmem:[%s1342 + $0x10] sm:$0xff]
    %v1346 = vld [vmem:[%s1342 + $0x18] sm:$0xff]
    %s1347 = smul.u32 6, 8
    %s1348 = smul.addr %s1347, 8
    %s1349 = scalar_lea.vmem [#allocation2], %s1348
    %v1350 = vld [vmem:[%s1349 + $0x20] sm:$0xff]
    %v1351 = vld [vmem:[%s1349 + $0x28] sm:$0xff]
    %v1352 = vld [vmem:[%s1349 + $0x30] sm:$0xff]
    %v1353 = vld [vmem:[%s1349 + $0x38] sm:$0xff]
    %v1354 = vld [vmem:[#allocation3] sm:$0xff]
    %v1355 = vld [vmem:[#allocation4] sm:$0xff]
    %v1356 = vld [vmem:[#allocation15] sm:$0xff]
    %v1357 = vld [vmem:[#allocation15 + $0x8] sm:$0xff]
    %v1358 = vld [vmem:[#allocation15 + $0x10] sm:$0xff]
    %v1359 = vld [vmem:[#allocation15 + $0x18] sm:$0xff]
    %v1360 = vld [vmem:[#allocation15 + $0x20] sm:$0xff]
    %v1361 = vld [vmem:[#allocation15 + $0x28] sm:$0xff]
    %v1362 = vld [vmem:[#allocation15 + $0x30] sm:$0xff]
    %v1363 = vld [vmem:[#allocation15 + $0x38] sm:$0xff]
    %v1364 = vld [vmem:[#allocation15 + $0x40] sm:$0xff]
    %v1365 = vld [vmem:[#allocation15 + $0x48] sm:$0xff]
    %v1366 = vld [vmem:[#allocation15 + $0x50] sm:$0xff]
    %v1367 = vld [vmem:[#allocation15 + $0x58] sm:$0xff]
    %v1368 = vld [vmem:[#allocation15 + $0x60] sm:$0xff]
    %v1369 = vld [vmem:[#allocation15 + $0x68] sm:$0xff]
    %v1370 = vld [vmem:[#allocation15 + $0x70] sm:$0xff]
    %v1371 = vld [vmem:[#allocation15 + $0x78] sm:$0xff]
    %v1372 = vld [vmem:[#allocation15 + $0x80] sm:$0xff]
    %v1373 = vld [vmem:[#allocation15 + $0x88] sm:$0xff]
    %v1374 = vld [vmem:[#allocation15 + $0x90] sm:$0xff]
    %v1375 = vld [vmem:[#allocation15 + $0x98] sm:$0xff]
    %v1376 = vld [vmem:[#allocation15 + $0xa0] sm:$0xff]
    %v1377 = vld [vmem:[#allocation15 + $0xa8] sm:$0xff]
    %v1378 = vld [vmem:[#allocation15 + $0xb0] sm:$0xff]
    %v1379 = vld [vmem:[#allocation15 + $0xb8] sm:$0xff]
    %v1380 = vld [vmem:[#allocation15 + $0xc0] sm:$0xff]
    %v1381 = vld [vmem:[#allocation15 + $0xc8] sm:$0xff]
    %v1382 = vld [vmem:[#allocation15 + $0xd0] sm:$0xff]
    %v1383 = vld [vmem:[#allocation15 + $0xd8] sm:$0xff]
    %v1384 = vld [vmem:[#allocation15 + $0xe0] sm:$0xff]
    %v1385 = vld [vmem:[#allocation15 + $0xe8] sm:$0xff]
    %v1386 = vld [vmem:[#allocation15 + $0xf0] sm:$0xff]
    %v1387 = vld [vmem:[#allocation15 + $0xf8] sm:$0xff]
    %v1388 = vld [vmem:[#allocation15 + $0x100] sm:$0xff]
    %v1389 = vld [vmem:[#allocation15 + $0x108] sm:$0xff]
    %v1390 = vld [vmem:[#allocation15 + $0x110] sm:$0xff]
    %v1391 = vld [vmem:[#allocation15 + $0x118] sm:$0xff]
    %v1392 = vld [vmem:[#allocation15 + $0x120] sm:$0xff]
    %v1393 = vld [vmem:[#allocation15 + $0x128] sm:$0xff]
    %v1394 = vld [vmem:[#allocation15 + $0x130] sm:$0xff]
    %v1395 = vld [vmem:[#allocation15 + $0x138] sm:$0xff]
    %v1396 = vld [vmem:[#allocation15 + $0x140] sm:$0xff]
    %v1397 = vld [vmem:[#allocation15 + $0x148] sm:$0xff]
    %v1398 = vld [vmem:[#allocation15 + $0x150] sm:$0xff]
    %v1399 = vld [vmem:[#allocation15 + $0x158] sm:$0xff]
    %v1400 = vld [vmem:[#allocation15 + $0x160] sm:$0xff]
    %v1401 = vld [vmem:[#allocation15 + $0x168] sm:$0xff]
    %v1402 = vld [vmem:[#allocation15 + $0x170] sm:$0xff]
    %v1403 = vld [vmem:[#allocation15 + $0x178] sm:$0xff]
    %v1404 = vld [vmem:[#allocation15 + $0x180] sm:$0xff]
    %v1405 = vld [vmem:[#allocation15 + $0x188] sm:$0xff]
    %v1406 = vld [vmem:[#allocation15 + $0x190] sm:$0xff]
    %v1407 = vld [vmem:[#allocation15 + $0x198] sm:$0xff]
    %v1408 = vld [vmem:[#allocation15 + $0x1a0] sm:$0xff]
    %v1409 = vld [vmem:[#allocation15 + $0x1a8] sm:$0xff]
    %v1410 = vld [vmem:[#allocation15 + $0x1b0] sm:$0xff]
    %v1411 = vld [vmem:[#allocation15 + $0x1b8] sm:$0xff]
    %v1412 = vld [vmem:[#allocation15 + $0x1c0] sm:$0xff]
    %v1413 = vld [vmem:[#allocation15 + $0x1c8] sm:$0xff]
    %v1414 = vld [vmem:[#allocation15 + $0x1d0] sm:$0xff]
    %v1415 = vld [vmem:[#allocation15 + $0x1d8] sm:$0xff]
    %v1416 = vld [vmem:[#allocation15 + $0x1e0] sm:$0xff]
    %v1417 = vld [vmem:[#allocation15 + $0x1e8] sm:$0xff]
    %v1418 = vld [vmem:[#allocation15 + $0x1f0] sm:$0xff]
    %v1419 = vld [vmem:[#allocation15 + $0x1f8] sm:$0xff]
    %1420 = vmatprep.subr.mxu0 %v1417
    %1421 = vmatpush1.msra.mxu0 %v1416
    %1422 = vmatprep.subr.mxu0 %v1413
    %1423 = vmatpush1.msra.mxu0 %v1412
    %1424 = vmatprep.subr.mxu0 %v1409
    %1425 = vmatpush1.msra.mxu0 %v1408
    %1426 = vmatprep.subr.mxu0 %v1405
    %1427 = vmatpush1.msra.mxu0 %v1404
    %1428 = vmatprep.subr.mxu0 %v1401
    %1429 = vmatpush1.msra.mxu0 %v1400
    %1430 = vmatprep.subr.mxu0 %v1397
    %1431 = vmatpush1.msra.mxu0 %v1396
    %1432 = vmatprep.subr.mxu0 %v1393
    %1433 = vmatpush1.msra.mxu0 %v1392
    %1434 = vmatprep.subr.mxu0 %v1389
    %1435 = vmatpush1.msra.mxu0 %v1388
    %1436 = vmatprep.subr.mxu0 %v1385
    %1437 = vmatpush1.msra.mxu0 %v1384
    %1438 = vmatprep.subr.mxu0 %v1381
    %1439 = vmatpush1.msra.mxu0 %v1380
    %1440 = vmatprep.subr.mxu0 %v1377
    %1441 = vmatpush1.msra.mxu0 %v1376
    %1442 = vmatprep.subr.mxu0 %v1373
    %1443 = vmatpush1.msra.mxu0 %v1372
    %1444 = vmatprep.subr.mxu0 %v1369
    %1445 = vmatpush1.msra.mxu0 %v1368
    %1446 = vmatprep.subr.mxu0 %v1365
    %1447 = vmatpush1.msra.mxu0 %v1364
    %1448 = vmatprep.subr.mxu0 %v1361
    %1449 = vmatpush1.msra.mxu0 %v1360
    %1450 = vmatprep.subr.mxu0 %v1357
    %1451 = vmatpush1.msra.mxu0 %v1356
    %1452 = vmatprep.subr.mxu0 0.0
    %1453 = vmatpush2.msra.mxu0 0.0
    %1454 = vmatprep.subr.mxu0 0.0
    %1455 = vmatpush2.msra.mxu0 0.0
    %1456 = vmatprep.subr.mxu0 0.0
    %1457 = vmatpush2.msra.mxu0 0.0
    %1458 = vmatprep.subr.mxu0 0.0
    %1459 = vmatpush2.msra.mxu0 0.0
    %1460 = vmatprep.subr.mxu0 0.0
    %1461 = vmatpush2.msra.mxu0 0.0
    %1462 = vmatprep.subr.mxu0 0.0
    %1463 = vmatpush2.msra.mxu0 0.0
    %1464 = vmatprep.subr.mxu0 0.0
    %1465 = vmatpush2.msra.mxu0 0.0
    %1466 = vmatprep.subr.mxu0 0.0
    %1467 = vmatpush2.msra.mxu0 0.0
    %1468 = vmatprep.subr.mxu0 0.0
    %1469 = vmatpush2.msra.mxu0 0.0
    %1470 = vmatprep.subr.mxu0 0.0
    %1471 = vmatpush2.msra.mxu0 0.0
    %1472 = vmatprep.subr.mxu0 0.0
    %1473 = vmatpush2.msra.mxu0 0.0
    %1474 = vmatprep.subr.mxu0 0.0
    %1475 = vmatpush2.msra.mxu0 0.0
    %1476 = vmatprep.subr.mxu0 0.0
    %1477 = vmatpush2.msra.mxu0 0.0
    %1478 = vmatprep.subr.mxu0 0.0
    %1479 = vmatpush2.msra.mxu0 0.0
    %1480 = vmatprep.subr.mxu0 0.0
    %1481 = vmatpush2.msra.mxu0 0.0
    %1482 = vmatprep.subr.mxu0 0.0
    %1483 = vmatpush2.msra.mxu0 0.0
    %1484 = vmatprep.mubr.f32.mxu0 0.0
    %1485 = vmatmul.mubr.f32.gmra.mxu0 %v1354
    %v1486 = vpop.f32.mrf.mxu0
    %v1487 = vadd.f32 0.0, %v1486
    %v1488 = vpop.f32.mrf.mxu0
    %v1489 = vadd.f32 0.0, %v1488
    %1490 = vdwg.mxu0
    %1491 = vmatprep.subr.mxu0 %v1419
    %1492 = vmatpush1.msra.mxu0 %v1418
    %1493 = vmatprep.subr.mxu0 %v1415
    %1494 = vmatpush1.msra.mxu0 %v1414
    %1495 = vmatprep.subr.mxu0 %v1411
    %1496 = vmatpush1.msra.mxu0 %v1410
    %1497 = vmatprep.subr.mxu0 %v1407
    %1498 = vmatpush1.msra.mxu0 %v1406
    %1499 = vmatprep.subr.mxu0 %v1403
    %1500 = vmatpush1.msra.mxu0 %v1402
    %1501 = vmatprep.subr.mxu0 %v1399
    %1502 = vmatpush1.msra.mxu0 %v1398
    %1503 = vmatprep.subr.mxu0 %v1395
    %1504 = vmatpush1.msra.mxu0 %v1394
    %1505 = vmatprep.subr.mxu0 %v1391
    %1506 = vmatpush1.msra.mxu0 %v1390
    %1507 = vmatprep.subr.mxu0 %v1387
    %1508 = vmatpush1.msra.mxu0 %v1386
    %1509 = vmatprep.subr.mxu0 %v1383
    %1510 = vmatpush1.msra.mxu0 %v1382
    %1511 = vmatprep.subr.mxu0 %v1379
    %1512 = vmatpush1.msra.mxu0 %v1378
    %1513 = vmatprep.subr.mxu0 %v1375
    %1514 = vmatpush1.msra.mxu0 %v1374
    %1515 = vmatprep.subr.mxu0 %v1371
    %1516 = vmatpush1.msra.mxu0 %v1370
    %1517 = vmatprep.subr.mxu0 %v1367
    %1518 = vmatpush1.msra.mxu0 %v1366
    %1519 = vmatprep.subr.mxu0 %v1363
    %1520 = vmatpush1.msra.mxu0 %v1362
    %1521 = vmatprep.subr.mxu0 %v1359
    %1522 = vmatpush1.msra.mxu0 %v1358
    %1523 = vmatprep.subr.mxu0 0.0
    %1524 = vmatpush2.msra.mxu0 0.0
    %1525 = vmatprep.subr.mxu0 0.0
    %1526 = vmatpush2.msra.mxu0 0.0
    %1527 = vmatprep.subr.mxu0 0.0
    %1528 = vmatpush2.msra.mxu0 0.0
    %1529 = vmatprep.subr.mxu0 0.0
    %1530 = vmatpush2.msra.mxu0 0.0
    %1531 = vmatprep.subr.mxu0 0.0
    %1532 = vmatpush2.msra.mxu0 0.0
    %1533 = vmatprep.subr.mxu0 0.0
    %1534 = vmatpush2.msra.mxu0 0.0
    %1535 = vmatprep.subr.mxu0 0.0
    %1536 = vmatpush2.msra.mxu0 0.0
    %1537 = vmatprep.subr.mxu0 0.0
    %1538 = vmatpush2.msra.mxu0 0.0
    %1539 = vmatprep.subr.mxu0 0.0
    %1540 = vmatpush2.msra.mxu0 0.0
    %1541 = vmatprep.subr.mxu0 0.0
    %1542 = vmatpush2.msra.mxu0 0.0
    %1543 = vmatprep.subr.mxu0 0.0
    %1544 = vmatpush2.msra.mxu0 0.0
    %1545 = vmatprep.subr.mxu0 0.0
    %1546 = vmatpush2.msra.mxu0 0.0
    %1547 = vmatprep.subr.mxu0 0.0
    %1548 = vmatpush2.msra.mxu0 0.0
    %1549 = vmatprep.subr.mxu0 0.0
    %1550 = vmatpush2.msra.mxu0 0.0
    %1551 = vmatprep.subr.mxu0 0.0
    %1552 = vmatpush2.msra.mxu0 0.0
    %1553 = vmatprep.subr.mxu0 0.0
    %1554 = vmatpush2.msra.mxu0 0.0
    %1555 = vmatprep.mubr.f32.mxu0 0.0
    %1556 = vmatmul.mubr.f32.gmra.mxu0 %v1354
    %v1557 = vpop.f32.mrf.mxu0
    %v1558 = vadd.f32 0.0, %v1557
    %v1559 = vpop.f32.mrf.mxu0
    %v1560 = vadd.f32 0.0, %v1559
    %1561 = vdwg.mxu0
    %v1562 = vadd.f32 %v1343, %v1487
    %v1563 = vadd.f32 %v1344, %v1489
    %v1564 = vadd.f32 %v1345, %v1558
    %v1565 = vadd.f32 %v1346, %v1560
    %v1566 = vxor.u32 %v1562, 2147483648
    %v1567 = vmul.f32 %v1566, 1.442695
    %v1568 = vpow.pop %v1567
    %v1569 = vadd.f32 %v1568, 1.0
    %v1570 = vrcp.pop %v1569
    %v1571 = vmul.f32 1.0, %v1570
    %v1572 = vxor.u32 %v1563, 2147483648
    %v1573 = vmul.f32 %v1572, 1.442695
    %v1574 = vpow.pop %v1573
    %v1575 = vadd.f32 %v1574, 1.0
    %v1576 = vrcp.pop %v1575
    %v1577 = vmul.f32 1.0, %v1576
    %v1578 = vtanh.pop %v1564
    %v1579 = vxor.u32 %v1565, 2147483648
    %v1580 = vmul.f32 %v1579, 1.442695
    %v1581 = vpow.pop %v1580
    %v1582 = vadd.f32 %v1581, 1.0
    %v1583 = vrcp.pop %v1582
    %v1584 = vmul.f32 1.0, %v1583
    %v1585 = vmul.f32 %v1577, %v1355
    %v1586 = vmul.f32 %v1571, %v1578
    %v1587 = vadd.f32 %v1585, %v1586
    %v1588 = vtanh.pop %v1587
    %v1589 = vmul.f32 %v1584, %v1588
    %v1590 = vld [vmem:[#allocation5] sm:$0xff]
    %v1591 = vld [vmem:[#allocation6] sm:$0xff]
    %v1592 = vld [vmem:[#allocation17] sm:$0xff]
    %v1593 = vld [vmem:[#allocation17 + $0x8] sm:$0xff]
    %v1594 = vld [vmem:[#allocation17 + $0x10] sm:$0xff]
    %v1595 = vld [vmem:[#allocation17 + $0x18] sm:$0xff]
    %v1596 = vld [vmem:[#allocation17 + $0x20] sm:$0xff]
    %v1597 = vld [vmem:[#allocation17 + $0x28] sm:$0xff]
    %v1598 = vld [vmem:[#allocation17 + $0x30] sm:$0xff]
    %v1599 = vld [vmem:[#allocation17 + $0x38] sm:$0xff]
    %v1600 = vld [vmem:[#allocation17 + $0x40] sm:$0xff]
    %v1601 = vld [vmem:[#allocation17 + $0x48] sm:$0xff]
    %v1602 = vld [vmem:[#allocation17 + $0x50] sm:$0xff]
    %v1603 = vld [vmem:[#allocation17 + $0x58] sm:$0xff]
    %v1604 = vld [vmem:[#allocation17 + $0x60] sm:$0xff]
    %v1605 = vld [vmem:[#allocation17 + $0x68] sm:$0xff]
    %v1606 = vld [vmem:[#allocation17 + $0x70] sm:$0xff]
    %v1607 = vld [vmem:[#allocation17 + $0x78] sm:$0xff]
    %v1608 = vld [vmem:[#allocation17 + $0x80] sm:$0xff]
    %v1609 = vld [vmem:[#allocation17 + $0x88] sm:$0xff]
    %v1610 = vld [vmem:[#allocation17 + $0x90] sm:$0xff]
    %v1611 = vld [vmem:[#allocation17 + $0x98] sm:$0xff]
    %v1612 = vld [vmem:[#allocation17 + $0xa0] sm:$0xff]
    %v1613 = vld [vmem:[#allocation17 + $0xa8] sm:$0xff]
    %v1614 = vld [vmem:[#allocation17 + $0xb0] sm:$0xff]
    %v1615 = vld [vmem:[#allocation17 + $0xb8] sm:$0xff]
    %v1616 = vld [vmem:[#allocation17 + $0xc0] sm:$0xff]
    %v1617 = vld [vmem:[#allocation17 + $0xc8] sm:$0xff]
    %v1618 = vld [vmem:[#allocation17 + $0xd0] sm:$0xff]
    %v1619 = vld [vmem:[#allocation17 + $0xd8] sm:$0xff]
    %v1620 = vld [vmem:[#allocation17 + $0xe0] sm:$0xff]
    %v1621 = vld [vmem:[#allocation17 + $0xe8] sm:$0xff]
    %v1622 = vld [vmem:[#allocation17 + $0xf0] sm:$0xff]
    %v1623 = vld [vmem:[#allocation17 + $0xf8] sm:$0xff]
    %v1624 = vld [vmem:[#allocation17 + $0x100] sm:$0xff]
    %v1625 = vld [vmem:[#allocation17 + $0x108] sm:$0xff]
    %v1626 = vld [vmem:[#allocation17 + $0x110] sm:$0xff]
    %v1627 = vld [vmem:[#allocation17 + $0x118] sm:$0xff]
    %v1628 = vld [vmem:[#allocation17 + $0x120] sm:$0xff]
    %v1629 = vld [vmem:[#allocation17 + $0x128] sm:$0xff]
    %v1630 = vld [vmem:[#allocation17 + $0x130] sm:$0xff]
    %v1631 = vld [vmem:[#allocation17 + $0x138] sm:$0xff]
    %v1632 = vld [vmem:[#allocation17 + $0x140] sm:$0xff]
    %v1633 = vld [vmem:[#allocation17 + $0x148] sm:$0xff]
    %v1634 = vld [vmem:[#allocation17 + $0x150] sm:$0xff]
    %v1635 = vld [vmem:[#allocation17 + $0x158] sm:$0xff]
    %v1636 = vld [vmem:[#allocation17 + $0x160] sm:$0xff]
    %v1637 = vld [vmem:[#allocation17 + $0x168] sm:$0xff]
    %v1638 = vld [vmem:[#allocation17 + $0x170] sm:$0xff]
    %v1639 = vld [vmem:[#allocation17 + $0x178] sm:$0xff]
    %v1640 = vld [vmem:[#allocation17 + $0x180] sm:$0xff]
    %v1641 = vld [vmem:[#allocation17 + $0x188] sm:$0xff]
    %v1642 = vld [vmem:[#allocation17 + $0x190] sm:$0xff]
    %v1643 = vld [vmem:[#allocation17 + $0x198] sm:$0xff]
    %v1644 = vld [vmem:[#allocation17 + $0x1a0] sm:$0xff]
    %v1645 = vld [vmem:[#allocation17 + $0x1a8] sm:$0xff]
    %v1646 = vld [vmem:[#allocation17 + $0x1b0] sm:$0xff]
    %v1647 = vld [vmem:[#allocation17 + $0x1b8] sm:$0xff]
    %v1648 = vld [vmem:[#allocation17 + $0x1c0] sm:$0xff]
    %v1649 = vld [vmem:[#allocation17 + $0x1c8] sm:$0xff]
    %v1650 = vld [vmem:[#allocation17 + $0x1d0] sm:$0xff]
    %v1651 = vld [vmem:[#allocation17 + $0x1d8] sm:$0xff]
    %v1652 = vld [vmem:[#allocation17 + $0x1e0] sm:$0xff]
    %v1653 = vld [vmem:[#allocation17 + $0x1e8] sm:$0xff]
    %v1654 = vld [vmem:[#allocation17 + $0x1f0] sm:$0xff]
    %v1655 = vld [vmem:[#allocation17 + $0x1f8] sm:$0xff]
    %1656 = vmatprep.subr.mxu0 %v1653
    %1657 = vmatpush1.msra.mxu0 %v1652
    %1658 = vmatprep.subr.mxu0 %v1649
    %1659 = vmatpush1.msra.mxu0 %v1648
    %1660 = vmatprep.subr.mxu0 %v1645
    %1661 = vmatpush1.msra.mxu0 %v1644
    %1662 = vmatprep.subr.mxu0 %v1641
    %1663 = vmatpush1.msra.mxu0 %v1640
    %1664 = vmatprep.subr.mxu0 %v1637
    %1665 = vmatpush1.msra.mxu0 %v1636
    %1666 = vmatprep.subr.mxu0 %v1633
    %1667 = vmatpush1.msra.mxu0 %v1632
    %1668 = vmatprep.subr.mxu0 %v1629
    %1669 = vmatpush1.msra.mxu0 %v1628
    %1670 = vmatprep.subr.mxu0 %v1625
    %1671 = vmatpush1.msra.mxu0 %v1624
    %1672 = vmatprep.subr.mxu0 %v1621
    %1673 = vmatpush1.msra.mxu0 %v1620
    %1674 = vmatprep.subr.mxu0 %v1617
    %1675 = vmatpush1.msra.mxu0 %v1616
    %1676 = vmatprep.subr.mxu0 %v1613
    %1677 = vmatpush1.msra.mxu0 %v1612
    %1678 = vmatprep.subr.mxu0 %v1609
    %1679 = vmatpush1.msra.mxu0 %v1608
    %1680 = vmatprep.subr.mxu0 %v1605
    %1681 = vmatpush1.msra.mxu0 %v1604
    %1682 = vmatprep.subr.mxu0 %v1601
    %1683 = vmatpush1.msra.mxu0 %v1600
    %1684 = vmatprep.subr.mxu0 %v1597
    %1685 = vmatpush1.msra.mxu0 %v1596
    %1686 = vmatprep.subr.mxu0 %v1593
    %1687 = vmatpush1.msra.mxu0 %v1592
    %1688 = vmatprep.subr.mxu0 0.0
    %1689 = vmatpush2.msra.mxu0 0.0
    %1690 = vmatprep.subr.mxu0 0.0
    %1691 = vmatpush2.msra.mxu0 0.0
    %1692 = vmatprep.subr.mxu0 0.0
    %1693 = vmatpush2.msra.mxu0 0.0
    %1694 = vmatprep.subr.mxu0 0.0
    %1695 = vmatpush2.msra.mxu0 0.0
    %1696 = vmatprep.subr.mxu0 0.0
    %1697 = vmatpush2.msra.mxu0 0.0
    %1698 = vmatprep.subr.mxu0 0.0
    %1699 = vmatpush2.msra.mxu0 0.0
    %1700 = vmatprep.subr.mxu0 0.0
    %1701 = vmatpush2.msra.mxu0 0.0
    %1702 = vmatprep.subr.mxu0 0.0
    %1703 = vmatpush2.msra.mxu0 0.0
    %1704 = vmatprep.subr.mxu0 0.0
    %1705 = vmatpush2.msra.mxu0 0.0
    %1706 = vmatprep.subr.mxu0 0.0
    %1707 = vmatpush2.msra.mxu0 0.0
    %1708 = vmatprep.subr.mxu0 0.0
    %1709 = vmatpush2.msra.mxu0 0.0
    %1710 = vmatprep.subr.mxu0 0.0
    %1711 = vmatpush2.msra.mxu0 0.0
    %1712 = vmatprep.subr.mxu0 0.0
    %1713 = vmatpush2.msra.mxu0 0.0
    %1714 = vmatprep.subr.mxu0 0.0
    %1715 = vmatpush2.msra.mxu0 0.0
    %1716 = vmatprep.subr.mxu0 0.0
    %1717 = vmatpush2.msra.mxu0 0.0
    %1718 = vmatprep.subr.mxu0 0.0
    %1719 = vmatpush2.msra.mxu0 0.0
    %1720 = vmatprep.mubr.f32.mxu0 0.0
    %1721 = vmatmul.mubr.f32.gmra.mxu0 %v1590
    %v1722 = vpop.f32.mrf.mxu0
    %v1723 = vadd.f32 0.0, %v1722
    %v1724 = vpop.f32.mrf.mxu0
    %v1725 = vadd.f32 0.0, %v1724
    %1726 = vdwg.mxu0
    %1727 = vmatprep.subr.mxu0 %v1655
    %1728 = vmatpush1.msra.mxu0 %v1654
    %1729 = vmatprep.subr.mxu0 %v1651
    %1730 = vmatpush1.msra.mxu0 %v1650
    %1731 = vmatprep.subr.mxu0 %v1647
    %1732 = vmatpush1.msra.mxu0 %v1646
    %1733 = vmatprep.subr.mxu0 %v1643
    %1734 = vmatpush1.msra.mxu0 %v1642
    %1735 = vmatprep.subr.mxu0 %v1639
    %1736 = vmatpush1.msra.mxu0 %v1638
    %1737 = vmatprep.subr.mxu0 %v1635
    %1738 = vmatpush1.msra.mxu0 %v1634
    %1739 = vmatprep.subr.mxu0 %v1631
    %1740 = vmatpush1.msra.mxu0 %v1630
    %1741 = vmatprep.subr.mxu0 %v1627
    %1742 = vmatpush1.msra.mxu0 %v1626
    %1743 = vmatprep.subr.mxu0 %v1623
    %1744 = vmatpush1.msra.mxu0 %v1622
    %1745 = vmatprep.subr.mxu0 %v1619
    %1746 = vmatpush1.msra.mxu0 %v1618
    %1747 = vmatprep.subr.mxu0 %v1615
    %1748 = vmatpush1.msra.mxu0 %v1614
    %1749 = vmatprep.subr.mxu0 %v1611
    %1750 = vmatpush1.msra.mxu0 %v1610
    %1751 = vmatprep.subr.mxu0 %v1607
    %1752 = vmatpush1.msra.mxu0 %v1606
    %1753 = vmatprep.subr.mxu0 %v1603
    %1754 = vmatpush1.msra.mxu0 %v1602
    %1755 = vmatprep.subr.mxu0 %v1599
    %1756 = vmatpush1.msra.mxu0 %v1598
    %1757 = vmatprep.subr.mxu0 %v1595
    %1758 = vmatpush1.msra.mxu0 %v1594
    %1759 = vmatprep.subr.mxu0 0.0
    %1760 = vmatpush2.msra.mxu0 0.0
    %1761 = vmatprep.subr.mxu0 0.0
    %1762 = vmatpush2.msra.mxu0 0.0
    %1763 = vmatprep.subr.mxu0 0.0
    %1764 = vmatpush2.msra.mxu0 0.0
    %1765 = vmatprep.subr.mxu0 0.0
    %1766 = vmatpush2.msra.mxu0 0.0
    %1767 = vmatprep.subr.mxu0 0.0
    %1768 = vmatpush2.msra.mxu0 0.0
    %1769 = vmatprep.subr.mxu0 0.0
    %1770 = vmatpush2.msra.mxu0 0.0
    %1771 = vmatprep.subr.mxu0 0.0
    %1772 = vmatpush2.msra.mxu0 0.0
    %1773 = vmatprep.subr.mxu0 0.0
    %1774 = vmatpush2.msra.mxu0 0.0
    %1775 = vmatprep.subr.mxu0 0.0
    %1776 = vmatpush2.msra.mxu0 0.0
    %1777 = vmatprep.subr.mxu0 0.0
    %1778 = vmatpush2.msra.mxu0 0.0
    %1779 = vmatprep.subr.mxu0 0.0
    %1780 = vmatpush2.msra.mxu0 0.0
    %1781 = vmatprep.subr.mxu0 0.0
    %1782 = vmatpush2.msra.mxu0 0.0
    %1783 = vmatprep.subr.mxu0 0.0
    %1784 = vmatpush2.msra.mxu0 0.0
    %1785 = vmatprep.subr.mxu0 0.0
    %1786 = vmatpush2.msra.mxu0 0.0
    %1787 = vmatprep.subr.mxu0 0.0
    %1788 = vmatpush2.msra.mxu0 0.0
    %1789 = vmatprep.subr.mxu0 0.0
    %1790 = vmatpush2.msra.mxu0 0.0
    %1791 = vmatprep.mubr.f32.mxu0 0.0
    %1792 = vmatmul.mubr.f32.gmra.mxu0 %v1590
    %v1793 = vpop.f32.mrf.mxu0
    %v1794 = vadd.f32 0.0, %v1793
    %v1795 = vpop.f32.mrf.mxu0
    %v1796 = vadd.f32 0.0, %v1795
    %1797 = vdwg.mxu0
    %v1798 = vadd.f32 %v1350, %v1723
    %v1799 = vadd.f32 %v1351, %v1725
    %v1800 = vadd.f32 %v1352, %v1794
    %v1801 = vadd.f32 %v1353, %v1796
    %v1802 = vxor.u32 %v1798, 2147483648
    %v1803 = vmul.f32 %v1802, 1.442695
    %v1804 = vpow.pop %v1803
    %v1805 = vadd.f32 %v1804, 1.0
    %v1806 = vrcp.pop %v1805
    %v1807 = vmul.f32 1.0, %v1806
    %v1808 = vxor.u32 %v1799, 2147483648
    %v1809 = vmul.f32 %v1808, 1.442695
    %v1810 = vpow.pop %v1809
    %v1811 = vadd.f32 %v1810, 1.0
    %v1812 = vrcp.pop %v1811
    %v1813 = vmul.f32 1.0, %v1812
    %v1814 = vtanh.pop %v1800
    %v1815 = vxor.u32 %v1801, 2147483648
    %v1816 = vmul.f32 %v1815, 1.442695
    %v1817 = vpow.pop %v1816
    %v1818 = vadd.f32 %v1817, 1.0
    %v1819 = vrcp.pop %v1818
    %v1820 = vmul.f32 1.0, %v1819
    %v1821 = vmul.f32 %v1813, %v1591
    %v1822 = vmul.f32 %v1807, %v1814
    %v1823 = vadd.f32 %v1821, %v1822
    %v1824 = vtanh.pop %v1823
    %v1825 = vmul.f32 %v1820, %v1824
    %1826 = vst [vmem:[#allocation3] sm:$0xff] %v1589
    %1827 = vst [vmem:[#allocation4] sm:$0xff] %v1587
    %1828 = vst [vmem:[#allocation5] sm:$0xff] %v1825
    %1829 = vst [vmem:[#allocation6] sm:$0xff] %v1823
    %s1830 = scalar_lea.vmem [#allocation7], 8
    %1831 = vst [vmem:[%s1830] sm:$0xff] %v1589
    %s1832 = scalar_lea.vmem [#allocation8], 48
    %1833 = vst [vmem:[%s1832] sm:$0xff] %v1825
    %s1834 = smul.u32 2, 8
    %s1835 = smul.addr %s1834, 8
    %s1836 = scalar_lea.vmem [#allocation2], %s1835
    %v1837 = vld [vmem:[%s1836] sm:$0xff]
    %v1838 = vld [vmem:[%s1836 + $0x8] sm:$0xff]
    %v1839 = vld [vmem:[%s1836 + $0x10] sm:$0xff]
    %v1840 = vld [vmem:[%s1836 + $0x18] sm:$0xff]
    %s1841 = smul.u32 5, 8
    %s1842 = smul.addr %s1841, 8
    %s1843 = scalar_lea.vmem [#allocation2], %s1842
    %v1844 = vld [vmem:[%s1843 + $0x20] sm:$0xff]
    %v1845 = vld [vmem:[%s1843 + $0x28] sm:$0xff]
    %v1846 = vld [vmem:[%s1843 + $0x30] sm:$0xff]
    %v1847 = vld [vmem:[%s1843 + $0x38] sm:$0xff]
    %v1848 = vld [vmem:[#allocation3] sm:$0xff]
    %v1849 = vld [vmem:[#allocation4] sm:$0xff]
    %v1850 = vld [vmem:[#allocation15] sm:$0xff]
    %v1851 = vld [vmem:[#allocation15 + $0x8] sm:$0xff]
    %v1852 = vld [vmem:[#allocation15 + $0x10] sm:$0xff]
    %v1853 = vld [vmem:[#allocation15 + $0x18] sm:$0xff]
    %v1854 = vld [vmem:[#allocation15 + $0x20] sm:$0xff]
    %v1855 = vld [vmem:[#allocation15 + $0x28] sm:$0xff]
    %v1856 = vld [vmem:[#allocation15 + $0x30] sm:$0xff]
    %v1857 = vld [vmem:[#allocation15 + $0x38] sm:$0xff]
    %v1858 = vld [vmem:[#allocation15 + $0x40] sm:$0xff]
    %v1859 = vld [vmem:[#allocation15 + $0x48] sm:$0xff]
    %v1860 = vld [vmem:[#allocation15 + $0x50] sm:$0xff]
    %v1861 = vld [vmem:[#allocation15 + $0x58] sm:$0xff]
    %v1862 = vld [vmem:[#allocation15 + $0x60] sm:$0xff]
    %v1863 = vld [vmem:[#allocation15 + $0x68] sm:$0xff]
    %v1864 = vld [vmem:[#allocation15 + $0x70] sm:$0xff]
    %v1865 = vld [vmem:[#allocation15 + $0x78] sm:$0xff]
    %v1866 = vld [vmem:[#allocation15 + $0x80] sm:$0xff]
    %v1867 = vld [vmem:[#allocation15 + $0x88] sm:$0xff]
    %v1868 = vld [vmem:[#allocation15 + $0x90] sm:$0xff]
    %v1869 = vld [vmem:[#allocation15 + $0x98] sm:$0xff]
    %v1870 = vld [vmem:[#allocation15 + $0xa0] sm:$0xff]
    %v1871 = vld [vmem:[#allocation15 + $0xa8] sm:$0xff]
    %v1872 = vld [vmem:[#allocation15 + $0xb0] sm:$0xff]
    %v1873 = vld [vmem:[#allocation15 + $0xb8] sm:$0xff]
    %v1874 = vld [vmem:[#allocation15 + $0xc0] sm:$0xff]
    %v1875 = vld [vmem:[#allocation15 + $0xc8] sm:$0xff]
    %v1876 = vld [vmem:[#allocation15 + $0xd0] sm:$0xff]
    %v1877 = vld [vmem:[#allocation15 + $0xd8] sm:$0xff]
    %v1878 = vld [vmem:[#allocation15 + $0xe0] sm:$0xff]
    %v1879 = vld [vmem:[#allocation15 + $0xe8] sm:$0xff]
    %v1880 = vld [vmem:[#allocation15 + $0xf0] sm:$0xff]
    %v1881 = vld [vmem:[#allocation15 + $0xf8] sm:$0xff]
    %v1882 = vld [vmem:[#allocation15 + $0x100] sm:$0xff]
    %v1883 = vld [vmem:[#allocation15 + $0x108] sm:$0xff]
    %v1884 = vld [vmem:[#allocation15 + $0x110] sm:$0xff]
    %v1885 = vld [vmem:[#allocation15 + $0x118] sm:$0xff]
    %v1886 = vld [vmem:[#allocation15 + $0x120] sm:$0xff]
    %v1887 = vld [vmem:[#allocation15 + $0x128] sm:$0xff]
    %v1888 = vld [vmem:[#allocation15 + $0x130] sm:$0xff]
    %v1889 = vld [vmem:[#allocation15 + $0x138] sm:$0xff]
    %v1890 = vld [vmem:[#allocation15 + $0x140] sm:$0xff]
    %v1891 = vld [vmem:[#allocation15 + $0x148] sm:$0xff]
    %v1892 = vld [vmem:[#allocation15 + $0x150] sm:$0xff]
    %v1893 = vld [vmem:[#allocation15 + $0x158] sm:$0xff]
    %v1894 = vld [vmem:[#allocation15 + $0x160] sm:$0xff]
    %v1895 = vld [vmem:[#allocation15 + $0x168] sm:$0xff]
    %v1896 = vld [vmem:[#allocation15 + $0x170] sm:$0xff]
    %v1897 = vld [vmem:[#allocation15 + $0x178] sm:$0xff]
    %v1898 = vld [vmem:[#allocation15 + $0x180] sm:$0xff]
    %v1899 = vld [vmem:[#allocation15 + $0x188] sm:$0xff]
    %v1900 = vld [vmem:[#allocation15 + $0x190] sm:$0xff]
    %v1901 = vld [vmem:[#allocation15 + $0x198] sm:$0xff]
    %v1902 = vld [vmem:[#allocation15 + $0x1a0] sm:$0xff]
    %v1903 = vld [vmem:[#allocation15 + $0x1a8] sm:$0xff]
    %v1904 = vld [vmem:[#allocation15 + $0x1b0] sm:$0xff]
    %v1905 = vld [vmem:[#allocation15 + $0x1b8] sm:$0xff]
    %v1906 = vld [vmem:[#allocation15 + $0x1c0] sm:$0xff]
    %v1907 = vld [vmem:[#allocation15 + $0x1c8] sm:$0xff]
    %v1908 = vld [vmem:[#allocation15 + $0x1d0] sm:$0xff]
    %v1909 = vld [vmem:[#allocation15 + $0x1d8] sm:$0xff]
    %v1910 = vld [vmem:[#allocation15 + $0x1e0] sm:$0xff]
    %v1911 = vld [vmem:[#allocation15 + $0x1e8] sm:$0xff]
    %v1912 = vld [vmem:[#allocation15 + $0x1f0] sm:$0xff]
    %v1913 = vld [vmem:[#allocation15 + $0x1f8] sm:$0xff]
    %1914 = vmatprep.subr.mxu0 %v1911
    %1915 = vmatpush1.msra.mxu0 %v1910
    %1916 = vmatprep.subr.mxu0 %v1907
    %1917 = vmatpush1.msra.mxu0 %v1906
    %1918 = vmatprep.subr.mxu0 %v1903
    %1919 = vmatpush1.msra.mxu0 %v1902
    %1920 = vmatprep.subr.mxu0 %v1899
    %1921 = vmatpush1.msra.mxu0 %v1898
    %1922 = vmatprep.subr.mxu0 %v1895
    %1923 = vmatpush1.msra.mxu0 %v1894
    %1924 = vmatprep.subr.mxu0 %v1891
    %1925 = vmatpush1.msra.mxu0 %v1890
    %1926 = vmatprep.subr.mxu0 %v1887
    %1927 = vmatpush1.msra.mxu0 %v1886
    %1928 = vmatprep.subr.mxu0 %v1883
    %1929 = vmatpush1.msra.mxu0 %v1882
    %1930 = vmatprep.subr.mxu0 %v1879
    %1931 = vmatpush1.msra.mxu0 %v1878
    %1932 = vmatprep.subr.mxu0 %v1875
    %1933 = vmatpush1.msra.mxu0 %v1874
    %1934 = vmatprep.subr.mxu0 %v1871
    %1935 = vmatpush1.msra.mxu0 %v1870
    %1936 = vmatprep.subr.mxu0 %v1867
    %1937 = vmatpush1.msra.mxu0 %v1866
    %1938 = vmatprep.subr.mxu0 %v1863
    %1939 = vmatpush1.msra.mxu0 %v1862
    %1940 = vmatprep.subr.mxu0 %v1859
    %1941 = vmatpush1.msra.mxu0 %v1858
    %1942 = vmatprep.subr.mxu0 %v1855
    %1943 = vmatpush1.msra.mxu0 %v1854
    %1944 = vmatprep.subr.mxu0 %v1851
    %1945 = vmatpush1.msra.mxu0 %v1850
    %1946 = vmatprep.subr.mxu0 0.0
    %1947 = vmatpush2.msra.mxu0 0.0
    %1948 = vmatprep.subr.mxu0 0.0
    %1949 = vmatpush2.msra.mxu0 0.0
    %1950 = vmatprep.subr.mxu0 0.0
    %1951 = vmatpush2.msra.mxu0 0.0
    %1952 = vmatprep.subr.mxu0 0.0
    %1953 = vmatpush2.msra.mxu0 0.0
    %1954 = vmatprep.subr.mxu0 0.0
    %1955 = vmatpush2.msra.mxu0 0.0
    %1956 = vmatprep.subr.mxu0 0.0
    %1957 = vmatpush2.msra.mxu0 0.0
    %1958 = vmatprep.subr.mxu0 0.0
    %1959 = vmatpush2.msra.mxu0 0.0
    %1960 = vmatprep.subr.mxu0 0.0
    %1961 = vmatpush2.msra.mxu0 0.0
    %1962 = vmatprep.subr.mxu0 0.0
    %1963 = vmatpush2.msra.mxu0 0.0
    %1964 = vmatprep.subr.mxu0 0.0
    %1965 = vmatpush2.msra.mxu0 0.0
    %1966 = vmatprep.subr.mxu0 0.0
    %1967 = vmatpush2.msra.mxu0 0.0
    %1968 = vmatprep.subr.mxu0 0.0
    %1969 = vmatpush2.msra.mxu0 0.0
    %1970 = vmatprep.subr.mxu0 0.0
    %1971 = vmatpush2.msra.mxu0 0.0
    %1972 = vmatprep.subr.mxu0 0.0
    %1973 = vmatpush2.msra.mxu0 0.0
    %1974 = vmatprep.subr.mxu0 0.0
    %1975 = vmatpush2.msra.mxu0 0.0
    %1976 = vmatprep.subr.mxu0 0.0
    %1977 = vmatpush2.msra.mxu0 0.0
    %1978 = vmatprep.mubr.f32.mxu0 0.0
    %1979 = vmatmul.mubr.f32.gmra.mxu0 %v1848
    %v1980 = vpop.f32.mrf.mxu0
    %v1981 = vadd.f32 0.0, %v1980
    %v1982 = vpop.f32.mrf.mxu0
    %v1983 = vadd.f32 0.0, %v1982
    %1984 = vdwg.mxu0
    %1985 = vmatprep.subr.mxu0 %v1913
    %1986 = vmatpush1.msra.mxu0 %v1912
    %1987 = vmatprep.subr.mxu0 %v1909
    %1988 = vmatpush1.msra.mxu0 %v1908
    %1989 = vmatprep.subr.mxu0 %v1905
    %1990 = vmatpush1.msra.mxu0 %v1904
    %1991 = vmatprep.subr.mxu0 %v1901
    %1992 = vmatpush1.msra.mxu0 %v1900
    %1993 = vmatprep.subr.mxu0 %v1897
    %1994 = vmatpush1.msra.mxu0 %v1896
    %1995 = vmatprep.subr.mxu0 %v1893
    %1996 = vmatpush1.msra.mxu0 %v1892
    %1997 = vmatprep.subr.mxu0 %v1889
    %1998 = vmatpush1.msra.mxu0 %v1888
    %1999 = vmatprep.subr.mxu0 %v1885
    %2000 = vmatpush1.msra.mxu0 %v1884
    %2001 = vmatprep.subr.mxu0 %v1881
    %2002 = vmatpush1.msra.mxu0 %v1880
    %2003 = vmatprep.subr.mxu0 %v1877
    %2004 = vmatpush1.msra.mxu0 %v1876
    %2005 = vmatprep.subr.mxu0 %v1873
    %2006 = vmatpush1.msra.mxu0 %v1872
    %2007 = vmatprep.subr.mxu0 %v1869
    %2008 = vmatpush1.msra.mxu0 %v1868
    %2009 = vmatprep.subr.mxu0 %v1865
    %2010 = vmatpush1.msra.mxu0 %v1864
    %2011 = vmatprep.subr.mxu0 %v1861
    %2012 = vmatpush1.msra.mxu0 %v1860
    %2013 = vmatprep.subr.mxu0 %v1857
    %2014 = vmatpush1.msra.mxu0 %v1856
    %2015 = vmatprep.subr.mxu0 %v1853
    %2016 = vmatpush1.msra.mxu0 %v1852
    %2017 = vmatprep.subr.mxu0 0.0
    %2018 = vmatpush2.msra.mxu0 0.0
    %2019 = vmatprep.subr.mxu0 0.0
    %2020 = vmatpush2.msra.mxu0 0.0
    %2021 = vmatprep.subr.mxu0 0.0
    %2022 = vmatpush2.msra.mxu0 0.0
    %2023 = vmatprep.subr.mxu0 0.0
    %2024 = vmatpush2.msra.mxu0 0.0
    %2025 = vmatprep.subr.mxu0 0.0
    %2026 = vmatpush2.msra.mxu0 0.0
    %2027 = vmatprep.subr.mxu0 0.0
    %2028 = vmatpush2.msra.mxu0 0.0
    %2029 = vmatprep.subr.mxu0 0.0
    %2030 = vmatpush2.msra.mxu0 0.0
    %2031 = vmatprep.subr.mxu0 0.0
    %2032 = vmatpush2.msra.mxu0 0.0
    %2033 = vmatprep.subr.mxu0 0.0
    %2034 = vmatpush2.msra.mxu0 0.0
    %2035 = vmatprep.subr.mxu0 0.0
    %2036 = vmatpush2.msra.mxu0 0.0
    %2037 = vmatprep.subr.mxu0 0.0
    %2038 = vmatpush2.msra.mxu0 0.0
    %2039 = vmatprep.subr.mxu0 0.0
    %2040 = vmatpush2.msra.mxu0 0.0
    %2041 = vmatprep.subr.mxu0 0.0
    %2042 = vmatpush2.msra.mxu0 0.0
    %2043 = vmatprep.subr.mxu0 0.0
    %2044 = vmatpush2.msra.mxu0 0.0
    %2045 = vmatprep.subr.mxu0 0.0
    %2046 = vmatpush2.msra.mxu0 0.0
    %2047 = vmatprep.subr.mxu0 0.0
    %2048 = vmatpush2.msra.mxu0 0.0
    %2049 = vmatprep.mubr.f32.mxu0 0.0
    %2050 = vmatmul.mubr.f32.gmra.mxu0 %v1848
    %v2051 = vpop.f32.mrf.mxu0
    %v2052 = vadd.f32 0.0, %v2051
    %v2053 = vpop.f32.mrf.mxu0
    %v2054 = vadd.f32 0.0, %v2053
    %2055 = vdwg.mxu0
    %v2056 = vadd.f32 %v1837, %v1981
    %v2057 = vadd.f32 %v1838, %v1983
    %v2058 = vadd.f32 %v1839, %v2052
    %v2059 = vadd.f32 %v1840, %v2054
    %v2060 = vxor.u32 %v2056, 2147483648
    %v2061 = vmul.f32 %v2060, 1.442695
    %v2062 = vpow.pop %v2061
    %v2063 = vadd.f32 %v2062, 1.0
    %v2064 = vrcp.pop %v2063
    %v2065 = vmul.f32 1.0, %v2064
    %v2066 = vxor.u32 %v2057, 2147483648
    %v2067 = vmul.f32 %v2066, 1.442695
    %v2068 = vpow.pop %v2067
    %v2069 = vadd.f32 %v2068, 1.0
    %v2070 = vrcp.pop %v2069
    %v2071 = vmul.f32 1.0, %v2070
    %v2072 = vtanh.pop %v2058
    %v2073 = vxor.u32 %v2059, 2147483648
    %v2074 = vmul.f32 %v2073, 1.442695
    %v2075 = vpow.pop %v2074
    %v2076 = vadd.f32 %v2075, 1.0
    %v2077 = vrcp.pop %v2076
    %v2078 = vmul.f32 1.0, %v2077
    %v2079 = vmul.f32 %v2071, %v1849
    %v2080 = vmul.f32 %v2065, %v2072
    %v2081 = vadd.f32 %v2079, %v2080
    %v2082 = vtanh.pop %v2081
    %v2083 = vmul.f32 %v2078, %v2082
    %v2084 = vld [vmem:[#allocation5] sm:$0xff]
    %v2085 = vld [vmem:[#allocation6] sm:$0xff]
    %v2086 = vld [vmem:[#allocation17] sm:$0xff]
    %v2087 = vld [vmem:[#allocation17 + $0x8] sm:$0xff]
    %v2088 = vld [vmem:[#allocation17 + $0x10] sm:$0xff]
    %v2089 = vld [vmem:[#allocation17 + $0x18] sm:$0xff]
    %v2090 = vld [vmem:[#allocation17 + $0x20] sm:$0xff]
    %v2091 = vld [vmem:[#allocation17 + $0x28] sm:$0xff]
    %v2092 = vld [vmem:[#allocation17 + $0x30] sm:$0xff]
    %v2093 = vld [vmem:[#allocation17 + $0x38] sm:$0xff]
    %v2094 = vld [vmem:[#allocation17 + $0x40] sm:$0xff]
    %v2095 = vld [vmem:[#allocation17 + $0x48] sm:$0xff]
    %v2096 = vld [vmem:[#allocation17 + $0x50] sm:$0xff]
    %v2097 = vld [vmem:[#allocation17 + $0x58] sm:$0xff]
    %v2098 = vld [vmem:[#allocation17 + $0x60] sm:$0xff]
    %v2099 = vld [vmem:[#allocation17 + $0x68] sm:$0xff]
    %v2100 = vld [vmem:[#allocation17 + $0x70] sm:$0xff]
    %v2101 = vld [vmem:[#allocation17 + $0x78] sm:$0xff]
    %v2102 = vld [vmem:[#allocation17 + $0x80] sm:$0xff]
    %v2103 = vld [vmem:[#allocation17 + $0x88] sm:$0xff]
    %v2104 = vld [vmem:[#allocation17 + $0x90] sm:$0xff]
    %v2105 = vld [vmem:[#allocation17 + $0x98] sm:$0xff]
    %v2106 = vld [vmem:[#allocation17 + $0xa0] sm:$0xff]
    %v2107 = vld [vmem:[#allocation17 + $0xa8] sm:$0xff]
    %v2108 = vld [vmem:[#allocation17 + $0xb0] sm:$0xff]
    %v2109 = vld [vmem:[#allocation17 + $0xb8] sm:$0xff]
    %v2110 = vld [vmem:[#allocation17 + $0xc0] sm:$0xff]
    %v2111 = vld [vmem:[#allocation17 + $0xc8] sm:$0xff]
    %v2112 = vld [vmem:[#allocation17 + $0xd0] sm:$0xff]
    %v2113 = vld [vmem:[#allocation17 + $0xd8] sm:$0xff]
    %v2114 = vld [vmem:[#allocation17 + $0xe0] sm:$0xff]
    %v2115 = vld [vmem:[#allocation17 + $0xe8] sm:$0xff]
    %v2116 = vld [vmem:[#allocation17 + $0xf0] sm:$0xff]
    %v2117 = vld [vmem:[#allocation17 + $0xf8] sm:$0xff]
    %v2118 = vld [vmem:[#allocation17 + $0x100] sm:$0xff]
    %v2119 = vld [vmem:[#allocation17 + $0x108] sm:$0xff]
    %v2120 = vld [vmem:[#allocation17 + $0x110] sm:$0xff]
    %v2121 = vld [vmem:[#allocation17 + $0x118] sm:$0xff]
    %v2122 = vld [vmem:[#allocation17 + $0x120] sm:$0xff]
    %v2123 = vld [vmem:[#allocation17 + $0x128] sm:$0xff]
    %v2124 = vld [vmem:[#allocation17 + $0x130] sm:$0xff]
    %v2125 = vld [vmem:[#allocation17 + $0x138] sm:$0xff]
    %v2126 = vld [vmem:[#allocation17 + $0x140] sm:$0xff]
    %v2127 = vld [vmem:[#allocation17 + $0x148] sm:$0xff]
    %v2128 = vld [vmem:[#allocation17 + $0x150] sm:$0xff]
    %v2129 = vld [vmem:[#allocation17 + $0x158] sm:$0xff]
    %v2130 = vld [vmem:[#allocation17 + $0x160] sm:$0xff]
    %v2131 = vld [vmem:[#allocation17 + $0x168] sm:$0xff]
    %v2132 = vld [vmem:[#allocation17 + $0x170] sm:$0xff]
    %v2133 = vld [vmem:[#allocation17 + $0x178] sm:$0xff]
    %v2134 = vld [vmem:[#allocation17 + $0x180] sm:$0xff]
    %v2135 = vld [vmem:[#allocation17 + $0x188] sm:$0xff]
    %v2136 = vld [vmem:[#allocation17 + $0x190] sm:$0xff]
    %v2137 = vld [vmem:[#allocation17 + $0x198] sm:$0xff]
    %v2138 = vld [vmem:[#allocation17 + $0x1a0] sm:$0xff]
    %v2139 = vld [vmem:[#allocation17 + $0x1a8] sm:$0xff]
    %v2140 = vld [vmem:[#allocation17 + $0x1b0] sm:$0xff]
    %v2141 = vld [vmem:[#allocation17 + $0x1b8] sm:$0xff]
    %v2142 = vld [vmem:[#allocation17 + $0x1c0] sm:$0xff]
    %v2143 = vld [vmem:[#allocation17 + $0x1c8] sm:$0xff]
    %v2144 = vld [vmem:[#allocation17 + $0x1d0] sm:$0xff]
    %v2145 = vld [vmem:[#allocation17 + $0x1d8] sm:$0xff]
    %v2146 = vld [vmem:[#allocation17 + $0x1e0] sm:$0xff]
    %v2147 = vld [vmem:[#allocation17 + $0x1e8] sm:$0xff]
    %v2148 = vld [vmem:[#allocation17 + $0x1f0] sm:$0xff]
    %v2149 = vld [vmem:[#allocation17 + $0x1f8] sm:$0xff]
    %2150 = vmatprep.subr.mxu0 %v2147
    %2151 = vmatpush1.msra.mxu0 %v2146
    %2152 = vmatprep.subr.mxu0 %v2143
    %2153 = vmatpush1.msra.mxu0 %v2142
    %2154 = vmatprep.subr.mxu0 %v2139
    %2155 = vmatpush1.msra.mxu0 %v2138
    %2156 = vmatprep.subr.mxu0 %v2135
    %2157 = vmatpush1.msra.mxu0 %v2134
    %2158 = vmatprep.subr.mxu0 %v2131
    %2159 = vmatpush1.msra.mxu0 %v2130
    %2160 = vmatprep.subr.mxu0 %v2127
    %2161 = vmatpush1.msra.mxu0 %v2126
    %2162 = vmatprep.subr.mxu0 %v2123
    %2163 = vmatpush1.msra.mxu0 %v2122
    %2164 = vmatprep.subr.mxu0 %v2119
    %2165 = vmatpush1.msra.mxu0 %v2118
    %2166 = vmatprep.subr.mxu0 %v2115
    %2167 = vmatpush1.msra.mxu0 %v2114
    %2168 = vmatprep.subr.mxu0 %v2111
    %2169 = vmatpush1.msra.mxu0 %v2110
    %2170 = vmatprep.subr.mxu0 %v2107
    %2171 = vmatpush1.msra.mxu0 %v2106
    %2172 = vmatprep.subr.mxu0 %v2103
    %2173 = vmatpush1.msra.mxu0 %v2102
    %2174 = vmatprep.subr.mxu0 %v2099
    %2175 = vmatpush1.msra.mxu0 %v2098
    %2176 = vmatprep.subr.mxu0 %v2095
    %2177 = vmatpush1.msra.mxu0 %v2094
    %2178 = vmatprep.subr.mxu0 %v2091
    %2179 = vmatpush1.msra.mxu0 %v2090
    %2180 = vmatprep.subr.mxu0 %v2087
    %2181 = vmatpush1.msra.mxu0 %v2086
    %2182 = vmatprep.subr.mxu0 0.0
    %2183 = vmatpush2.msra.mxu0 0.0
    %2184 = vmatprep.subr.mxu0 0.0
    %2185 = vmatpush2.msra.mxu0 0.0
    %2186 = vmatprep.subr.mxu0 0.0
    %2187 = vmatpush2.msra.mxu0 0.0
    %2188 = vmatprep.subr.mxu0 0.0
    %2189 = vmatpush2.msra.mxu0 0.0
    %2190 = vmatprep.subr.mxu0 0.0
    %2191 = vmatpush2.msra.mxu0 0.0
    %2192 = vmatprep.subr.mxu0 0.0
    %2193 = vmatpush2.msra.mxu0 0.0
    %2194 = vmatprep.subr.mxu0 0.0
    %2195 = vmatpush2.msra.mxu0 0.0
    %2196 = vmatprep.subr.mxu0 0.0
    %2197 = vmatpush2.msra.mxu0 0.0
    %2198 = vmatprep.subr.mxu0 0.0
    %2199 = vmatpush2.msra.mxu0 0.0
    %2200 = vmatprep.subr.mxu0 0.0
    %2201 = vmatpush2.msra.mxu0 0.0
    %2202 = vmatprep.subr.mxu0 0.0
    %2203 = vmatpush2.msra.mxu0 0.0
    %2204 = vmatprep.subr.mxu0 0.0
    %2205 = vmatpush2.msra.mxu0 0.0
    %2206 = vmatprep.subr.mxu0 0.0
    %2207 = vmatpush2.msra.mxu0 0.0
    %2208 = vmatprep.subr.mxu0 0.0
    %2209 = vmatpush2.msra.mxu0 0.0
    %2210 = vmatprep.subr.mxu0 0.0
    %2211 = vmatpush2.msra.mxu0 0.0
    %2212 = vmatprep.subr.mxu0 0.0
    %2213 = vmatpush2.msra.mxu0 0.0
    %2214 = vmatprep.mubr.f32.mxu0 0.0
    %2215 = vmatmul.mubr.f32.gmra.mxu0 %v2084
    %v2216 = vpop.f32.mrf.mxu0
    %v2217 = vadd.f32 0.0, %v2216
    %v2218 = vpop.f32.mrf.mxu0
    %v2219 = vadd.f32 0.0, %v2218
    %2220 = vdwg.mxu0
    %2221 = vmatprep.subr.mxu0 %v2149
    %2222 = vmatpush1.msra.mxu0 %v2148
    %2223 = vmatprep.subr.mxu0 %v2145
    %2224 = vmatpush1.msra.mxu0 %v2144
    %2225 = vmatprep.subr.mxu0 %v2141
    %2226 = vmatpush1.msra.mxu0 %v2140
    %2227 = vmatprep.subr.mxu0 %v2137
    %2228 = vmatpush1.msra.mxu0 %v2136
    %2229 = vmatprep.subr.mxu0 %v2133
    %2230 = vmatpush1.msra.mxu0 %v2132
    %2231 = vmatprep.subr.mxu0 %v2129
    %2232 = vmatpush1.msra.mxu0 %v2128
    %2233 = vmatprep.subr.mxu0 %v2125
    %2234 = vmatpush1.msra.mxu0 %v2124
    %2235 = vmatprep.subr.mxu0 %v2121
    %2236 = vmatpush1.msra.mxu0 %v2120
    %2237 = vmatprep.subr.mxu0 %v2117
    %2238 = vmatpush1.msra.mxu0 %v2116
    %2239 = vmatprep.subr.mxu0 %v2113
    %2240 = vmatpush1.msra.mxu0 %v2112
    %2241 = vmatprep.subr.mxu0 %v2109
    %2242 = vmatpush1.msra.mxu0 %v2108
    %2243 = vmatprep.subr.mxu0 %v2105
    %2244 = vmatpush1.msra.mxu0 %v2104
    %2245 = vmatprep.subr.mxu0 %v2101
    %2246 = vmatpush1.msra.mxu0 %v2100
    %2247 = vmatprep.subr.mxu0 %v2097
    %2248 = vmatpush1.msra.mxu0 %v2096
    %2249 = vmatprep.subr.mxu0 %v2093
    %2250 = vmatpush1.msra.mxu0 %v2092
    %2251 = vmatprep.subr.mxu0 %v2089
    %2252 = vmatpush1.msra.mxu0 %v2088
    %2253 = vmatprep.subr.mxu0 0.0
    %2254 = vmatpush2.msra.mxu0 0.0
    %2255 = vmatprep.subr.mxu0 0.0
    %2256 = vmatpush2.msra.mxu0 0.0
    %2257 = vmatprep.subr.mxu0 0.0
    %2258 = vmatpush2.msra.mxu0 0.0
    %2259 = vmatprep.subr.mxu0 0.0
    %2260 = vmatpush2.msra.mxu0 0.0
    %2261 = vmatprep.subr.mxu0 0.0
    %2262 = vmatpush2.msra.mxu0 0.0
    %2263 = vmatprep.subr.mxu0 0.0
    %2264 = vmatpush2.msra.mxu0 0.0
    %2265 = vmatprep.subr.mxu0 0.0
    %2266 = vmatpush2.msra.mxu0 0.0
    %2267 = vmatprep.subr.mxu0 0.0
    %2268 = vmatpush2.msra.mxu0 0.0
    %2269 = vmatprep.subr.mxu0 0.0
    %2270 = vmatpush2.msra.mxu0 0.0
    %2271 = vmatprep.subr.mxu0 0.0
    %2272 = vmatpush2.msra.mxu0 0.0
    %2273 = vmatprep.subr.mxu0 0.0
    %2274 = vmatpush2.msra.mxu0 0.0
    %2275 = vmatprep.subr.mxu0 0.0
    %2276 = vmatpush2.msra.mxu0 0.0
    %2277 = vmatprep.subr.mxu0 0.0
    %2278 = vmatpush2.msra.mxu0 0.0
    %2279 = vmatprep.subr.mxu0 0.0
    %2280 = vmatpush2.msra.mxu0 0.0
    %2281 = vmatprep.subr.mxu0 0.0
    %2282 = vmatpush2.msra.mxu0 0.0
    %2283 = vmatprep.subr.mxu0 0.0
    %2284 = vmatpush2.msra.mxu0 0.0
    %2285 = vmatprep.mubr.f32.mxu0 0.0
    %2286 = vmatmul.mubr.f32.gmra.mxu0 %v2084
    %v2287 = vpop.f32.mrf.mxu0
    %v2288 = vadd.f32 0.0, %v2287
    %v2289 = vpop.f32.mrf.mxu0
    %v2290 = vadd.f32 0.0, %v2289
    %2291 = vdwg.mxu0
    %v2292 = vadd.f32 %v1844, %v2217
    %v2293 = vadd.f32 %v1845, %v2219
    %v2294 = vadd.f32 %v1846, %v2288
    %v2295 = vadd.f32 %v1847, %v2290
    %v2296 = vxor.u32 %v2292, 2147483648
    %v2297 = vmul.f32 %v2296, 1.442695
    %v2298 = vpow.pop %v2297
    %v2299 = vadd.f32 %v2298, 1.0
    %v2300 = vrcp.pop %v2299
    %v2301 = vmul.f32 1.0, %v2300
    %v2302 = vxor.u32 %v2293, 2147483648
    %v2303 = vmul.f32 %v2302, 1.442695
    %v2304 = vpow.pop %v2303
    %v2305 = vadd.f32 %v2304, 1.0
    %v2306 = vrcp.pop %v2305
    %v2307 = vmul.f32 1.0, %v2306
    %v2308 = vtanh.pop %v2294
    %v2309 = vxor.u32 %v2295, 2147483648
    %v2310 = vmul.f32 %v2309, 1.442695
    %v2311 = vpow.pop %v2310
    %v2312 = vadd.f32 %v2311, 1.0
    %v2313 = vrcp.pop %v2312
    %v2314 = vmul.f32 1.0, %v2313
    %v2315 = vmul.f32 %v2307, %v2085
    %v2316 = vmul.f32 %v2301, %v2308
    %v2317 = vadd.f32 %v2315, %v2316
    %v2318 = vtanh.pop %v2317
    %v2319 = vmul.f32 %v2314, %v2318
    %2320 = vst [vmem:[#allocation3] sm:$0xff] %v2083
    %2321 = vst [vmem:[#allocation4] sm:$0xff] %v2081
    %2322 = vst [vmem:[#allocation5] sm:$0xff] %v2319
    %2323 = vst [vmem:[#allocation6] sm:$0xff] %v2317
    %s2324 = scalar_lea.vmem [#allocation7], 16
    %2325 = vst [vmem:[%s2324] sm:$0xff] %v2083
    %s2326 = scalar_lea.vmem [#allocation8], 40
    %2327 = vst [vmem:[%s2326] sm:$0xff] %v2319
    %s2328 = smul.u32 3, 8
    %s2329 = smul.addr %s2328, 8
    %s2330 = scalar_lea.vmem [#allocation2], %s2329
    %v2331 = vld [vmem:[%s2330] sm:$0xff]
    %v2332 = vld [vmem:[%s2330 + $0x8] sm:$0xff]
    %v2333 = vld [vmem:[%s2330 + $0x10] sm:$0xff]
    %v2334 = vld [vmem:[%s2330 + $0x18] sm:$0xff]
    %s2335 = smul.u32 4, 8
    %s2336 = smul.addr %s2335, 8
    %s2337 = scalar_lea.vmem [#allocation2], %s2336
    %v2338 = vld [vmem:[%s2337 + $0x20] sm:$0xff]
    %v2339 = vld [vmem:[%s2337 + $0x28] sm:$0xff]
    %v2340 = vld [vmem:[%s2337 + $0x30] sm:$0xff]
    %v2341 = vld [vmem:[%s2337 + $0x38] sm:$0xff]
    %v2342 = vld [vmem:[#allocation3] sm:$0xff]
    %v2343 = vld [vmem:[#allocation4] sm:$0xff]
    %v2344 = vld [vmem:[#allocation15] sm:$0xff]
    %v2345 = vld [vmem:[#allocation15 + $0x8] sm:$0xff]
    %v2346 = vld [vmem:[#allocation15 + $0x10] sm:$0xff]
    %v2347 = vld [vmem:[#allocation15 + $0x18] sm:$0xff]
    %v2348 = vld [vmem:[#allocation15 + $0x20] sm:$0xff]
    %v2349 = vld [vmem:[#allocation15 + $0x28] sm:$0xff]
    %v2350 = vld [vmem:[#allocation15 + $0x30] sm:$0xff]
    %v2351 = vld [vmem:[#allocation15 + $0x38] sm:$0xff]
    %v2352 = vld [vmem:[#allocation15 + $0x40] sm:$0xff]
    %v2353 = vld [vmem:[#allocation15 + $0x48] sm:$0xff]
    %v2354 = vld [vmem:[#allocation15 + $0x50] sm:$0xff]
    %v2355 = vld [vmem:[#allocation15 + $0x58] sm:$0xff]
    %v2356 = vld [vmem:[#allocation15 + $0x60] sm:$0xff]
    %v2357 = vld [vmem:[#allocation15 + $0x68] sm:$0xff]
    %v2358 = vld [vmem:[#allocation15 + $0x70] sm:$0xff]
    %v2359 = vld [vmem:[#allocation15 + $0x78] sm:$0xff]
    %v2360 = vld [vmem:[#allocation15 + $0x80] sm:$0xff]
    %v2361 = vld [vmem:[#allocation15 + $0x88] sm:$0xff]
    %v2362 = vld [vmem:[#allocation15 + $0x90] sm:$0xff]
    %v2363 = vld [vmem:[#allocation15 + $0x98] sm:$0xff]
    %v2364 = vld [vmem:[#allocation15 + $0xa0] sm:$0xff]
    %v2365 = vld [vmem:[#allocation15 + $0xa8] sm:$0xff]
    %v2366 = vld [vmem:[#allocation15 + $0xb0] sm:$0xff]
    %v2367 = vld [vmem:[#allocation15 + $0xb8] sm:$0xff]
    %v2368 = vld [vmem:[#allocation15 + $0xc0] sm:$0xff]
    %v2369 = vld [vmem:[#allocation15 + $0xc8] sm:$0xff]
    %v2370 = vld [vmem:[#allocation15 + $0xd0] sm:$0xff]
    %v2371 = vld [vmem:[#allocation15 + $0xd8] sm:$0xff]
    %v2372 = vld [vmem:[#allocation15 + $0xe0] sm:$0xff]
    %v2373 = vld [vmem:[#allocation15 + $0xe8] sm:$0xff]
    %v2374 = vld [vmem:[#allocation15 + $0xf0] sm:$0xff]
    %v2375 = vld [vmem:[#allocation15 + $0xf8] sm:$0xff]
    %v2376 = vld [vmem:[#allocation15 + $0x100] sm:$0xff]
    %v2377 = vld [vmem:[#allocation15 + $0x108] sm:$0xff]
    %v2378 = vld [vmem:[#allocation15 + $0x110] sm:$0xff]
    %v2379 = vld [vmem:[#allocation15 + $0x118] sm:$0xff]
    %v2380 = vld [vmem:[#allocation15 + $0x120] sm:$0xff]
    %v2381 = vld [vmem:[#allocation15 + $0x128] sm:$0xff]
    %v2382 = vld [vmem:[#allocation15 + $0x130] sm:$0xff]
    %v2383 = vld [vmem:[#allocation15 + $0x138] sm:$0xff]
    %v2384 = vld [vmem:[#allocation15 + $0x140] sm:$0xff]
    %v2385 = vld [vmem:[#allocation15 + $0x148] sm:$0xff]
    %v2386 = vld [vmem:[#allocation15 + $0x150] sm:$0xff]
    %v2387 = vld [vmem:[#allocation15 + $0x158] sm:$0xff]
    %v2388 = vld [vmem:[#allocation15 + $0x160] sm:$0xff]
    %v2389 = vld [vmem:[#allocation15 + $0x168] sm:$0xff]
    %v2390 = vld [vmem:[#allocation15 + $0x170] sm:$0xff]
    %v2391 = vld [vmem:[#allocation15 + $0x178] sm:$0xff]
    %v2392 = vld [vmem:[#allocation15 + $0x180] sm:$0xff]
    %v2393 = vld [vmem:[#allocation15 + $0x188] sm:$0xff]
    %v2394 = vld [vmem:[#allocation15 + $0x190] sm:$0xff]
    %v2395 = vld [vmem:[#allocation15 + $0x198] sm:$0xff]
    %v2396 = vld [vmem:[#allocation15 + $0x1a0] sm:$0xff]
    %v2397 = vld [vmem:[#allocation15 + $0x1a8] sm:$0xff]
    %v2398 = vld [vmem:[#allocation15 + $0x1b0] sm:$0xff]
    %v2399 = vld [vmem:[#allocation15 + $0x1b8] sm:$0xff]
    %v2400 = vld [vmem:[#allocation15 + $0x1c0] sm:$0xff]
    %v2401 = vld [vmem:[#allocation15 + $0x1c8] sm:$0xff]
    %v2402 = vld [vmem:[#allocation15 + $0x1d0] sm:$0xff]
    %v2403 = vld [vmem:[#allocation15 + $0x1d8] sm:$0xff]
    %v2404 = vld [vmem:[#allocation15 + $0x1e0] sm:$0xff]
    %v2405 = vld [vmem:[#allocation15 + $0x1e8] sm:$0xff]
    %v2406 = vld [vmem:[#allocation15 + $0x1f0] sm:$0xff]
    %v2407 = vld [vmem:[#allocation15 + $0x1f8] sm:$0xff]
    %2408 = vmatprep.subr.mxu0 %v2405
    %2409 = vmatpush1.msra.mxu0 %v2404
    %2410 = vmatprep.subr.mxu0 %v2401
    %2411 = vmatpush1.msra.mxu0 %v2400
    %2412 = vmatprep.subr.mxu0 %v2397
    %2413 = vmatpush1.msra.mxu0 %v2396
    %2414 = vmatprep.subr.mxu0 %v2393
    %2415 = vmatpush1.msra.mxu0 %v2392
    %2416 = vmatprep.subr.mxu0 %v2389
    %2417 = vmatpush1.msra.mxu0 %v2388
    %2418 = vmatprep.subr.mxu0 %v2385
    %2419 = vmatpush1.msra.mxu0 %v2384
    %2420 = vmatprep.subr.mxu0 %v2381
    %2421 = vmatpush1.msra.mxu0 %v2380
    %2422 = vmatprep.subr.mxu0 %v2377
    %2423 = vmatpush1.msra.mxu0 %v2376
    %2424 = vmatprep.subr.mxu0 %v2373
    %2425 = vmatpush1.msra.mxu0 %v2372
    %2426 = vmatprep.subr.mxu0 %v2369
    %2427 = vmatpush1.msra.mxu0 %v2368
    %2428 = vmatprep.subr.mxu0 %v2365
    %2429 = vmatpush1.msra.mxu0 %v2364
    %2430 = vmatprep.subr.mxu0 %v2361
    %2431 = vmatpush1.msra.mxu0 %v2360
    %2432 = vmatprep.subr.mxu0 %v2357
    %2433 = vmatpush1.msra.mxu0 %v2356
    %2434 = vmatprep.subr.mxu0 %v2353
    %2435 = vmatpush1.msra.mxu0 %v2352
    %2436 = vmatprep.subr.mxu0 %v2349
    %2437 = vmatpush1.msra.mxu0 %v2348
    %2438 = vmatprep.subr.mxu0 %v2345
    %2439 = vmatpush1.msra.mxu0 %v2344
    %2440 = vmatprep.subr.mxu0 0.0
    %2441 = vmatpush2.msra.mxu0 0.0
    %2442 = vmatprep.subr.mxu0 0.0
    %2443 = vmatpush2.msra.mxu0 0.0
    %2444 = vmatprep.subr.mxu0 0.0
    %2445 = vmatpush2.msra.mxu0 0.0
    %2446 = vmatprep.subr.mxu0 0.0
    %2447 = vmatpush2.msra.mxu0 0.0
    %2448 = vmatprep.subr.mxu0 0.0
    %2449 = vmatpush2.msra.mxu0 0.0
    %2450 = vmatprep.subr.mxu0 0.0
    %2451 = vmatpush2.msra.mxu0 0.0
    %2452 = vmatprep.subr.mxu0 0.0
    %2453 = vmatpush2.msra.mxu0 0.0
    %2454 = vmatprep.subr.mxu0 0.0
    %2455 = vmatpush2.msra.mxu0 0.0
    %2456 = vmatprep.subr.mxu0 0.0
    %2457 = vmatpush2.msra.mxu0 0.0
    %2458 = vmatprep.subr.mxu0 0.0
    %2459 = vmatpush2.msra.mxu0 0.0
    %2460 = vmatprep.subr.mxu0 0.0
    %2461 = vmatpush2.msra.mxu0 0.0
    %2462 = vmatprep.subr.mxu0 0.0
    %2463 = vmatpush2.msra.mxu0 0.0
    %2464 = vmatprep.subr.mxu0 0.0
    %2465 = vmatpush2.msra.mxu0 0.0
    %2466 = vmatprep.subr.mxu0 0.0
    %2467 = vmatpush2.msra.mxu0 0.0
    %2468 = vmatprep.subr.mxu0 0.0
    %2469 = vmatpush2.msra.mxu0 0.0
    %2470 = vmatprep.subr.mxu0 0.0
    %2471 = vmatpush2.msra.mxu0 0.0
    %2472 = vmatprep.mubr.f32.mxu0 0.0
    %2473 = vmatmul.mubr.f32.gmra.mxu0 %v2342
    %v2474 = vpop.f32.mrf.mxu0
    %v2475 = vadd.f32 0.0, %v2474
    %v2476 = vpop.f32.mrf.mxu0
    %v2477 = vadd.f32 0.0, %v2476
    %2478 = vdwg.mxu0
    %2479 = vmatprep.subr.mxu0 %v2407
    %2480 = vmatpush1.msra.mxu0 %v2406
    %2481 = vmatprep.subr.mxu0 %v2403
    %2482 = vmatpush1.msra.mxu0 %v2402
    %2483 = vmatprep.subr.mxu0 %v2399
    %2484 = vmatpush1.msra.mxu0 %v2398
    %2485 = vmatprep.subr.mxu0 %v2395
    %2486 = vmatpush1.msra.mxu0 %v2394
    %2487 = vmatprep.subr.mxu0 %v2391
    %2488 = vmatpush1.msra.mxu0 %v2390
    %2489 = vmatprep.subr.mxu0 %v2387
    %2490 = vmatpush1.msra.mxu0 %v2386
    %2491 = vmatprep.subr.mxu0 %v2383
    %2492 = vmatpush1.msra.mxu0 %v2382
    %2493 = vmatprep.subr.mxu0 %v2379
    %2494 = vmatpush1.msra.mxu0 %v2378
    %2495 = vmatprep.subr.mxu0 %v2375
    %2496 = vmatpush1.msra.mxu0 %v2374
    %2497 = vmatprep.subr.mxu0 %v2371
    %2498 = vmatpush1.msra.mxu0 %v2370
    %2499 = vmatprep.subr.mxu0 %v2367
    %2500 = vmatpush1.msra.mxu0 %v2366
    %2501 = vmatprep.subr.mxu0 %v2363
    %2502 = vmatpush1.msra.mxu0 %v2362
    %2503 = vmatprep.subr.mxu0 %v2359
    %2504 = vmatpush1.msra.mxu0 %v2358
    %2505 = vmatprep.subr.mxu0 %v2355
    %2506 = vmatpush1.msra.mxu0 %v2354
    %2507 = vmatprep.subr.mxu0 %v2351
    %2508 = vmatpush1.msra.mxu0 %v2350
    %2509 = vmatprep.subr.mxu0 %v2347
    %2510 = vmatpush1.msra.mxu0 %v2346
    %2511 = vmatprep.subr.mxu0 0.0
    %2512 = vmatpush2.msra.mxu0 0.0
    %2513 = vmatprep.subr.mxu0 0.0
    %2514 = vmatpush2.msra.mxu0 0.0
    %2515 = vmatprep.subr.mxu0 0.0
    %2516 = vmatpush2.msra.mxu0 0.0
    %2517 = vmatprep.subr.mxu0 0.0
    %2518 = vmatpush2.msra.mxu0 0.0
    %2519 = vmatprep.subr.mxu0 0.0
    %2520 = vmatpush2.msra.mxu0 0.0
    %2521 = vmatprep.subr.mxu0 0.0
    %2522 = vmatpush2.msra.mxu0 0.0
    %2523 = vmatprep.subr.mxu0 0.0
    %2524 = vmatpush2.msra.mxu0 0.0
    %2525 = vmatprep.subr.mxu0 0.0
    %2526 = vmatpush2.msra.mxu0 0.0
    %2527 = vmatprep.subr.mxu0 0.0
    %2528 = vmatpush2.msra.mxu0 0.0
    %2529 = vmatprep.subr.mxu0 0.0
    %2530 = vmatpush2.msra.mxu0 0.0
    %2531 = vmatprep.subr.mxu0 0.0
    %2532 = vmatpush2.msra.mxu0 0.0
    %2533 = vmatprep.subr.mxu0 0.0
    %2534 = vmatpush2.msra.mxu0 0.0
    %2535 = vmatprep.subr.mxu0 0.0
    %2536 = vmatpush2.msra.mxu0 0.0
    %2537 = vmatprep.subr.mxu0 0.0
    %2538 = vmatpush2.msra.mxu0 0.0
    %2539 = vmatprep.subr.mxu0 0.0
    %2540 = vmatpush2.msra.mxu0 0.0
    %2541 = vmatprep.subr.mxu0 0.0
    %2542 = vmatpush2.msra.mxu0 0.0
    %2543 = vmatprep.mubr.f32.mxu0 0.0
    %2544 = vmatmul.mubr.f32.gmra.mxu0 %v2342
    %v2545 = vpop.f32.mrf.mxu0
    %v2546 = vadd.f32 0.0, %v2545
    %v2547 = vpop.f32.mrf.mxu0
    %v2548 = vadd.f32 0.0, %v2547
    %2549 = vdwg.mxu0
    %v2550 = vadd.f32 %v2331, %v2475
    %v2551 = vadd.f32 %v2332, %v2477
    %v2552 = vadd.f32 %v2333, %v2546
    %v2553 = vadd.f32 %v2334, %v2548
    %v2554 = vxor.u32 %v2550, 2147483648
    %v2555 = vmul.f32 %v2554, 1.442695
    %v2556 = vpow.pop %v2555
    %v2557 = vadd.f32 %v2556, 1.0
    %v2558 = vrcp.pop %v2557
    %v2559 = vmul.f32 1.0, %v2558
    %v2560 = vxor.u32 %v2551, 2147483648
    %v2561 = vmul.f32 %v2560, 1.442695
    %v2562 = vpow.pop %v2561
    %v2563 = vadd.f32 %v2562, 1.0
    %v2564 = vrcp.pop %v2563
    %v2565 = vmul.f32 1.0, %v2564
    %v2566 = vtanh.pop %v2552
    %v2567 = vxor.u32 %v2553, 2147483648
    %v2568 = vmul.f32 %v2567, 1.442695
    %v2569 = vpow.pop %v2568
    %v2570 = vadd.f32 %v2569, 1.0
    %v2571 = vrcp.pop %v2570
    %v2572 = vmul.f32 1.0, %v2571
    %v2573 = vmul.f32 %v2565, %v2343
    %v2574 = vmul.f32 %v2559, %v2566
    %v2575 = vadd.f32 %v2573, %v2574
    %v2576 = vtanh.pop %v2575
    %v2577 = vmul.f32 %v2572, %v2576
    %v2578 = vld [vmem:[#allocation5] sm:$0xff]
    %v2579 = vld [vmem:[#allocation6] sm:$0xff]
    %v2580 = vld [vmem:[#allocation17] sm:$0xff]
    %v2581 = vld [vmem:[#allocation17 + $0x8] sm:$0xff]
    %v2582 = vld [vmem:[#allocation17 + $0x10] sm:$0xff]
    %v2583 = vld [vmem:[#allocation17 + $0x18] sm:$0xff]
    %v2584 = vld [vmem:[#allocation17 + $0x20] sm:$0xff]
    %v2585 = vld [vmem:[#allocation17 + $0x28] sm:$0xff]
    %v2586 = vld [vmem:[#allocation17 + $0x30] sm:$0xff]
    %v2587 = vld [vmem:[#allocation17 + $0x38] sm:$0xff]
    %v2588 = vld [vmem:[#allocation17 + $0x40] sm:$0xff]
    %v2589 = vld [vmem:[#allocation17 + $0x48] sm:$0xff]
    %v2590 = vld [vmem:[#allocation17 + $0x50] sm:$0xff]
    %v2591 = vld [vmem:[#allocation17 + $0x58] sm:$0xff]
    %v2592 = vld [vmem:[#allocation17 + $0x60] sm:$0xff]
    %v2593 = vld [vmem:[#allocation17 + $0x68] sm:$0xff]
    %v2594 = vld [vmem:[#allocation17 + $0x70] sm:$0xff]
    %v2595 = vld [vmem:[#allocation17 + $0x78] sm:$0xff]
    %v2596 = vld [vmem:[#allocation17 + $0x80] sm:$0xff]
    %v2597 = vld [vmem:[#allocation17 + $0x88] sm:$0xff]
    %v2598 = vld [vmem:[#allocation17 + $0x90] sm:$0xff]
    %v2599 = vld [vmem:[#allocation17 + $0x98] sm:$0xff]
    %v2600 = vld [vmem:[#allocation17 + $0xa0] sm:$0xff]
    %v2601 = vld [vmem:[#allocation17 + $0xa8] sm:$0xff]
    %v2602 = vld [vmem:[#allocation17 + $0xb0] sm:$0xff]
    %v2603 = vld [vmem:[#allocation17 + $0xb8] sm:$0xff]
    %v2604 = vld [vmem:[#allocation17 + $0xc0] sm:$0xff]
    %v2605 = vld [vmem:[#allocation17 + $0xc8] sm:$0xff]
    %v2606 = vld [vmem:[#allocation17 + $0xd0] sm:$0xff]
    %v2607 = vld [vmem:[#allocation17 + $0xd8] sm:$0xff]
    %v2608 = vld [vmem:[#allocation17 + $0xe0] sm:$0xff]
    %v2609 = vld [vmem:[#allocation17 + $0xe8] sm:$0xff]
    %v2610 = vld [vmem:[#allocation17 + $0xf0] sm:$0xff]
    %v2611 = vld [vmem:[#allocation17 + $0xf8] sm:$0xff]
    %v2612 = vld [vmem:[#allocation17 + $0x100] sm:$0xff]
    %v2613 = vld [vmem:[#allocation17 + $0x108] sm:$0xff]
    %v2614 = vld [vmem:[#allocation17 + $0x110] sm:$0xff]
    %v2615 = vld [vmem:[#allocation17 + $0x118] sm:$0xff]
    %v2616 = vld [vmem:[#allocation17 + $0x120] sm:$0xff]
    %v2617 = vld [vmem:[#allocation17 + $0x128] sm:$0xff]
    %v2618 = vld [vmem:[#allocation17 + $0x130] sm:$0xff]
    %v2619 = vld [vmem:[#allocation17 + $0x138] sm:$0xff]
    %v2620 = vld [vmem:[#allocation17 + $0x140] sm:$0xff]
    %v2621 = vld [vmem:[#allocation17 + $0x148] sm:$0xff]
    %v2622 = vld [vmem:[#allocation17 + $0x150] sm:$0xff]
    %v2623 = vld [vmem:[#allocation17 + $0x158] sm:$0xff]
    %v2624 = vld [vmem:[#allocation17 + $0x160] sm:$0xff]
    %v2625 = vld [vmem:[#allocation17 + $0x168] sm:$0xff]
    %v2626 = vld [vmem:[#allocation17 + $0x170] sm:$0xff]
    %v2627 = vld [vmem:[#allocation17 + $0x178] sm:$0xff]
    %v2628 = vld [vmem:[#allocation17 + $0x180] sm:$0xff]
    %v2629 = vld [vmem:[#allocation17 + $0x188] sm:$0xff]
    %v2630 = vld [vmem:[#allocation17 + $0x190] sm:$0xff]
    %v2631 = vld [vmem:[#allocation17 + $0x198] sm:$0xff]
    %v2632 = vld [vmem:[#allocation17 + $0x1a0] sm:$0xff]
    %v2633 = vld [vmem:[#allocation17 + $0x1a8] sm:$0xff]
    %v2634 = vld [vmem:[#allocation17 + $0x1b0] sm:$0xff]
    %v2635 = vld [vmem:[#allocation17 + $0x1b8] sm:$0xff]
    %v2636 = vld [vmem:[#allocation17 + $0x1c0] sm:$0xff]
    %v2637 = vld [vmem:[#allocation17 + $0x1c8] sm:$0xff]
    %v2638 = vld [vmem:[#allocation17 + $0x1d0] sm:$0xff]
    %v2639 = vld [vmem:[#allocation17 + $0x1d8] sm:$0xff]
    %v2640 = vld [vmem:[#allocation17 + $0x1e0] sm:$0xff]
    %v2641 = vld [vmem:[#allocation17 + $0x1e8] sm:$0xff]
    %v2642 = vld [vmem:[#allocation17 + $0x1f0] sm:$0xff]
    %v2643 = vld [vmem:[#allocation17 + $0x1f8] sm:$0xff]
    %2644 = vmatprep.subr.mxu0 %v2641
    %2645 = vmatpush1.msra.mxu0 %v2640
    %2646 = vmatprep.subr.mxu0 %v2637
    %2647 = vmatpush1.msra.mxu0 %v2636
    %2648 = vmatprep.subr.mxu0 %v2633
    %2649 = vmatpush1.msra.mxu0 %v2632
    %2650 = vmatprep.subr.mxu0 %v2629
    %2651 = vmatpush1.msra.mxu0 %v2628
    %2652 = vmatprep.subr.mxu0 %v2625
    %2653 = vmatpush1.msra.mxu0 %v2624
    %2654 = vmatprep.subr.mxu0 %v2621
    %2655 = vmatpush1.msra.mxu0 %v2620
    %2656 = vmatprep.subr.mxu0 %v2617
    %2657 = vmatpush1.msra.mxu0 %v2616
    %2658 = vmatprep.subr.mxu0 %v2613
    %2659 = vmatpush1.msra.mxu0 %v2612
    %2660 = vmatprep.subr.mxu0 %v2609
    %2661 = vmatpush1.msra.mxu0 %v2608
    %2662 = vmatprep.subr.mxu0 %v2605
    %2663 = vmatpush1.msra.mxu0 %v2604
    %2664 = vmatprep.subr.mxu0 %v2601
    %2665 = vmatpush1.msra.mxu0 %v2600
    %2666 = vmatprep.subr.mxu0 %v2597
    %2667 = vmatpush1.msra.mxu0 %v2596
    %2668 = vmatprep.subr.mxu0 %v2593
    %2669 = vmatpush1.msra.mxu0 %v2592
    %2670 = vmatprep.subr.mxu0 %v2589
    %2671 = vmatpush1.msra.mxu0 %v2588
    %2672 = vmatprep.subr.mxu0 %v2585
    %2673 = vmatpush1.msra.mxu0 %v2584
    %2674 = vmatprep.subr.mxu0 %v2581
    %2675 = vmatpush1.msra.mxu0 %v2580
    %2676 = vmatprep.subr.mxu0 0.0
    %2677 = vmatpush2.msra.mxu0 0.0
    %2678 = vmatprep.subr.mxu0 0.0
    %2679 = vmatpush2.msra.mxu0 0.0
    %2680 = vmatprep.subr.mxu0 0.0
    %2681 = vmatpush2.msra.mxu0 0.0
    %2682 = vmatprep.subr.mxu0 0.0
    %2683 = vmatpush2.msra.mxu0 0.0
    %2684 = vmatprep.subr.mxu0 0.0
    %2685 = vmatpush2.msra.mxu0 0.0
    %2686 = vmatprep.subr.mxu0 0.0
    %2687 = vmatpush2.msra.mxu0 0.0
    %2688 = vmatprep.subr.mxu0 0.0
    %2689 = vmatpush2.msra.mxu0 0.0
    %2690 = vmatprep.subr.mxu0 0.0
    %2691 = vmatpush2.msra.mxu0 0.0
    %2692 = vmatprep.subr.mxu0 0.0
    %2693 = vmatpush2.msra.mxu0 0.0
    %2694 = vmatprep.subr.mxu0 0.0
    %2695 = vmatpush2.msra.mxu0 0.0
    %2696 = vmatprep.subr.mxu0 0.0
    %2697 = vmatpush2.msra.mxu0 0.0
    %2698 = vmatprep.subr.mxu0 0.0
    %2699 = vmatpush2.msra.mxu0 0.0
    %2700 = vmatprep.subr.mxu0 0.0
    %2701 = vmatpush2.msra.mxu0 0.0
    %2702 = vmatprep.subr.mxu0 0.0
    %2703 = vmatpush2.msra.mxu0 0.0
    %2704 = vmatprep.subr.mxu0 0.0
    %2705 = vmatpush2.msra.mxu0 0.0
    %2706 = vmatprep.subr.mxu0 0.0
    %2707 = vmatpush2.msra.mxu0 0.0
    %2708 = vmatprep.mubr.f32.mxu0 0.0
    %2709 = vmatmul.mubr.f32.gmra.mxu0 %v2578
    %v2710 = vpop.f32.mrf.mxu0
    %v2711 = vadd.f32 0.0, %v2710
    %v2712 = vpop.f32.mrf.mxu0
    %v2713 = vadd.f32 0.0, %v2712
    %2714 = vdwg.mxu0
    %2715 = vmatprep.subr.mxu0 %v2643
    %2716 = vmatpush1.msra.mxu0 %v2642
    %2717 = vmatprep.subr.mxu0 %v2639
    %2718 = vmatpush1.msra.mxu0 %v2638
    %2719 = vmatprep.subr.mxu0 %v2635
    %2720 = vmatpush1.msra.mxu0 %v2634
    %2721 = vmatprep.subr.mxu0 %v2631
    %2722 = vmatpush1.msra.mxu0 %v2630
    %2723 = vmatprep.subr.mxu0 %v2627
    %2724 = vmatpush1.msra.mxu0 %v2626
    %2725 = vmatprep.subr.mxu0 %v2623
    %2726 = vmatpush1.msra.mxu0 %v2622
    %2727 = vmatprep.subr.mxu0 %v2619
    %2728 = vmatpush1.msra.mxu0 %v2618
    %2729 = vmatprep.subr.mxu0 %v2615
    %2730 = vmatpush1.msra.mxu0 %v2614
    %2731 = vmatprep.subr.mxu0 %v2611
    %2732 = vmatpush1.msra.mxu0 %v2610
    %2733 = vmatprep.subr.mxu0 %v2607
    %2734 = vmatpush1.msra.mxu0 %v2606
    %2735 = vmatprep.subr.mxu0 %v2603
    %2736 = vmatpush1.msra.mxu0 %v2602
    %2737 = vmatprep.subr.mxu0 %v2599
    %2738 = vmatpush1.msra.mxu0 %v2598
    %2739 = vmatprep.subr.mxu0 %v2595
    %2740 = vmatpush1.msra.mxu0 %v2594
    %2741 = vmatprep.subr.mxu0 %v2591
    %2742 = vmatpush1.msra.mxu0 %v2590
    %2743 = vmatprep.subr.mxu0 %v2587
    %2744 = vmatpush1.msra.mxu0 %v2586
    %2745 = vmatprep.subr.mxu0 %v2583
    %2746 = vmatpush1.msra.mxu0 %v2582
    %2747 = vmatprep.subr.mxu0 0.0
    %2748 = vmatpush2.msra.mxu0 0.0
    %2749 = vmatprep.subr.mxu0 0.0
    %2750 = vmatpush2.msra.mxu0 0.0
    %2751 = vmatprep.subr.mxu0 0.0
    %2752 = vmatpush2.msra.mxu0 0.0
    %2753 = vmatprep.subr.mxu0 0.0
    %2754 = vmatpush2.msra.mxu0 0.0
    %2755 = vmatprep.subr.mxu0 0.0
    %2756 = vmatpush2.msra.mxu0 0.0
    %2757 = vmatprep.subr.mxu0 0.0
    %2758 = vmatpush2.msra.mxu0 0.0
    %2759 = vmatprep.subr.mxu0 0.0
    %2760 = vmatpush2.msra.mxu0 0.0
    %2761 = vmatprep.subr.mxu0 0.0
    %2762 = vmatpush2.msra.mxu0 0.0
    %2763 = vmatprep.subr.mxu0 0.0
    %2764 = vmatpush2.msra.mxu0 0.0
    %2765 = vmatprep.subr.mxu0 0.0
    %2766 = vmatpush2.msra.mxu0 0.0
    %2767 = vmatprep.subr.mxu0 0.0
    %2768 = vmatpush2.msra.mxu0 0.0
    %2769 = vmatprep.subr.mxu0 0.0
    %2770 = vmatpush2.msra.mxu0 0.0
    %2771 = vmatprep.subr.mxu0 0.0
    %2772 = vmatpush2.msra.mxu0 0.0
    %2773 = vmatprep.subr.mxu0 0.0
    %2774 = vmatpush2.msra.mxu0 0.0
    %2775 = vmatprep.subr.mxu0 0.0
    %2776 = vmatpush2.msra.mxu0 0.0
    %2777 = vmatprep.subr.mxu0 0.0
    %2778 = vmatpush2.msra.mxu0 0.0
    %2779 = vmatprep.mubr.f32.mxu0 0.0
    %2780 = vmatmul.mubr.f32.gmra.mxu0 %v2578
    %v2781 = vpop.f32.mrf.mxu0
    %v2782 = vadd.f32 0.0, %v2781
    %v2783 = vpop.f32.mrf.mxu0
    %v2784 = vadd.f32 0.0, %v2783
    %2785 = vdwg.mxu0
    %v2786 = vadd.f32 %v2338, %v2711
    %v2787 = vadd.f32 %v2339, %v2713
    %v2788 = vadd.f32 %v2340, %v2782
    %v2789 = vadd.f32 %v2341, %v2784
    %v2790 = vxor.u32 %v2786, 2147483648
    %v2791 = vmul.f32 %v2790, 1.442695
    %v2792 = vpow.pop %v2791
    %v2793 = vadd.f32 %v2792, 1.0
    %v2794 = vrcp.pop %v2793
    %v2795 = vmul.f32 1.0, %v2794
    %v2796 = vxor.u32 %v2787, 2147483648
    %v2797 = vmul.f32 %v2796, 1.442695
    %v2798 = vpow.pop %v2797
    %v2799 = vadd.f32 %v2798, 1.0
    %v2800 = vrcp.pop %v2799
    %v2801 = vmul.f32 1.0, %v2800
    %v2802 = vtanh.pop %v2788
    %v2803 = vxor.u32 %v2789, 2147483648
    %v2804 = vmul.f32 %v2803, 1.442695
    %v2805 = vpow.pop %v2804
    %v2806 = vadd.f32 %v2805, 1.0
    %v2807 = vrcp.pop %v2806
    %v2808 = vmul.f32 1.0, %v2807
    %v2809 = vmul.f32 %v2801, %v2579
    %v2810 = vmul.f32 %v2795, %v2802
    %v2811 = vadd.f32 %v2809, %v2810
    %v2812 = vtanh.pop %v2811
    %v2813 = vmul.f32 %v2808, %v2812
    %2814 = vst [vmem:[#allocation3] sm:$0xff] %v2577
    %2815 = vst [vmem:[#allocation4] sm:$0xff] %v2575
    %2816 = vst [vmem:[#allocation5] sm:$0xff] %v2813
    %2817 = vst [vmem:[#allocation6] sm:$0xff] %v2811
    %s2818 = scalar_lea.vmem [#allocation7], 24
    %2819 = vst [vmem:[%s2818] sm:$0xff] %v2577
    %s2820 = scalar_lea.vmem [#allocation8], 32
    %2821 = vst [vmem:[%s2820] sm:$0xff] %v2813
    %v2822 = vld [vmem:[%s2337] sm:$0xff]
    %v2823 = vld [vmem:[%s2337 + $0x8] sm:$0xff]
    %v2824 = vld [vmem:[%s2337 + $0x10] sm:$0xff]
    %v2825 = vld [vmem:[%s2337 + $0x18] sm:$0xff]
    %v2826 = vld [vmem:[%s2330 + $0x20] sm:$0xff]
    %v2827 = vld [vmem:[%s2330 + $0x28] sm:$0xff]
    %v2828 = vld [vmem:[%s2330 + $0x30] sm:$0xff]
    %v2829 = vld [vmem:[%s2330 + $0x38] sm:$0xff]
    %v2830 = vld [vmem:[#allocation3] sm:$0xff]
    %v2831 = vld [vmem:[#allocation4] sm:$0xff]
    %v2832 = vld [vmem:[#allocation15] sm:$0xff]
    %v2833 = vld [vmem:[#allocation15 + $0x8] sm:$0xff]
    %v2834 = vld [vmem:[#allocation15 + $0x10] sm:$0xff]
    %v2835 = vld [vmem:[#allocation15 + $0x18] sm:$0xff]
    %v2836 = vld [vmem:[#allocation15 + $0x20] sm:$0xff]
    %v2837 = vld [vmem:[#allocation15 + $0x28] sm:$0xff]
    %v2838 = vld [vmem:[#allocation15 + $0x30] sm:$0xff]
    %v2839 = vld [vmem:[#allocation15 + $0x38] sm:$0xff]
    %v2840 = vld [vmem:[#allocation15 + $0x40] sm:$0xff]
    %v2841 = vld [vmem:[#allocation15 + $0x48] sm:$0xff]
    %v2842 = vld [vmem:[#allocation15 + $0x50] sm:$0xff]
    %v2843 = vld [vmem:[#allocation15 + $0x58] sm:$0xff]
    %v2844 = vld [vmem:[#allocation15 + $0x60] sm:$0xff]
    %v2845 = vld [vmem:[#allocation15 + $0x68] sm:$0xff]
    %v2846 = vld [vmem:[#allocation15 + $0x70] sm:$0xff]
    %v2847 = vld [vmem:[#allocation15 + $0x78] sm:$0xff]
    %v2848 = vld [vmem:[#allocation15 + $0x80] sm:$0xff]
    %v2849 = vld [vmem:[#allocation15 + $0x88] sm:$0xff]
    %v2850 = vld [vmem:[#allocation15 + $0x90] sm:$0xff]
    %v2851 = vld [vmem:[#allocation15 + $0x98] sm:$0xff]
    %v2852 = vld [vmem:[#allocation15 + $0xa0] sm:$0xff]
    %v2853 = vld [vmem:[#allocation15 + $0xa8] sm:$0xff]
    %v2854 = vld [vmem:[#allocation15 + $0xb0] sm:$0xff]
    %v2855 = vld [vmem:[#allocation15 + $0xb8] sm:$0xff]
    %v2856 = vld [vmem:[#allocation15 + $0xc0] sm:$0xff]
    %v2857 = vld [vmem:[#allocation15 + $0xc8] sm:$0xff]
    %v2858 = vld [vmem:[#allocation15 + $0xd0] sm:$0xff]
    %v2859 = vld [vmem:[#allocation15 + $0xd8] sm:$0xff]
    %v2860 = vld [vmem:[#allocation15 + $0xe0] sm:$0xff]
    %v2861 = vld [vmem:[#allocation15 + $0xe8] sm:$0xff]
    %v2862 = vld [vmem:[#allocation15 + $0xf0] sm:$0xff]
    %v2863 = vld [vmem:[#allocation15 + $0xf8] sm:$0xff]
    %v2864 = vld [vmem:[#allocation15 + $0x100] sm:$0xff]
    %v2865 = vld [vmem:[#allocation15 + $0x108] sm:$0xff]
    %v2866 = vld [vmem:[#allocation15 + $0x110] sm:$0xff]
    %v2867 = vld [vmem:[#allocation15 + $0x118] sm:$0xff]
    %v2868 = vld [vmem:[#allocation15 + $0x120] sm:$0xff]
    %v2869 = vld [vmem:[#allocation15 + $0x128] sm:$0xff]
    %v2870 = vld [vmem:[#allocation15 + $0x130] sm:$0xff]
    %v2871 = vld [vmem:[#allocation15 + $0x138] sm:$0xff]
    %v2872 = vld [vmem:[#allocation15 + $0x140] sm:$0xff]
    %v2873 = vld [vmem:[#allocation15 + $0x148] sm:$0xff]
    %v2874 = vld [vmem:[#allocation15 + $0x150] sm:$0xff]
    %v2875 = vld [vmem:[#allocation15 + $0x158] sm:$0xff]
    %v2876 = vld [vmem:[#allocation15 + $0x160] sm:$0xff]
    %v2877 = vld [vmem:[#allocation15 + $0x168] sm:$0xff]
    %v2878 = vld [vmem:[#allocation15 + $0x170] sm:$0xff]
    %v2879 = vld [vmem:[#allocation15 + $0x178] sm:$0xff]
    %v2880 = vld [vmem:[#allocation15 + $0x180] sm:$0xff]
    %v2881 = vld [vmem:[#allocation15 + $0x188] sm:$0xff]
    %v2882 = vld [vmem:[#allocation15 + $0x190] sm:$0xff]
    %v2883 = vld [vmem:[#allocation15 + $0x198] sm:$0xff]
    %v2884 = vld [vmem:[#allocation15 + $0x1a0] sm:$0xff]
    %v2885 = vld [vmem:[#allocation15 + $0x1a8] sm:$0xff]
    %v2886 = vld [vmem:[#allocation15 + $0x1b0] sm:$0xff]
    %v2887 = vld [vmem:[#allocation15 + $0x1b8] sm:$0xff]
    %v2888 = vld [vmem:[#allocation15 + $0x1c0] sm:$0xff]
    %v2889 = vld [vmem:[#allocation15 + $0x1c8] sm:$0xff]
    %v2890 = vld [vmem:[#allocation15 + $0x1d0] sm:$0xff]
    %v2891 = vld [vmem:[#allocation15 + $0x1d8] sm:$0xff]
    %v2892 = vld [vmem:[#allocation15 + $0x1e0] sm:$0xff]
    %v2893 = vld [vmem:[#allocation15 + $0x1e8] sm:$0xff]
    %v2894 = vld [vmem:[#allocation15 + $0x1f0] sm:$0xff]
    %v2895 = vld [vmem:[#allocation15 + $0x1f8] sm:$0xff]
    %2896 = vmatprep.subr.mxu0 %v2893
    %2897 = vmatpush1.msra.mxu0 %v2892
    %2898 = vmatprep.subr.mxu0 %v2889
    %2899 = vmatpush1.msra.mxu0 %v2888
    %2900 = vmatprep.subr.mxu0 %v2885
    %2901 = vmatpush1.msra.mxu0 %v2884
    %2902 = vmatprep.subr.mxu0 %v2881
    %2903 = vmatpush1.msra.mxu0 %v2880
    %2904 = vmatprep.subr.mxu0 %v2877
    %2905 = vmatpush1.msra.mxu0 %v2876
    %2906 = vmatprep.subr.mxu0 %v2873
    %2907 = vmatpush1.msra.mxu0 %v2872
    %2908 = vmatprep.subr.mxu0 %v2869
    %2909 = vmatpush1.msra.mxu0 %v2868
    %2910 = vmatprep.subr.mxu0 %v2865
    %2911 = vmatpush1.msra.mxu0 %v2864
    %2912 = vmatprep.subr.mxu0 %v2861
    %2913 = vmatpush1.msra.mxu0 %v2860
    %2914 = vmatprep.subr.mxu0 %v2857
    %2915 = vmatpush1.msra.mxu0 %v2856
    %2916 = vmatprep.subr.mxu0 %v2853
    %2917 = vmatpush1.msra.mxu0 %v2852
    %2918 = vmatprep.subr.mxu0 %v2849
    %2919 = vmatpush1.msra.mxu0 %v2848
    %2920 = vmatprep.subr.mxu0 %v2845
    %2921 = vmatpush1.msra.mxu0 %v2844
    %2922 = vmatprep.subr.mxu0 %v2841
    %2923 = vmatpush1.msra.mxu0 %v2840
    %2924 = vmatprep.subr.mxu0 %v2837
    %2925 = vmatpush1.msra.mxu0 %v2836
    %2926 = vmatprep.subr.mxu0 %v2833
    %2927 = vmatpush1.msra.mxu0 %v2832
    %2928 = vmatprep.subr.mxu0 0.0
    %2929 = vmatpush2.msra.mxu0 0.0
    %2930 = vmatprep.subr.mxu0 0.0
    %2931 = vmatpush2.msra.mxu0 0.0
    %2932 = vmatprep.subr.mxu0 0.0
    %2933 = vmatpush2.msra.mxu0 0.0
    %2934 = vmatprep.subr.mxu0 0.0
    %2935 = vmatpush2.msra.mxu0 0.0
    %2936 = vmatprep.subr.mxu0 0.0
    %2937 = vmatpush2.msra.mxu0 0.0
    %2938 = vmatprep.subr.mxu0 0.0
    %2939 = vmatpush2.msra.mxu0 0.0
    %2940 = vmatprep.subr.mxu0 0.0
    %2941 = vmatpush2.msra.mxu0 0.0
    %2942 = vmatprep.subr.mxu0 0.0
    %2943 = vmatpush2.msra.mxu0 0.0
    %2944 = vmatprep.subr.mxu0 0.0
    %2945 = vmatpush2.msra.mxu0 0.0
    %2946 = vmatprep.subr.mxu0 0.0
    %2947 = vmatpush2.msra.mxu0 0.0
    %2948 = vmatprep.subr.mxu0 0.0
    %2949 = vmatpush2.msra.mxu0 0.0
    %2950 = vmatprep.subr.mxu0 0.0
    %2951 = vmatpush2.msra.mxu0 0.0
    %2952 = vmatprep.subr.mxu0 0.0
    %2953 = vmatpush2.msra.mxu0 0.0
    %2954 = vmatprep.subr.mxu0 0.0
    %2955 = vmatpush2.msra.mxu0 0.0
    %2956 = vmatprep.subr.mxu0 0.0
    %2957 = vmatpush2.msra.mxu0 0.0
    %2958 = vmatprep.subr.mxu0 0.0
    %2959 = vmatpush2.msra.mxu0 0.0
    %2960 = vmatprep.mubr.f32.mxu0 0.0
    %2961 = vmatmul.mubr.f32.gmra.mxu0 %v2830
    %v2962 = vpop.f32.mrf.mxu0
    %v2963 = vadd.f32 0.0, %v2962
    %v2964 = vpop.f32.mrf.mxu0
    %v2965 = vadd.f32 0.0, %v2964
    %2966 = vdwg.mxu0
    %2967 = vmatprep.subr.mxu0 %v2895
    %2968 = vmatpush1.msra.mxu0 %v2894
    %2969 = vmatprep.subr.mxu0 %v2891
    %2970 = vmatpush1.msra.mxu0 %v2890
    %2971 = vmatprep.subr.mxu0 %v2887
    %2972 = vmatpush1.msra.mxu0 %v2886
    %2973 = vmatprep.subr.mxu0 %v2883
    %2974 = vmatpush1.msra.mxu0 %v2882
    %2975 = vmatprep.subr.mxu0 %v2879
    %2976 = vmatpush1.msra.mxu0 %v2878
    %2977 = vmatprep.subr.mxu0 %v2875
    %2978 = vmatpush1.msra.mxu0 %v2874
    %2979 = vmatprep.subr.mxu0 %v2871
    %2980 = vmatpush1.msra.mxu0 %v2870
    %2981 = vmatprep.subr.mxu0 %v2867
    %2982 = vmatpush1.msra.mxu0 %v2866
    %2983 = vmatprep.subr.mxu0 %v2863
    %2984 = vmatpush1.msra.mxu0 %v2862
    %2985 = vmatprep.subr.mxu0 %v2859
    %2986 = vmatpush1.msra.mxu0 %v2858
    %2987 = vmatprep.subr.mxu0 %v2855
    %2988 = vmatpush1.msra.mxu0 %v2854
    %2989 = vmatprep.subr.mxu0 %v2851
    %2990 = vmatpush1.msra.mxu0 %v2850
    %2991 = vmatprep.subr.mxu0 %v2847
    %2992 = vmatpush1.msra.mxu0 %v2846
    %2993 = vmatprep.subr.mxu0 %v2843
    %2994 = vmatpush1.msra.mxu0 %v2842
    %2995 = vmatprep.subr.mxu0 %v2839
    %2996 = vmatpush1.msra.mxu0 %v2838
    %2997 = vmatprep.subr.mxu0 %v2835
    %2998 = vmatpush1.msra.mxu0 %v2834
    %2999 = vmatprep.subr.mxu0 0.0
    %3000 = vmatpush2.msra.mxu0 0.0
    %3001 = vmatprep.subr.mxu0 0.0
    %3002 = vmatpush2.msra.mxu0 0.0
    %3003 = vmatprep.subr.mxu0 0.0
    %3004 = vmatpush2.msra.mxu0 0.0
    %3005 = vmatprep.subr.mxu0 0.0
    %3006 = vmatpush2.msra.mxu0 0.0
    %3007 = vmatprep.subr.mxu0 0.0
    %3008 = vmatpush2.msra.mxu0 0.0
    %3009 = vmatprep.subr.mxu0 0.0
    %3010 = vmatpush2.msra.mxu0 0.0
    %3011 = vmatprep.subr.mxu0 0.0
    %3012 = vmatpush2.msra.mxu0 0.0
    %3013 = vmatprep.subr.mxu0 0.0
    %3014 = vmatpush2.msra.mxu0 0.0
    %3015 = vmatprep.subr.mxu0 0.0
    %3016 = vmatpush2.msra.mxu0 0.0
    %3017 = vmatprep.subr.mxu0 0.0
    %3018 = vmatpush2.msra.mxu0 0.0
    %3019 = vmatprep.subr.mxu0 0.0
    %3020 = vmatpush2.msra.mxu0 0.0
    %3021 = vmatprep.subr.mxu0 0.0
    %3022 = vmatpush2.msra.mxu0 0.0
    %3023 = vmatprep.subr.mxu0 0.0
    %3024 = vmatpush2.msra.mxu0 0.0
    %3025 = vmatprep.subr.mxu0 0.0
    %3026 = vmatpush2.msra.mxu0 0.0
    %3027 = vmatprep.subr.mxu0 0.0
    %3028 = vmatpush2.msra.mxu0 0.0
    %3029 = vmatprep.subr.mxu0 0.0
    %3030 = vmatpush2.msra.mxu0 0.0
    %3031 = vmatprep.mubr.f32.mxu0 0.0
    %3032 = vmatmul.mubr.f32.gmra.mxu0 %v2830
    %v3033 = vpop.f32.mrf.mxu0
    %v3034 = vadd.f32 0.0, %v3033
    %v3035 = vpop.f32.mrf.mxu0
    %v3036 = vadd.f32 0.0, %v3035
    %3037 = vdwg.mxu0
    %v3038 = vadd.f32 %v2822, %v2963
    %v3039 = vadd.f32 %v2823, %v2965
    %v3040 = vadd.f32 %v2824, %v3034
    %v3041 = vadd.f32 %v2825, %v3036
    %v3042 = vxor.u32 %v3038, 2147483648
    %v3043 = vmul.f32 %v3042, 1.442695
    %v3044 = vpow.pop %v3043
    %v3045 = vadd.f32 %v3044, 1.0
    %v3046 = vrcp.pop %v3045
    %v3047 = vmul.f32 1.0, %v3046
    %v3048 = vxor.u32 %v3039, 2147483648
    %v3049 = vmul.f32 %v3048, 1.442695
    %v3050 = vpow.pop %v3049
    %v3051 = vadd.f32 %v3050, 1.0
    %v3052 = vrcp.pop %v3051
    %v3053 = vmul.f32 1.0, %v3052
    %v3054 = vtanh.pop %v3040
    %v3055 = vxor.u32 %v3041, 2147483648
    %v3056 = vmul.f32 %v3055, 1.442695
    %v3057 = vpow.pop %v3056
    %v3058 = vadd.f32 %v3057, 1.0
    %v3059 = vrcp.pop %v3058
    %v3060 = vmul.f32 1.0, %v3059
    %v3061 = vmul.f32 %v3053, %v2831
    %v3062 = vmul.f32 %v3047, %v3054
    %v3063 = vadd.f32 %v3061, %v3062
    %v3064 = vtanh.pop %v3063
    %v3065 = vmul.f32 %v3060, %v3064
    %v3066 = vld [vmem:[#allocation5] sm:$0xff]
    %v3067 = vld [vmem:[#allocation6] sm:$0xff]
    %v3068 = vld [vmem:[#allocation17] sm:$0xff]
    %v3069 = vld [vmem:[#allocation17 + $0x8] sm:$0xff]
    %v3070 = vld [vmem:[#allocation17 + $0x10] sm:$0xff]
    %v3071 = vld [vmem:[#allocation17 + $0x18] sm:$0xff]
    %v3072 = vld [vmem:[#allocation17 + $0x20] sm:$0xff]
    %v3073 = vld [vmem:[#allocation17 + $0x28] sm:$0xff]
    %v3074 = vld [vmem:[#allocation17 + $0x30] sm:$0xff]
    %v3075 = vld [vmem:[#allocation17 + $0x38] sm:$0xff]
    %v3076 = vld [vmem:[#allocation17 + $0x40] sm:$0xff]
    %v3077 = vld [vmem:[#allocation17 + $0x48] sm:$0xff]
    %v3078 = vld [vmem:[#allocation17 + $0x50] sm:$0xff]
    %v3079 = vld [vmem:[#allocation17 + $0x58] sm:$0xff]
    %v3080 = vld [vmem:[#allocation17 + $0x60] sm:$0xff]
    %v3081 = vld [vmem:[#allocation17 + $0x68] sm:$0xff]
    %v3082 = vld [vmem:[#allocation17 + $0x70] sm:$0xff]
    %v3083 = vld [vmem:[#allocation17 + $0x78] sm:$0xff]
    %v3084 = vld [vmem:[#allocation17 + $0x80] sm:$0xff]
    %v3085 = vld [vmem:[#allocation17 + $0x88] sm:$0xff]
    %v3086 = vld [vmem:[#allocation17 + $0x90] sm:$0xff]
    %v3087 = vld [vmem:[#allocation17 + $0x98] sm:$0xff]
    %v3088 = vld [vmem:[#allocation17 + $0xa0] sm:$0xff]
    %v3089 = vld [vmem:[#allocation17 + $0xa8] sm:$0xff]
    %v3090 = vld [vmem:[#allocation17 + $0xb0] sm:$0xff]
    %v3091 = vld [vmem:[#allocation17 + $0xb8] sm:$0xff]
    %v3092 = vld [vmem:[#allocation17 + $0xc0] sm:$0xff]
    %v3093 = vld [vmem:[#allocation17 + $0xc8] sm:$0xff]
    %v3094 = vld [vmem:[#allocation17 + $0xd0] sm:$0xff]
    %v3095 = vld [vmem:[#allocation17 + $0xd8] sm:$0xff]
    %v3096 = vld [vmem:[#allocation17 + $0xe0] sm:$0xff]
    %v3097 = vld [vmem:[#allocation17 + $0xe8] sm:$0xff]
    %v3098 = vld [vmem:[#allocation17 + $0xf0] sm:$0xff]
    %v3099 = vld [vmem:[#allocation17 + $0xf8] sm:$0xff]
    %v3100 = vld [vmem:[#allocation17 + $0x100] sm:$0xff]
    %v3101 = vld [vmem:[#allocation17 + $0x108] sm:$0xff]
    %v3102 = vld [vmem:[#allocation17 + $0x110] sm:$0xff]
    %v3103 = vld [vmem:[#allocation17 + $0x118] sm:$0xff]
    %v3104 = vld [vmem:[#allocation17 + $0x120] sm:$0xff]
    %v3105 = vld [vmem:[#allocation17 + $0x128] sm:$0xff]
    %v3106 = vld [vmem:[#allocation17 + $0x130] sm:$0xff]
    %v3107 = vld [vmem:[#allocation17 + $0x138] sm:$0xff]
    %v3108 = vld [vmem:[#allocation17 + $0x140] sm:$0xff]
    %v3109 = vld [vmem:[#allocation17 + $0x148] sm:$0xff]
    %v3110 = vld [vmem:[#allocation17 + $0x150] sm:$0xff]
    %v3111 = vld [vmem:[#allocation17 + $0x158] sm:$0xff]
    %v3112 = vld [vmem:[#allocation17 + $0x160] sm:$0xff]
    %v3113 = vld [vmem:[#allocation17 + $0x168] sm:$0xff]
    %v3114 = vld [vmem:[#allocation17 + $0x170] sm:$0xff]
    %v3115 = vld [vmem:[#allocation17 + $0x178] sm:$0xff]
    %v3116 = vld [vmem:[#allocation17 + $0x180] sm:$0xff]
    %v3117 = vld [vmem:[#allocation17 + $0x188] sm:$0xff]
    %v3118 = vld [vmem:[#allocation17 + $0x190] sm:$0xff]
    %v3119 = vld [vmem:[#allocation17 + $0x198] sm:$0xff]
    %v3120 = vld [vmem:[#allocation17 + $0x1a0] sm:$0xff]
    %v3121 = vld [vmem:[#allocation17 + $0x1a8] sm:$0xff]
    %v3122 = vld [vmem:[#allocation17 + $0x1b0] sm:$0xff]
    %v3123 = vld [vmem:[#allocation17 + $0x1b8] sm:$0xff]
    %v3124 = vld [vmem:[#allocation17 + $0x1c0] sm:$0xff]
    %v3125 = vld [vmem:[#allocation17 + $0x1c8] sm:$0xff]
    %v3126 = vld [vmem:[#allocation17 + $0x1d0] sm:$0xff]
    %v3127 = vld [vmem:[#allocation17 + $0x1d8] sm:$0xff]
    %v3128 = vld [vmem:[#allocation17 + $0x1e0] sm:$0xff]
    %v3129 = vld [vmem:[#allocation17 + $0x1e8] sm:$0xff]
    %v3130 = vld [vmem:[#allocation17 + $0x1f0] sm:$0xff]
    %v3131 = vld [vmem:[#allocation17 + $0x1f8] sm:$0xff]
    %3132 = vmatprep.subr.mxu0 %v3129
    %3133 = vmatpush1.msra.mxu0 %v3128
    %3134 = vmatprep.subr.mxu0 %v3125
    %3135 = vmatpush1.msra.mxu0 %v3124
    %3136 = vmatprep.subr.mxu0 %v3121
    %3137 = vmatpush1.msra.mxu0 %v3120
    %3138 = vmatprep.subr.mxu0 %v3117
    %3139 = vmatpush1.msra.mxu0 %v3116
    %3140 = vmatprep.subr.mxu0 %v3113
    %3141 = vmatpush1.msra.mxu0 %v3112
    %3142 = vmatprep.subr.mxu0 %v3109
    %3143 = vmatpush1.msra.mxu0 %v3108
    %3144 = vmatprep.subr.mxu0 %v3105
    %3145 = vmatpush1.msra.mxu0 %v3104
    %3146 = vmatprep.subr.mxu0 %v3101
    %3147 = vmatpush1.msra.mxu0 %v3100
    %3148 = vmatprep.subr.mxu0 %v3097
    %3149 = vmatpush1.msra.mxu0 %v3096
    %3150 = vmatprep.subr.mxu0 %v3093
    %3151 = vmatpush1.msra.mxu0 %v3092
    %3152 = vmatprep.subr.mxu0 %v3089
    %3153 = vmatpush1.msra.mxu0 %v3088
    %3154 = vmatprep.subr.mxu0 %v3085
    %3155 = vmatpush1.msra.mxu0 %v3084
    %3156 = vmatprep.subr.mxu0 %v3081
    %3157 = vmatpush1.msra.mxu0 %v3080
    %3158 = vmatprep.subr.mxu0 %v3077
    %3159 = vmatpush1.msra.mxu0 %v3076
    %3160 = vmatprep.subr.mxu0 %v3073
    %3161 = vmatpush1.msra.mxu0 %v3072
    %3162 = vmatprep.subr.mxu0 %v3069
    %3163 = vmatpush1.msra.mxu0 %v3068
    %3164 = vmatprep.subr.mxu0 0.0
    %3165 = vmatpush2.msra.mxu0 0.0
    %3166 = vmatprep.subr.mxu0 0.0
    %3167 = vmatpush2.msra.mxu0 0.0
    %3168 = vmatprep.subr.mxu0 0.0
    %3169 = vmatpush2.msra.mxu0 0.0
    %3170 = vmatprep.subr.mxu0 0.0
    %3171 = vmatpush2.msra.mxu0 0.0
    %3172 = vmatprep.subr.mxu0 0.0
    %3173 = vmatpush2.msra.mxu0 0.0
    %3174 = vmatprep.subr.mxu0 0.0
    %3175 = vmatpush2.msra.mxu0 0.0
    %3176 = vmatprep.subr.mxu0 0.0
    %3177 = vmatpush2.msra.mxu0 0.0
    %3178 = vmatprep.subr.mxu0 0.0
    %3179 = vmatpush2.msra.mxu0 0.0
    %3180 = vmatprep.subr.mxu0 0.0
    %3181 = vmatpush2.msra.mxu0 0.0
    %3182 = vmatprep.subr.mxu0 0.0
    %3183 = vmatpush2.msra.mxu0 0.0
    %3184 = vmatprep.subr.mxu0 0.0
    %3185 = vmatpush2.msra.mxu0 0.0
    %3186 = vmatprep.subr.mxu0 0.0
    %3187 = vmatpush2.msra.mxu0 0.0
    %3188 = vmatprep.subr.mxu0 0.0
    %3189 = vmatpush2.msra.mxu0 0.0
    %3190 = vmatprep.subr.mxu0 0.0
    %3191 = vmatpush2.msra.mxu0 0.0
    %3192 = vmatprep.subr.mxu0 0.0
    %3193 = vmatpush2.msra.mxu0 0.0
    %3194 = vmatprep.subr.mxu0 0.0
    %3195 = vmatpush2.msra.mxu0 0.0
    %3196 = vmatprep.mubr.f32.mxu0 0.0
    %3197 = vmatmul.mubr.f32.gmra.mxu0 %v3066
    %v3198 = vpop.f32.mrf.mxu0
    %v3199 = vadd.f32 0.0, %v3198
    %v3200 = vpop.f32.mrf.mxu0
    %v3201 = vadd.f32 0.0, %v3200
    %3202 = vdwg.mxu0
    %3203 = vmatprep.subr.mxu0 %v3131
    %3204 = vmatpush1.msra.mxu0 %v3130
    %3205 = vmatprep.subr.mxu0 %v3127
    %3206 = vmatpush1.msra.mxu0 %v3126
    %3207 = vmatprep.subr.mxu0 %v3123
    %3208 = vmatpush1.msra.mxu0 %v3122
    %3209 = vmatprep.subr.mxu0 %v3119
    %3210 = vmatpush1.msra.mxu0 %v3118
    %3211 = vmatprep.subr.mxu0 %v3115
    %3212 = vmatpush1.msra.mxu0 %v3114
    %3213 = vmatprep.subr.mxu0 %v3111
    %3214 = vmatpush1.msra.mxu0 %v3110
    %3215 = vmatprep.subr.mxu0 %v3107
    %3216 = vmatpush1.msra.mxu0 %v3106
    %3217 = vmatprep.subr.mxu0 %v3103
    %3218 = vmatpush1.msra.mxu0 %v3102
    %3219 = vmatprep.subr.mxu0 %v3099
    %3220 = vmatpush1.msra.mxu0 %v3098
    %3221 = vmatprep.subr.mxu0 %v3095
    %3222 = vmatpush1.msra.mxu0 %v3094
    %3223 = vmatprep.subr.mxu0 %v3091
    %3224 = vmatpush1.msra.mxu0 %v3090
    %3225 = vmatprep.subr.mxu0 %v3087
    %3226 = vmatpush1.msra.mxu0 %v3086
    %3227 = vmatprep.subr.mxu0 %v3083
    %3228 = vmatpush1.msra.mxu0 %v3082
    %3229 = vmatprep.subr.mxu0 %v3079
    %3230 = vmatpush1.msra.mxu0 %v3078
    %3231 = vmatprep.subr.mxu0 %v3075
    %3232 = vmatpush1.msra.mxu0 %v3074
    %3233 = vmatprep.subr.mxu0 %v3071
    %3234 = vmatpush1.msra.mxu0 %v3070
    %3235 = vmatprep.subr.mxu0 0.0
    %3236 = vmatpush2.msra.mxu0 0.0
    %3237 = vmatprep.subr.mxu0 0.0
    %3238 = vmatpush2.msra.mxu0 0.0
    %3239 = vmatprep.subr.mxu0 0.0
    %3240 = vmatpush2.msra.mxu0 0.0
    %3241 = vmatprep.subr.mxu0 0.0
    %3242 = vmatpush2.msra.mxu0 0.0
    %3243 = vmatprep.subr.mxu0 0.0
    %3244 = vmatpush2.msra.mxu0 0.0
    %3245 = vmatprep.subr.mxu0 0.0
    %3246 = vmatpush2.msra.mxu0 0.0
    %3247 = vmatprep.subr.mxu0 0.0
    %3248 = vmatpush2.msra.mxu0 0.0
    %3249 = vmatprep.subr.mxu0 0.0
    %3250 = vmatpush2.msra.mxu0 0.0
    %3251 = vmatprep.subr.mxu0 0.0
    %3252 = vmatpush2.msra.mxu0 0.0
    %3253 = vmatprep.subr.mxu0 0.0
    %3254 = vmatpush2.msra.mxu0 0.0
    %3255 = vmatprep.subr.mxu0 0.0
    %3256 = vmatpush2.msra.mxu0 0.0
    %3257 = vmatprep.subr.mxu0 0.0
    %3258 = vmatpush2.msra.mxu0 0.0
    %3259 = vmatprep.subr.mxu0 0.0
    %3260 = vmatpush2.msra.mxu0 0.0
    %3261 = vmatprep.subr.mxu0 0.0
    %3262 = vmatpush2.msra.mxu0 0.0
    %3263 = vmatprep.subr.mxu0 0.0
    %3264 = vmatpush2.msra.mxu0 0.0
    %3265 = vmatprep.subr.mxu0 0.0
    %3266 = vmatpush2.msra.mxu0 0.0
    %3267 = vmatprep.mubr.f32.mxu0 0.0
    %3268 = vmatmul.mubr.f32.gmra.mxu0 %v3066
    %v3269 = vpop.f32.mrf.mxu0
    %v3270 = vadd.f32 0.0, %v3269
    %v3271 = vpop.f32.mrf.mxu0
    %v3272 = vadd.f32 0.0, %v3271
    %3273 = vdwg.mxu0
    %v3274 = vadd.f32 %v2826, %v3199
    %v3275 = vadd.f32 %v2827, %v3201
    %v3276 = vadd.f32 %v2828, %v3270
    %v3277 = vadd.f32 %v2829, %v3272
    %v3278 = vxor.u32 %v3274, 2147483648
    %v3279 = vmul.f32 %v3278, 1.442695
    %v3280 = vpow.pop %v3279
    %v3281 = vadd.f32 %v3280, 1.0
    %v3282 = vrcp.pop %v3281
    %v3283 = vmul.f32 1.0, %v3282
    %v3284 = vxor.u32 %v3275, 2147483648
    %v3285 = vmul.f32 %v3284, 1.442695
    %v3286 = vpow.pop %v3285
    %v3287 = vadd.f32 %v3286, 1.0
    %v3288 = vrcp.pop %v3287
    %v3289 = vmul.f32 1.0, %v3288
    %v3290 = vtanh.pop %v3276
    %v3291 = vxor.u32 %v3277, 2147483648
    %v3292 = vmul.f32 %v3291, 1.442695
    %v3293 = vpow.pop %v3292
    %v3294 = vadd.f32 %v3293, 1.0
    %v3295 = vrcp.pop %v3294
    %v3296 = vmul.f32 1.0, %v3295
    %v3297 = vmul.f32 %v3289, %v3067
    %v3298 = vmul.f32 %v3283, %v3290
    %v3299 = vadd.f32 %v3297, %v3298
    %v3300 = vtanh.pop %v3299
    %v3301 = vmul.f32 %v3296, %v3300
    %3302 = vst [vmem:[#allocation3] sm:$0xff] %v3065
    %3303 = vst [vmem:[#allocation4] sm:$0xff] %v3063
    %3304 = vst [vmem:[#allocation5] sm:$0xff] %v3301
    %3305 = vst [vmem:[#allocation6] sm:$0xff] %v3299
    %s3306 = scalar_lea.vmem [#allocation7], 32
    %3307 = vst [vmem:[%s3306] sm:$0xff] %v3065
    %s3308 = scalar_lea.vmem [#allocation8], 24
    %3309 = vst [vmem:[%s3308] sm:$0xff] %v3301
    %v3310 = vld [vmem:[%s1843] sm:$0xff]
    %v3311 = vld [vmem:[%s1843 + $0x8] sm:$0xff]
    %v3312 = vld [vmem:[%s1843 + $0x10] sm:$0xff]
    %v3313 = vld [vmem:[%s1843 + $0x18] sm:$0xff]
    %v3314 = vld [vmem:[%s1836 + $0x20] sm:$0xff]
    %v3315 = vld [vmem:[%s1836 + $0x28] sm:$0xff]
    %v3316 = vld [vmem:[%s1836 + $0x30] sm:$0xff]
    %v3317 = vld [vmem:[%s1836 + $0x38] sm:$0xff]
    %v3318 = vld [vmem:[#allocation3] sm:$0xff]
    %v3319 = vld [vmem:[#allocation4] sm:$0xff]
    %v3320 = vld [vmem:[#allocation15] sm:$0xff]
    %v3321 = vld [vmem:[#allocation15 + $0x8] sm:$0xff]
    %v3322 = vld [vmem:[#allocation15 + $0x10] sm:$0xff]
    %v3323 = vld [vmem:[#allocation15 + $0x18] sm:$0xff]
    %v3324 = vld [vmem:[#allocation15 + $0x20] sm:$0xff]
    %v3325 = vld [vmem:[#allocation15 + $0x28] sm:$0xff]
    %v3326 = vld [vmem:[#allocation15 + $0x30] sm:$0xff]
    %v3327 = vld [vmem:[#allocation15 + $0x38] sm:$0xff]
    %v3328 = vld [vmem:[#allocation15 + $0x40] sm:$0xff]
    %v3329 = vld [vmem:[#allocation15 + $0x48] sm:$0xff]
    %v3330 = vld [vmem:[#allocation15 + $0x50] sm:$0xff]
    %v3331 = vld [vmem:[#allocation15 + $0x58] sm:$0xff]
    %v3332 = vld [vmem:[#allocation15 + $0x60] sm:$0xff]
    %v3333 = vld [vmem:[#allocation15 + $0x68] sm:$0xff]
    %v3334 = vld [vmem:[#allocation15 + $0x70] sm:$0xff]
    %v3335 = vld [vmem:[#allocation15 + $0x78] sm:$0xff]
    %v3336 = vld [vmem:[#allocation15 + $0x80] sm:$0xff]
    %v3337 = vld [vmem:[#allocation15 + $0x88] sm:$0xff]
    %v3338 = vld [vmem:[#allocation15 + $0x90] sm:$0xff]
    %v3339 = vld [vmem:[#allocation15 + $0x98] sm:$0xff]
    %v3340 = vld [vmem:[#allocation15 + $0xa0] sm:$0xff]
    %v3341 = vld [vmem:[#allocation15 + $0xa8] sm:$0xff]
    %v3342 = vld [vmem:[#allocation15 + $0xb0] sm:$0xff]
    %v3343 = vld [vmem:[#allocation15 + $0xb8] sm:$0xff]
    %v3344 = vld [vmem:[#allocation15 + $0xc0] sm:$0xff]
    %v3345 = vld [vmem:[#allocation15 + $0xc8] sm:$0xff]
    %v3346 = vld [vmem:[#allocation15 + $0xd0] sm:$0xff]
    %v3347 = vld [vmem:[#allocation15 + $0xd8] sm:$0xff]
    %v3348 = vld [vmem:[#allocation15 + $0xe0] sm:$0xff]
    %v3349 = vld [vmem:[#allocation15 + $0xe8] sm:$0xff]
    %v3350 = vld [vmem:[#allocation15 + $0xf0] sm:$0xff]
    %v3351 = vld [vmem:[#allocation15 + $0xf8] sm:$0xff]
    %v3352 = vld [vmem:[#allocation15 + $0x100] sm:$0xff]
    %v3353 = vld [vmem:[#allocation15 + $0x108] sm:$0xff]
    %v3354 = vld [vmem:[#allocation15 + $0x110] sm:$0xff]
    %v3355 = vld [vmem:[#allocation15 + $0x118] sm:$0xff]
    %v3356 = vld [vmem:[#allocation15 + $0x120] sm:$0xff]
    %v3357 = vld [vmem:[#allocation15 + $0x128] sm:$0xff]
    %v3358 = vld [vmem:[#allocation15 + $0x130] sm:$0xff]
    %v3359 = vld [vmem:[#allocation15 + $0x138] sm:$0xff]
    %v3360 = vld [vmem:[#allocation15 + $0x140] sm:$0xff]
    %v3361 = vld [vmem:[#allocation15 + $0x148] sm:$0xff]
    %v3362 = vld [vmem:[#allocation15 + $0x150] sm:$0xff]
    %v3363 = vld [vmem:[#allocation15 + $0x158] sm:$0xff]
    %v3364 = vld [vmem:[#allocation15 + $0x160] sm:$0xff]
    %v3365 = vld [vmem:[#allocation15 + $0x168] sm:$0xff]
    %v3366 = vld [vmem:[#allocation15 + $0x170] sm:$0xff]
    %v3367 = vld [vmem:[#allocation15 + $0x178] sm:$0xff]
    %v3368 = vld [vmem:[#allocation15 + $0x180] sm:$0xff]
    %v3369 = vld [vmem:[#allocation15 + $0x188] sm:$0xff]
    %v3370 = vld [vmem:[#allocation15 + $0x190] sm:$0xff]
    %v3371 = vld [vmem:[#allocation15 + $0x198] sm:$0xff]
    %v3372 = vld [vmem:[#allocation15 + $0x1a0] sm:$0xff]
    %v3373 = vld [vmem:[#allocation15 + $0x1a8] sm:$0xff]
    %v3374 = vld [vmem:[#allocation15 + $0x1b0] sm:$0xff]
    %v3375 = vld [vmem:[#allocation15 + $0x1b8] sm:$0xff]
    %v3376 = vld [vmem:[#allocation15 + $0x1c0] sm:$0xff]
    %v3377 = vld [vmem:[#allocation15 + $0x1c8] sm:$0xff]
    %v3378 = vld [vmem:[#allocation15 + $0x1d0] sm:$0xff]
    %v3379 = vld [vmem:[#allocation15 + $0x1d8] sm:$0xff]
    %v3380 = vld [vmem:[#allocation15 + $0x1e0] sm:$0xff]
    %v3381 = vld [vmem:[#allocation15 + $0x1e8] sm:$0xff]
    %v3382 = vld [vmem:[#allocation15 + $0x1f0] sm:$0xff]
    %v3383 = vld [vmem:[#allocation15 + $0x1f8] sm:$0xff]
    %3384 = vmatprep.subr.mxu0 %v3381
    %3385 = vmatpush1.msra.mxu0 %v3380
    %3386 = vmatprep.subr.mxu0 %v3377
    %3387 = vmatpush1.msra.mxu0 %v3376
    %3388 = vmatprep.subr.mxu0 %v3373
    %3389 = vmatpush1.msra.mxu0 %v3372
    %3390 = vmatprep.subr.mxu0 %v3369
    %3391 = vmatpush1.msra.mxu0 %v3368
    %3392 = vmatprep.subr.mxu0 %v3365
    %3393 = vmatpush1.msra.mxu0 %v3364
    %3394 = vmatprep.subr.mxu0 %v3361
    %3395 = vmatpush1.msra.mxu0 %v3360
    %3396 = vmatprep.subr.mxu0 %v3357
    %3397 = vmatpush1.msra.mxu0 %v3356
    %3398 = vmatprep.subr.mxu0 %v3353
    %3399 = vmatpush1.msra.mxu0 %v3352
    %3400 = vmatprep.subr.mxu0 %v3349
    %3401 = vmatpush1.msra.mxu0 %v3348
    %3402 = vmatprep.subr.mxu0 %v3345
    %3403 = vmatpush1.msra.mxu0 %v3344
    %3404 = vmatprep.subr.mxu0 %v3341
    %3405 = vmatpush1.msra.mxu0 %v3340
    %3406 = vmatprep.subr.mxu0 %v3337
    %3407 = vmatpush1.msra.mxu0 %v3336
    %3408 = vmatprep.subr.mxu0 %v3333
    %3409 = vmatpush1.msra.mxu0 %v3332
    %3410 = vmatprep.subr.mxu0 %v3329
    %3411 = vmatpush1.msra.mxu0 %v3328
    %3412 = vmatprep.subr.mxu0 %v3325
    %3413 = vmatpush1.msra.mxu0 %v3324
    %3414 = vmatprep.subr.mxu0 %v3321
    %3415 = vmatpush1.msra.mxu0 %v3320
    %3416 = vmatprep.subr.mxu0 0.0
    %3417 = vmatpush2.msra.mxu0 0.0
    %3418 = vmatprep.subr.mxu0 0.0
    %3419 = vmatpush2.msra.mxu0 0.0
    %3420 = vmatprep.subr.mxu0 0.0
    %3421 = vmatpush2.msra.mxu0 0.0
    %3422 = vmatprep.subr.mxu0 0.0
    %3423 = vmatpush2.msra.mxu0 0.0
    %3424 = vmatprep.subr.mxu0 0.0
    %3425 = vmatpush2.msra.mxu0 0.0
    %3426 = vmatprep.subr.mxu0 0.0
    %3427 = vmatpush2.msra.mxu0 0.0
    %3428 = vmatprep.subr.mxu0 0.0
    %3429 = vmatpush2.msra.mxu0 0.0
    %3430 = vmatprep.subr.mxu0 0.0
    %3431 = vmatpush2.msra.mxu0 0.0
    %3432 = vmatprep.subr.mxu0 0.0
    %3433 = vmatpush2.msra.mxu0 0.0
    %3434 = vmatprep.subr.mxu0 0.0
    %3435 = vmatpush2.msra.mxu0 0.0
    %3436 = vmatprep.subr.mxu0 0.0
    %3437 = vmatpush2.msra.mxu0 0.0
    %3438 = vmatprep.subr.mxu0 0.0
    %3439 = vmatpush2.msra.mxu0 0.0
    %3440 = vmatprep.subr.mxu0 0.0
    %3441 = vmatpush2.msra.mxu0 0.0
    %3442 = vmatprep.subr.mxu0 0.0
    %3443 = vmatpush2.msra.mxu0 0.0
    %3444 = vmatprep.subr.mxu0 0.0
    %3445 = vmatpush2.msra.mxu0 0.0
    %3446 = vmatprep.subr.mxu0 0.0
    %3447 = vmatpush2.msra.mxu0 0.0
    %3448 = vmatprep.mubr.f32.mxu0 0.0
    %3449 = vmatmul.mubr.f32.gmra.mxu0 %v3318
    %v3450 = vpop.f32.mrf.mxu0
    %v3451 = vadd.f32 0.0, %v3450
    %v3452 = vpop.f32.mrf.mxu0
    %v3453 = vadd.f32 0.0, %v3452
    %3454 = vdwg.mxu0
    %3455 = vmatprep.subr.mxu0 %v3383
    %3456 = vmatpush1.msra.mxu0 %v3382
    %3457 = vmatprep.subr.mxu0 %v3379
    %3458 = vmatpush1.msra.mxu0 %v3378
    %3459 = vmatprep.subr.mxu0 %v3375
    %3460 = vmatpush1.msra.mxu0 %v3374
    %3461 = vmatprep.subr.mxu0 %v3371
    %3462 = vmatpush1.msra.mxu0 %v3370
    %3463 = vmatprep.subr.mxu0 %v3367
    %3464 = vmatpush1.msra.mxu0 %v3366
    %3465 = vmatprep.subr.mxu0 %v3363
    %3466 = vmatpush1.msra.mxu0 %v3362
    %3467 = vmatprep.subr.mxu0 %v3359
    %3468 = vmatpush1.msra.mxu0 %v3358
    %3469 = vmatprep.subr.mxu0 %v3355
    %3470 = vmatpush1.msra.mxu0 %v3354
    %3471 = vmatprep.subr.mxu0 %v3351
    %3472 = vmatpush1.msra.mxu0 %v3350
    %3473 = vmatprep.subr.mxu0 %v3347
    %3474 = vmatpush1.msra.mxu0 %v3346
    %3475 = vmatprep.subr.mxu0 %v3343
    %3476 = vmatpush1.msra.mxu0 %v3342
    %3477 = vmatprep.subr.mxu0 %v3339
    %3478 = vmatpush1.msra.mxu0 %v3338
    %3479 = vmatprep.subr.mxu0 %v3335
    %3480 = vmatpush1.msra.mxu0 %v3334
    %3481 = vmatprep.subr.mxu0 %v3331
    %3482 = vmatpush1.msra.mxu0 %v3330
    %3483 = vmatprep.subr.mxu0 %v3327
    %3484 = vmatpush1.msra.mxu0 %v3326
    %3485 = vmatprep.subr.mxu0 %v3323
    %3486 = vmatpush1.msra.mxu0 %v3322
    %3487 = vmatprep.subr.mxu0 0.0
    %3488 = vmatpush2.msra.mxu0 0.0
    %3489 = vmatprep.subr.mxu0 0.0
    %3490 = vmatpush2.msra.mxu0 0.0
    %3491 = vmatprep.subr.mxu0 0.0
    %3492 = vmatpush2.msra.mxu0 0.0
    %3493 = vmatprep.subr.mxu0 0.0
    %3494 = vmatpush2.msra.mxu0 0.0
    %3495 = vmatprep.subr.mxu0 0.0
    %3496 = vmatpush2.msra.mxu0 0.0
    %3497 = vmatprep.subr.mxu0 0.0
    %3498 = vmatpush2.msra.mxu0 0.0
    %3499 = vmatprep.subr.mxu0 0.0
    %3500 = vmatpush2.msra.mxu0 0.0
    %3501 = vmatprep.subr.mxu0 0.0
    %3502 = vmatpush2.msra.mxu0 0.0
    %3503 = vmatprep.subr.mxu0 0.0
    %3504 = vmatpush2.msra.mxu0 0.0
    %3505 = vmatprep.subr.mxu0 0.0
    %3506 = vmatpush2.msra.mxu0 0.0
    %3507 = vmatprep.subr.mxu0 0.0
    %3508 = vmatpush2.msra.mxu0 0.0
    %3509 = vmatprep.subr.mxu0 0.0
    %3510 = vmatpush2.msra.mxu0 0.0
    %3511 = vmatprep.subr.mxu0 0.0
    %3512 = vmatpush2.msra.mxu0 0.0
    %3513 = vmatprep.subr.mxu0 0.0
    %3514 = vmatpush2.msra.mxu0 0.0
    %3515 = vmatprep.subr.mxu0 0.0
    %3516 = vmatpush2.msra.mxu0 0.0
    %3517 = vmatprep.subr.mxu0 0.0
    %3518 = vmatpush2.msra.mxu0 0.0
    %3519 = vmatprep.mubr.f32.mxu0 0.0
    %3520 = vmatmul.mubr.f32.gmra.mxu0 %v3318
    %v3521 = vpop.f32.mrf.mxu0
    %v3522 = vadd.f32 0.0, %v3521
    %v3523 = vpop.f32.mrf.mxu0
    %v3524 = vadd.f32 0.0, %v3523
    %3525 = vdwg.mxu0
    %v3526 = vadd.f32 %v3310, %v3451
    %v3527 = vadd.f32 %v3311, %v3453
    %v3528 = vadd.f32 %v3312, %v3522
    %v3529 = vadd.f32 %v3313, %v3524
    %v3530 = vxor.u32 %v3526, 2147483648
    %v3531 = vmul.f32 %v3530, 1.442695
    %v3532 = vpow.pop %v3531
    %v3533 = vadd.f32 %v3532, 1.0
    %v3534 = vrcp.pop %v3533
    %v3535 = vmul.f32 1.0, %v3534
    %v3536 = vxor.u32 %v3527, 2147483648
    %v3537 = vmul.f32 %v3536, 1.442695
    %v3538 = vpow.pop %v3537
    %v3539 = vadd.f32 %v3538, 1.0
    %v3540 = vrcp.pop %v3539
    %v3541 = vmul.f32 1.0, %v3540
    %v3542 = vtanh.pop %v3528
    %v3543 = vxor.u32 %v3529, 2147483648
    %v3544 = vmul.f32 %v3543, 1.442695
    %v3545 = vpow.pop %v3544
    %v3546 = vadd.f32 %v3545, 1.0
    %v3547 = vrcp.pop %v3546
    %v3548 = vmul.f32 1.0, %v3547
    %v3549 = vmul.f32 %v3541, %v3319
    %v3550 = vmul.f32 %v3535, %v3542
    %v3551 = vadd.f32 %v3549, %v3550
    %v3552 = vtanh.pop %v3551
    %v3553 = vmul.f32 %v3548, %v3552
    %v3554 = vld [vmem:[#allocation5] sm:$0xff]
    %v3555 = vld [vmem:[#allocation6] sm:$0xff]
    %v3556 = vld [vmem:[#allocation17] sm:$0xff]
    %v3557 = vld [vmem:[#allocation17 + $0x8] sm:$0xff]
    %v3558 = vld [vmem:[#allocation17 + $0x10] sm:$0xff]
    %v3559 = vld [vmem:[#allocation17 + $0x18] sm:$0xff]
    %v3560 = vld [vmem:[#allocation17 + $0x20] sm:$0xff]
    %v3561 = vld [vmem:[#allocation17 + $0x28] sm:$0xff]
    %v3562 = vld [vmem:[#allocation17 + $0x30] sm:$0xff]
    %v3563 = vld [vmem:[#allocation17 + $0x38] sm:$0xff]
    %v3564 = vld [vmem:[#allocation17 + $0x40] sm:$0xff]
    %v3565 = vld [vmem:[#allocation17 + $0x48] sm:$0xff]
    %v3566 = vld [vmem:[#allocation17 + $0x50] sm:$0xff]
    %v3567 = vld [vmem:[#allocation17 + $0x58] sm:$0xff]
    %v3568 = vld [vmem:[#allocation17 + $0x60] sm:$0xff]
    %v3569 = vld [vmem:[#allocation17 + $0x68] sm:$0xff]
    %v3570 = vld [vmem:[#allocation17 + $0x70] sm:$0xff]
    %v3571 = vld [vmem:[#allocation17 + $0x78] sm:$0xff]
    %v3572 = vld [vmem:[#allocation17 + $0x80] sm:$0xff]
    %v3573 = vld [vmem:[#allocation17 + $0x88] sm:$0xff]
    %v3574 = vld [vmem:[#allocation17 + $0x90] sm:$0xff]
    %v3575 = vld [vmem:[#allocation17 + $0x98] sm:$0xff]
    %v3576 = vld [vmem:[#allocation17 + $0xa0] sm:$0xff]
    %v3577 = vld [vmem:[#allocation17 + $0xa8] sm:$0xff]
    %v3578 = vld [vmem:[#allocation17 + $0xb0] sm:$0xff]
    %v3579 = vld [vmem:[#allocation17 + $0xb8] sm:$0xff]
    %v3580 = vld [vmem:[#allocation17 + $0xc0] sm:$0xff]
    %v3581 = vld [vmem:[#allocation17 + $0xc8] sm:$0xff]
    %v3582 = vld [vmem:[#allocation17 + $0xd0] sm:$0xff]
    %v3583 = vld [vmem:[#allocation17 + $0xd8] sm:$0xff]
    %v3584 = vld [vmem:[#allocation17 + $0xe0] sm:$0xff]
    %v3585 = vld [vmem:[#allocation17 + $0xe8] sm:$0xff]
    %v3586 = vld [vmem:[#allocation17 + $0xf0] sm:$0xff]
    %v3587 = vld [vmem:[#allocation17 + $0xf8] sm:$0xff]
    %v3588 = vld [vmem:[#allocation17 + $0x100] sm:$0xff]
    %v3589 = vld [vmem:[#allocation17 + $0x108] sm:$0xff]
    %v3590 = vld [vmem:[#allocation17 + $0x110] sm:$0xff]
    %v3591 = vld [vmem:[#allocation17 + $0x118] sm:$0xff]
    %v3592 = vld [vmem:[#allocation17 + $0x120] sm:$0xff]
    %v3593 = vld [vmem:[#allocation17 + $0x128] sm:$0xff]
    %v3594 = vld [vmem:[#allocation17 + $0x130] sm:$0xff]
    %v3595 = vld [vmem:[#allocation17 + $0x138] sm:$0xff]
    %v3596 = vld [vmem:[#allocation17 + $0x140] sm:$0xff]
    %v3597 = vld [vmem:[#allocation17 + $0x148] sm:$0xff]
    %v3598 = vld [vmem:[#allocation17 + $0x150] sm:$0xff]
    %v3599 = vld [vmem:[#allocation17 + $0x158] sm:$0xff]
    %v3600 = vld [vmem:[#allocation17 + $0x160] sm:$0xff]
    %v3601 = vld [vmem:[#allocation17 + $0x168] sm:$0xff]
    %v3602 = vld [vmem:[#allocation17 + $0x170] sm:$0xff]
    %v3603 = vld [vmem:[#allocation17 + $0x178] sm:$0xff]
    %v3604 = vld [vmem:[#allocation17 + $0x180] sm:$0xff]
    %v3605 = vld [vmem:[#allocation17 + $0x188] sm:$0xff]
    %v3606 = vld [vmem:[#allocation17 + $0x190] sm:$0xff]
    %v3607 = vld [vmem:[#allocation17 + $0x198] sm:$0xff]
    %v3608 = vld [vmem:[#allocation17 + $0x1a0] sm:$0xff]
    %v3609 = vld [vmem:[#allocation17 + $0x1a8] sm:$0xff]
    %v3610 = vld [vmem:[#allocation17 + $0x1b0] sm:$0xff]
    %v3611 = vld [vmem:[#allocation17 + $0x1b8] sm:$0xff]
    %v3612 = vld [vmem:[#allocation17 + $0x1c0] sm:$0xff]
    %v3613 = vld [vmem:[#allocation17 + $0x1c8] sm:$0xff]
    %v3614 = vld [vmem:[#allocation17 + $0x1d0] sm:$0xff]
    %v3615 = vld [vmem:[#allocation17 + $0x1d8] sm:$0xff]
    %v3616 = vld [vmem:[#allocation17 + $0x1e0] sm:$0xff]
    %v3617 = vld [vmem:[#allocation17 + $0x1e8] sm:$0xff]
    %v3618 = vld [vmem:[#allocation17 + $0x1f0] sm:$0xff]
    %v3619 = vld [vmem:[#allocation17 + $0x1f8] sm:$0xff]
    %3620 = vmatprep.subr.mxu0 %v3617
    %3621 = vmatpush1.msra.mxu0 %v3616
    %3622 = vmatprep.subr.mxu0 %v3613
    %3623 = vmatpush1.msra.mxu0 %v3612
    %3624 = vmatprep.subr.mxu0 %v3609
    %3625 = vmatpush1.msra.mxu0 %v3608
    %3626 = vmatprep.subr.mxu0 %v3605
    %3627 = vmatpush1.msra.mxu0 %v3604
    %3628 = vmatprep.subr.mxu0 %v3601
    %3629 = vmatpush1.msra.mxu0 %v3600
    %3630 = vmatprep.subr.mxu0 %v3597
    %3631 = vmatpush1.msra.mxu0 %v3596
    %3632 = vmatprep.subr.mxu0 %v3593
    %3633 = vmatpush1.msra.mxu0 %v3592
    %3634 = vmatprep.subr.mxu0 %v3589
    %3635 = vmatpush1.msra.mxu0 %v3588
    %3636 = vmatprep.subr.mxu0 %v3585
    %3637 = vmatpush1.msra.mxu0 %v3584
    %3638 = vmatprep.subr.mxu0 %v3581
    %3639 = vmatpush1.msra.mxu0 %v3580
    %3640 = vmatprep.subr.mxu0 %v3577
    %3641 = vmatpush1.msra.mxu0 %v3576
    %3642 = vmatprep.subr.mxu0 %v3573
    %3643 = vmatpush1.msra.mxu0 %v3572
    %3644 = vmatprep.subr.mxu0 %v3569
    %3645 = vmatpush1.msra.mxu0 %v3568
    %3646 = vmatprep.subr.mxu0 %v3565
    %3647 = vmatpush1.msra.mxu0 %v3564
    %3648 = vmatprep.subr.mxu0 %v3561
    %3649 = vmatpush1.msra.mxu0 %v3560
    %3650 = vmatprep.subr.mxu0 %v3557
    %3651 = vmatpush1.msra.mxu0 %v3556
    %3652 = vmatprep.subr.mxu0 0.0
    %3653 = vmatpush2.msra.mxu0 0.0
    %3654 = vmatprep.subr.mxu0 0.0
    %3655 = vmatpush2.msra.mxu0 0.0
    %3656 = vmatprep.subr.mxu0 0.0
    %3657 = vmatpush2.msra.mxu0 0.0
    %3658 = vmatprep.subr.mxu0 0.0
    %3659 = vmatpush2.msra.mxu0 0.0
    %3660 = vmatprep.subr.mxu0 0.0
    %3661 = vmatpush2.msra.mxu0 0.0
    %3662 = vmatprep.subr.mxu0 0.0
    %3663 = vmatpush2.msra.mxu0 0.0
    %3664 = vmatprep.subr.mxu0 0.0
    %3665 = vmatpush2.msra.mxu0 0.0
    %3666 = vmatprep.subr.mxu0 0.0
    %3667 = vmatpush2.msra.mxu0 0.0
    %3668 = vmatprep.subr.mxu0 0.0
    %3669 = vmatpush2.msra.mxu0 0.0
    %3670 = vmatprep.subr.mxu0 0.0
    %3671 = vmatpush2.msra.mxu0 0.0
    %3672 = vmatprep.subr.mxu0 0.0
    %3673 = vmatpush2.msra.mxu0 0.0
    %3674 = vmatprep.subr.mxu0 0.0
    %3675 = vmatpush2.msra.mxu0 0.0
    %3676 = vmatprep.subr.mxu0 0.0
    %3677 = vmatpush2.msra.mxu0 0.0
    %3678 = vmatprep.subr.mxu0 0.0
    %3679 = vmatpush2.msra.mxu0 0.0
    %3680 = vmatprep.subr.mxu0 0.0
    %3681 = vmatpush2.msra.mxu0 0.0
    %3682 = vmatprep.subr.mxu0 0.0
    %3683 = vmatpush2.msra.mxu0 0.0
    %3684 = vmatprep.mubr.f32.mxu0 0.0
    %3685 = vmatmul.mubr.f32.gmra.mxu0 %v3554
    %v3686 = vpop.f32.mrf.mxu0
    %v3687 = vadd.f32 0.0, %v3686
    %v3688 = vpop.f32.mrf.mxu0
    %v3689 = vadd.f32 0.0, %v3688
    %3690 = vdwg.mxu0
    %3691 = vmatprep.subr.mxu0 %v3619
    %3692 = vmatpush1.msra.mxu0 %v3618
    %3693 = vmatprep.subr.mxu0 %v3615
    %3694 = vmatpush1.msra.mxu0 %v3614
    %3695 = vmatprep.subr.mxu0 %v3611
    %3696 = vmatpush1.msra.mxu0 %v3610
    %3697 = vmatprep.subr.mxu0 %v3607
    %3698 = vmatpush1.msra.mxu0 %v3606
    %3699 = vmatprep.subr.mxu0 %v3603
    %3700 = vmatpush1.msra.mxu0 %v3602
    %3701 = vmatprep.subr.mxu0 %v3599
    %3702 = vmatpush1.msra.mxu0 %v3598
    %3703 = vmatprep.subr.mxu0 %v3595
    %3704 = vmatpush1.msra.mxu0 %v3594
    %3705 = vmatprep.subr.mxu0 %v3591
    %3706 = vmatpush1.msra.mxu0 %v3590
    %3707 = vmatprep.subr.mxu0 %v3587
    %3708 = vmatpush1.msra.mxu0 %v3586
    %3709 = vmatprep.subr.mxu0 %v3583
    %3710 = vmatpush1.msra.mxu0 %v3582
    %3711 = vmatprep.subr.mxu0 %v3579
    %3712 = vmatpush1.msra.mxu0 %v3578
    %3713 = vmatprep.subr.mxu0 %v3575
    %3714 = vmatpush1.msra.mxu0 %v3574
    %3715 = vmatprep.subr.mxu0 %v3571
    %3716 = vmatpush1.msra.mxu0 %v3570
    %3717 = vmatprep.subr.mxu0 %v3567
    %3718 = vmatpush1.msra.mxu0 %v3566
    %3719 = vmatprep.subr.mxu0 %v3563
    %3720 = vmatpush1.msra.mxu0 %v3562
    %3721 = vmatprep.subr.mxu0 %v3559
    %3722 = vmatpush1.msra.mxu0 %v3558
    %3723 = vmatprep.subr.mxu0 0.0
    %3724 = vmatpush2.msra.mxu0 0.0
    %3725 = vmatprep.subr.mxu0 0.0
    %3726 = vmatpush2.msra.mxu0 0.0
    %3727 = vmatprep.subr.mxu0 0.0
    %3728 = vmatpush2.msra.mxu0 0.0
    %3729 = vmatprep.subr.mxu0 0.0
    %3730 = vmatpush2.msra.mxu0 0.0
    %3731 = vmatprep.subr.mxu0 0.0
    %3732 = vmatpush2.msra.mxu0 0.0
    %3733 = vmatprep.subr.mxu0 0.0
    %3734 = vmatpush2.msra.mxu0 0.0
    %3735 = vmatprep.subr.mxu0 0.0
    %3736 = vmatpush2.msra.mxu0 0.0
    %3737 = vmatprep.subr.mxu0 0.0
    %3738 = vmatpush2.msra.mxu0 0.0
    %3739 = vmatprep.subr.mxu0 0.0
    %3740 = vmatpush2.msra.mxu0 0.0
    %3741 = vmatprep.subr.mxu0 0.0
    %3742 = vmatpush2.msra.mxu0 0.0
    %3743 = vmatprep.subr.mxu0 0.0
    %3744 = vmatpush2.msra.mxu0 0.0
    %3745 = vmatprep.subr.mxu0 0.0
    %3746 = vmatpush2.msra.mxu0 0.0
    %3747 = vmatprep.subr.mxu0 0.0
    %3748 = vmatpush2.msra.mxu0 0.0
    %3749 = vmatprep.subr.mxu0 0.0
    %3750 = vmatpush2.msra.mxu0 0.0
    %3751 = vmatprep.subr.mxu0 0.0
    %3752 = vmatpush2.msra.mxu0 0.0
    %3753 = vmatprep.subr.mxu0 0.0
    %3754 = vmatpush2.msra.mxu0 0.0
    %3755 = vmatprep.mubr.f32.mxu0 0.0
    %3756 = vmatmul.mubr.f32.gmra.mxu0 %v3554
    %v3757 = vpop.f32.mrf.mxu0
    %v3758 = vadd.f32 0.0, %v3757
    %v3759 = vpop.f32.mrf.mxu0
    %v3760 = vadd.f32 0.0, %v3759
    %3761 = vdwg.mxu0
    %v3762 = vadd.f32 %v3314, %v3687
    %v3763 = vadd.f32 %v3315, %v3689
    %v3764 = vadd.f32 %v3316, %v3758
    %v3765 = vadd.f32 %v3317, %v3760
    %v3766 = vxor.u32 %v3762, 2147483648
    %v3767 = vmul.f32 %v3766, 1.442695
    %v3768 = vpow.pop %v3767
    %v3769 = vadd.f32 %v3768, 1.0
    %v3770 = vrcp.pop %v3769
    %v3771 = vmul.f32 1.0, %v3770
    %v3772 = vxor.u32 %v3763, 2147483648
    %v3773 = vmul.f32 %v3772, 1.442695
    %v3774 = vpow.pop %v3773
    %v3775 = vadd.f32 %v3774, 1.0
    %v3776 = vrcp.pop %v3775
    %v3777 = vmul.f32 1.0, %v3776
    %v3778 = vtanh.pop %v3764
    %v3779 = vxor.u32 %v3765, 2147483648
    %v3780 = vmul.f32 %v3779, 1.442695
    %v3781 = vpow.pop %v3780
    %v3782 = vadd.f32 %v3781, 1.0
    %v3783 = vrcp.pop %v3782
    %v3784 = vmul.f32 1.0, %v3783
    %v3785 = vmul.f32 %v3777, %v3555
    %v3786 = vmul.f32 %v3771, %v3778
    %v3787 = vadd.f32 %v3785, %v3786
    %v3788 = vtanh.pop %v3787
    %v3789 = vmul.f32 %v3784, %v3788
    %3790 = vst [vmem:[#allocation3] sm:$0xff] %v3553
    %3791 = vst [vmem:[#allocation4] sm:$0xff] %v3551
    %3792 = vst [vmem:[#allocation5] sm:$0xff] %v3789
    %3793 = vst [vmem:[#allocation6] sm:$0xff] %v3787
    %s3794 = scalar_lea.vmem [#allocation7], 40
    %3795 = vst [vmem:[%s3794] sm:$0xff] %v3553
    %s3796 = scalar_lea.vmem [#allocation8], 16
    %3797 = vst [vmem:[%s3796] sm:$0xff] %v3789
    %v3798 = vld [vmem:[%s1349] sm:$0xff]
    %v3799 = vld [vmem:[%s1349 + $0x8] sm:$0xff]
    %v3800 = vld [vmem:[%s1349 + $0x10] sm:$0xff]
    %v3801 = vld [vmem:[%s1349 + $0x18] sm:$0xff]
    %v3802 = vld [vmem:[%s1342 + $0x20] sm:$0xff]
    %v3803 = vld [vmem:[%s1342 + $0x28] sm:$0xff]
    %v3804 = vld [vmem:[%s1342 + $0x30] sm:$0xff]
    %v3805 = vld [vmem:[%s1342 + $0x38] sm:$0xff]
    %v3806 = vld [vmem:[#allocation3] sm:$0xff]
    %v3807 = vld [vmem:[#allocation4] sm:$0xff]
    %v3808 = vld [vmem:[#allocation15] sm:$0xff]
    %v3809 = vld [vmem:[#allocation15 + $0x8] sm:$0xff]
    %v3810 = vld [vmem:[#allocation15 + $0x10] sm:$0xff]
    %v3811 = vld [vmem:[#allocation15 + $0x18] sm:$0xff]
    %v3812 = vld [vmem:[#allocation15 + $0x20] sm:$0xff]
    %v3813 = vld [vmem:[#allocation15 + $0x28] sm:$0xff]
    %v3814 = vld [vmem:[#allocation15 + $0x30] sm:$0xff]
    %v3815 = vld [vmem:[#allocation15 + $0x38] sm:$0xff]
    %v3816 = vld [vmem:[#allocation15 + $0x40] sm:$0xff]
    %v3817 = vld [vmem:[#allocation15 + $0x48] sm:$0xff]
    %v3818 = vld [vmem:[#allocation15 + $0x50] sm:$0xff]
    %v3819 = vld [vmem:[#allocation15 + $0x58] sm:$0xff]
    %v3820 = vld [vmem:[#allocation15 + $0x60] sm:$0xff]
    %v3821 = vld [vmem:[#allocation15 + $0x68] sm:$0xff]
    %v3822 = vld [vmem:[#allocation15 + $0x70] sm:$0xff]
    %v3823 = vld [vmem:[#allocation15 + $0x78] sm:$0xff]
    %v3824 = vld [vmem:[#allocation15 + $0x80] sm:$0xff]
    %v3825 = vld [vmem:[#allocation15 + $0x88] sm:$0xff]
    %v3826 = vld [vmem:[#allocation15 + $0x90] sm:$0xff]
    %v3827 = vld [vmem:[#allocation15 + $0x98] sm:$0xff]
    %v3828 = vld [vmem:[#allocation15 + $0xa0] sm:$0xff]
    %v3829 = vld [vmem:[#allocation15 + $0xa8] sm:$0xff]
    %v3830 = vld [vmem:[#allocation15 + $0xb0] sm:$0xff]
    %v3831 = vld [vmem:[#allocation15 + $0xb8] sm:$0xff]
    %v3832 = vld [vmem:[#allocation15 + $0xc0] sm:$0xff]
    %v3833 = vld [vmem:[#allocation15 + $0xc8] sm:$0xff]
    %v3834 = vld [vmem:[#allocation15 + $0xd0] sm:$0xff]
    %v3835 = vld [vmem:[#allocation15 + $0xd8] sm:$0xff]
    %v3836 = vld [vmem:[#allocation15 + $0xe0] sm:$0xff]
    %v3837 = vld [vmem:[#allocation15 + $0xe8] sm:$0xff]
    %v3838 = vld [vmem:[#allocation15 + $0xf0] sm:$0xff]
    %v3839 = vld [vmem:[#allocation15 + $0xf8] sm:$0xff]
    %v3840 = vld [vmem:[#allocation15 + $0x100] sm:$0xff]
    %v3841 = vld [vmem:[#allocation15 + $0x108] sm:$0xff]
    %v3842 = vld [vmem:[#allocation15 + $0x110] sm:$0xff]
    %v3843 = vld [vmem:[#allocation15 + $0x118] sm:$0xff]
    %v3844 = vld [vmem:[#allocation15 + $0x120] sm:$0xff]
    %v3845 = vld [vmem:[#allocation15 + $0x128] sm:$0xff]
    %v3846 = vld [vmem:[#allocation15 + $0x130] sm:$0xff]
    %v3847 = vld [vmem:[#allocation15 + $0x138] sm:$0xff]
    %v3848 = vld [vmem:[#allocation15 + $0x140] sm:$0xff]
    %v3849 = vld [vmem:[#allocation15 + $0x148] sm:$0xff]
    %v3850 = vld [vmem:[#allocation15 + $0x150] sm:$0xff]
    %v3851 = vld [vmem:[#allocation15 + $0x158] sm:$0xff]
    %v3852 = vld [vmem:[#allocation15 + $0x160] sm:$0xff]
    %v3853 = vld [vmem:[#allocation15 + $0x168] sm:$0xff]
    %v3854 = vld [vmem:[#allocation15 + $0x170] sm:$0xff]
    %v3855 = vld [vmem:[#allocation15 + $0x178] sm:$0xff]
    %v3856 = vld [vmem:[#allocation15 + $0x180] sm:$0xff]
    %v3857 = vld [vmem:[#allocation15 + $0x188] sm:$0xff]
    %v3858 = vld [vmem:[#allocation15 + $0x190] sm:$0xff]
    %v3859 = vld [vmem:[#allocation15 + $0x198] sm:$0xff]
    %v3860 = vld [vmem:[#allocation15 + $0x1a0] sm:$0xff]
    %v3861 = vld [vmem:[#allocation15 + $0x1a8] sm:$0xff]
    %v3862 = vld [vmem:[#allocation15 + $0x1b0] sm:$0xff]
    %v3863 = vld [vmem:[#allocation15 + $0x1b8] sm:$0xff]
    %v3864 = vld [vmem:[#allocation15 + $0x1c0] sm:$0xff]
    %v3865 = vld [vmem:[#allocation15 + $0x1c8] sm:$0xff]
    %v3866 = vld [vmem:[#allocation15 + $0x1d0] sm:$0xff]
    %v3867 = vld [vmem:[#allocation15 + $0x1d8] sm:$0xff]
    %v3868 = vld [vmem:[#allocation15 + $0x1e0] sm:$0xff]
    %v3869 = vld [vmem:[#allocation15 + $0x1e8] sm:$0xff]
    %v3870 = vld [vmem:[#allocation15 + $0x1f0] sm:$0xff]
    %v3871 = vld [vmem:[#allocation15 + $0x1f8] sm:$0xff]
    %3872 = vmatprep.subr.mxu0 %v3869
    %3873 = vmatpush1.msra.mxu0 %v3868
    %3874 = vmatprep.subr.mxu0 %v3865
    %3875 = vmatpush1.msra.mxu0 %v3864
    %3876 = vmatprep.subr.mxu0 %v3861
    %3877 = vmatpush1.msra.mxu0 %v3860
    %3878 = vmatprep.subr.mxu0 %v3857
    %3879 = vmatpush1.msra.mxu0 %v3856
    %3880 = vmatprep.subr.mxu0 %v3853
    %3881 = vmatpush1.msra.mxu0 %v3852
    %3882 = vmatprep.subr.mxu0 %v3849
    %3883 = vmatpush1.msra.mxu0 %v3848
    %3884 = vmatprep.subr.mxu0 %v3845
    %3885 = vmatpush1.msra.mxu0 %v3844
    %3886 = vmatprep.subr.mxu0 %v3841
    %3887 = vmatpush1.msra.mxu0 %v3840
    %3888 = vmatprep.subr.mxu0 %v3837
    %3889 = vmatpush1.msra.mxu0 %v3836
    %3890 = vmatprep.subr.mxu0 %v3833
    %3891 = vmatpush1.msra.mxu0 %v3832
    %3892 = vmatprep.subr.mxu0 %v3829
    %3893 = vmatpush1.msra.mxu0 %v3828
    %3894 = vmatprep.subr.mxu0 %v3825
    %3895 = vmatpush1.msra.mxu0 %v3824
    %3896 = vmatprep.subr.mxu0 %v3821
    %3897 = vmatpush1.msra.mxu0 %v3820
    %3898 = vmatprep.subr.mxu0 %v3817
    %3899 = vmatpush1.msra.mxu0 %v3816
    %3900 = vmatprep.subr.mxu0 %v3813
    %3901 = vmatpush1.msra.mxu0 %v3812
    %3902 = vmatprep.subr.mxu0 %v3809
    %3903 = vmatpush1.msra.mxu0 %v3808
    %3904 = vmatprep.subr.mxu0 0.0
    %3905 = vmatpush2.msra.mxu0 0.0
    %3906 = vmatprep.subr.mxu0 0.0
    %3907 = vmatpush2.msra.mxu0 0.0
    %3908 = vmatprep.subr.mxu0 0.0
    %3909 = vmatpush2.msra.mxu0 0.0
    %3910 = vmatprep.subr.mxu0 0.0
    %3911 = vmatpush2.msra.mxu0 0.0
    %3912 = vmatprep.subr.mxu0 0.0
    %3913 = vmatpush2.msra.mxu0 0.0
    %3914 = vmatprep.subr.mxu0 0.0
    %3915 = vmatpush2.msra.mxu0 0.0
    %3916 = vmatprep.subr.mxu0 0.0
    %3917 = vmatpush2.msra.mxu0 0.0
    %3918 = vmatprep.subr.mxu0 0.0
    %3919 = vmatpush2.msra.mxu0 0.0
    %3920 = vmatprep.subr.mxu0 0.0
    %3921 = vmatpush2.msra.mxu0 0.0
    %3922 = vmatprep.subr.mxu0 0.0
    %3923 = vmatpush2.msra.mxu0 0.0
    %3924 = vmatprep.subr.mxu0 0.0
    %3925 = vmatpush2.msra.mxu0 0.0
    %3926 = vmatprep.subr.mxu0 0.0
    %3927 = vmatpush2.msra.mxu0 0.0
    %3928 = vmatprep.subr.mxu0 0.0
    %3929 = vmatpush2.msra.mxu0 0.0
    %3930 = vmatprep.subr.mxu0 0.0
    %3931 = vmatpush2.msra.mxu0 0.0
    %3932 = vmatprep.subr.mxu0 0.0
    %3933 = vmatpush2.msra.mxu0 0.0
    %3934 = vmatprep.subr.mxu0 0.0
    %3935 = vmatpush2.msra.mxu0 0.0
    %3936 = vmatprep.mubr.f32.mxu0 0.0
    %3937 = vmatmul.mubr.f32.gmra.mxu0 %v3806
    %v3938 = vpop.f32.mrf.mxu0
    %v3939 = vadd.f32 0.0, %v3938
    %v3940 = vpop.f32.mrf.mxu0
    %v3941 = vadd.f32 0.0, %v3940
    %3942 = vdwg.mxu0
    %3943 = vmatprep.subr.mxu0 %v3871
    %3944 = vmatpush1.msra.mxu0 %v3870
    %3945 = vmatprep.subr.mxu0 %v3867
    %3946 = vmatpush1.msra.mxu0 %v3866
    %3947 = vmatprep.subr.mxu0 %v3863
    %3948 = vmatpush1.msra.mxu0 %v3862
    %3949 = vmatprep.subr.mxu0 %v3859
    %3950 = vmatpush1.msra.mxu0 %v3858
    %3951 = vmatprep.subr.mxu0 %v3855
    %3952 = vmatpush1.msra.mxu0 %v3854
    %3953 = vmatprep.subr.mxu0 %v3851
    %3954 = vmatpush1.msra.mxu0 %v3850
    %3955 = vmatprep.subr.mxu0 %v3847
    %3956 = vmatpush1.msra.mxu0 %v3846
    %3957 = vmatprep.subr.mxu0 %v3843
    %3958 = vmatpush1.msra.mxu0 %v3842
    %3959 = vmatprep.subr.mxu0 %v3839
    %3960 = vmatpush1.msra.mxu0 %v3838
    %3961 = vmatprep.subr.mxu0 %v3835
    %3962 = vmatpush1.msra.mxu0 %v3834
    %3963 = vmatprep.subr.mxu0 %v3831
    %3964 = vmatpush1.msra.mxu0 %v3830
    %3965 = vmatprep.subr.mxu0 %v3827
    %3966 = vmatpush1.msra.mxu0 %v3826
    %3967 = vmatprep.subr.mxu0 %v3823
    %3968 = vmatpush1.msra.mxu0 %v3822
    %3969 = vmatprep.subr.mxu0 %v3819
    %3970 = vmatpush1.msra.mxu0 %v3818
    %3971 = vmatprep.subr.mxu0 %v3815
    %3972 = vmatpush1.msra.mxu0 %v3814
    %3973 = vmatprep.subr.mxu0 %v3811
    %3974 = vmatpush1.msra.mxu0 %v3810
    %3975 = vmatprep.subr.mxu0 0.0
    %3976 = vmatpush2.msra.mxu0 0.0
    %3977 = vmatprep.subr.mxu0 0.0
    %3978 = vmatpush2.msra.mxu0 0.0
    %3979 = vmatprep.subr.mxu0 0.0
    %3980 = vmatpush2.msra.mxu0 0.0
    %3981 = vmatprep.subr.mxu0 0.0
    %3982 = vmatpush2.msra.mxu0 0.0
    %3983 = vmatprep.subr.mxu0 0.0
    %3984 = vmatpush2.msra.mxu0 0.0
    %3985 = vmatprep.subr.mxu0 0.0
    %3986 = vmatpush2.msra.mxu0 0.0
    %3987 = vmatprep.subr.mxu0 0.0
    %3988 = vmatpush2.msra.mxu0 0.0
    %3989 = vmatprep.subr.mxu0 0.0
    %3990 = vmatpush2.msra.mxu0 0.0
    %3991 = vmatprep.subr.mxu0 0.0
    %3992 = vmatpush2.msra.mxu0 0.0
    %3993 = vmatprep.subr.mxu0 0.0
    %3994 = vmatpush2.msra.mxu0 0.0
    %3995 = vmatprep.subr.mxu0 0.0
    %3996 = vmatpush2.msra.mxu0 0.0
    %3997 = vmatprep.subr.mxu0 0.0
    %3998 = vmatpush2.msra.mxu0 0.0
    %3999 = vmatprep.subr.mxu0 0.0
    %4000 = vmatpush2.msra.mxu0 0.0
    %4001 = vmatprep.subr.mxu0 0.0
    %4002 = vmatpush2.msra.mxu0 0.0
    %4003 = vmatprep.subr.mxu0 0.0
    %4004 = vmatpush2.msra.mxu0 0.0
    %4005 = vmatprep.subr.mxu0 0.0
    %4006 = vmatpush2.msra.mxu0 0.0
    %4007 = vmatprep.mubr.f32.mxu0 0.0
    %4008 = vmatmul.mubr.f32.gmra.mxu0 %v3806
    %v4009 = vpop.f32.mrf.mxu0
    %v4010 = vadd.f32 0.0, %v4009
    %v4011 = vpop.f32.mrf.mxu0
    %v4012 = vadd.f32 0.0, %v4011
    %4013 = vdwg.mxu0
    %v4014 = vadd.f32 %v3798, %v3939
    %v4015 = vadd.f32 %v3799, %v3941
    %v4016 = vadd.f32 %v3800, %v4010
    %v4017 = vadd.f32 %v3801, %v4012
    %v4018 = vxor.u32 %v4014, 2147483648
    %v4019 = vmul.f32 %v4018, 1.442695
    %v4020 = vpow.pop %v4019
    %v4021 = vadd.f32 %v4020, 1.0
    %v4022 = vrcp.pop %v4021
    %v4023 = vmul.f32 1.0, %v4022
    %v4024 = vxor.u32 %v4015, 2147483648
    %v4025 = vmul.f32 %v4024, 1.442695
    %v4026 = vpow.pop %v4025
    %v4027 = vadd.f32 %v4026, 1.0
    %v4028 = vrcp.pop %v4027
    %v4029 = vmul.f32 1.0, %v4028
    %v4030 = vtanh.pop %v4016
    %v4031 = vxor.u32 %v4017, 2147483648
    %v4032 = vmul.f32 %v4031, 1.442695
    %v4033 = vpow.pop %v4032
    %v4034 = vadd.f32 %v4033, 1.0
    %v4035 = vrcp.pop %v4034
    %v4036 = vmul.f32 1.0, %v4035
    %v4037 = vmul.f32 %v4029, %v3807
    %v4038 = vmul.f32 %v4023, %v4030
    %v4039 = vadd.f32 %v4037, %v4038
    %v4040 = vtanh.pop %v4039
    %v4041 = vmul.f32 %v4036, %v4040
    %v4042 = vld [vmem:[#allocation5] sm:$0xff]
    %v4043 = vld [vmem:[#allocation6] sm:$0xff]
    %v4044 = vld [vmem:[#allocation17] sm:$0xff]
    %v4045 = vld [vmem:[#allocation17 + $0x8] sm:$0xff]
    %v4046 = vld [vmem:[#allocation17 + $0x10] sm:$0xff]
    %v4047 = vld [vmem:[#allocation17 + $0x18] sm:$0xff]
    %v4048 = vld [vmem:[#allocation17 + $0x20] sm:$0xff]
    %v4049 = vld [vmem:[#allocation17 + $0x28] sm:$0xff]
    %v4050 = vld [vmem:[#allocation17 + $0x30] sm:$0xff]
    %v4051 = vld [vmem:[#allocation17 + $0x38] sm:$0xff]
    %v4052 = vld [vmem:[#allocation17 + $0x40] sm:$0xff]
    %v4053 = vld [vmem:[#allocation17 + $0x48] sm:$0xff]
    %v4054 = vld [vmem:[#allocation17 + $0x50] sm:$0xff]
    %v4055 = vld [vmem:[#allocation17 + $0x58] sm:$0xff]
    %v4056 = vld [vmem:[#allocation17 + $0x60] sm:$0xff]
    %v4057 = vld [vmem:[#allocation17 + $0x68] sm:$0xff]
    %v4058 = vld [vmem:[#allocation17 + $0x70] sm:$0xff]
    %v4059 = vld [vmem:[#allocation17 + $0x78] sm:$0xff]
    %v4060 = vld [vmem:[#allocation17 + $0x80] sm:$0xff]
    %v4061 = vld [vmem:[#allocation17 + $0x88] sm:$0xff]
    %v4062 = vld [vmem:[#allocation17 + $0x90] sm:$0xff]
    %v4063 = vld [vmem:[#allocation17 + $0x98] sm:$0xff]
    %v4064 = vld [vmem:[#allocation17 + $0xa0] sm:$0xff]
    %v4065 = vld [vmem:[#allocation17 + $0xa8] sm:$0xff]
    %v4066 = vld [vmem:[#allocation17 + $0xb0] sm:$0xff]
    %v4067 = vld [vmem:[#allocation17 + $0xb8] sm:$0xff]
    %v4068 = vld [vmem:[#allocation17 + $0xc0] sm:$0xff]
    %v4069 = vld [vmem:[#allocation17 + $0xc8] sm:$0xff]
    %v4070 = vld [vmem:[#allocation17 + $0xd0] sm:$0xff]
    %v4071 = vld [vmem:[#allocation17 + $0xd8] sm:$0xff]
    %v4072 = vld [vmem:[#allocation17 + $0xe0] sm:$0xff]
    %v4073 = vld [vmem:[#allocation17 + $0xe8] sm:$0xff]
    %v4074 = vld [vmem:[#allocation17 + $0xf0] sm:$0xff]
    %v4075 = vld [vmem:[#allocation17 + $0xf8] sm:$0xff]
    %v4076 = vld [vmem:[#allocation17 + $0x100] sm:$0xff]
    %v4077 = vld [vmem:[#allocation17 + $0x108] sm:$0xff]
    %v4078 = vld [vmem:[#allocation17 + $0x110] sm:$0xff]
    %v4079 = vld [vmem:[#allocation17 + $0x118] sm:$0xff]
    %v4080 = vld [vmem:[#allocation17 + $0x120] sm:$0xff]
    %v4081 = vld [vmem:[#allocation17 + $0x128] sm:$0xff]
    %v4082 = vld [vmem:[#allocation17 + $0x130] sm:$0xff]
    %v4083 = vld [vmem:[#allocation17 + $0x138] sm:$0xff]
    %v4084 = vld [vmem:[#allocation17 + $0x140] sm:$0xff]
    %v4085 = vld [vmem:[#allocation17 + $0x148] sm:$0xff]
    %v4086 = vld [vmem:[#allocation17 + $0x150] sm:$0xff]
    %v4087 = vld [vmem:[#allocation17 + $0x158] sm:$0xff]
    %v4088 = vld [vmem:[#allocation17 + $0x160] sm:$0xff]
    %v4089 = vld [vmem:[#allocation17 + $0x168] sm:$0xff]
    %v4090 = vld [vmem:[#allocation17 + $0x170] sm:$0xff]
    %v4091 = vld [vmem:[#allocation17 + $0x178] sm:$0xff]
    %v4092 = vld [vmem:[#allocation17 + $0x180] sm:$0xff]
    %v4093 = vld [vmem:[#allocation17 + $0x188] sm:$0xff]
    %v4094 = vld [vmem:[#allocation17 + $0x190] sm:$0xff]
    %v4095 = vld [vmem:[#allocation17 + $0x198] sm:$0xff]
    %v4096 = vld [vmem:[#allocation17 + $0x1a0] sm:$0xff]
    %v4097 = vld [vmem:[#allocation17 + $0x1a8] sm:$0xff]
    %v4098 = vld [vmem:[#allocation17 + $0x1b0] sm:$0xff]
    %v4099 = vld [vmem:[#allocation17 + $0x1b8] sm:$0xff]
    %v4100 = vld [vmem:[#allocation17 + $0x1c0] sm:$0xff]
    %v4101 = vld [vmem:[#allocation17 + $0x1c8] sm:$0xff]
    %v4102 = vld [vmem:[#allocation17 + $0x1d0] sm:$0xff]
    %v4103 = vld [vmem:[#allocation17 + $0x1d8] sm:$0xff]
    %v4104 = vld [vmem:[#allocation17 + $0x1e0] sm:$0xff]
    %v4105 = vld [vmem:[#allocation17 + $0x1e8] sm:$0xff]
    %v4106 = vld [vmem:[#allocation17 + $0x1f0] sm:$0xff]
    %v4107 = vld [vmem:[#allocation17 + $0x1f8] sm:$0xff]
    %4108 = vmatprep.subr.mxu0 %v4105
    %4109 = vmatpush1.msra.mxu0 %v4104
    %4110 = vmatprep.subr.mxu0 %v4101
    %4111 = vmatpush1.msra.mxu0 %v4100
    %4112 = vmatprep.subr.mxu0 %v4097
    %4113 = vmatpush1.msra.mxu0 %v4096
    %4114 = vmatprep.subr.mxu0 %v4093
    %4115 = vmatpush1.msra.mxu0 %v4092
    %4116 = vmatprep.subr.mxu0 %v4089
    %4117 = vmatpush1.msra.mxu0 %v4088
    %4118 = vmatprep.subr.mxu0 %v4085
    %4119 = vmatpush1.msra.mxu0 %v4084
    %4120 = vmatprep.subr.mxu0 %v4081
    %4121 = vmatpush1.msra.mxu0 %v4080
    %4122 = vmatprep.subr.mxu0 %v4077
    %4123 = vmatpush1.msra.mxu0 %v4076
    %4124 = vmatprep.subr.mxu0 %v4073
    %4125 = vmatpush1.msra.mxu0 %v4072
    %4126 = vmatprep.subr.mxu0 %v4069
    %4127 = vmatpush1.msra.mxu0 %v4068
    %4128 = vmatprep.subr.mxu0 %v4065
    %4129 = vmatpush1.msra.mxu0 %v4064
    %4130 = vmatprep.subr.mxu0 %v4061
    %4131 = vmatpush1.msra.mxu0 %v4060
    %4132 = vmatprep.subr.mxu0 %v4057
    %4133 = vmatpush1.msra.mxu0 %v4056
    %4134 = vmatprep.subr.mxu0 %v4053
    %4135 = vmatpush1.msra.mxu0 %v4052
    %4136 = vmatprep.subr.mxu0 %v4049
    %4137 = vmatpush1.msra.mxu0 %v4048
    %4138 = vmatprep.subr.mxu0 %v4045
    %4139 = vmatpush1.msra.mxu0 %v4044
    %4140 = vmatprep.subr.mxu0 0.0
    %4141 = vmatpush2.msra.mxu0 0.0
    %4142 = vmatprep.subr.mxu0 0.0
    %4143 = vmatpush2.msra.mxu0 0.0
    %4144 = vmatprep.subr.mxu0 0.0
    %4145 = vmatpush2.msra.mxu0 0.0
    %4146 = vmatprep.subr.mxu0 0.0
    %4147 = vmatpush2.msra.mxu0 0.0
    %4148 = vmatprep.subr.mxu0 0.0
    %4149 = vmatpush2.msra.mxu0 0.0
    %4150 = vmatprep.subr.mxu0 0.0
    %4151 = vmatpush2.msra.mxu0 0.0
    %4152 = vmatprep.subr.mxu0 0.0
    %4153 = vmatpush2.msra.mxu0 0.0
    %4154 = vmatprep.subr.mxu0 0.0
    %4155 = vmatpush2.msra.mxu0 0.0
    %4156 = vmatprep.subr.mxu0 0.0
    %4157 = vmatpush2.msra.mxu0 0.0
    %4158 = vmatprep.subr.mxu0 0.0
    %4159 = vmatpush2.msra.mxu0 0.0
    %4160 = vmatprep.subr.mxu0 0.0
    %4161 = vmatpush2.msra.mxu0 0.0
    %4162 = vmatprep.subr.mxu0 0.0
    %4163 = vmatpush2.msra.mxu0 0.0
    %4164 = vmatprep.subr.mxu0 0.0
    %4165 = vmatpush2.msra.mxu0 0.0
    %4166 = vmatprep.subr.mxu0 0.0
    %4167 = vmatpush2.msra.mxu0 0.0
    %4168 = vmatprep.subr.mxu0 0.0
    %4169 = vmatpush2.msra.mxu0 0.0
    %4170 = vmatprep.subr.mxu0 0.0
    %4171 = vmatpush2.msra.mxu0 0.0
    %4172 = vmatprep.mubr.f32.mxu0 0.0
    %4173 = vmatmul.mubr.f32.gmra.mxu0 %v4042
    %v4174 = vpop.f32.mrf.mxu0
    %v4175 = vadd.f32 0.0, %v4174
    %v4176 = vpop.f32.mrf.mxu0
    %v4177 = vadd.f32 0.0, %v4176
    %4178 = vdwg.mxu0
    %4179 = vmatprep.subr.mxu0 %v4107
    %4180 = vmatpush1.msra.mxu0 %v4106
    %4181 = vmatprep.subr.mxu0 %v4103
    %4182 = vmatpush1.msra.mxu0 %v4102
    %4183 = vmatprep.subr.mxu0 %v4099
    %4184 = vmatpush1.msra.mxu0 %v4098
    %4185 = vmatprep.subr.mxu0 %v4095
    %4186 = vmatpush1.msra.mxu0 %v4094
    %4187 = vmatprep.subr.mxu0 %v4091
    %4188 = vmatpush1.msra.mxu0 %v4090
    %4189 = vmatprep.subr.mxu0 %v4087
    %4190 = vmatpush1.msra.mxu0 %v4086
    %4191 = vmatprep.subr.mxu0 %v4083
    %4192 = vmatpush1.msra.mxu0 %v4082
    %4193 = vmatprep.subr.mxu0 %v4079
    %4194 = vmatpush1.msra.mxu0 %v4078
    %4195 = vmatprep.subr.mxu0 %v4075
    %4196 = vmatpush1.msra.mxu0 %v4074
    %4197 = vmatprep.subr.mxu0 %v4071
    %4198 = vmatpush1.msra.mxu0 %v4070
    %4199 = vmatprep.subr.mxu0 %v4067
    %4200 = vmatpush1.msra.mxu0 %v4066
    %4201 = vmatprep.subr.mxu0 %v4063
    %4202 = vmatpush1.msra.mxu0 %v4062
    %4203 = vmatprep.subr.mxu0 %v4059
    %4204 = vmatpush1.msra.mxu0 %v4058
    %4205 = vmatprep.subr.mxu0 %v4055
    %4206 = vmatpush1.msra.mxu0 %v4054
    %4207 = vmatprep.subr.mxu0 %v4051
    %4208 = vmatpush1.msra.mxu0 %v4050
    %4209 = vmatprep.subr.mxu0 %v4047
    %4210 = vmatpush1.msra.mxu0 %v4046
    %4211 = vmatprep.subr.mxu0 0.0
    %4212 = vmatpush2.msra.mxu0 0.0
    %4213 = vmatprep.subr.mxu0 0.0
    %4214 = vmatpush2.msra.mxu0 0.0
    %4215 = vmatprep.subr.mxu0 0.0
    %4216 = vmatpush2.msra.mxu0 0.0
    %4217 = vmatprep.subr.mxu0 0.0
    %4218 = vmatpush2.msra.mxu0 0.0
    %4219 = vmatprep.subr.mxu0 0.0
    %4220 = vmatpush2.msra.mxu0 0.0
    %4221 = vmatprep.subr.mxu0 0.0
    %4222 = vmatpush2.msra.mxu0 0.0
    %4223 = vmatprep.subr.mxu0 0.0
    %4224 = vmatpush2.msra.mxu0 0.0
    %4225 = vmatprep.subr.mxu0 0.0
    %4226 = vmatpush2.msra.mxu0 0.0
    %4227 = vmatprep.subr.mxu0 0.0
    %4228 = vmatpush2.msra.mxu0 0.0
    %4229 = vmatprep.subr.mxu0 0.0
    %4230 = vmatpush2.msra.mxu0 0.0
    %4231 = vmatprep.subr.mxu0 0.0
    %4232 = vmatpush2.msra.mxu0 0.0
    %4233 = vmatprep.subr.mxu0 0.0
    %4234 = vmatpush2.msra.mxu0 0.0
    %4235 = vmatprep.subr.mxu0 0.0
    %4236 = vmatpush2.msra.mxu0 0.0
    %4237 = vmatprep.subr.mxu0 0.0
    %4238 = vmatpush2.msra.mxu0 0.0
    %4239 = vmatprep.subr.mxu0 0.0
    %4240 = vmatpush2.msra.mxu0 0.0
    %4241 = vmatprep.subr.mxu0 0.0
    %4242 = vmatpush2.msra.mxu0 0.0
    %4243 = vmatprep.mubr.f32.mxu0 0.0
    %4244 = vmatmul.mubr.f32.gmra.mxu0 %v4042
    %v4245 = vpop.f32.mrf.mxu0
    %v4246 = vadd.f32 0.0, %v4245
    %v4247 = vpop.f32.mrf.mxu0
    %v4248 = vadd.f32 0.0, %v4247
    %4249 = vdwg.mxu0
    %v4250 = vadd.f32 %v3802, %v4175
    %v4251 = vadd.f32 %v3803, %v4177
    %v4252 = vadd.f32 %v3804, %v4246
    %v4253 = vadd.f32 %v3805, %v4248
    %v4254 = vxor.u32 %v4250, 2147483648
    %v4255 = vmul.f32 %v4254, 1.442695
    %v4256 = vpow.pop %v4255
    %v4257 = vadd.f32 %v4256, 1.0
    %v4258 = vrcp.pop %v4257
    %v4259 = vmul.f32 1.0, %v4258
    %v4260 = vxor.u32 %v4251, 2147483648
    %v4261 = vmul.f32 %v4260, 1.442695
    %v4262 = vpow.pop %v4261
    %v4263 = vadd.f32 %v4262, 1.0
    %v4264 = vrcp.pop %v4263
    %v4265 = vmul.f32 1.0, %v4264
    %v4266 = vtanh.pop %v4252
    %v4267 = vxor.u32 %v4253, 2147483648
    %v4268 = vmul.f32 %v4267, 1.442695
    %v4269 = vpow.pop %v4268
    %v4270 = vadd.f32 %v4269, 1.0
    %v4271 = vrcp.pop %v4270
    %v4272 = vmul.f32 1.0, %v4271
    %v4273 = vmul.f32 %v4265, %v4043
    %v4274 = vmul.f32 %v4259, %v4266
    %v4275 = vadd.f32 %v4273, %v4274
    %v4276 = vtanh.pop %v4275
    %v4277 = vmul.f32 %v4272, %v4276
    %4278 = vst [vmem:[#allocation3] sm:$0xff] %v4041
    %4279 = vst [vmem:[#allocation4] sm:$0xff] %v4039
    %4280 = vst [vmem:[#allocation5] sm:$0xff] %v4277
    %4281 = vst [vmem:[#allocation6] sm:$0xff] %v4275
    %s4282 = scalar_lea.vmem [#allocation7], 48
    %4283 = vst [vmem:[%s4282] sm:$0xff] %v4041
    %s4284 = scalar_lea.vmem [#allocation8], 8
    %4285 = vst [vmem:[%s4284] sm:$0xff] %v4277
    %v4286 = vld [vmem:[%s856] sm:$0xff]
    %v4287 = vld [vmem:[%s856 + $0x8] sm:$0xff]
    %v4288 = vld [vmem:[%s856 + $0x10] sm:$0xff]
    %v4289 = vld [vmem:[%s856 + $0x18] sm:$0xff]
    %v4290 = vld [vmem:[%s849 + $0x20] sm:$0xff]
    %v4291 = vld [vmem:[%s849 + $0x28] sm:$0xff]
    %v4292 = vld [vmem:[%s849 + $0x30] sm:$0xff]
    %v4293 = vld [vmem:[%s849 + $0x38] sm:$0xff]
    %v4294 = vld [vmem:[#allocation3] sm:$0xff]
    %v4295 = vld [vmem:[#allocation4] sm:$0xff]
    %v4296 = vld [vmem:[#allocation15] sm:$0xff]
    %v4297 = vld [vmem:[#allocation15 + $0x8] sm:$0xff]
    %v4298 = vld [vmem:[#allocation15 + $0x10] sm:$0xff]
    %v4299 = vld [vmem:[#allocation15 + $0x18] sm:$0xff]
    %v4300 = vld [vmem:[#allocation15 + $0x20] sm:$0xff]
    %v4301 = vld [vmem:[#allocation15 + $0x28] sm:$0xff]
    %v4302 = vld [vmem:[#allocation15 + $0x30] sm:$0xff]
    %v4303 = vld [vmem:[#allocation15 + $0x38] sm:$0xff]
    %v4304 = vld [vmem:[#allocation15 + $0x40] sm:$0xff]
    %v4305 = vld [vmem:[#allocation15 + $0x48] sm:$0xff]
    %v4306 = vld [vmem:[#allocation15 + $0x50] sm:$0xff]
    %v4307 = vld [vmem:[#allocation15 + $0x58] sm:$0xff]
    %v4308 = vld [vmem:[#allocation15 + $0x60] sm:$0xff]
    %v4309 = vld [vmem:[#allocation15 + $0x68] sm:$0xff]
    %v4310 = vld [vmem:[#allocation15 + $0x70] sm:$0xff]
    %v4311 = vld [vmem:[#allocation15 + $0x78] sm:$0xff]
    %v4312 = vld [vmem:[#allocation15 + $0x80] sm:$0xff]
    %v4313 = vld [vmem:[#allocation15 + $0x88] sm:$0xff]
    %v4314 = vld [vmem:[#allocation15 + $0x90] sm:$0xff]
    %v4315 = vld [vmem:[#allocation15 + $0x98] sm:$0xff]
    %v4316 = vld [vmem:[#allocation15 + $0xa0] sm:$0xff]
    %v4317 = vld [vmem:[#allocation15 + $0xa8] sm:$0xff]
    %v4318 = vld [vmem:[#allocation15 + $0xb0] sm:$0xff]
    %v4319 = vld [vmem:[#allocation15 + $0xb8] sm:$0xff]
    %v4320 = vld [vmem:[#allocation15 + $0xc0] sm:$0xff]
    %v4321 = vld [vmem:[#allocation15 + $0xc8] sm:$0xff]
    %v4322 = vld [vmem:[#allocation15 + $0xd0] sm:$0xff]
    %v4323 = vld [vmem:[#allocation15 + $0xd8] sm:$0xff]
    %v4324 = vld [vmem:[#allocation15 + $0xe0] sm:$0xff]
    %v4325 = vld [vmem:[#allocation15 + $0xe8] sm:$0xff]
    %v4326 = vld [vmem:[#allocation15 + $0xf0] sm:$0xff]
    %v4327 = vld [vmem:[#allocation15 + $0xf8] sm:$0xff]
    %v4328 = vld [vmem:[#allocation15 + $0x100] sm:$0xff]
    %v4329 = vld [vmem:[#allocation15 + $0x108] sm:$0xff]
    %v4330 = vld [vmem:[#allocation15 + $0x110] sm:$0xff]
    %v4331 = vld [vmem:[#allocation15 + $0x118] sm:$0xff]
    %v4332 = vld [vmem:[#allocation15 + $0x120] sm:$0xff]
    %v4333 = vld [vmem:[#allocation15 + $0x128] sm:$0xff]
    %v4334 = vld [vmem:[#allocation15 + $0x130] sm:$0xff]
    %v4335 = vld [vmem:[#allocation15 + $0x138] sm:$0xff]
    %v4336 = vld [vmem:[#allocation15 + $0x140] sm:$0xff]
    %v4337 = vld [vmem:[#allocation15 + $0x148] sm:$0xff]
    %v4338 = vld [vmem:[#allocation15 + $0x150] sm:$0xff]
    %v4339 = vld [vmem:[#allocation15 + $0x158] sm:$0xff]
    %v4340 = vld [vmem:[#allocation15 + $0x160] sm:$0xff]
    %v4341 = vld [vmem:[#allocation15 + $0x168] sm:$0xff]
    %v4342 = vld [vmem:[#allocation15 + $0x170] sm:$0xff]
    %v4343 = vld [vmem:[#allocation15 + $0x178] sm:$0xff]
    %v4344 = vld [vmem:[#allocation15 + $0x180] sm:$0xff]
    %v4345 = vld [vmem:[#allocation15 + $0x188] sm:$0xff]
    %v4346 = vld [vmem:[#allocation15 + $0x190] sm:$0xff]
    %v4347 = vld [vmem:[#allocation15 + $0x198] sm:$0xff]
    %v4348 = vld [vmem:[#allocation15 + $0x1a0] sm:$0xff]
    %v4349 = vld [vmem:[#allocation15 + $0x1a8] sm:$0xff]
    %v4350 = vld [vmem:[#allocation15 + $0x1b0] sm:$0xff]
    %v4351 = vld [vmem:[#allocation15 + $0x1b8] sm:$0xff]
    %v4352 = vld [vmem:[#allocation15 + $0x1c0] sm:$0xff]
    %v4353 = vld [vmem:[#allocation15 + $0x1c8] sm:$0xff]
    %v4354 = vld [vmem:[#allocation15 + $0x1d0] sm:$0xff]
    %v4355 = vld [vmem:[#allocation15 + $0x1d8] sm:$0xff]
    %v4356 = vld [vmem:[#allocation15 + $0x1e0] sm:$0xff]
    %v4357 = vld [vmem:[#allocation15 + $0x1e8] sm:$0xff]
    %v4358 = vld [vmem:[#allocation15 + $0x1f0] sm:$0xff]
    %v4359 = vld [vmem:[#allocation15 + $0x1f8] sm:$0xff]
    %4360 = vmatprep.subr.mxu0 %v4357
    %4361 = vmatpush1.msra.mxu0 %v4356
    %4362 = vmatprep.subr.mxu0 %v4353
    %4363 = vmatpush1.msra.mxu0 %v4352
    %4364 = vmatprep.subr.mxu0 %v4349
    %4365 = vmatpush1.msra.mxu0 %v4348
    %4366 = vmatprep.subr.mxu0 %v4345
    %4367 = vmatpush1.msra.mxu0 %v4344
    %4368 = vmatprep.subr.mxu0 %v4341
    %4369 = vmatpush1.msra.mxu0 %v4340
    %4370 = vmatprep.subr.mxu0 %v4337
    %4371 = vmatpush1.msra.mxu0 %v4336
    %4372 = vmatprep.subr.mxu0 %v4333
    %4373 = vmatpush1.msra.mxu0 %v4332
    %4374 = vmatprep.subr.mxu0 %v4329
    %4375 = vmatpush1.msra.mxu0 %v4328
    %4376 = vmatprep.subr.mxu0 %v4325
    %4377 = vmatpush1.msra.mxu0 %v4324
    %4378 = vmatprep.subr.mxu0 %v4321
    %4379 = vmatpush1.msra.mxu0 %v4320
    %4380 = vmatprep.subr.mxu0 %v4317
    %4381 = vmatpush1.msra.mxu0 %v4316
    %4382 = vmatprep.subr.mxu0 %v4313
    %4383 = vmatpush1.msra.mxu0 %v4312
    %4384 = vmatprep.subr.mxu0 %v4309
    %4385 = vmatpush1.msra.mxu0 %v4308
    %4386 = vmatprep.subr.mxu0 %v4305
    %4387 = vmatpush1.msra.mxu0 %v4304
    %4388 = vmatprep.subr.mxu0 %v4301
    %4389 = vmatpush1.msra.mxu0 %v4300
    %4390 = vmatprep.subr.mxu0 %v4297
    %4391 = vmatpush1.msra.mxu0 %v4296
    %4392 = vmatprep.subr.mxu0 0.0
    %4393 = vmatpush2.msra.mxu0 0.0
    %4394 = vmatprep.subr.mxu0 0.0
    %4395 = vmatpush2.msra.mxu0 0.0
    %4396 = vmatprep.subr.mxu0 0.0
    %4397 = vmatpush2.msra.mxu0 0.0
    %4398 = vmatprep.subr.mxu0 0.0
    %4399 = vmatpush2.msra.mxu0 0.0
    %4400 = vmatprep.subr.mxu0 0.0
    %4401 = vmatpush2.msra.mxu0 0.0
    %4402 = vmatprep.subr.mxu0 0.0
    %4403 = vmatpush2.msra.mxu0 0.0
    %4404 = vmatprep.subr.mxu0 0.0
    %4405 = vmatpush2.msra.mxu0 0.0
    %4406 = vmatprep.subr.mxu0 0.0
    %4407 = vmatpush2.msra.mxu0 0.0
    %4408 = vmatprep.subr.mxu0 0.0
    %4409 = vmatpush2.msra.mxu0 0.0
    %4410 = vmatprep.subr.mxu0 0.0
    %4411 = vmatpush2.msra.mxu0 0.0
    %4412 = vmatprep.subr.mxu0 0.0
    %4413 = vmatpush2.msra.mxu0 0.0
    %4414 = vmatprep.subr.mxu0 0.0
    %4415 = vmatpush2.msra.mxu0 0.0
    %4416 = vmatprep.subr.mxu0 0.0
    %4417 = vmatpush2.msra.mxu0 0.0
    %4418 = vmatprep.subr.mxu0 0.0
    %4419 = vmatpush2.msra.mxu0 0.0
    %4420 = vmatprep.subr.mxu0 0.0
    %4421 = vmatpush2.msra.mxu0 0.0
    %4422 = vmatprep.subr.mxu0 0.0
    %4423 = vmatpush2.msra.mxu0 0.0
    %4424 = vmatprep.mubr.f32.mxu0 0.0
    %4425 = vmatmul.mubr.f32.gmra.mxu0 %v4294
    %v4426 = vpop.f32.mrf.mxu0
    %v4427 = vadd.f32 0.0, %v4426
    %v4428 = vpop.f32.mrf.mxu0
    %v4429 = vadd.f32 0.0, %v4428
    %4430 = vdwg.mxu0
    %4431 = vmatprep.subr.mxu0 %v4359
    %4432 = vmatpush1.msra.mxu0 %v4358
    %4433 = vmatprep.subr.mxu0 %v4355
    %4434 = vmatpush1.msra.mxu0 %v4354
    %4435 = vmatprep.subr.mxu0 %v4351
    %4436 = vmatpush1.msra.mxu0 %v4350
    %4437 = vmatprep.subr.mxu0 %v4347
    %4438 = vmatpush1.msra.mxu0 %v4346
    %4439 = vmatprep.subr.mxu0 %v4343
    %4440 = vmatpush1.msra.mxu0 %v4342
    %4441 = vmatprep.subr.mxu0 %v4339
    %4442 = vmatpush1.msra.mxu0 %v4338
    %4443 = vmatprep.subr.mxu0 %v4335
    %4444 = vmatpush1.msra.mxu0 %v4334
    %4445 = vmatprep.subr.mxu0 %v4331
    %4446 = vmatpush1.msra.mxu0 %v4330
    %4447 = vmatprep.subr.mxu0 %v4327
    %4448 = vmatpush1.msra.mxu0 %v4326
    %4449 = vmatprep.subr.mxu0 %v4323
    %4450 = vmatpush1.msra.mxu0 %v4322
    %4451 = vmatprep.subr.mxu0 %v4319
    %4452 = vmatpush1.msra.mxu0 %v4318
    %4453 = vmatprep.subr.mxu0 %v4315
    %4454 = vmatpush1.msra.mxu0 %v4314
    %4455 = vmatprep.subr.mxu0 %v4311
    %4456 = vmatpush1.msra.mxu0 %v4310
    %4457 = vmatprep.subr.mxu0 %v4307
    %4458 = vmatpush1.msra.mxu0 %v4306
    %4459 = vmatprep.subr.mxu0 %v4303
    %4460 = vmatpush1.msra.mxu0 %v4302
    %4461 = vmatprep.subr.mxu0 %v4299
    %4462 = vmatpush1.msra.mxu0 %v4298
    %4463 = vmatprep.subr.mxu0 0.0
    %4464 = vmatpush2.msra.mxu0 0.0
    %4465 = vmatprep.subr.mxu0 0.0
    %4466 = vmatpush2.msra.mxu0 0.0
    %4467 = vmatprep.subr.mxu0 0.0
    %4468 = vmatpush2.msra.mxu0 0.0
    %4469 = vmatprep.subr.mxu0 0.0
    %4470 = vmatpush2.msra.mxu0 0.0
    %4471 = vmatprep.subr.mxu0 0.0
    %4472 = vmatpush2.msra.mxu0 0.0
    %4473 = vmatprep.subr.mxu0 0.0
    %4474 = vmatpush2.msra.mxu0 0.0
    %4475 = vmatprep.subr.mxu0 0.0
    %4476 = vmatpush2.msra.mxu0 0.0
    %4477 = vmatprep.subr.mxu0 0.0
    %4478 = vmatpush2.msra.mxu0 0.0
    %4479 = vmatprep.subr.mxu0 0.0
    %4480 = vmatpush2.msra.mxu0 0.0
    %4481 = vmatprep.subr.mxu0 0.0
    %4482 = vmatpush2.msra.mxu0 0.0
    %4483 = vmatprep.subr.mxu0 0.0
    %4484 = vmatpush2.msra.mxu0 0.0
    %4485 = vmatprep.subr.mxu0 0.0
    %4486 = vmatpush2.msra.mxu0 0.0
    %4487 = vmatprep.subr.mxu0 0.0
    %4488 = vmatpush2.msra.mxu0 0.0
    %4489 = vmatprep.subr.mxu0 0.0
    %4490 = vmatpush2.msra.mxu0 0.0
    %4491 = vmatprep.subr.mxu0 0.0
    %4492 = vmatpush2.msra.mxu0 0.0
    %4493 = vmatprep.subr.mxu0 0.0
    %4494 = vmatpush2.msra.mxu0 0.0
    %4495 = vmatprep.mubr.f32.mxu0 0.0
    %4496 = vmatmul.mubr.f32.gmra.mxu0 %v4294
    %v4497 = vpop.f32.mrf.mxu0
    %v4498 = vadd.f32 0.0, %v4497
    %v4499 = vpop.f32.mrf.mxu0
    %v4500 = vadd.f32 0.0, %v4499
    %4501 = vdwg.mxu0
    %v4502 = vadd.f32 %v4286, %v4427
    %v4503 = vadd.f32 %v4287, %v4429
    %v4504 = vadd.f32 %v4288, %v4498
    %v4505 = vadd.f32 %v4289, %v4500
    %v4506 = vxor.u32 %v4502, 2147483648
    %v4507 = vmul.f32 %v4506, 1.442695
    %v4508 = vpow.pop %v4507
    %v4509 = vadd.f32 %v4508, 1.0
    %v4510 = vrcp.pop %v4509
    %v4511 = vmul.f32 1.0, %v4510
    %v4512 = vxor.u32 %v4503, 2147483648
    %v4513 = vmul.f32 %v4512, 1.442695
    %v4514 = vpow.pop %v4513
    %v4515 = vadd.f32 %v4514, 1.0
    %v4516 = vrcp.pop %v4515
    %v4517 = vmul.f32 1.0, %v4516
    %v4518 = vtanh.pop %v4504
    %v4519 = vxor.u32 %v4505, 2147483648
    %v4520 = vmul.f32 %v4519, 1.442695
    %v4521 = vpow.pop %v4520
    %v4522 = vadd.f32 %v4521, 1.0
    %v4523 = vrcp.pop %v4522
    %v4524 = vmul.f32 1.0, %v4523
    %v4525 = vmul.f32 %v4517, %v4295
    %v4526 = vmul.f32 %v4511, %v4518
    %v4527 = vadd.f32 %v4525, %v4526
    %v4528 = vtanh.pop %v4527
    %v4529 = vmul.f32 %v4524, %v4528
    %v4530 = vld [vmem:[#allocation5] sm:$0xff]
    %v4531 = vld [vmem:[#allocation6] sm:$0xff]
    %v4532 = vld [vmem:[#allocation17] sm:$0xff]
    %v4533 = vld [vmem:[#allocation17 + $0x8] sm:$0xff]
    %v4534 = vld [vmem:[#allocation17 + $0x10] sm:$0xff]
    %v4535 = vld [vmem:[#allocation17 + $0x18] sm:$0xff]
    %v4536 = vld [vmem:[#allocation17 + $0x20] sm:$0xff]
    %v4537 = vld [vmem:[#allocation17 + $0x28] sm:$0xff]
    %v4538 = vld [vmem:[#allocation17 + $0x30] sm:$0xff]
    %v4539 = vld [vmem:[#allocation17 + $0x38] sm:$0xff]
    %v4540 = vld [vmem:[#allocation17 + $0x40] sm:$0xff]
    %v4541 = vld [vmem:[#allocation17 + $0x48] sm:$0xff]
    %v4542 = vld [vmem:[#allocation17 + $0x50] sm:$0xff]
    %v4543 = vld [vmem:[#allocation17 + $0x58] sm:$0xff]
    %v4544 = vld [vmem:[#allocation17 + $0x60] sm:$0xff]
    %v4545 = vld [vmem:[#allocation17 + $0x68] sm:$0xff]
    %v4546 = vld [vmem:[#allocation17 + $0x70] sm:$0xff]
    %v4547 = vld [vmem:[#allocation17 + $0x78] sm:$0xff]
    %v4548 = vld [vmem:[#allocation17 + $0x80] sm:$0xff]
    %v4549 = vld [vmem:[#allocation17 + $0x88] sm:$0xff]
    %v4550 = vld [vmem:[#allocation17 + $0x90] sm:$0xff]
    %v4551 = vld [vmem:[#allocation17 + $0x98] sm:$0xff]
    %v4552 = vld [vmem:[#allocation17 + $0xa0] sm:$0xff]
    %v4553 = vld [vmem:[#allocation17 + $0xa8] sm:$0xff]
    %v4554 = vld [vmem:[#allocation17 + $0xb0] sm:$0xff]
    %v4555 = vld [vmem:[#allocation17 + $0xb8] sm:$0xff]
    %v4556 = vld [vmem:[#allocation17 + $0xc0] sm:$0xff]
    %v4557 = vld [vmem:[#allocation17 + $0xc8] sm:$0xff]
    %v4558 = vld [vmem:[#allocation17 + $0xd0] sm:$0xff]
    %v4559 = vld [vmem:[#allocation17 + $0xd8] sm:$0xff]
    %v4560 = vld [vmem:[#allocation17 + $0xe0] sm:$0xff]
    %v4561 = vld [vmem:[#allocation17 + $0xe8] sm:$0xff]
    %v4562 = vld [vmem:[#allocation17 + $0xf0] sm:$0xff]
    %v4563 = vld [vmem:[#allocation17 + $0xf8] sm:$0xff]
    %v4564 = vld [vmem:[#allocation17 + $0x100] sm:$0xff]
    %v4565 = vld [vmem:[#allocation17 + $0x108] sm:$0xff]
    %v4566 = vld [vmem:[#allocation17 + $0x110] sm:$0xff]
    %v4567 = vld [vmem:[#allocation17 + $0x118] sm:$0xff]
    %v4568 = vld [vmem:[#allocation17 + $0x120] sm:$0xff]
    %v4569 = vld [vmem:[#allocation17 + $0x128] sm:$0xff]
    %v4570 = vld [vmem:[#allocation17 + $0x130] sm:$0xff]
    %v4571 = vld [vmem:[#allocation17 + $0x138] sm:$0xff]
    %v4572 = vld [vmem:[#allocation17 + $0x140] sm:$0xff]
    %v4573 = vld [vmem:[#allocation17 + $0x148] sm:$0xff]
    %v4574 = vld [vmem:[#allocation17 + $0x150] sm:$0xff]
    %v4575 = vld [vmem:[#allocation17 + $0x158] sm:$0xff]
    %v4576 = vld [vmem:[#allocation17 + $0x160] sm:$0xff]
    %v4577 = vld [vmem:[#allocation17 + $0x168] sm:$0xff]
    %v4578 = vld [vmem:[#allocation17 + $0x170] sm:$0xff]
    %v4579 = vld [vmem:[#allocation17 + $0x178] sm:$0xff]
    %v4580 = vld [vmem:[#allocation17 + $0x180] sm:$0xff]
    %v4581 = vld [vmem:[#allocation17 + $0x188] sm:$0xff]
    %v4582 = vld [vmem:[#allocation17 + $0x190] sm:$0xff]
    %v4583 = vld [vmem:[#allocation17 + $0x198] sm:$0xff]
    %v4584 = vld [vmem:[#allocation17 + $0x1a0] sm:$0xff]
    %v4585 = vld [vmem:[#allocation17 + $0x1a8] sm:$0xff]
    %v4586 = vld [vmem:[#allocation17 + $0x1b0] sm:$0xff]
    %v4587 = vld [vmem:[#allocation17 + $0x1b8] sm:$0xff]
    %v4588 = vld [vmem:[#allocation17 + $0x1c0] sm:$0xff]
    %v4589 = vld [vmem:[#allocation17 + $0x1c8] sm:$0xff]
    %v4590 = vld [vmem:[#allocation17 + $0x1d0] sm:$0xff]
    %v4591 = vld [vmem:[#allocation17 + $0x1d8] sm:$0xff]
    %v4592 = vld [vmem:[#allocation17 + $0x1e0] sm:$0xff]
    %v4593 = vld [vmem:[#allocation17 + $0x1e8] sm:$0xff]
    %v4594 = vld [vmem:[#allocation17 + $0x1f0] sm:$0xff]
    %v4595 = vld [vmem:[#allocation17 + $0x1f8] sm:$0xff]
    %4596 = vmatprep.subr.mxu0 %v4593
    %4597 = vmatpush1.msra.mxu0 %v4592
    %4598 = vmatprep.subr.mxu0 %v4589
    %4599 = vmatpush1.msra.mxu0 %v4588
    %4600 = vmatprep.subr.mxu0 %v4585
    %4601 = vmatpush1.msra.mxu0 %v4584
    %4602 = vmatprep.subr.mxu0 %v4581
    %4603 = vmatpush1.msra.mxu0 %v4580
    %4604 = vmatprep.subr.mxu0 %v4577
    %4605 = vmatpush1.msra.mxu0 %v4576
    %4606 = vmatprep.subr.mxu0 %v4573
    %4607 = vmatpush1.msra.mxu0 %v4572
    %4608 = vmatprep.subr.mxu0 %v4569
    %4609 = vmatpush1.msra.mxu0 %v4568
    %4610 = vmatprep.subr.mxu0 %v4565
    %4611 = vmatpush1.msra.mxu0 %v4564
    %4612 = vmatprep.subr.mxu0 %v4561
    %4613 = vmatpush1.msra.mxu0 %v4560
    %4614 = vmatprep.subr.mxu0 %v4557
    %4615 = vmatpush1.msra.mxu0 %v4556
    %4616 = vmatprep.subr.mxu0 %v4553
    %4617 = vmatpush1.msra.mxu0 %v4552
    %4618 = vmatprep.subr.mxu0 %v4549
    %4619 = vmatpush1.msra.mxu0 %v4548
    %4620 = vmatprep.subr.mxu0 %v4545
    %4621 = vmatpush1.msra.mxu0 %v4544
    %4622 = vmatprep.subr.mxu0 %v4541
    %4623 = vmatpush1.msra.mxu0 %v4540
    %4624 = vmatprep.subr.mxu0 %v4537
    %4625 = vmatpush1.msra.mxu0 %v4536
    %4626 = vmatprep.subr.mxu0 %v4533
    %4627 = vmatpush1.msra.mxu0 %v4532
    %4628 = vmatprep.subr.mxu0 0.0
    %4629 = vmatpush2.msra.mxu0 0.0
    %4630 = vmatprep.subr.mxu0 0.0
    %4631 = vmatpush2.msra.mxu0 0.0
    %4632 = vmatprep.subr.mxu0 0.0
    %4633 = vmatpush2.msra.mxu0 0.0
    %4634 = vmatprep.subr.mxu0 0.0
    %4635 = vmatpush2.msra.mxu0 0.0
    %4636 = vmatprep.subr.mxu0 0.0
    %4637 = vmatpush2.msra.mxu0 0.0
    %4638 = vmatprep.subr.mxu0 0.0
    %4639 = vmatpush2.msra.mxu0 0.0
    %4640 = vmatprep.subr.mxu0 0.0
    %4641 = vmatpush2.msra.mxu0 0.0
    %4642 = vmatprep.subr.mxu0 0.0
    %4643 = vmatpush2.msra.mxu0 0.0
    %4644 = vmatprep.subr.mxu0 0.0
    %4645 = vmatpush2.msra.mxu0 0.0
    %4646 = vmatprep.subr.mxu0 0.0
    %4647 = vmatpush2.msra.mxu0 0.0
    %4648 = vmatprep.subr.mxu0 0.0
    %4649 = vmatpush2.msra.mxu0 0.0
    %4650 = vmatprep.subr.mxu0 0.0
    %4651 = vmatpush2.msra.mxu0 0.0
    %4652 = vmatprep.subr.mxu0 0.0
    %4653 = vmatpush2.msra.mxu0 0.0
    %4654 = vmatprep.subr.mxu0 0.0
    %4655 = vmatpush2.msra.mxu0 0.0
    %4656 = vmatprep.subr.mxu0 0.0
    %4657 = vmatpush2.msra.mxu0 0.0
    %4658 = vmatprep.subr.mxu0 0.0
    %4659 = vmatpush2.msra.mxu0 0.0
    %4660 = vmatprep.mubr.f32.mxu0 0.0
    %4661 = vmatmul.mubr.f32.gmra.mxu0 %v4530
    %v4662 = vpop.f32.mrf.mxu0
    %v4663 = vadd.f32 0.0, %v4662
    %v4664 = vpop.f32.mrf.mxu0
    %v4665 = vadd.f32 0.0, %v4664
    %4666 = vdwg.mxu0
    %4667 = vmatprep.subr.mxu0 %v4595
    %4668 = vmatpush1.msra.mxu0 %v4594
    %4669 = vmatprep.subr.mxu0 %v4591
    %4670 = vmatpush1.msra.mxu0 %v4590
    %4671 = vmatprep.subr.mxu0 %v4587
    %4672 = vmatpush1.msra.mxu0 %v4586
    %4673 = vmatprep.subr.mxu0 %v4583
    %4674 = vmatpush1.msra.mxu0 %v4582
    %4675 = vmatprep.subr.mxu0 %v4579
    %4676 = vmatpush1.msra.mxu0 %v4578
    %4677 = vmatprep.subr.mxu0 %v4575
    %4678 = vmatpush1.msra.mxu0 %v4574
    %4679 = vmatprep.subr.mxu0 %v4571
    %4680 = vmatpush1.msra.mxu0 %v4570
    %4681 = vmatprep.subr.mxu0 %v4567
    %4682 = vmatpush1.msra.mxu0 %v4566
    %4683 = vmatprep.subr.mxu0 %v4563
    %4684 = vmatpush1.msra.mxu0 %v4562
    %4685 = vmatprep.subr.mxu0 %v4559
    %4686 = vmatpush1.msra.mxu0 %v4558
    %4687 = vmatprep.subr.mxu0 %v4555
    %4688 = vmatpush1.msra.mxu0 %v4554
    %4689 = vmatprep.subr.mxu0 %v4551
    %4690 = vmatpush1.msra.mxu0 %v4550
    %4691 = vmatprep.subr.mxu0 %v4547
    %4692 = vmatpush1.msra.mxu0 %v4546
    %4693 = vmatprep.subr.mxu0 %v4543
    %4694 = vmatpush1.msra.mxu0 %v4542
    %4695 = vmatprep.subr.mxu0 %v4539
    %4696 = vmatpush1.msra.mxu0 %v4538
    %4697 = vmatprep.subr.mxu0 %v4535
    %4698 = vmatpush1.msra.mxu0 %v4534
    %4699 = vmatprep.subr.mxu0 0.0
    %4700 = vmatpush2.msra.mxu0 0.0
    %4701 = vmatprep.subr.mxu0 0.0
    %4702 = vmatpush2.msra.mxu0 0.0
    %4703 = vmatprep.subr.mxu0 0.0
    %4704 = vmatpush2.msra.mxu0 0.0
    %4705 = vmatprep.subr.mxu0 0.0
    %4706 = vmatpush2.msra.mxu0 0.0
    %4707 = vmatprep.subr.mxu0 0.0
    %4708 = vmatpush2.msra.mxu0 0.0
    %4709 = vmatprep.subr.mxu0 0.0
    %4710 = vmatpush2.msra.mxu0 0.0
    %4711 = vmatprep.subr.mxu0 0.0
    %4712 = vmatpush2.msra.mxu0 0.0
    %4713 = vmatprep.subr.mxu0 0.0
    %4714 = vmatpush2.msra.mxu0 0.0
    %4715 = vmatprep.subr.mxu0 0.0
    %4716 = vmatpush2.msra.mxu0 0.0
    %4717 = vmatprep.subr.mxu0 0.0
    %4718 = vmatpush2.msra.mxu0 0.0
    %4719 = vmatprep.subr.mxu0 0.0
    %4720 = vmatpush2.msra.mxu0 0.0
    %4721 = vmatprep.subr.mxu0 0.0
    %4722 = vmatpush2.msra.mxu0 0.0
    %4723 = vmatprep.subr.mxu0 0.0
    %4724 = vmatpush2.msra.mxu0 0.0
    %4725 = vmatprep.subr.mxu0 0.0
    %4726 = vmatpush2.msra.mxu0 0.0
    %4727 = vmatprep.subr.mxu0 0.0
    %4728 = vmatpush2.msra.mxu0 0.0
    %4729 = vmatprep.subr.mxu0 0.0
    %4730 = vmatpush2.msra.mxu0 0.0
    %4731 = vmatprep.mubr.f32.mxu0 0.0
    %4732 = vmatmul.mubr.f32.gmra.mxu0 %v4530
    %v4733 = vpop.f32.mrf.mxu0
    %v4734 = vadd.f32 0.0, %v4733
    %v4735 = vpop.f32.mrf.mxu0
    %v4736 = vadd.f32 0.0, %v4735
    %4737 = vdwg.mxu0
    %v4738 = vadd.f32 %v4290, %v4663
    %v4739 = vadd.f32 %v4291, %v4665
    %v4740 = vadd.f32 %v4292, %v4734
    %v4741 = vadd.f32 %v4293, %v4736
    %v4742 = vxor.u32 %v4738, 2147483648
    %v4743 = vmul.f32 %v4742, 1.442695
    %v4744 = vpow.pop %v4743
    %v4745 = vadd.f32 %v4744, 1.0
    %v4746 = vrcp.pop %v4745
    %v4747 = vmul.f32 1.0, %v4746
    %v4748 = vxor.u32 %v4739, 2147483648
    %v4749 = vmul.f32 %v4748, 1.442695
    %v4750 = vpow.pop %v4749
    %v4751 = vadd.f32 %v4750, 1.0
    %v4752 = vrcp.pop %v4751
    %v4753 = vmul.f32 1.0, %v4752
    %v4754 = vtanh.pop %v4740
    %v4755 = vxor.u32 %v4741, 2147483648
    %v4756 = vmul.f32 %v4755, 1.442695
    %v4757 = vpow.pop %v4756
    %v4758 = vadd.f32 %v4757, 1.0
    %v4759 = vrcp.pop %v4758
    %v4760 = vmul.f32 1.0, %v4759
    %v4761 = vmul.f32 %v4753, %v4531
    %v4762 = vmul.f32 %v4747, %v4754
    %v4763 = vadd.f32 %v4761, %v4762
    %v4764 = vtanh.pop %v4763
    %v4765 = vmul.f32 %v4760, %v4764
    %4766 = vst [vmem:[#allocation3] sm:$0xff] %v4529
    %4767 = vst [vmem:[#allocation4] sm:$0xff] %v4527
    %4768 = vst [vmem:[#allocation5] sm:$0xff] %v4765
    %4769 = vst [vmem:[#allocation6] sm:$0xff] %v4763
    %s4770 = scalar_lea.vmem [#allocation7], 56
    %4771 = vst [vmem:[%s4770] sm:$0xff] %v4529
    %4772 = vst [vmem:[#allocation8] sm:$0xff] %v4765
    %v4773 = vld [vmem:[#allocation7] sm:$0xff]
    %v4774 = vld [vmem:[#allocation7 + $0x8] sm:$0xff]
    %v4775 = vld [vmem:[#allocation7 + $0x10] sm:$0xff]
    %v4776 = vld [vmem:[#allocation7 + $0x18] sm:$0xff]
    %v4777 = vld [vmem:[#allocation7 + $0x20] sm:$0xff]
    %v4778 = vld [vmem:[#allocation7 + $0x28] sm:$0xff]
    %v4779 = vld [vmem:[#allocation7 + $0x30] sm:$0xff]
    %v4780 = vld [vmem:[#allocation7 + $0x38] sm:$0xff]
    %v4781 = vld [vmem:[#allocation18] sm:$0xff]
    %v4782 = vld [vmem:[#allocation18 + $0x8] sm:$0xff]
    %v4783 = vld [vmem:[#allocation18 + $0x10] sm:$0xff]
    %v4784 = vld [vmem:[#allocation18 + $0x18] sm:$0xff]
    %v4785 = vld [vmem:[#allocation18 + $0x20] sm:$0xff]
    %v4786 = vld [vmem:[#allocation18 + $0x28] sm:$0xff]
    %v4787 = vld [vmem:[#allocation18 + $0x30] sm:$0xff]
    %v4788 = vld [vmem:[#allocation18 + $0x38] sm:$0xff]
    %v4789 = vld [vmem:[#allocation18 + $0x40] sm:$0xff]
    %v4790 = vld [vmem:[#allocation18 + $0x48] sm:$0xff]
    %v4791 = vld [vmem:[#allocation18 + $0x50] sm:$0xff]
    %v4792 = vld [vmem:[#allocation18 + $0x58] sm:$0xff]
    %v4793 = vld [vmem:[#allocation18 + $0x60] sm:$0xff]
    %v4794 = vld [vmem:[#allocation18 + $0x68] sm:$0xff]
    %v4795 = vld [vmem:[#allocation18 + $0x70] sm:$0xff]
    %v4796 = vld [vmem:[#allocation18 + $0x78] sm:$0xff]
    %v4797 = vld [vmem:[#allocation8] sm:$0xff]
    %v4798 = vld [vmem:[#allocation8 + $0x8] sm:$0xff]
    %v4799 = vld [vmem:[#allocation8 + $0x10] sm:$0xff]
    %v4800 = vld [vmem:[#allocation8 + $0x18] sm:$0xff]
    %v4801 = vld [vmem:[#allocation8 + $0x20] sm:$0xff]
    %v4802 = vld [vmem:[#allocation8 + $0x28] sm:$0xff]
    %v4803 = vld [vmem:[#allocation8 + $0x30] sm:$0xff]
    %v4804 = vld [vmem:[#allocation8 + $0x38] sm:$0xff]
    %v4805 = vld [vmem:[#allocation20] sm:$0xff]
    %v4806 = vld [vmem:[#allocation20 + $0x8] sm:$0xff]
    %v4807 = vld [vmem:[#allocation20 + $0x10] sm:$0xff]
    %v4808 = vld [vmem:[#allocation20 + $0x18] sm:$0xff]
    %v4809 = vld [vmem:[#allocation20 + $0x20] sm:$0xff]
    %v4810 = vld [vmem:[#allocation20 + $0x28] sm:$0xff]
    %v4811 = vld [vmem:[#allocation20 + $0x30] sm:$0xff]
    %v4812 = vld [vmem:[#allocation20 + $0x38] sm:$0xff]
    %v4813 = vld [vmem:[#allocation20 + $0x40] sm:$0xff]
    %v4814 = vld [vmem:[#allocation20 + $0x48] sm:$0xff]
    %v4815 = vld [vmem:[#allocation20 + $0x50] sm:$0xff]
    %v4816 = vld [vmem:[#allocation20 + $0x58] sm:$0xff]
    %v4817 = vld [vmem:[#allocation20 + $0x60] sm:$0xff]
    %v4818 = vld [vmem:[#allocation20 + $0x68] sm:$0xff]
    %v4819 = vld [vmem:[#allocation20 + $0x70] sm:$0xff]
    %v4820 = vld [vmem:[#allocation20 + $0x78] sm:$0xff]
    %4821 = vmatprep.subr.mxu0 0.0
    %4822 = vmatpush1.msra.mxu0 %v4820
    %4823 = vmatprep.subr.mxu0 0.0
    %4824 = vmatpush1.msra.mxu0 %v4819
    %4825 = vmatprep.subr.mxu0 0.0
    %4826 = vmatpush1.msra.mxu0 %v4818
    %4827 = vmatprep.subr.mxu0 0.0
    %4828 = vmatpush1.msra.mxu0 %v4817
    %4829 = vmatprep.subr.mxu0 0.0
    %4830 = vmatpush1.msra.mxu0 %v4816
    %4831 = vmatprep.subr.mxu0 0.0
    %4832 = vmatpush1.msra.mxu0 %v4815
    %4833 = vmatprep.subr.mxu0 0.0
    %4834 = vmatpush1.msra.mxu0 %v4814
    %4835 = vmatprep.subr.mxu0 0.0
    %4836 = vmatpush1.msra.mxu0 %v4813
    %4837 = vmatprep.subr.mxu0 0.0
    %4838 = vmatpush1.msra.mxu0 %v4812
    %4839 = vmatprep.subr.mxu0 0.0
    %4840 = vmatpush1.msra.mxu0 %v4811
    %4841 = vmatprep.subr.mxu0 0.0
    %4842 = vmatpush1.msra.mxu0 %v4810
    %4843 = vmatprep.subr.mxu0 0.0
    %4844 = vmatpush1.msra.mxu0 %v4809
    %4845 = vmatprep.subr.mxu0 0.0
    %4846 = vmatpush1.msra.mxu0 %v4808
    %4847 = vmatprep.subr.mxu0 0.0
    %4848 = vmatpush1.msra.mxu0 %v4807
    %4849 = vmatprep.subr.mxu0 0.0
    %4850 = vmatpush1.msra.mxu0 %v4806
    %4851 = vmatprep.subr.mxu0 0.0
    %4852 = vmatpush1.msra.mxu0 %v4805
    %4853 = vmatprep.subr.mxu0 0.0
    %4854 = vmatpush2.msra.mxu0 0.0
    %4855 = vmatprep.subr.mxu0 0.0
    %4856 = vmatpush2.msra.mxu0 0.0
    %4857 = vmatprep.subr.mxu0 0.0
    %4858 = vmatpush2.msra.mxu0 0.0
    %4859 = vmatprep.subr.mxu0 0.0
    %4860 = vmatpush2.msra.mxu0 0.0
    %4861 = vmatprep.subr.mxu0 0.0
    %4862 = vmatpush2.msra.mxu0 0.0
    %4863 = vmatprep.subr.mxu0 0.0
    %4864 = vmatpush2.msra.mxu0 0.0
    %4865 = vmatprep.subr.mxu0 0.0
    %4866 = vmatpush2.msra.mxu0 0.0
    %4867 = vmatprep.subr.mxu0 0.0
    %4868 = vmatpush2.msra.mxu0 0.0
    %4869 = vmatprep.subr.mxu0 0.0
    %4870 = vmatpush2.msra.mxu0 0.0
    %4871 = vmatprep.subr.mxu0 0.0
    %4872 = vmatpush2.msra.mxu0 0.0
    %4873 = vmatprep.subr.mxu0 0.0
    %4874 = vmatpush2.msra.mxu0 0.0
    %4875 = vmatprep.subr.mxu0 0.0
    %4876 = vmatpush2.msra.mxu0 0.0
    %4877 = vmatprep.subr.mxu0 0.0
    %4878 = vmatpush2.msra.mxu0 0.0
    %4879 = vmatprep.subr.mxu0 0.0
    %4880 = vmatpush2.msra.mxu0 0.0
    %4881 = vmatprep.subr.mxu0 0.0
    %4882 = vmatpush2.msra.mxu0 0.0
    %4883 = vmatprep.subr.mxu0 0.0
    %4884 = vmatpush2.msra.mxu0 0.0
    %4885 = vmatprep.mubr.f32.mxu0 0.0
    %4886 = vmatmul.mubr.f32.gmra.mxu0 %v4797
    %v4887 = vpop.f32.mrf.mxu0
    %v4888 = vadd.f32 0.0, %v4887
    %v4889 = vpop.f32.mrf.mxu0
    %4890 = vmatprep.mubr.f32.mxu0 0.0
    %4891 = vmatmul.mubr.f32.gmra.mxu0 %v4798
    %v4892 = vpop.f32.mrf.mxu0
    %v4893 = vadd.f32 0.0, %v4892
    %v4894 = vpop.f32.mrf.mxu0
    %4895 = vmatprep.mubr.f32.mxu0 0.0
    %4896 = vmatmul.mubr.f32.gmra.mxu0 %v4799
    %v4897 = vpop.f32.mrf.mxu0
    %v4898 = vadd.f32 0.0, %v4897
    %v4899 = vpop.f32.mrf.mxu0
    %4900 = vmatprep.mubr.f32.mxu0 0.0
    %4901 = vmatmul.mubr.f32.gmra.mxu0 %v4800
    %v4902 = vpop.f32.mrf.mxu0
    %v4903 = vadd.f32 0.0, %v4902
    %v4904 = vpop.f32.mrf.mxu0
    %4905 = vmatprep.mubr.f32.mxu0 0.0
    %4906 = vmatmul.mubr.f32.gmra.mxu0 %v4801
    %v4907 = vpop.f32.mrf.mxu0
    %v4908 = vadd.f32 0.0, %v4907
    %v4909 = vpop.f32.mrf.mxu0
    %4910 = vmatprep.mubr.f32.mxu0 0.0
    %4911 = vmatmul.mubr.f32.gmra.mxu0 %v4802
    %v4912 = vpop.f32.mrf.mxu0
    %v4913 = vadd.f32 0.0, %v4912
    %v4914 = vpop.f32.mrf.mxu0
    %4915 = vmatprep.mubr.f32.mxu0 0.0
    %4916 = vmatmul.mubr.f32.gmra.mxu0 %v4803
    %v4917 = vpop.f32.mrf.mxu0
    %v4918 = vadd.f32 0.0, %v4917
    %v4919 = vpop.f32.mrf.mxu0
    %4920 = vmatprep.mubr.f32.mxu0 0.0
    %4921 = vmatmul.mubr.f32.gmra.mxu0 %v4804
    %v4922 = vpop.f32.mrf.mxu0
    %v4923 = vadd.f32 0.0, %v4922
    %v4924 = vpop.f32.mrf.mxu0
    %4925 = vdwg.mxu0
    %4926 = vmatprep.subr.mxu0 0.0
    %4927 = vmatpush1.msra.mxu0 %v4796
    %4928 = vmatprep.subr.mxu0 0.0
    %4929 = vmatpush1.msra.mxu0 %v4795
    %4930 = vmatprep.subr.mxu0 0.0
    %4931 = vmatpush1.msra.mxu0 %v4794
    %4932 = vmatprep.subr.mxu0 0.0
    %4933 = vmatpush1.msra.mxu0 %v4793
    %4934 = vmatprep.subr.mxu0 0.0
    %4935 = vmatpush1.msra.mxu0 %v4792
    %4936 = vmatprep.subr.mxu0 0.0
    %4937 = vmatpush1.msra.mxu0 %v4791
    %4938 = vmatprep.subr.mxu0 0.0
    %4939 = vmatpush1.msra.mxu0 %v4790
    %4940 = vmatprep.subr.mxu0 0.0
    %4941 = vmatpush1.msra.mxu0 %v4789
    %4942 = vmatprep.subr.mxu0 0.0
    %4943 = vmatpush1.msra.mxu0 %v4788
    %4944 = vmatprep.subr.mxu0 0.0
    %4945 = vmatpush1.msra.mxu0 %v4787
    %4946 = vmatprep.subr.mxu0 0.0
    %4947 = vmatpush1.msra.mxu0 %v4786
    %4948 = vmatprep.subr.mxu0 0.0
    %4949 = vmatpush1.msra.mxu0 %v4785
    %4950 = vmatprep.subr.mxu0 0.0
    %4951 = vmatpush1.msra.mxu0 %v4784
    %4952 = vmatprep.subr.mxu0 0.0
    %4953 = vmatpush1.msra.mxu0 %v4783
    %4954 = vmatprep.subr.mxu0 0.0
    %4955 = vmatpush1.msra.mxu0 %v4782
    %4956 = vmatprep.subr.mxu0 0.0
    %4957 = vmatpush1.msra.mxu0 %v4781
    %4958 = vmatprep.subr.mxu0 0.0
    %4959 = vmatpush2.msra.mxu0 0.0
    %4960 = vmatprep.subr.mxu0 0.0
    %4961 = vmatpush2.msra.mxu0 0.0
    %4962 = vmatprep.subr.mxu0 0.0
    %4963 = vmatpush2.msra.mxu0 0.0
    %4964 = vmatprep.subr.mxu0 0.0
    %4965 = vmatpush2.msra.mxu0 0.0
    %4966 = vmatprep.subr.mxu0 0.0
    %4967 = vmatpush2.msra.mxu0 0.0
    %4968 = vmatprep.subr.mxu0 0.0
    %4969 = vmatpush2.msra.mxu0 0.0
    %4970 = vmatprep.subr.mxu0 0.0
    %4971 = vmatpush2.msra.mxu0 0.0
    %4972 = vmatprep.subr.mxu0 0.0
    %4973 = vmatpush2.msra.mxu0 0.0
    %4974 = vmatprep.subr.mxu0 0.0
    %4975 = vmatpush2.msra.mxu0 0.0
    %4976 = vmatprep.subr.mxu0 0.0
    %4977 = vmatpush2.msra.mxu0 0.0
    %4978 = vmatprep.subr.mxu0 0.0
    %4979 = vmatpush2.msra.mxu0 0.0
    %4980 = vmatprep.subr.mxu0 0.0
    %4981 = vmatpush2.msra.mxu0 0.0
    %4982 = vmatprep.subr.mxu0 0.0
    %4983 = vmatpush2.msra.mxu0 0.0
    %4984 = vmatprep.subr.mxu0 0.0
    %4985 = vmatpush2.msra.mxu0 0.0
    %4986 = vmatprep.subr.mxu0 0.0
    %4987 = vmatpush2.msra.mxu0 0.0
    %4988 = vmatprep.subr.mxu0 0.0
    %4989 = vmatpush2.msra.mxu0 0.0
    %4990 = vmatprep.mubr.f32.mxu0 0.0
    %4991 = vmatmul.mubr.f32.gmra.mxu0 %v4773
    %v4992 = vpop.f32.mrf.mxu0
    %v4993 = vadd.f32 %v4888, %v4992
    %v4994 = vpop.f32.mrf.mxu0
    %4995 = vmatprep.mubr.f32.mxu0 0.0
    %4996 = vmatmul.mubr.f32.gmra.mxu0 %v4774
    %v4997 = vpop.f32.mrf.mxu0
    %v4998 = vadd.f32 %v4893, %v4997
    %v4999 = vpop.f32.mrf.mxu0
    %5000 = vmatprep.mubr.f32.mxu0 0.0
    %5001 = vmatmul.mubr.f32.gmra.mxu0 %v4775
    %v5002 = vpop.f32.mrf.mxu0
    %v5003 = vadd.f32 %v4898, %v5002
    %v5004 = vpop.f32.mrf.mxu0
    %5005 = vmatprep.mubr.f32.mxu0 0.0
    %5006 = vmatmul.mubr.f32.gmra.mxu0 %v4776
    %v5007 = vpop.f32.mrf.mxu0
    %v5008 = vadd.f32 %v4903, %v5007
    %v5009 = vpop.f32.mrf.mxu0
    %5010 = vmatprep.mubr.f32.mxu0 0.0
    %5011 = vmatmul.mubr.f32.gmra.mxu0 %v4777
    %v5012 = vpop.f32.mrf.mxu0
    %v5013 = vadd.f32 %v4908, %v5012
    %v5014 = vpop.f32.mrf.mxu0
    %5015 = vmatprep.mubr.f32.mxu0 0.0
    %5016 = vmatmul.mubr.f32.gmra.mxu0 %v4778
    %v5017 = vpop.f32.mrf.mxu0
    %v5018 = vadd.f32 %v4913, %v5017
    %v5019 = vpop.f32.mrf.mxu0
    %5020 = vmatprep.mubr.f32.mxu0 0.0
    %5021 = vmatmul.mubr.f32.gmra.mxu0 %v4779
    %v5022 = vpop.f32.mrf.mxu0
    %v5023 = vadd.f32 %v4918, %v5022
    %v5024 = vpop.f32.mrf.mxu0
    %5025 = vmatprep.mubr.f32.mxu0 0.0
    %5026 = vmatmul.mubr.f32.gmra.mxu0 %v4780
    %v5027 = vpop.f32.mrf.mxu0
    %v5028 = vadd.f32 %v4923, %v5027
    %v5029 = vpop.f32.mrf.mxu0
    %5030 = vdwg.mxu0
    %v5031 = vld [vmem:[%s7] sm:$0x1]
    %v5033 = vlaneseq
    %v5034 = vshrl.u32 %v5033, 7
    %v5035 = vsub.s32 0, %v5034
    %v5036 = vrot.slane %v5031, %v5035
    %v5038 = vadd.f32 %v4993, %v5036
    %v5039 = vadd.f32 %v4998, %v5036
    %v5040 = vadd.f32 %v5003, %v5036
    %v5041 = vadd.f32 %v5008, %v5036
    %v5042 = vadd.f32 %v5013, %v5036
    %v5043 = vadd.f32 %v5018, %v5036
    %v5044 = vadd.f32 %v5023, %v5036
    %v5045 = vadd.f32 %v5028, %v5036
    %5046 = vst [vmem:[#allocation21] sm:$0xff] %v5038
    %5047 = vst [vmem:[#allocation21 + $0x8] sm:$0xff] %v5039
    %5048 = vst [vmem:[#allocation21 + $0x10] sm:$0xff] %v5040
    %5049 = vst [vmem:[#allocation21 + $0x18] sm:$0xff] %v5041
    %5050 = vst [vmem:[#allocation21 + $0x20] sm:$0xff] %v5042
    %5051 = vst [vmem:[#allocation21 + $0x28] sm:$0xff] %v5043
    %5052 = vst [vmem:[#allocation21 + $0x30] sm:$0xff] %v5044
    %5053 = vst [vmem:[#allocation21 + $0x38] sm:$0xff] %v5045
    // Predicated region
    $region62: #{tpu_custom_call.1} parent=1 // pred_check
      _
    $region63: #{tpu_custom_call.1} parent=1 // pred_check_branch
      %5055 = sbr.rel (0) target = $region65
    $region64: #{tpu_custom_call.1} parent=1 // pred_region
      %s5057 = ssub.s32 1024, 1024
      %5058 = vsyncadd [#allocation11], %s5057
      %s5059 = sshll.u32 [#allocation21], 4
      %s5060 = int_to_ptr.vmem [resolvable:$true] %s5059
      %5065 = dma.vmem_to_hbm [thread:$0]  %s5060, 1024, %s8, [#allocation11], 128, 128, 8
    $region65: #{tpu_custom_call.1} parent=1 // pred_fallthru
      _
    // Predicated region
    $region66: #{tpu_custom_call.1} parent=1 // pred_check
      _
    $region67: #{tpu_custom_call.1} parent=1 // pred_check_branch
      %5067 = sbr.rel (0) target = $region69
    $region68: #{tpu_custom_call.1} parent=1 // pred_region
      %5068 = dma.done [#allocation11], 1024
    $region69: #{tpu_custom_call.1} parent=1 // pred_fallthru
      _
    %5069 = vsyncpa [#allocation10], 1
    %5070 = vsyncpa [#allocation13], 1
    %5071 = vsyncpa [#allocation16], 1
    %5072 = vsyncpa [#allocation19], 1
    %5073 = vsyncpa [#allocation11], 1

</llo_original>
